<compile_context>
chip_gen: v7x
topology: tpu7x:2x2x1
jax: 0.10.0
libtpu: 0.0.40
codegen_flags: <defaults>
</compile_context>

<pallas_src>
import math

import jax
import jax.numpy as jnp
from jax.experimental import pallas as pl
from jax.experimental.pallas import tpu as pltpu

# ----------------------------- static config --------------------------------
DIM = 128                  # d_model (module default)
NHEAD = 4
HEAD_DIM = DIM // NHEAD
NUM_LAYERS = 2             # args-override (module default is 4) for a small test
LN_EPS = 1e-5

MAPPING = ["<B>", "<S>", "<E>", "<P>", "a", "b", "c", "d", "e", "f"]
NUM_CLASSES = len(MAPPING)
NUM_CLASSES_PAD = 128      # pad fc output lanes to a full 128-lane vreg
MAX_OUTPUT_LENGTH = 10

B = 2
IMG_H, IMG_W = 16, 36
WINDOW_W, WINDOW_S = 8, 4
SX = (IMG_W - WINDOW_W) // WINDOW_S + 1   # 8 feature-sequence length
C1 = 64                    # stand-in CNN hidden channels
C1_PAD = 128               # padded to 128 lanes
SY = 8                     # decoder target sequence length

SQRT_DIM = math.sqrt(DIM)
ATTN_SCALE = 1.0 / math.sqrt(HEAD_DIM)
NEG_INF = -1e30


# ----------------------------- in-kernel helpers -----------------------------
def _mxu(a, w):
    """bf16-operand MXU matmul with f32 accumulation."""
    return jnp.dot(a.astype(jnp.bfloat16), w.astype(jnp.bfloat16),
                   preferred_element_type=jnp.float32)


def _layernorm(h, g, b):
    mean = jnp.mean(h, axis=-1, keepdims=True)
    c = h - mean
    var = jnp.mean(c * c, axis=-1, keepdims=True)
    return c * jax.lax.rsqrt(var + LN_EPS) * g + b


def _mha(q, k, v, sq, sk, bias):
    """Multi-head attention on batch-major 2-D slabs, fully unrolled.

    q: (B*sq, DIM), k/v: (B*sk, DIM). Heads live as contiguous 32-lane chunks
    of the 128-lane model dim; batch/head loops are static Python unrolls so
    everything stays inside the single fused kernel.
    """
    batch_out = []
    for b in range(B):
        qb = q[b * sq:(b + 1) * sq, :] * ATTN_SCALE     # fold 1/sqrt(hd) into q
        kb = k[b * sk:(b + 1) * sk, :]
        vb = v[b * sk:(b + 1) * sk, :]
        head_out = []
        for h in range(NHEAD):
            lo, hi = h * HEAD_DIM, (h + 1) * HEAD_DIM
            qh = qb[:, lo:hi].astype(jnp.bfloat16)
            kh = kb[:, lo:hi].astype(jnp.bfloat16)
            vh = vb[:, lo:hi].astype(jnp.bfloat16)
            # contract on the head dim directly (no explicit k.T materialized)
            s = jax.lax.dot_general(qh, kh, (((1,), (1,)), ((), ())),
                                    preferred_element_type=jnp.float32)
            if bias is not None:
                s = s + bias
            s = s - jnp.max(s, axis=-1, keepdims=True)
            p = jnp.exp(s)
            p = p * pl.reciprocal(jnp.sum(p, axis=-1, keepdims=True), approx=True)
            head_out.append(_mxu(p, vh))
        batch_out.append(jnp.concatenate(head_out, axis=1))    # (sq, DIM)
    return jnp.concatenate(batch_out, axis=0)                  # (B*sq, DIM)


# ----------------------------- fused forward kernel --------------------------
def _fused_forward_kernel(
        patches_ref, y_ref, pe_mem_ref,
        conv1_w_ref, conv1_b_ref, conv2_w_ref, conv2_b_ref,
        sa_in_w_ref, sa_in_b_ref, sa_out_w_ref, sa_out_b_ref,
        ca_q_w_ref, ca_q_b_ref, ca_kv_w_ref, ca_kv_b_ref,
        ca_out_w_ref, ca_out_b_ref,
        ff1_w_ref, ff1_b_ref, ff2_w_ref, ff2_b_ref,
        n1_w_ref, n1_b_ref, n2_w_ref, n2_b_ref, n3_w_ref, n3_b_ref,
        fc_w_ref, fc_b_ref,
        out_ref):
    # --- LineCNN stand-in: windowed conv as im2col matmuls (128-lane padded) ---
    h = jnp.maximum(_mxu(patches_ref[...], conv1_w_ref[...]) + conv1_b_ref[...], 0.0)
    mem = _mxu(h, conv2_w_ref[...]) + conv2_b_ref[...]
    mem = mem * SQRT_DIM + pe_mem_ref[...]          # (B*SX, DIM) memory

    x = y_ref[...]                                   # (B*SY, DIM) embed*sqrt+pe

    # causal (subsequent) mask built in-kernel: avoids a DMA'd mask input.
    row = jax.lax.broadcasted_iota(jnp.int32, (SY, SY), 0)
    col = jax.lax.broadcasted_iota(jnp.int32, (SY, SY), 1)
    causal_bias = jnp.where(col <= row, 0.0, NEG_INF).astype(jnp.float32)

    for l in range(NUM_LAYERS):                      # static unroll
        # --- self attention (fused QKV projection: one (128,384) matmul) ---
        qkv = _mxu(x, sa_in_w_ref[l]) + sa_in_b_ref[l]
        sa = _mha(qkv[:, :DIM], qkv[:, DIM:2 * DIM], qkv[:, 2 * DIM:],
                  SY, SY, causal_bias)
        sa = _mxu(sa, sa_out_w_ref[l]) + sa_out_b_ref[l]
        x = _layernorm(x + sa, n1_w_ref[l], n1_b_ref[l])

        # --- cross attention (memory mask is all-zero -> dropped) ---
        q = _mxu(x, ca_q_w_ref[l]) + ca_q_b_ref[l]
        kv = _mxu(mem, ca_kv_w_ref[l]) + ca_kv_b_ref[l]
        ca = _mha(q, kv[:, :DIM], kv[:, DIM:], SY, SX, None)
        ca = _mxu(ca, ca_out_w_ref[l]) + ca_out_b_ref[l]
        x = _layernorm(x + ca, n2_w_ref[l], n2_b_ref[l])

        # --- feed-forward (dim_feedforward == dim) ---
        ff = jnp.maximum(_mxu(x, ff1_w_ref[l]) + ff1_b_ref[l], 0.0)
        ff = _mxu(ff, ff2_w_ref[l]) + ff2_b_ref[l]
        x = _layernorm(x + ff, n3_w_ref[l], n3_b_ref[l])

    # --- classifier head (lane-padded to 128; sliced in the wrapper) ---
    out_ref[...] = _mxu(x, fc_w_ref[...]) + fc_b_ref[...]


# ----------------------------- wrapper ---------------------------------------
def forward(prepared, x, y):
    """LineCNNTransformer.forward: x (B,1,H,W), y (B,Sy) -> (B, num_classes, Sy)."""
    # im2col glue (XLA): full-height windows of width WINDOW_W, stride WINDOW_S
    patches = jnp.stack(
        [x[:, 0, :, i * WINDOW_S:i * WINDOW_S + WINDOW_W] for i in range(SX)],
        axis=1)                                          # (B, Sx, H, WW)
    patches = patches.reshape(B * SX, IMG_H * WINDOW_W).astype(jnp.float32)

    # decoder input: embedding lookup * sqrt(dim) + positional encoding
    y_emb = (prepared["embedding"][y.reshape(-1)] * SQRT_DIM
             + prepared["pe_y"]).astype(jnp.float32)      # (B*SY, DIM)

    inputs = [
        patches, y_emb, prepared["pe_mem"],
        prepared["conv1_w"], prepared["conv1_b"],
        prepared["conv2_w"], prepared["conv2_b"],
        prepared["sa_in_w"], prepared["sa_in_b"],
        prepared["sa_out_w"], prepared["sa_out_b"],
        prepared["ca_q_w"], prepared["ca_q_b"],
        prepared["ca_kv_w"], prepared["ca_kv_b"],
        prepared["ca_out_w"], prepared["ca_out_b"],
        prepared["ff1_w"], prepared["ff1_b"],
        prepared["ff2_w"], prepared["ff2_b"],
        prepared["n1_w"], prepared["n1_b"],
        prepared["n2_w"], prepared["n2_b"],
        prepared["n3_w"], prepared["n3_b"],
        prepared["fc_w"], prepared["fc_b"],
    ]

    out = pl.pallas_call(
        _fused_forward_kernel,
        out_shape=jax.ShapeDtypeStruct((B * SY, NUM_CLASSES_PAD), jnp.float32),
        in_specs=[pl.BlockSpec(memory_space=pltpu.MemorySpace.VMEM)] * len(inputs),
        out_specs=pl.BlockSpec(memory_space=pltpu.MemorySpace.VMEM),
    )(*inputs)

    logits = out[:, :NUM_CLASSES].reshape(B, SY, NUM_CLASSES)
    return logits.transpose(0, 2, 1)                     # (B, num_classes, Sy)


# ----------------------------- parameters ------------------------------------
def make_positional_encoding(max_len, d_model):
    position = jnp.arange(max_len, dtype=jnp.float32)[:, None]
    div_term = jnp.exp(jnp.arange(0, d_model, 2, dtype=jnp.float32)
                       * (-math.log(10000.0) / d_model))
    pe = jnp.zeros((max_len, d_model), jnp.float32)
    pe = pe.at[:, 0::2].set(jnp.sin(position * div_term))
    pe = pe.at[:, 1::2].set(jnp.cos(position * div_term))
    return pe                                            # (max_len, d_model)


def init_params(key):
    """Torch-layout parameters (weights as (Dout, Din))."""
    dim = DIM
    keys = iter(jax.random.split(key, 128))

    def nrm(shape, scale=0.05):
        return (scale * jax.random.normal(next(keys), shape)).astype(jnp.float32)

    def uni(shape, r=0.1):
        return jax.random.uniform(next(keys), shape, jnp.float32, -r, r)

    def attn_params():
        return {
            "in_proj_weight": nrm((3 * dim, dim)),
            "in_proj_bias": jnp.zeros((3 * dim,), jnp.float32),
            "out_proj_weight": nrm((dim, dim)),
            "out_proj_bias": jnp.zeros((dim,), jnp.float32),
        }

    layers = []
    for _ in range(NUM_LAYERS):
        layers.append({
            "self_attn": attn_params(),
            "cross_attn": attn_params(),
            "linear1_w": nrm((dim, dim)),       # dim_feedforward == dim
            "linear1_b": jnp.zeros((dim,), jnp.float32),
            "linear2_w": nrm((dim, dim)),
            "linear2_b": jnp.zeros((dim,), jnp.float32),
            "norm1_w": jnp.ones((dim,), jnp.float32),
            "norm1_b": jnp.zeros((dim,), jnp.float32),
            "norm2_w": jnp.ones((dim,), jnp.float32),
            "norm2_b": jnp.zeros((dim,), jnp.float32),
            "norm3_w": jnp.ones((dim,), jnp.float32),
            "norm3_b": jnp.zeros((dim,), jnp.float32),
        })

    return {
        "line_cnn": {
            "conv1_w": nrm((C1, IMG_H * WINDOW_W)),
            "conv1_b": jnp.zeros((C1,), jnp.float32),
            "conv2_w": nrm((dim, C1)),
            "conv2_b": jnp.zeros((dim,), jnp.float32),
        },
        "embedding": uni((NUM_CLASSES, dim)),   # init_weights: uniform(-0.1, 0.1)
        "fc_w": uni((NUM_CLASSES, dim)),
        "fc_b": jnp.zeros((NUM_CLASSES,), jnp.float32),
        "pe": make_positional_encoding(64, dim),
        "layers": layers,
    }


def prepare_params(raw):
    """One-time layout prep: transpose weights to (Din, Dout), pad sub-128 lane
    dims to 128, stack per-layer tensors, cast matmul weights to bf16
    (biases / LayerNorm params / embeddings stay f32)."""
    def wt(w):                       # torch (Dout, Din) -> (Din, Dout), bf16
        return jnp.asarray(w).T.astype(jnp.bfloat16)

    def bias_row(b, pad_to=None):
        b = jnp.asarray(b, jnp.float32).reshape(1, -1)
        if pad_to is not None and b.shape[1] < pad_to:
            b = jnp.pad(b, ((0, 0), (0, pad_to - b.shape[1])))
        return b

    def pad_lanes(w, pad_to):        # pad output (lane) dim
        return jnp.pad(w, ((0, 0), (0, pad_to - w.shape[1])))

    def pad_rows(w, pad_to):         # pad input (contraction) dim
        return jnp.pad(w, ((0, pad_to - w.shape[0]), (0, 0)))

    lc = raw["line_cnn"]
    p = {
        "conv1_w": pad_lanes(wt(lc["conv1_w"]), C1_PAD),
        "conv1_b": bias_row(lc["conv1_b"], C1_PAD),
        "conv2_w": pad_rows(wt(lc["conv2_w"]), C1_PAD),
        "conv2_b": bias_row(lc["conv2_b"]),
        "fc_w": pad_lanes(wt(raw["fc_w"]), NUM_CLASSES_PAD),
        "fc_b": bias_row(raw["fc_b"], NUM_CLASSES_PAD),
        "embedding": jnp.asarray(raw["embedding"], jnp.float32),
    }

    pe2d = raw["pe"]
    p["pe_mem"] = jnp.tile(pe2d[:SX], (B, 1)).astype(jnp.float32)   # (B*SX, DIM)
    p["pe_y"] = jnp.tile(pe2d[:SY], (B, 1)).astype(jnp.float32)     # (B*SY, DIM)

    def stack(fn):
        return jnp.stack([fn(lp) for lp in raw["layers"]])

    p.update({
        "sa_in_w": stack(lambda lp: wt(lp["self_attn"]["in_proj_weight"])),
        "sa_in_b": stack(lambda lp: bias_row(lp["self_attn"]["in_proj_bias"])),
        "sa_out_w": stack(lambda lp: wt(lp["self_attn"]["out_proj_weight"])),
        "sa_out_b": stack(lambda lp: bias_row(lp["self_attn"]["out_proj_bias"])),
        "ca_q_w": stack(lambda lp: wt(lp["cross_attn"]["in_proj_weight"][:DIM])),
        "ca_q_b": stack(lambda lp: bias_row(lp["cross_attn"]["in_proj_bias"][:DIM])),
        "ca_kv_w": stack(lambda lp: wt(lp["cross_attn"]["in_proj_weight"][DIM:])),
        "ca_kv_b": stack(lambda lp: bias_row(lp["cross_attn"]["in_proj_bias"][DIM:])),
        "ca_out_w": stack(lambda lp: wt(lp["cross_attn"]["out_proj_weight"])),
        "ca_out_b": stack(lambda lp: bias_row(lp["cross_attn"]["out_proj_bias"])),
        "ff1_w": stack(lambda lp: wt(lp["linear1_w"])),
        "ff1_b": stack(lambda lp: bias_row(lp["linear1_b"])),
        "ff2_w": stack(lambda lp: wt(lp["linear2_w"])),
        "ff2_b": stack(lambda lp: bias_row(lp["linear2_b"])),
        "n1_w": stack(lambda lp: bias_row(lp["norm1_w"])),
        "n1_b": stack(lambda lp: bias_row(lp["norm1_b"])),
        "n2_w": stack(lambda lp: bias_row(lp["norm2_w"])),
        "n2_b": stack(lambda lp: bias_row(lp["norm2_b"])),
        "n3_w": stack(lambda lp: bias_row(lp["norm3_w"])),
        "n3_b": stack(lambda lp: bias_row(lp["norm3_b"])),
    })
    return p


# ----------------------------- main ------------------------------------------
if __name__ == "__main__":
    key = jax.random.PRNGKey(0)
    k_param, k_x, k_y = jax.random.split(key, 3)

    raw_params = init_params(k_param)
    prepared = prepare_params(raw_params)        # one-time transpose/pad/stack/bf16

    x = jax.random.normal(k_x, (B, 1, IMG_H, IMG_W), jnp.float32)    # NCHW image
    y = jax.random.randint(k_y, (B, SY), 0, NUM_CLASSES, jnp.int32)  # token ids

    fwd = jax.jit(forward)
    out = fwd(prepared, x, y)
    out = jax.block_until_ready(out)

    assert out.shape == (B, NUM_CLASSES, SY), out.shape
    assert bool(jnp.all(jnp.isfinite(out)))
    print("KERNEL_OK")
</pallas_src>

<mosaic_0001>
module attributes {stable_mosaic.version = 11 : i64} {
  func.func @_fused_forward_kernel(%arg0: memref<16x128xf32, #tpu.memory_space<vmem>>, %arg1: memref<16x128xf32, #tpu.memory_space<vmem>>, %arg2: memref<16x128xf32, #tpu.memory_space<vmem>>, %arg3: memref<128x128xbf16, #tpu.memory_space<vmem>>, %arg4: memref<1x128xf32, #tpu.memory_space<vmem>>, %arg5: memref<128x128xbf16, #tpu.memory_space<vmem>>, %arg6: memref<1x128xf32, #tpu.memory_space<vmem>>, %arg7: memref<2x128x384xbf16, #tpu.memory_space<vmem>>, %arg8: memref<2x1x384xf32, #tpu.memory_space<vmem>>, %arg9: memref<2x128x128xbf16, #tpu.memory_space<vmem>>, %arg10: memref<2x1x128xf32, #tpu.memory_space<vmem>>, %arg11: memref<2x128x128xbf16, #tpu.memory_space<vmem>>, %arg12: memref<2x1x128xf32, #tpu.memory_space<vmem>>, %arg13: memref<2x128x256xbf16, #tpu.memory_space<vmem>>, %arg14: memref<2x1x256xf32, #tpu.memory_space<vmem>>, %arg15: memref<2x128x128xbf16, #tpu.memory_space<vmem>>, %arg16: memref<2x1x128xf32, #tpu.memory_space<vmem>>, %arg17: memref<2x128x128xbf16, #tpu.memory_space<vmem>>, %arg18: memref<2x1x128xf32, #tpu.memory_space<vmem>>, %arg19: memref<2x128x128xbf16, #tpu.memory_space<vmem>>, %arg20: memref<2x1x128xf32, #tpu.memory_space<vmem>>, %arg21: memref<2x1x128xf32, #tpu.memory_space<vmem>>, %arg22: memref<2x1x128xf32, #tpu.memory_space<vmem>>, %arg23: memref<2x1x128xf32, #tpu.memory_space<vmem>>, %arg24: memref<2x1x128xf32, #tpu.memory_space<vmem>>, %arg25: memref<2x1x128xf32, #tpu.memory_space<vmem>>, %arg26: memref<2x1x128xf32, #tpu.memory_space<vmem>>, %arg27: memref<128x128xbf16, #tpu.memory_space<vmem>>, %arg28: memref<1x128xf32, #tpu.memory_space<vmem>>, %arg29: memref<16x128xf32, #tpu.memory_space<vmem>>) attributes {dimension_semantics = [], scalar_prefetch = 0 : i64, scratch_operands = 0 : i64, tpu.core_type = #tpu.core_type<tc>} {
    %c0 = arith.constant 0 : index
    %c0_0 = arith.constant 0 : index
    %0 = vector.load %arg0[%c0, %c0_0] : memref<16x128xf32, #tpu.memory_space<vmem>>, vector<16x128xf32>
    %c0_1 = arith.constant 0 : index
    %c0_2 = arith.constant 0 : index
    %1 = vector.load %arg3[%c0_1, %c0_2] : memref<128x128xbf16, #tpu.memory_space<vmem>>, vector<128x128xbf16>
    %2 = arith.truncf %0 : vector<16x128xf32> to vector<16x128xbf16>
    %cst = arith.constant dense<0.000000e+00> : vector<16x128xf32>
    %3 = tpu.matmul %2, %1, %cst {dimension_numbers = #tpu.dot_dimension_numbers<[1], [0], [0], [1], [0, 0, 1, 1], [], []>} : vector<16x128xbf16>, vector<128x128xbf16>, vector<16x128xf32> -> vector<16x128xf32>
    %c0_3 = arith.constant 0 : index
    %c0_4 = arith.constant 0 : index
    %4 = vector.load %arg4[%c0_3, %c0_4] : memref<1x128xf32, #tpu.memory_space<vmem>>, vector<1x128xf32>
    %5 = vector.broadcast %4 : vector<1x128xf32> to vector<16x128xf32>
    %6 = arith.addf %3, %5 : vector<16x128xf32>
    %cst_5 = arith.constant 0.000000e+00 : f32
    %7 = vector.broadcast %cst_5 : f32 to vector<16x128xf32>
    %8 = arith.maximumf %6, %7 : vector<16x128xf32>
    %c0_6 = arith.constant 0 : index
    %c0_7 = arith.constant 0 : index
    %9 = vector.load %arg5[%c0_6, %c0_7] : memref<128x128xbf16, #tpu.memory_space<vmem>>, vector<128x128xbf16>
    %10 = arith.truncf %8 : vector<16x128xf32> to vector<16x128xbf16>
    %cst_8 = arith.constant dense<0.000000e+00> : vector<16x128xf32>
    %11 = tpu.matmul %10, %9, %cst_8 {dimension_numbers = #tpu.dot_dimension_numbers<[1], [0], [0], [1], [0, 0, 1, 1], [], []>} : vector<16x128xbf16>, vector<128x128xbf16>, vector<16x128xf32> -> vector<16x128xf32>
    %c0_9 = arith.constant 0 : index
    %c0_10 = arith.constant 0 : index
    %12 = vector.load %arg6[%c0_9, %c0_10] : memref<1x128xf32, #tpu.memory_space<vmem>>, vector<1x128xf32>
    %13 = vector.broadcast %12 : vector<1x128xf32> to vector<16x128xf32>
    %14 = arith.addf %11, %13 : vector<16x128xf32>
    %cst_11 = arith.constant 11.3137083 : f32
    %15 = vector.broadcast %cst_11 : f32 to vector<16x128xf32>
    %16 = arith.mulf %14, %15 : vector<16x128xf32>
    %c0_12 = arith.constant 0 : index
    %c0_13 = arith.constant 0 : index
    %17 = vector.load %arg2[%c0_12, %c0_13] : memref<16x128xf32, #tpu.memory_space<vmem>>, vector<16x128xf32>
    %18 = arith.addf %16, %17 : vector<16x128xf32>
    %c0_14 = arith.constant 0 : index
    %c0_15 = arith.constant 0 : index
    %19 = vector.load %arg1[%c0_14, %c0_15] : memref<16x128xf32, #tpu.memory_space<vmem>>, vector<16x128xf32>
    %20 = tpu.iota {dimensions = array<i32: 0>} : vector<8x8xi32>
    %21 = tpu.iota {dimensions = array<i32: 1>} : vector<8x8xi32>
    %22 = arith.cmpi sle, %21, %20 : vector<8x8xi32>
    %cst_16 = arith.constant 0.000000e+00 : f32
    %cst_17 = arith.constant -1.000000e+30 : f32
    %23 = vector.broadcast %cst_16 : f32 to vector<8x8xf32>
    %24 = vector.broadcast %cst_17 : f32 to vector<8x8xf32>
    %25 = arith.select %22, %23, %24 : vector<8x8xi1>, vector<8x8xf32>
    %c0_18 = arith.constant 0 : index
    %c0_19 = arith.constant 0 : index
    %c0_20 = arith.constant 0 : index
    %26 = vector.load %arg7[%c0_18, %c0_19, %c0_20] : memref<2x128x384xbf16, #tpu.memory_space<vmem>>, vector<1x128x384xbf16>
    %27 = vector.shape_cast %26 : vector<1x128x384xbf16> to vector<128x384xbf16>
    %28 = arith.truncf %19 : vector<16x128xf32> to vector<16x128xbf16>
    %cst_21 = arith.constant dense<0.000000e+00> : vector<16x384xf32>
    %29 = tpu.matmul %28, %27, %cst_21 {dimension_numbers = #tpu.dot_dimension_numbers<[1], [0], [0], [1], [0, 0, 1, 1], [], []>} : vector<16x128xbf16>, vector<128x384xbf16>, vector<16x384xf32> -> vector<16x384xf32>
    %c0_22 = arith.constant 0 : index
    %c0_23 = arith.constant 0 : index
    %c0_24 = arith.constant 0 : index
    %30 = vector.load %arg8[%c0_22, %c0_23, %c0_24] : memref<2x1x384xf32, #tpu.memory_space<vmem>>, vector<1x1x384xf32>
    %31 = vector.shape_cast %30 : vector<1x1x384xf32> to vector<1x384xf32>
    %32 = vector.broadcast %31 : vector<1x384xf32> to vector<16x384xf32>
    %33 = arith.addf %29, %32 : vector<16x384xf32>
    %34 = vector.extract_strided_slice %33 {offsets = [0, 0], sizes = [16, 128], strides = [1, 1]} : vector<16x384xf32> to vector<16x128xf32>
    %35 = vector.extract_strided_slice %33 {offsets = [0, 128], sizes = [16, 128], strides = [1, 1]} : vector<16x384xf32> to vector<16x128xf32>
    %36 = vector.extract_strided_slice %33 {offsets = [0, 256], sizes = [16, 128], strides = [1, 1]} : vector<16x384xf32> to vector<16x128xf32>
    %37 = vector.extract_strided_slice %34 {offsets = [0, 0], sizes = [8, 128], strides = [1, 1]} : vector<16x128xf32> to vector<8x128xf32>
    %cst_25 = arith.constant 0.176776692 : f32
    %38 = vector.broadcast %cst_25 : f32 to vector<8x128xf32>
    %39 = arith.mulf %37, %38 : vector<8x128xf32>
    %40 = vector.extract_strided_slice %35 {offsets = [0, 0], sizes = [8, 128], strides = [1, 1]} : vector<16x128xf32> to vector<8x128xf32>
    %41 = vector.extract_strided_slice %36 {offsets = [0, 0], sizes = [8, 128], strides = [1, 1]} : vector<16x128xf32> to vector<8x128xf32>
    %42 = vector.extract_strided_slice %39 {offsets = [0, 0], sizes = [8, 32], strides = [1, 1]} : vector<8x128xf32> to vector<8x32xf32>
    %43 = arith.truncf %42 : vector<8x32xf32> to vector<8x32xbf16>
    %44 = vector.extract_strided_slice %40 {offsets = [0, 0], sizes = [8, 32], strides = [1, 1]} : vector<8x128xf32> to vector<8x32xf32>
    %45 = arith.truncf %44 : vector<8x32xf32> to vector<8x32xbf16>
    %46 = vector.extract_strided_slice %41 {offsets = [0, 0], sizes = [8, 32], strides = [1, 1]} : vector<8x128xf32> to vector<8x32xf32>
    %47 = arith.truncf %46 : vector<8x32xf32> to vector<8x32xbf16>
    %cst_26 = arith.constant dense<0.000000e+00> : vector<8x8xf32>
    %48 = tpu.matmul %43, %45, %cst_26 {dimension_numbers = #tpu.dot_dimension_numbers<[1], [1], [0], [0], [0, 0, 1, 0], [], []>} : vector<8x32xbf16>, vector<8x32xbf16>, vector<8x8xf32> -> vector<8x8xf32>
    %49 = arith.addf %48, %25 : vector<8x8xf32>
    %cst_27 = arith.constant dense<0xFF800000> : vector<8xf32>
    %50 = vector.multi_reduction <maximumf>, %49, %cst_27 [1] : vector<8x8xf32> to vector<8xf32>
    %51 = vector.shape_cast %50 : vector<8xf32> to vector<8x1xf32>
    %52 = vector.broadcast %51 : vector<8x1xf32> to vector<8x8xf32>
    %53 = arith.subf %49, %52 : vector<8x8xf32>
    %54 = math.exp %53 : vector<8x8xf32>
    %cst_28 = arith.constant dense<0.000000e+00> : vector<8xf32>
    %55 = vector.multi_reduction <add>, %54, %cst_28 [1] : vector<8x8xf32> to vector<8xf32>
    %56 = vector.shape_cast %55 : vector<8xf32> to vector<8x1xf32>
    %57 = tpu.reciprocal %56 {approx = true} : vector<8x1xf32> -> vector<8x1xf32>
    %58 = vector.broadcast %57 : vector<8x1xf32> to vector<8x8xf32>
    %59 = arith.mulf %54, %58 : vector<8x8xf32>
    %60 = arith.truncf %59 : vector<8x8xf32> to vector<8x8xbf16>
    %cst_29 = arith.constant dense<0.000000e+00> : vector<8x32xf32>
    %61 = tpu.matmul %60, %47, %cst_29 {dimension_numbers = #tpu.dot_dimension_numbers<[1], [0], [0], [1], [0, 0, 1, 1], [], []>} : vector<8x8xbf16>, vector<8x32xbf16>, vector<8x32xf32> -> vector<8x32xf32>
    %62 = vector.extract_strided_slice %39 {offsets = [0, 32], sizes = [8, 32], strides = [1, 1]} : vector<8x128xf32> to vector<8x32xf32>
    %63 = arith.truncf %62 : vector<8x32xf32> to vector<8x32xbf16>
    %64 = vector.extract_strided_slice %40 {offsets = [0, 32], sizes = [8, 32], strides = [1, 1]} : vector<8x128xf32> to vector<8x32xf32>
    %65 = arith.truncf %64 : vector<8x32xf32> to vector<8x32xbf16>
    %66 = vector.extract_strided_slice %41 {offsets = [0, 32], sizes = [8, 32], strides = [1, 1]} : vector<8x128xf32> to vector<8x32xf32>
    %67 = arith.truncf %66 : vector<8x32xf32> to vector<8x32xbf16>
    %cst_30 = arith.constant dense<0.000000e+00> : vector<8x8xf32>
    %68 = tpu.matmul %63, %65, %cst_30 {dimension_numbers = #tpu.dot_dimension_numbers<[1], [1], [0], [0], [0, 0, 1, 0], [], []>} : vector<8x32xbf16>, vector<8x32xbf16>, vector<8x8xf32> -> vector<8x8xf32>
    %69 = arith.addf %68, %25 : vector<8x8xf32>
    %cst_31 = arith.constant dense<0xFF800000> : vector<8xf32>
    %70 = vector.multi_reduction <maximumf>, %69, %cst_31 [1] : vector<8x8xf32> to vector<8xf32>
    %71 = vector.shape_cast %70 : vector<8xf32> to vector<8x1xf32>
    %72 = vector.broadcast %71 : vector<8x1xf32> to vector<8x8xf32>
    %73 = arith.subf %69, %72 : vector<8x8xf32>
    %74 = math.exp %73 : vector<8x8xf32>
    %cst_32 = arith.constant dense<0.000000e+00> : vector<8xf32>
    %75 = vector.multi_reduction <add>, %74, %cst_32 [1] : vector<8x8xf32> to vector<8xf32>
    %76 = vector.shape_cast %75 : vector<8xf32> to vector<8x1xf32>
    %77 = tpu.reciprocal %76 {approx = true} : vector<8x1xf32> -> vector<8x1xf32>
    %78 = vector.broadcast %77 : vector<8x1xf32> to vector<8x8xf32>
    %79 = arith.mulf %74, %78 : vector<8x8xf32>
    %80 = arith.truncf %79 : vector<8x8xf32> to vector<8x8xbf16>
    %cst_33 = arith.constant dense<0.000000e+00> : vector<8x32xf32>
    %81 = tpu.matmul %80, %67, %cst_33 {dimension_numbers = #tpu.dot_dimension_numbers<[1], [0], [0], [1], [0, 0, 1, 1], [], []>} : vector<8x8xbf16>, vector<8x32xbf16>, vector<8x32xf32> -> vector<8x32xf32>
    %82 = vector.extract_strided_slice %39 {offsets = [0, 64], sizes = [8, 32], strides = [1, 1]} : vector<8x128xf32> to vector<8x32xf32>
    %83 = arith.truncf %82 : vector<8x32xf32> to vector<8x32xbf16>
    %84 = vector.extract_strided_slice %40 {offsets = [0, 64], sizes = [8, 32], strides = [1, 1]} : vector<8x128xf32> to vector<8x32xf32>
    %85 = arith.truncf %84 : vector<8x32xf32> to vector<8x32xbf16>
    %86 = vector.extract_strided_slice %41 {offsets = [0, 64], sizes = [8, 32], strides = [1, 1]} : vector<8x128xf32> to vector<8x32xf32>
    %87 = arith.truncf %86 : vector<8x32xf32> to vector<8x32xbf16>
    %cst_34 = arith.constant dense<0.000000e+00> : vector<8x8xf32>
    %88 = tpu.matmul %83, %85, %cst_34 {dimension_numbers = #tpu.dot_dimension_numbers<[1], [1], [0], [0], [0, 0, 1, 0], [], []>} : vector<8x32xbf16>, vector<8x32xbf16>, vector<8x8xf32> -> vector<8x8xf32>
    %89 = arith.addf %88, %25 : vector<8x8xf32>
    %cst_35 = arith.constant dense<0xFF800000> : vector<8xf32>
    %90 = vector.multi_reduction <maximumf>, %89, %cst_35 [1] : vector<8x8xf32> to vector<8xf32>
    %91 = vector.shape_cast %90 : vector<8xf32> to vector<8x1xf32>
    %92 = vector.broadcast %91 : vector<8x1xf32> to vector<8x8xf32>
    %93 = arith.subf %89, %92 : vector<8x8xf32>
    %94 = math.exp %93 : vector<8x8xf32>
    %cst_36 = arith.constant dense<0.000000e+00> : vector<8xf32>
    %95 = vector.multi_reduction <add>, %94, %cst_36 [1] : vector<8x8xf32> to vector<8xf32>
    %96 = vector.shape_cast %95 : vector<8xf32> to vector<8x1xf32>
    %97 = tpu.reciprocal %96 {approx = true} : vector<8x1xf32> -> vector<8x1xf32>
    %98 = vector.broadcast %97 : vector<8x1xf32> to vector<8x8xf32>
    %99 = arith.mulf %94, %98 : vector<8x8xf32>
    %100 = arith.truncf %99 : vector<8x8xf32> to vector<8x8xbf16>
    %cst_37 = arith.constant dense<0.000000e+00> : vector<8x32xf32>
    %101 = tpu.matmul %100, %87, %cst_37 {dimension_numbers = #tpu.dot_dimension_numbers<[1], [0], [0], [1], [0, 0, 1, 1], [], []>} : vector<8x8xbf16>, vector<8x32xbf16>, vector<8x32xf32> -> vector<8x32xf32>
    %102 = vector.extract_strided_slice %39 {offsets = [0, 96], sizes = [8, 32], strides = [1, 1]} : vector<8x128xf32> to vector<8x32xf32>
    %103 = arith.truncf %102 : vector<8x32xf32> to vector<8x32xbf16>
    %104 = vector.extract_strided_slice %40 {offsets = [0, 96], sizes = [8, 32], strides = [1, 1]} : vector<8x128xf32> to vector<8x32xf32>
    %105 = arith.truncf %104 : vector<8x32xf32> to vector<8x32xbf16>
    %106 = vector.extract_strided_slice %41 {offsets = [0, 96], sizes = [8, 32], strides = [1, 1]} : vector<8x128xf32> to vector<8x32xf32>
    %107 = arith.truncf %106 : vector<8x32xf32> to vector<8x32xbf16>
    %cst_38 = arith.constant dense<0.000000e+00> : vector<8x8xf32>
    %108 = tpu.matmul %103, %105, %cst_38 {dimension_numbers = #tpu.dot_dimension_numbers<[1], [1], [0], [0], [0, 0, 1, 0], [], []>} : vector<8x32xbf16>, vector<8x32xbf16>, vector<8x8xf32> -> vector<8x8xf32>
    %109 = arith.addf %108, %25 : vector<8x8xf32>
    %cst_39 = arith.constant dense<0xFF800000> : vector<8xf32>
    %110 = vector.multi_reduction <maximumf>, %109, %cst_39 [1] : vector<8x8xf32> to vector<8xf32>
    %111 = vector.shape_cast %110 : vector<8xf32> to vector<8x1xf32>
    %112 = vector.broadcast %111 : vector<8x1xf32> to vector<8x8xf32>
    %113 = arith.subf %109, %112 : vector<8x8xf32>
    %114 = math.exp %113 : vector<8x8xf32>
    %cst_40 = arith.constant dense<0.000000e+00> : vector<8xf32>
    %115 = vector.multi_reduction <add>, %114, %cst_40 [1] : vector<8x8xf32> to vector<8xf32>
    %116 = vector.shape_cast %115 : vector<8xf32> to vector<8x1xf32>
    %117 = tpu.reciprocal %116 {approx = true} : vector<8x1xf32> -> vector<8x1xf32>
    %118 = vector.broadcast %117 : vector<8x1xf32> to vector<8x8xf32>
    %119 = arith.mulf %114, %118 : vector<8x8xf32>
    %120 = arith.truncf %119 : vector<8x8xf32> to vector<8x8xbf16>
    %cst_41 = arith.constant dense<0.000000e+00> : vector<8x32xf32>
    %121 = tpu.matmul %120, %107, %cst_41 {dimension_numbers = #tpu.dot_dimension_numbers<[1], [0], [0], [1], [0, 0, 1, 1], [], []>} : vector<8x8xbf16>, vector<8x32xbf16>, vector<8x32xf32> -> vector<8x32xf32>
    %122 = tpu.concatenate %61, %81, %101, %121 in 1 : vector<8x32xf32>, vector<8x32xf32>, vector<8x32xf32>, vector<8x32xf32> -> vector<8x128xf32>
    %123 = vector.extract_strided_slice %34 {offsets = [8, 0], sizes = [8, 128], strides = [1, 1]} : vector<16x128xf32> to vector<8x128xf32>
    %cst_42 = arith.constant 0.176776692 : f32
    %124 = vector.broadcast %cst_42 : f32 to vector<8x128xf32>
    %125 = arith.mulf %123, %124 : vector<8x128xf32>
    %126 = vector.extract_strided_slice %35 {offsets = [8, 0], sizes = [8, 128], strides = [1, 1]} : vector<16x128xf32> to vector<8x128xf32>
    %127 = vector.extract_strided_slice %36 {offsets = [8, 0], sizes = [8, 128], strides = [1, 1]} : vector<16x128xf32> to vector<8x128xf32>
    %128 = vector.extract_strided_slice %125 {offsets = [0, 0], sizes = [8, 32], strides = [1, 1]} : vector<8x128xf32> to vector<8x32xf32>
    %129 = arith.truncf %128 : vector<8x32xf32> to vector<8x32xbf16>
    %130 = vector.extract_strided_slice %126 {offsets = [0, 0], sizes = [8, 32], strides = [1, 1]} : vector<8x128xf32> to vector<8x32xf32>
    %131 = arith.truncf %130 : vector<8x32xf32> to vector<8x32xbf16>
    %132 = vector.extract_strided_slice %127 {offsets = [0, 0], sizes = [8, 32], strides = [1, 1]} : vector<8x128xf32> to vector<8x32xf32>
    %133 = arith.truncf %132 : vector<8x32xf32> to vector<8x32xbf16>
    %cst_43 = arith.constant dense<0.000000e+00> : vector<8x8xf32>
    %134 = tpu.matmul %129, %131, %cst_43 {dimension_numbers = #tpu.dot_dimension_numbers<[1], [1], [0], [0], [0, 0, 1, 0], [], []>} : vector<8x32xbf16>, vector<8x32xbf16>, vector<8x8xf32> -> vector<8x8xf32>
    %135 = arith.addf %134, %25 : vector<8x8xf32>
    %cst_44 = arith.constant dense<0xFF800000> : vector<8xf32>
    %136 = vector.multi_reduction <maximumf>, %135, %cst_44 [1] : vector<8x8xf32> to vector<8xf32>
    %137 = vector.shape_cast %136 : vector<8xf32> to vector<8x1xf32>
    %138 = vector.broadcast %137 : vector<8x1xf32> to vector<8x8xf32>
    %139 = arith.subf %135, %138 : vector<8x8xf32>
    %140 = math.exp %139 : vector<8x8xf32>
    %cst_45 = arith.constant dense<0.000000e+00> : vector<8xf32>
    %141 = vector.multi_reduction <add>, %140, %cst_45 [1] : vector<8x8xf32> to vector<8xf32>
    %142 = vector.shape_cast %141 : vector<8xf32> to vector<8x1xf32>
    %143 = tpu.reciprocal %142 {approx = true} : vector<8x1xf32> -> vector<8x1xf32>
    %144 = vector.broadcast %143 : vector<8x1xf32> to vector<8x8xf32>
    %145 = arith.mulf %140, %144 : vector<8x8xf32>
    %146 = arith.truncf %145 : vector<8x8xf32> to vector<8x8xbf16>
    %cst_46 = arith.constant dense<0.000000e+00> : vector<8x32xf32>
    %147 = tpu.matmul %146, %133, %cst_46 {dimension_numbers = #tpu.dot_dimension_numbers<[1], [0], [0], [1], [0, 0, 1, 1], [], []>} : vector<8x8xbf16>, vector<8x32xbf16>, vector<8x32xf32> -> vector<8x32xf32>
    %148 = vector.extract_strided_slice %125 {offsets = [0, 32], sizes = [8, 32], strides = [1, 1]} : vector<8x128xf32> to vector<8x32xf32>
    %149 = arith.truncf %148 : vector<8x32xf32> to vector<8x32xbf16>
    %150 = vector.extract_strided_slice %126 {offsets = [0, 32], sizes = [8, 32], strides = [1, 1]} : vector<8x128xf32> to vector<8x32xf32>
    %151 = arith.truncf %150 : vector<8x32xf32> to vector<8x32xbf16>
    %152 = vector.extract_strided_slice %127 {offsets = [0, 32], sizes = [8, 32], strides = [1, 1]} : vector<8x128xf32> to vector<8x32xf32>
    %153 = arith.truncf %152 : vector<8x32xf32> to vector<8x32xbf16>
    %cst_47 = arith.constant dense<0.000000e+00> : vector<8x8xf32>
    %154 = tpu.matmul %149, %151, %cst_47 {dimension_numbers = #tpu.dot_dimension_numbers<[1], [1], [0], [0], [0, 0, 1, 0], [], []>} : vector<8x32xbf16>, vector<8x32xbf16>, vector<8x8xf32> -> vector<8x8xf32>
    %155 = arith.addf %154, %25 : vector<8x8xf32>
    %cst_48 = arith.constant dense<0xFF800000> : vector<8xf32>
    %156 = vector.multi_reduction <maximumf>, %155, %cst_48 [1] : vector<8x8xf32> to vector<8xf32>
    %157 = vector.shape_cast %156 : vector<8xf32> to vector<8x1xf32>
    %158 = vector.broadcast %157 : vector<8x1xf32> to vector<8x8xf32>
    %159 = arith.subf %155, %158 : vector<8x8xf32>
    %160 = math.exp %159 : vector<8x8xf32>
    %cst_49 = arith.constant dense<0.000000e+00> : vector<8xf32>
    %161 = vector.multi_reduction <add>, %160, %cst_49 [1] : vector<8x8xf32> to vector<8xf32>
    %162 = vector.shape_cast %161 : vector<8xf32> to vector<8x1xf32>
    %163 = tpu.reciprocal %162 {approx = true} : vector<8x1xf32> -> vector<8x1xf32>
    %164 = vector.broadcast %163 : vector<8x1xf32> to vector<8x8xf32>
    %165 = arith.mulf %160, %164 : vector<8x8xf32>
    %166 = arith.truncf %165 : vector<8x8xf32> to vector<8x8xbf16>
    %cst_50 = arith.constant dense<0.000000e+00> : vector<8x32xf32>
    %167 = tpu.matmul %166, %153, %cst_50 {dimension_numbers = #tpu.dot_dimension_numbers<[1], [0], [0], [1], [0, 0, 1, 1], [], []>} : vector<8x8xbf16>, vector<8x32xbf16>, vector<8x32xf32> -> vector<8x32xf32>
    %168 = vector.extract_strided_slice %125 {offsets = [0, 64], sizes = [8, 32], strides = [1, 1]} : vector<8x128xf32> to vector<8x32xf32>
    %169 = arith.truncf %168 : vector<8x32xf32> to vector<8x32xbf16>
    %170 = vector.extract_strided_slice %126 {offsets = [0, 64], sizes = [8, 32], strides = [1, 1]} : vector<8x128xf32> to vector<8x32xf32>
    %171 = arith.truncf %170 : vector<8x32xf32> to vector<8x32xbf16>
    %172 = vector.extract_strided_slice %127 {offsets = [0, 64], sizes = [8, 32], strides = [1, 1]} : vector<8x128xf32> to vector<8x32xf32>
    %173 = arith.truncf %172 : vector<8x32xf32> to vector<8x32xbf16>
    %cst_51 = arith.constant dense<0.000000e+00> : vector<8x8xf32>
    %174 = tpu.matmul %169, %171, %cst_51 {dimension_numbers = #tpu.dot_dimension_numbers<[1], [1], [0], [0], [0, 0, 1, 0], [], []>} : vector<8x32xbf16>, vector<8x32xbf16>, vector<8x8xf32> -> vector<8x8xf32>
    %175 = arith.addf %174, %25 : vector<8x8xf32>
    %cst_52 = arith.constant dense<0xFF800000> : vector<8xf32>
    %176 = vector.multi_reduction <maximumf>, %175, %cst_52 [1] : vector<8x8xf32> to vector<8xf32>
    %177 = vector.shape_cast %176 : vector<8xf32> to vector<8x1xf32>
    %178 = vector.broadcast %177 : vector<8x1xf32> to vector<8x8xf32>
    %179 = arith.subf %175, %178 : vector<8x8xf32>
    %180 = math.exp %179 : vector<8x8xf32>
    %cst_53 = arith.constant dense<0.000000e+00> : vector<8xf32>
    %181 = vector.multi_reduction <add>, %180, %cst_53 [1] : vector<8x8xf32> to vector<8xf32>
    %182 = vector.shape_cast %181 : vector<8xf32> to vector<8x1xf32>
    %183 = tpu.reciprocal %182 {approx = true} : vector<8x1xf32> -> vector<8x1xf32>
    %184 = vector.broadcast %183 : vector<8x1xf32> to vector<8x8xf32>
    %185 = arith.mulf %180, %184 : vector<8x8xf32>
    %186 = arith.truncf %185 : vector<8x8xf32> to vector<8x8xbf16>
    %cst_54 = arith.constant dense<0.000000e+00> : vector<8x32xf32>
    %187 = tpu.matmul %186, %173, %cst_54 {dimension_numbers = #tpu.dot_dimension_numbers<[1], [0], [0], [1], [0, 0, 1, 1], [], []>} : vector<8x8xbf16>, vector<8x32xbf16>, vector<8x32xf32> -> vector<8x32xf32>
    %188 = vector.extract_strided_slice %125 {offsets = [0, 96], sizes = [8, 32], strides = [1, 1]} : vector<8x128xf32> to vector<8x32xf32>
    %189 = arith.truncf %188 : vector<8x32xf32> to vector<8x32xbf16>
    %190 = vector.extract_strided_slice %126 {offsets = [0, 96], sizes = [8, 32], strides = [1, 1]} : vector<8x128xf32> to vector<8x32xf32>
    %191 = arith.truncf %190 : vector<8x32xf32> to vector<8x32xbf16>
    %192 = vector.extract_strided_slice %127 {offsets = [0, 96], sizes = [8, 32], strides = [1, 1]} : vector<8x128xf32> to vector<8x32xf32>
    %193 = arith.truncf %192 : vector<8x32xf32> to vector<8x32xbf16>
    %cst_55 = arith.constant dense<0.000000e+00> : vector<8x8xf32>
    %194 = tpu.matmul %189, %191, %cst_55 {dimension_numbers = #tpu.dot_dimension_numbers<[1], [1], [0], [0], [0, 0, 1, 0], [], []>} : vector<8x32xbf16>, vector<8x32xbf16>, vector<8x8xf32> -> vector<8x8xf32>
    %195 = arith.addf %194, %25 : vector<8x8xf32>
    %cst_56 = arith.constant dense<0xFF800000> : vector<8xf32>
    %196 = vector.multi_reduction <maximumf>, %195, %cst_56 [1] : vector<8x8xf32> to vector<8xf32>
    %197 = vector.shape_cast %196 : vector<8xf32> to vector<8x1xf32>
    %198 = vector.broadcast %197 : vector<8x1xf32> to vector<8x8xf32>
    %199 = arith.subf %195, %198 : vector<8x8xf32>
    %200 = math.exp %199 : vector<8x8xf32>
    %cst_57 = arith.constant dense<0.000000e+00> : vector<8xf32>
    %201 = vector.multi_reduction <add>, %200, %cst_57 [1] : vector<8x8xf32> to vector<8xf32>
    %202 = vector.shape_cast %201 : vector<8xf32> to vector<8x1xf32>
    %203 = tpu.reciprocal %202 {approx = true} : vector<8x1xf32> -> vector<8x1xf32>
    %204 = vector.broadcast %203 : vector<8x1xf32> to vector<8x8xf32>
    %205 = arith.mulf %200, %204 : vector<8x8xf32>
    %206 = arith.truncf %205 : vector<8x8xf32> to vector<8x8xbf16>
    %cst_58 = arith.constant dense<0.000000e+00> : vector<8x32xf32>
    %207 = tpu.matmul %206, %193, %cst_58 {dimension_numbers = #tpu.dot_dimension_numbers<[1], [0], [0], [1], [0, 0, 1, 1], [], []>} : vector<8x8xbf16>, vector<8x32xbf16>, vector<8x32xf32> -> vector<8x32xf32>
    %208 = tpu.concatenate %147, %167, %187, %207 in 1 : vector<8x32xf32>, vector<8x32xf32>, vector<8x32xf32>, vector<8x32xf32> -> vector<8x128xf32>
    %209 = tpu.concatenate %122, %208 in 0 : vector<8x128xf32>, vector<8x128xf32> -> vector<16x128xf32>
    %c0_59 = arith.constant 0 : index
    %c0_60 = arith.constant 0 : index
    %c0_61 = arith.constant 0 : index
    %210 = vector.load %arg9[%c0_59, %c0_60, %c0_61] : memref<2x128x128xbf16, #tpu.memory_space<vmem>>, vector<1x128x128xbf16>
    %211 = vector.shape_cast %210 : vector<1x128x128xbf16> to vector<128x128xbf16>
    %212 = arith.truncf %209 : vector<16x128xf32> to vector<16x128xbf16>
    %cst_62 = arith.constant dense<0.000000e+00> : vector<16x128xf32>
    %213 = tpu.matmul %212, %211, %cst_62 {dimension_numbers = #tpu.dot_dimension_numbers<[1], [0], [0], [1], [0, 0, 1, 1], [], []>} : vector<16x128xbf16>, vector<128x128xbf16>, vector<16x128xf32> -> vector<16x128xf32>
    %c0_63 = arith.constant 0 : index
    %c0_64 = arith.constant 0 : index
    %c0_65 = arith.constant 0 : index
    %214 = vector.load %arg10[%c0_63, %c0_64, %c0_65] : memref<2x1x128xf32, #tpu.memory_space<vmem>>, vector<1x1x128xf32>
    %215 = vector.shape_cast %214 : vector<1x1x128xf32> to vector<1x128xf32>
    %216 = vector.broadcast %215 : vector<1x128xf32> to vector<16x128xf32>
    %217 = arith.addf %213, %216 : vector<16x128xf32>
    %218 = arith.addf %19, %217 : vector<16x128xf32>
    %c0_66 = arith.constant 0 : index
    %c0_67 = arith.constant 0 : index
    %c0_68 = arith.constant 0 : index
    %219 = vector.load %arg21[%c0_66, %c0_67, %c0_68] : memref<2x1x128xf32, #tpu.memory_space<vmem>>, vector<1x1x128xf32>
    %220 = vector.shape_cast %219 : vector<1x1x128xf32> to vector<1x128xf32>
    %c0_69 = arith.constant 0 : index
    %c0_70 = arith.constant 0 : index
    %c0_71 = arith.constant 0 : index
    %221 = vector.load %arg22[%c0_69, %c0_70, %c0_71] : memref<2x1x128xf32, #tpu.memory_space<vmem>>, vector<1x1x128xf32>
    %222 = vector.shape_cast %221 : vector<1x1x128xf32> to vector<1x128xf32>
    %cst_72 = arith.constant dense<0.000000e+00> : vector<16xf32>
    %223 = vector.multi_reduction <add>, %218, %cst_72 [1] : vector<16x128xf32> to vector<16xf32>
    %224 = vector.shape_cast %223 : vector<16xf32> to vector<16x1xf32>
    %cst_73 = arith.constant 1.280000e+02 : f32
    %225 = vector.broadcast %cst_73 : f32 to vector<16x1xf32>
    %226 = arith.divf %224, %225 : vector<16x1xf32>
    %227 = vector.broadcast %226 : vector<16x1xf32> to vector<16x128xf32>
    %228 = arith.subf %218, %227 : vector<16x128xf32>
    %229 = arith.mulf %228, %228 : vector<16x128xf32>
    %cst_74 = arith.constant dense<0.000000e+00> : vector<16xf32>
    %230 = vector.multi_reduction <add>, %229, %cst_74 [1] : vector<16x128xf32> to vector<16xf32>
    %231 = vector.shape_cast %230 : vector<16xf32> to vector<16x1xf32>
    %cst_75 = arith.constant 1.280000e+02 : f32
    %232 = vector.broadcast %cst_75 : f32 to vector<16x1xf32>
    %233 = arith.divf %231, %232 : vector<16x1xf32>
    %cst_76 = arith.constant 9.99999974E-6 : f32
    %234 = vector.broadcast %cst_76 : f32 to vector<16x1xf32>
    %235 = arith.addf %233, %234 : vector<16x1xf32>
    %236 = math.rsqrt %235 : vector<16x1xf32>
    %237 = vector.broadcast %236 : vector<16x1xf32> to vector<16x128xf32>
    %238 = arith.mulf %228, %237 : vector<16x128xf32>
    %239 = vector.broadcast %220 : vector<1x128xf32> to vector<16x128xf32>
    %240 = arith.mulf %238, %239 : vector<16x128xf32>
    %241 = vector.broadcast %222 : vector<1x128xf32> to vector<16x128xf32>
    %242 = arith.addf %240, %241 : vector<16x128xf32>
    %c0_77 = arith.constant 0 : index
    %c0_78 = arith.constant 0 : index
    %c0_79 = arith.constant 0 : index
    %243 = vector.load %arg11[%c0_77, %c0_78, %c0_79] : memref<2x128x128xbf16, #tpu.memory_space<vmem>>, vector<1x128x128xbf16>
    %244 = vector.shape_cast %243 : vector<1x128x128xbf16> to vector<128x128xbf16>
    %245 = arith.truncf %242 : vector<16x128xf32> to vector<16x128xbf16>
    %cst_80 = arith.constant dense<0.000000e+00> : vector<16x128xf32>
    %246 = tpu.matmul %245, %244, %cst_80 {dimension_numbers = #tpu.dot_dimension_numbers<[1], [0], [0], [1], [0, 0, 1, 1], [], []>} : vector<16x128xbf16>, vector<128x128xbf16>, vector<16x128xf32> -> vector<16x128xf32>
    %c0_81 = arith.constant 0 : index
    %c0_82 = arith.constant 0 : index
    %c0_83 = arith.constant 0 : index
    %247 = vector.load %arg12[%c0_81, %c0_82, %c0_83] : memref<2x1x128xf32, #tpu.memory_space<vmem>>, vector<1x1x128xf32>
    %248 = vector.shape_cast %247 : vector<1x1x128xf32> to vector<1x128xf32>
    %249 = vector.broadcast %248 : vector<1x128xf32> to vector<16x128xf32>
    %250 = arith.addf %246, %249 : vector<16x128xf32>
    %c0_84 = arith.constant 0 : index
    %c0_85 = arith.constant 0 : index
    %c0_86 = arith.constant 0 : index
    %251 = vector.load %arg13[%c0_84, %c0_85, %c0_86] : memref<2x128x256xbf16, #tpu.memory_space<vmem>>, vector<1x128x256xbf16>
    %252 = vector.shape_cast %251 : vector<1x128x256xbf16> to vector<128x256xbf16>
    %253 = arith.truncf %18 : vector<16x128xf32> to vector<16x128xbf16>
    %cst_87 = arith.constant dense<0.000000e+00> : vector<16x256xf32>
    %254 = tpu.matmul %253, %252, %cst_87 {dimension_numbers = #tpu.dot_dimension_numbers<[1], [0], [0], [1], [0, 0, 1, 1], [], []>} : vector<16x128xbf16>, vector<128x256xbf16>, vector<16x256xf32> -> vector<16x256xf32>
    %c0_88 = arith.constant 0 : index
    %c0_89 = arith.constant 0 : index
    %c0_90 = arith.constant 0 : index
    %255 = vector.load %arg14[%c0_88, %c0_89, %c0_90] : memref<2x1x256xf32, #tpu.memory_space<vmem>>, vector<1x1x256xf32>
    %256 = vector.shape_cast %255 : vector<1x1x256xf32> to vector<1x256xf32>
    %257 = vector.broadcast %256 : vector<1x256xf32> to vector<16x256xf32>
    %258 = arith.addf %254, %257 : vector<16x256xf32>
    %259 = vector.extract_strided_slice %258 {offsets = [0, 0], sizes = [16, 128], strides = [1, 1]} : vector<16x256xf32> to vector<16x128xf32>
    %260 = vector.extract_strided_slice %258 {offsets = [0, 128], sizes = [16, 128], strides = [1, 1]} : vector<16x256xf32> to vector<16x128xf32>
    %261 = vector.extract_strided_slice %250 {offsets = [0, 0], sizes = [8, 128], strides = [1, 1]} : vector<16x128xf32> to vector<8x128xf32>
    %cst_91 = arith.constant 0.176776692 : f32
    %262 = vector.broadcast %cst_91 : f32 to vector<8x128xf32>
    %263 = arith.mulf %261, %262 : vector<8x128xf32>
    %264 = vector.extract_strided_slice %259 {offsets = [0, 0], sizes = [8, 128], strides = [1, 1]} : vector<16x128xf32> to vector<8x128xf32>
    %265 = vector.extract_strided_slice %260 {offsets = [0, 0], sizes = [8, 128], strides = [1, 1]} : vector<16x128xf32> to vector<8x128xf32>
    %266 = vector.extract_strided_slice %263 {offsets = [0, 0], sizes = [8, 32], strides = [1, 1]} : vector<8x128xf32> to vector<8x32xf32>
    %267 = arith.truncf %266 : vector<8x32xf32> to vector<8x32xbf16>
    %268 = vector.extract_strided_slice %264 {offsets = [0, 0], sizes = [8, 32], strides = [1, 1]} : vector<8x128xf32> to vector<8x32xf32>
    %269 = arith.truncf %268 : vector<8x32xf32> to vector<8x32xbf16>
    %270 = vector.extract_strided_slice %265 {offsets = [0, 0], sizes = [8, 32], strides = [1, 1]} : vector<8x128xf32> to vector<8x32xf32>
    %271 = arith.truncf %270 : vector<8x32xf32> to vector<8x32xbf16>
    %cst_92 = arith.constant dense<0.000000e+00> : vector<8x8xf32>
    %272 = tpu.matmul %267, %269, %cst_92 {dimension_numbers = #tpu.dot_dimension_numbers<[1], [1], [0], [0], [0, 0, 1, 0], [], []>} : vector<8x32xbf16>, vector<8x32xbf16>, vector<8x8xf32> -> vector<8x8xf32>
    %cst_93 = arith.constant dense<0xFF800000> : vector<8xf32>
    %273 = vector.multi_reduction <maximumf>, %272, %cst_93 [1] : vector<8x8xf32> to vector<8xf32>
    %274 = vector.shape_cast %273 : vector<8xf32> to vector<8x1xf32>
    %275 = vector.broadcast %274 : vector<8x1xf32> to vector<8x8xf32>
    %276 = arith.subf %272, %275 : vector<8x8xf32>
    %277 = math.exp %276 : vector<8x8xf32>
    %cst_94 = arith.constant dense<0.000000e+00> : vector<8xf32>
    %278 = vector.multi_reduction <add>, %277, %cst_94 [1] : vector<8x8xf32> to vector<8xf32>
    %279 = vector.shape_cast %278 : vector<8xf32> to vector<8x1xf32>
    %280 = tpu.reciprocal %279 {approx = true} : vector<8x1xf32> -> vector<8x1xf32>
    %281 = vector.broadcast %280 : vector<8x1xf32> to vector<8x8xf32>
    %282 = arith.mulf %277, %281 : vector<8x8xf32>
    %283 = arith.truncf %282 : vector<8x8xf32> to vector<8x8xbf16>
    %cst_95 = arith.constant dense<0.000000e+00> : vector<8x32xf32>
    %284 = tpu.matmul %283, %271, %cst_95 {dimension_numbers = #tpu.dot_dimension_numbers<[1], [0], [0], [1], [0, 0, 1, 1], [], []>} : vector<8x8xbf16>, vector<8x32xbf16>, vector<8x32xf32> -> vector<8x32xf32>
    %285 = vector.extract_strided_slice %263 {offsets = [0, 32], sizes = [8, 32], strides = [1, 1]} : vector<8x128xf32> to vector<8x32xf32>
    %286 = arith.truncf %285 : vector<8x32xf32> to vector<8x32xbf16>
    %287 = vector.extract_strided_slice %264 {offsets = [0, 32], sizes = [8, 32], strides = [1, 1]} : vector<8x128xf32> to vector<8x32xf32>
    %288 = arith.truncf %287 : vector<8x32xf32> to vector<8x32xbf16>
    %289 = vector.extract_strided_slice %265 {offsets = [0, 32], sizes = [8, 32], strides = [1, 1]} : vector<8x128xf32> to vector<8x32xf32>
    %290 = arith.truncf %289 : vector<8x32xf32> to vector<8x32xbf16>
    %cst_96 = arith.constant dense<0.000000e+00> : vector<8x8xf32>
    %291 = tpu.matmul %286, %288, %cst_96 {dimension_numbers = #tpu.dot_dimension_numbers<[1], [1], [0], [0], [0, 0, 1, 0], [], []>} : vector<8x32xbf16>, vector<8x32xbf16>, vector<8x8xf32> -> vector<8x8xf32>
    %cst_97 = arith.constant dense<0xFF800000> : vector<8xf32>
    %292 = vector.multi_reduction <maximumf>, %291, %cst_97 [1] : vector<8x8xf32> to vector<8xf32>
    %293 = vector.shape_cast %292 : vector<8xf32> to vector<8x1xf32>
    %294 = vector.broadcast %293 : vector<8x1xf32> to vector<8x8xf32>
    %295 = arith.subf %291, %294 : vector<8x8xf32>
    %296 = math.exp %295 : vector<8x8xf32>
    %cst_98 = arith.constant dense<0.000000e+00> : vector<8xf32>
    %297 = vector.multi_reduction <add>, %296, %cst_98 [1] : vector<8x8xf32> to vector<8xf32>
    %298 = vector.shape_cast %297 : vector<8xf32> to vector<8x1xf32>
    %299 = tpu.reciprocal %298 {approx = true} : vector<8x1xf32> -> vector<8x1xf32>
    %300 = vector.broadcast %299 : vector<8x1xf32> to vector<8x8xf32>
    %301 = arith.mulf %296, %300 : vector<8x8xf32>
    %302 = arith.truncf %301 : vector<8x8xf32> to vector<8x8xbf16>
    %cst_99 = arith.constant dense<0.000000e+00> : vector<8x32xf32>
    %303 = tpu.matmul %302, %290, %cst_99 {dimension_numbers = #tpu.dot_dimension_numbers<[1], [0], [0], [1], [0, 0, 1, 1], [], []>} : vector<8x8xbf16>, vector<8x32xbf16>, vector<8x32xf32> -> vector<8x32xf32>
    %304 = vector.extract_strided_slice %263 {offsets = [0, 64], sizes = [8, 32], strides = [1, 1]} : vector<8x128xf32> to vector<8x32xf32>
    %305 = arith.truncf %304 : vector<8x32xf32> to vector<8x32xbf16>
    %306 = vector.extract_strided_slice %264 {offsets = [0, 64], sizes = [8, 32], strides = [1, 1]} : vector<8x128xf32> to vector<8x32xf32>
    %307 = arith.truncf %306 : vector<8x32xf32> to vector<8x32xbf16>
    %308 = vector.extract_strided_slice %265 {offsets = [0, 64], sizes = [8, 32], strides = [1, 1]} : vector<8x128xf32> to vector<8x32xf32>
    %309 = arith.truncf %308 : vector<8x32xf32> to vector<8x32xbf16>
    %cst_100 = arith.constant dense<0.000000e+00> : vector<8x8xf32>
    %310 = tpu.matmul %305, %307, %cst_100 {dimension_numbers = #tpu.dot_dimension_numbers<[1], [1], [0], [0], [0, 0, 1, 0], [], []>} : vector<8x32xbf16>, vector<8x32xbf16>, vector<8x8xf32> -> vector<8x8xf32>
    %cst_101 = arith.constant dense<0xFF800000> : vector<8xf32>
    %311 = vector.multi_reduction <maximumf>, %310, %cst_101 [1] : vector<8x8xf32> to vector<8xf32>
    %312 = vector.shape_cast %311 : vector<8xf32> to vector<8x1xf32>
    %313 = vector.broadcast %312 : vector<8x1xf32> to vector<8x8xf32>
    %314 = arith.subf %310, %313 : vector<8x8xf32>
    %315 = math.exp %314 : vector<8x8xf32>
    %cst_102 = arith.constant dense<0.000000e+00> : vector<8xf32>
    %316 = vector.multi_reduction <add>, %315, %cst_102 [1] : vector<8x8xf32> to vector<8xf32>
    %317 = vector.shape_cast %316 : vector<8xf32> to vector<8x1xf32>
    %318 = tpu.reciprocal %317 {approx = true} : vector<8x1xf32> -> vector<8x1xf32>
    %319 = vector.broadcast %318 : vector<8x1xf32> to vector<8x8xf32>
    %320 = arith.mulf %315, %319 : vector<8x8xf32>
    %321 = arith.truncf %320 : vector<8x8xf32> to vector<8x8xbf16>
    %cst_103 = arith.constant dense<0.000000e+00> : vector<8x32xf32>
    %322 = tpu.matmul %321, %309, %cst_103 {dimension_numbers = #tpu.dot_dimension_numbers<[1], [0], [0], [1], [0, 0, 1, 1], [], []>} : vector<8x8xbf16>, vector<8x32xbf16>, vector<8x32xf32> -> vector<8x32xf32>
    %323 = vector.extract_strided_slice %263 {offsets = [0, 96], sizes = [8, 32], strides = [1, 1]} : vector<8x128xf32> to vector<8x32xf32>
    %324 = arith.truncf %323 : vector<8x32xf32> to vector<8x32xbf16>
    %325 = vector.extract_strided_slice %264 {offsets = [0, 96], sizes = [8, 32], strides = [1, 1]} : vector<8x128xf32> to vector<8x32xf32>
    %326 = arith.truncf %325 : vector<8x32xf32> to vector<8x32xbf16>
    %327 = vector.extract_strided_slice %265 {offsets = [0, 96], sizes = [8, 32], strides = [1, 1]} : vector<8x128xf32> to vector<8x32xf32>
    %328 = arith.truncf %327 : vector<8x32xf32> to vector<8x32xbf16>
    %cst_104 = arith.constant dense<0.000000e+00> : vector<8x8xf32>
    %329 = tpu.matmul %324, %326, %cst_104 {dimension_numbers = #tpu.dot_dimension_numbers<[1], [1], [0], [0], [0, 0, 1, 0], [], []>} : vector<8x32xbf16>, vector<8x32xbf16>, vector<8x8xf32> -> vector<8x8xf32>
    %cst_105 = arith.constant dense<0xFF800000> : vector<8xf32>
    %330 = vector.multi_reduction <maximumf>, %329, %cst_105 [1] : vector<8x8xf32> to vector<8xf32>
    %331 = vector.shape_cast %330 : vector<8xf32> to vector<8x1xf32>
    %332 = vector.broadcast %331 : vector<8x1xf32> to vector<8x8xf32>
    %333 = arith.subf %329, %332 : vector<8x8xf32>
    %334 = math.exp %333 : vector<8x8xf32>
    %cst_106 = arith.constant dense<0.000000e+00> : vector<8xf32>
    %335 = vector.multi_reduction <add>, %334, %cst_106 [1] : vector<8x8xf32> to vector<8xf32>
    %336 = vector.shape_cast %335 : vector<8xf32> to vector<8x1xf32>
    %337 = tpu.reciprocal %336 {approx = true} : vector<8x1xf32> -> vector<8x1xf32>
    %338 = vector.broadcast %337 : vector<8x1xf32> to vector<8x8xf32>
    %339 = arith.mulf %334, %338 : vector<8x8xf32>
    %340 = arith.truncf %339 : vector<8x8xf32> to vector<8x8xbf16>
    %cst_107 = arith.constant dense<0.000000e+00> : vector<8x32xf32>
    %341 = tpu.matmul %340, %328, %cst_107 {dimension_numbers = #tpu.dot_dimension_numbers<[1], [0], [0], [1], [0, 0, 1, 1], [], []>} : vector<8x8xbf16>, vector<8x32xbf16>, vector<8x32xf32> -> vector<8x32xf32>
    %342 = tpu.concatenate %284, %303, %322, %341 in 1 : vector<8x32xf32>, vector<8x32xf32>, vector<8x32xf32>, vector<8x32xf32> -> vector<8x128xf32>
    %343 = vector.extract_strided_slice %250 {offsets = [8, 0], sizes = [8, 128], strides = [1, 1]} : vector<16x128xf32> to vector<8x128xf32>
    %cst_108 = arith.constant 0.176776692 : f32
    %344 = vector.broadcast %cst_108 : f32 to vector<8x128xf32>
    %345 = arith.mulf %343, %344 : vector<8x128xf32>
    %346 = vector.extract_strided_slice %259 {offsets = [8, 0], sizes = [8, 128], strides = [1, 1]} : vector<16x128xf32> to vector<8x128xf32>
    %347 = vector.extract_strided_slice %260 {offsets = [8, 0], sizes = [8, 128], strides = [1, 1]} : vector<16x128xf32> to vector<8x128xf32>
    %348 = vector.extract_strided_slice %345 {offsets = [0, 0], sizes = [8, 32], strides = [1, 1]} : vector<8x128xf32> to vector<8x32xf32>
    %349 = arith.truncf %348 : vector<8x32xf32> to vector<8x32xbf16>
    %350 = vector.extract_strided_slice %346 {offsets = [0, 0], sizes = [8, 32], strides = [1, 1]} : vector<8x128xf32> to vector<8x32xf32>
    %351 = arith.truncf %350 : vector<8x32xf32> to vector<8x32xbf16>
    %352 = vector.extract_strided_slice %347 {offsets = [0, 0], sizes = [8, 32], strides = [1, 1]} : vector<8x128xf32> to vector<8x32xf32>
    %353 = arith.truncf %352 : vector<8x32xf32> to vector<8x32xbf16>
    %cst_109 = arith.constant dense<0.000000e+00> : vector<8x8xf32>
    %354 = tpu.matmul %349, %351, %cst_109 {dimension_numbers = #tpu.dot_dimension_numbers<[1], [1], [0], [0], [0, 0, 1, 0], [], []>} : vector<8x32xbf16>, vector<8x32xbf16>, vector<8x8xf32> -> vector<8x8xf32>
    %cst_110 = arith.constant dense<0xFF800000> : vector<8xf32>
    %355 = vector.multi_reduction <maximumf>, %354, %cst_110 [1] : vector<8x8xf32> to vector<8xf32>
    %356 = vector.shape_cast %355 : vector<8xf32> to vector<8x1xf32>
    %357 = vector.broadcast %356 : vector<8x1xf32> to vector<8x8xf32>
    %358 = arith.subf %354, %357 : vector<8x8xf32>
    %359 = math.exp %358 : vector<8x8xf32>
    %cst_111 = arith.constant dense<0.000000e+00> : vector<8xf32>
    %360 = vector.multi_reduction <add>, %359, %cst_111 [1] : vector<8x8xf32> to vector<8xf32>
    %361 = vector.shape_cast %360 : vector<8xf32> to vector<8x1xf32>
    %362 = tpu.reciprocal %361 {approx = true} : vector<8x1xf32> -> vector<8x1xf32>
    %363 = vector.broadcast %362 : vector<8x1xf32> to vector<8x8xf32>
    %364 = arith.mulf %359, %363 : vector<8x8xf32>
    %365 = arith.truncf %364 : vector<8x8xf32> to vector<8x8xbf16>
    %cst_112 = arith.constant dense<0.000000e+00> : vector<8x32xf32>
    %366 = tpu.matmul %365, %353, %cst_112 {dimension_numbers = #tpu.dot_dimension_numbers<[1], [0], [0], [1], [0, 0, 1, 1], [], []>} : vector<8x8xbf16>, vector<8x32xbf16>, vector<8x32xf32> -> vector<8x32xf32>
    %367 = vector.extract_strided_slice %345 {offsets = [0, 32], sizes = [8, 32], strides = [1, 1]} : vector<8x128xf32> to vector<8x32xf32>
    %368 = arith.truncf %367 : vector<8x32xf32> to vector<8x32xbf16>
    %369 = vector.extract_strided_slice %346 {offsets = [0, 32], sizes = [8, 32], strides = [1, 1]} : vector<8x128xf32> to vector<8x32xf32>
    %370 = arith.truncf %369 : vector<8x32xf32> to vector<8x32xbf16>
    %371 = vector.extract_strided_slice %347 {offsets = [0, 32], sizes = [8, 32], strides = [1, 1]} : vector<8x128xf32> to vector<8x32xf32>
    %372 = arith.truncf %371 : vector<8x32xf32> to vector<8x32xbf16>
    %cst_113 = arith.constant dense<0.000000e+00> : vector<8x8xf32>
    %373 = tpu.matmul %368, %370, %cst_113 {dimension_numbers = #tpu.dot_dimension_numbers<[1], [1], [0], [0], [0, 0, 1, 0], [], []>} : vector<8x32xbf16>, vector<8x32xbf16>, vector<8x8xf32> -> vector<8x8xf32>
    %cst_114 = arith.constant dense<0xFF800000> : vector<8xf32>
    %374 = vector.multi_reduction <maximumf>, %373, %cst_114 [1] : vector<8x8xf32> to vector<8xf32>
    %375 = vector.shape_cast %374 : vector<8xf32> to vector<8x1xf32>
    %376 = vector.broadcast %375 : vector<8x1xf32> to vector<8x8xf32>
    %377 = arith.subf %373, %376 : vector<8x8xf32>
    %378 = math.exp %377 : vector<8x8xf32>
    %cst_115 = arith.constant dense<0.000000e+00> : vector<8xf32>
    %379 = vector.multi_reduction <add>, %378, %cst_115 [1] : vector<8x8xf32> to vector<8xf32>
    %380 = vector.shape_cast %379 : vector<8xf32> to vector<8x1xf32>
    %381 = tpu.reciprocal %380 {approx = true} : vector<8x1xf32> -> vector<8x1xf32>
    %382 = vector.broadcast %381 : vector<8x1xf32> to vector<8x8xf32>
    %383 = arith.mulf %378, %382 : vector<8x8xf32>
    %384 = arith.truncf %383 : vector<8x8xf32> to vector<8x8xbf16>
    %cst_116 = arith.constant dense<0.000000e+00> : vector<8x32xf32>
    %385 = tpu.matmul %384, %372, %cst_116 {dimension_numbers = #tpu.dot_dimension_numbers<[1], [0], [0], [1], [0, 0, 1, 1], [], []>} : vector<8x8xbf16>, vector<8x32xbf16>, vector<8x32xf32> -> vector<8x32xf32>
    %386 = vector.extract_strided_slice %345 {offsets = [0, 64], sizes = [8, 32], strides = [1, 1]} : vector<8x128xf32> to vector<8x32xf32>
    %387 = arith.truncf %386 : vector<8x32xf32> to vector<8x32xbf16>
    %388 = vector.extract_strided_slice %346 {offsets = [0, 64], sizes = [8, 32], strides = [1, 1]} : vector<8x128xf32> to vector<8x32xf32>
    %389 = arith.truncf %388 : vector<8x32xf32> to vector<8x32xbf16>
    %390 = vector.extract_strided_slice %347 {offsets = [0, 64], sizes = [8, 32], strides = [1, 1]} : vector<8x128xf32> to vector<8x32xf32>
    %391 = arith.truncf %390 : vector<8x32xf32> to vector<8x32xbf16>
    %cst_117 = arith.constant dense<0.000000e+00> : vector<8x8xf32>
    %392 = tpu.matmul %387, %389, %cst_117 {dimension_numbers = #tpu.dot_dimension_numbers<[1], [1], [0], [0], [0, 0, 1, 0], [], []>} : vector<8x32xbf16>, vector<8x32xbf16>, vector<8x8xf32> -> vector<8x8xf32>
    %cst_118 = arith.constant dense<0xFF800000> : vector<8xf32>
    %393 = vector.multi_reduction <maximumf>, %392, %cst_118 [1] : vector<8x8xf32> to vector<8xf32>
    %394 = vector.shape_cast %393 : vector<8xf32> to vector<8x1xf32>
    %395 = vector.broadcast %394 : vector<8x1xf32> to vector<8x8xf32>
    %396 = arith.subf %392, %395 : vector<8x8xf32>
    %397 = math.exp %396 : vector<8x8xf32>
    %cst_119 = arith.constant dense<0.000000e+00> : vector<8xf32>
    %398 = vector.multi_reduction <add>, %397, %cst_119 [1] : vector<8x8xf32> to vector<8xf32>
    %399 = vector.shape_cast %398 : vector<8xf32> to vector<8x1xf32>
    %400 = tpu.reciprocal %399 {approx = true} : vector<8x1xf32> -> vector<8x1xf32>
    %401 = vector.broadcast %400 : vector<8x1xf32> to vector<8x8xf32>
    %402 = arith.mulf %397, %401 : vector<8x8xf32>
    %403 = arith.truncf %402 : vector<8x8xf32> to vector<8x8xbf16>
    %cst_120 = arith.constant dense<0.000000e+00> : vector<8x32xf32>
    %404 = tpu.matmul %403, %391, %cst_120 {dimension_numbers = #tpu.dot_dimension_numbers<[1], [0], [0], [1], [0, 0, 1, 1], [], []>} : vector<8x8xbf16>, vector<8x32xbf16>, vector<8x32xf32> -> vector<8x32xf32>
    %405 = vector.extract_strided_slice %345 {offsets = [0, 96], sizes = [8, 32], strides = [1, 1]} : vector<8x128xf32> to vector<8x32xf32>
    %406 = arith.truncf %405 : vector<8x32xf32> to vector<8x32xbf16>
    %407 = vector.extract_strided_slice %346 {offsets = [0, 96], sizes = [8, 32], strides = [1, 1]} : vector<8x128xf32> to vector<8x32xf32>
    %408 = arith.truncf %407 : vector<8x32xf32> to vector<8x32xbf16>
    %409 = vector.extract_strided_slice %347 {offsets = [0, 96], sizes = [8, 32], strides = [1, 1]} : vector<8x128xf32> to vector<8x32xf32>
    %410 = arith.truncf %409 : vector<8x32xf32> to vector<8x32xbf16>
    %cst_121 = arith.constant dense<0.000000e+00> : vector<8x8xf32>
    %411 = tpu.matmul %406, %408, %cst_121 {dimension_numbers = #tpu.dot_dimension_numbers<[1], [1], [0], [0], [0, 0, 1, 0], [], []>} : vector<8x32xbf16>, vector<8x32xbf16>, vector<8x8xf32> -> vector<8x8xf32>
    %cst_122 = arith.constant dense<0xFF800000> : vector<8xf32>
    %412 = vector.multi_reduction <maximumf>, %411, %cst_122 [1] : vector<8x8xf32> to vector<8xf32>
    %413 = vector.shape_cast %412 : vector<8xf32> to vector<8x1xf32>
    %414 = vector.broadcast %413 : vector<8x1xf32> to vector<8x8xf32>
    %415 = arith.subf %411, %414 : vector<8x8xf32>
    %416 = math.exp %415 : vector<8x8xf32>
    %cst_123 = arith.constant dense<0.000000e+00> : vector<8xf32>
    %417 = vector.multi_reduction <add>, %416, %cst_123 [1] : vector<8x8xf32> to vector<8xf32>
    %418 = vector.shape_cast %417 : vector<8xf32> to vector<8x1xf32>
    %419 = tpu.reciprocal %418 {approx = true} : vector<8x1xf32> -> vector<8x1xf32>
    %420 = vector.broadcast %419 : vector<8x1xf32> to vector<8x8xf32>
    %421 = arith.mulf %416, %420 : vector<8x8xf32>
    %422 = arith.truncf %421 : vector<8x8xf32> to vector<8x8xbf16>
    %cst_124 = arith.constant dense<0.000000e+00> : vector<8x32xf32>
    %423 = tpu.matmul %422, %410, %cst_124 {dimension_numbers = #tpu.dot_dimension_numbers<[1], [0], [0], [1], [0, 0, 1, 1], [], []>} : vector<8x8xbf16>, vector<8x32xbf16>, vector<8x32xf32> -> vector<8x32xf32>
    %424 = tpu.concatenate %366, %385, %404, %423 in 1 : vector<8x32xf32>, vector<8x32xf32>, vector<8x32xf32>, vector<8x32xf32> -> vector<8x128xf32>
    %425 = tpu.concatenate %342, %424 in 0 : vector<8x128xf32>, vector<8x128xf32> -> vector<16x128xf32>
    %c0_125 = arith.constant 0 : index
    %c0_126 = arith.constant 0 : index
    %c0_127 = arith.constant 0 : index
    %426 = vector.load %arg15[%c0_125, %c0_126, %c0_127] : memref<2x128x128xbf16, #tpu.memory_space<vmem>>, vector<1x128x128xbf16>
    %427 = vector.shape_cast %426 : vector<1x128x128xbf16> to vector<128x128xbf16>
    %428 = arith.truncf %425 : vector<16x128xf32> to vector<16x128xbf16>
    %cst_128 = arith.constant dense<0.000000e+00> : vector<16x128xf32>
    %429 = tpu.matmul %428, %427, %cst_128 {dimension_numbers = #tpu.dot_dimension_numbers<[1], [0], [0], [1], [0, 0, 1, 1], [], []>} : vector<16x128xbf16>, vector<128x128xbf16>, vector<16x128xf32> -> vector<16x128xf32>
    %c0_129 = arith.constant 0 : index
    %c0_130 = arith.constant 0 : index
    %c0_131 = arith.constant 0 : index
    %430 = vector.load %arg16[%c0_129, %c0_130, %c0_131] : memref<2x1x128xf32, #tpu.memory_space<vmem>>, vector<1x1x128xf32>
    %431 = vector.shape_cast %430 : vector<1x1x128xf32> to vector<1x128xf32>
    %432 = vector.broadcast %431 : vector<1x128xf32> to vector<16x128xf32>
    %433 = arith.addf %429, %432 : vector<16x128xf32>
    %434 = arith.addf %242, %433 : vector<16x128xf32>
    %c0_132 = arith.constant 0 : index
    %c0_133 = arith.constant 0 : index
    %c0_134 = arith.constant 0 : index
    %435 = vector.load %arg23[%c0_132, %c0_133, %c0_134] : memref<2x1x128xf32, #tpu.memory_space<vmem>>, vector<1x1x128xf32>
    %436 = vector.shape_cast %435 : vector<1x1x128xf32> to vector<1x128xf32>
    %c0_135 = arith.constant 0 : index
    %c0_136 = arith.constant 0 : index
    %c0_137 = arith.constant 0 : index
    %437 = vector.load %arg24[%c0_135, %c0_136, %c0_137] : memref<2x1x128xf32, #tpu.memory_space<vmem>>, vector<1x1x128xf32>
    %438 = vector.shape_cast %437 : vector<1x1x128xf32> to vector<1x128xf32>
    %cst_138 = arith.constant dense<0.000000e+00> : vector<16xf32>
    %439 = vector.multi_reduction <add>, %434, %cst_138 [1] : vector<16x128xf32> to vector<16xf32>
    %440 = vector.shape_cast %439 : vector<16xf32> to vector<16x1xf32>
    %cst_139 = arith.constant 1.280000e+02 : f32
    %441 = vector.broadcast %cst_139 : f32 to vector<16x1xf32>
    %442 = arith.divf %440, %441 : vector<16x1xf32>
    %443 = vector.broadcast %442 : vector<16x1xf32> to vector<16x128xf32>
    %444 = arith.subf %434, %443 : vector<16x128xf32>
    %445 = arith.mulf %444, %444 : vector<16x128xf32>
    %cst_140 = arith.constant dense<0.000000e+00> : vector<16xf32>
    %446 = vector.multi_reduction <add>, %445, %cst_140 [1] : vector<16x128xf32> to vector<16xf32>
    %447 = vector.shape_cast %446 : vector<16xf32> to vector<16x1xf32>
    %cst_141 = arith.constant 1.280000e+02 : f32
    %448 = vector.broadcast %cst_141 : f32 to vector<16x1xf32>
    %449 = arith.divf %447, %448 : vector<16x1xf32>
    %cst_142 = arith.constant 9.99999974E-6 : f32
    %450 = vector.broadcast %cst_142 : f32 to vector<16x1xf32>
    %451 = arith.addf %449, %450 : vector<16x1xf32>
    %452 = math.rsqrt %451 : vector<16x1xf32>
    %453 = vector.broadcast %452 : vector<16x1xf32> to vector<16x128xf32>
    %454 = arith.mulf %444, %453 : vector<16x128xf32>
    %455 = vector.broadcast %436 : vector<1x128xf32> to vector<16x128xf32>
    %456 = arith.mulf %454, %455 : vector<16x128xf32>
    %457 = vector.broadcast %438 : vector<1x128xf32> to vector<16x128xf32>
    %458 = arith.addf %456, %457 : vector<16x128xf32>
    %c0_143 = arith.constant 0 : index
    %c0_144 = arith.constant 0 : index
    %c0_145 = arith.constant 0 : index
    %459 = vector.load %arg17[%c0_143, %c0_144, %c0_145] : memref<2x128x128xbf16, #tpu.memory_space<vmem>>, vector<1x128x128xbf16>
    %460 = vector.shape_cast %459 : vector<1x128x128xbf16> to vector<128x128xbf16>
    %461 = arith.truncf %458 : vector<16x128xf32> to vector<16x128xbf16>
    %cst_146 = arith.constant dense<0.000000e+00> : vector<16x128xf32>
    %462 = tpu.matmul %461, %460, %cst_146 {dimension_numbers = #tpu.dot_dimension_numbers<[1], [0], [0], [1], [0, 0, 1, 1], [], []>} : vector<16x128xbf16>, vector<128x128xbf16>, vector<16x128xf32> -> vector<16x128xf32>
    %c0_147 = arith.constant 0 : index
    %c0_148 = arith.constant 0 : index
    %c0_149 = arith.constant 0 : index
    %463 = vector.load %arg18[%c0_147, %c0_148, %c0_149] : memref<2x1x128xf32, #tpu.memory_space<vmem>>, vector<1x1x128xf32>
    %464 = vector.shape_cast %463 : vector<1x1x128xf32> to vector<1x128xf32>
    %465 = vector.broadcast %464 : vector<1x128xf32> to vector<16x128xf32>
    %466 = arith.addf %462, %465 : vector<16x128xf32>
    %cst_150 = arith.constant 0.000000e+00 : f32
    %467 = vector.broadcast %cst_150 : f32 to vector<16x128xf32>
    %468 = arith.maximumf %466, %467 : vector<16x128xf32>
    %c0_151 = arith.constant 0 : index
    %c0_152 = arith.constant 0 : index
    %c0_153 = arith.constant 0 : index
    %469 = vector.load %arg19[%c0_151, %c0_152, %c0_153] : memref<2x128x128xbf16, #tpu.memory_space<vmem>>, vector<1x128x128xbf16>
    %470 = vector.shape_cast %469 : vector<1x128x128xbf16> to vector<128x128xbf16>
    %471 = arith.truncf %468 : vector<16x128xf32> to vector<16x128xbf16>
    %cst_154 = arith.constant dense<0.000000e+00> : vector<16x128xf32>
    %472 = tpu.matmul %471, %470, %cst_154 {dimension_numbers = #tpu.dot_dimension_numbers<[1], [0], [0], [1], [0, 0, 1, 1], [], []>} : vector<16x128xbf16>, vector<128x128xbf16>, vector<16x128xf32> -> vector<16x128xf32>
    %c0_155 = arith.constant 0 : index
    %c0_156 = arith.constant 0 : index
    %c0_157 = arith.constant 0 : index
    %473 = vector.load %arg20[%c0_155, %c0_156, %c0_157] : memref<2x1x128xf32, #tpu.memory_space<vmem>>, vector<1x1x128xf32>
    %474 = vector.shape_cast %473 : vector<1x1x128xf32> to vector<1x128xf32>
    %475 = vector.broadcast %474 : vector<1x128xf32> to vector<16x128xf32>
    %476 = arith.addf %472, %475 : vector<16x128xf32>
    %477 = arith.addf %458, %476 : vector<16x128xf32>
    %c0_158 = arith.constant 0 : index
    %c0_159 = arith.constant 0 : index
    %c0_160 = arith.constant 0 : index
    %478 = vector.load %arg25[%c0_158, %c0_159, %c0_160] : memref<2x1x128xf32, #tpu.memory_space<vmem>>, vector<1x1x128xf32>
    %479 = vector.shape_cast %478 : vector<1x1x128xf32> to vector<1x128xf32>
    %c0_161 = arith.constant 0 : index
    %c0_162 = arith.constant 0 : index
    %c0_163 = arith.constant 0 : index
    %480 = vector.load %arg26[%c0_161, %c0_162, %c0_163] : memref<2x1x128xf32, #tpu.memory_space<vmem>>, vector<1x1x128xf32>
    %481 = vector.shape_cast %480 : vector<1x1x128xf32> to vector<1x128xf32>
    %cst_164 = arith.constant dense<0.000000e+00> : vector<16xf32>
    %482 = vector.multi_reduction <add>, %477, %cst_164 [1] : vector<16x128xf32> to vector<16xf32>
    %483 = vector.shape_cast %482 : vector<16xf32> to vector<16x1xf32>
    %cst_165 = arith.constant 1.280000e+02 : f32
    %484 = vector.broadcast %cst_165 : f32 to vector<16x1xf32>
    %485 = arith.divf %483, %484 : vector<16x1xf32>
    %486 = vector.broadcast %485 : vector<16x1xf32> to vector<16x128xf32>
    %487 = arith.subf %477, %486 : vector<16x128xf32>
    %488 = arith.mulf %487, %487 : vector<16x128xf32>
    %cst_166 = arith.constant dense<0.000000e+00> : vector<16xf32>
    %489 = vector.multi_reduction <add>, %488, %cst_166 [1] : vector<16x128xf32> to vector<16xf32>
    %490 = vector.shape_cast %489 : vector<16xf32> to vector<16x1xf32>
    %cst_167 = arith.constant 1.280000e+02 : f32
    %491 = vector.broadcast %cst_167 : f32 to vector<16x1xf32>
    %492 = arith.divf %490, %491 : vector<16x1xf32>
    %cst_168 = arith.constant 9.99999974E-6 : f32
    %493 = vector.broadcast %cst_168 : f32 to vector<16x1xf32>
    %494 = arith.addf %492, %493 : vector<16x1xf32>
    %495 = math.rsqrt %494 : vector<16x1xf32>
    %496 = vector.broadcast %495 : vector<16x1xf32> to vector<16x128xf32>
    %497 = arith.mulf %487, %496 : vector<16x128xf32>
    %498 = vector.broadcast %479 : vector<1x128xf32> to vector<16x128xf32>
    %499 = arith.mulf %497, %498 : vector<16x128xf32>
    %500 = vector.broadcast %481 : vector<1x128xf32> to vector<16x128xf32>
    %501 = arith.addf %499, %500 : vector<16x128xf32>
    %c1 = arith.constant 1 : index
    %c0_169 = arith.constant 0 : index
    %c0_170 = arith.constant 0 : index
    %502 = vector.load %arg7[%c1, %c0_169, %c0_170] : memref<2x128x384xbf16, #tpu.memory_space<vmem>>, vector<1x128x384xbf16>
    %503 = vector.shape_cast %502 : vector<1x128x384xbf16> to vector<128x384xbf16>
    %504 = arith.truncf %501 : vector<16x128xf32> to vector<16x128xbf16>
    %cst_171 = arith.constant dense<0.000000e+00> : vector<16x384xf32>
    %505 = tpu.matmul %504, %503, %cst_171 {dimension_numbers = #tpu.dot_dimension_numbers<[1], [0], [0], [1], [0, 0, 1, 1], [], []>} : vector<16x128xbf16>, vector<128x384xbf16>, vector<16x384xf32> -> vector<16x384xf32>
    %c1_172 = arith.constant 1 : index
    %c0_173 = arith.constant 0 : index
    %c0_174 = arith.constant 0 : index
    %506 = vector.load %arg8[%c1_172, %c0_173, %c0_174] : memref<2x1x384xf32, #tpu.memory_space<vmem>>, vector<1x1x384xf32>
    %507 = vector.shape_cast %506 : vector<1x1x384xf32> to vector<1x384xf32>
    %508 = vector.broadcast %507 : vector<1x384xf32> to vector<16x384xf32>
    %509 = arith.addf %505, %508 : vector<16x384xf32>
    %510 = vector.extract_strided_slice %509 {offsets = [0, 0], sizes = [16, 128], strides = [1, 1]} : vector<16x384xf32> to vector<16x128xf32>
    %511 = vector.extract_strided_slice %509 {offsets = [0, 128], sizes = [16, 128], strides = [1, 1]} : vector<16x384xf32> to vector<16x128xf32>
    %512 = vector.extract_strided_slice %509 {offsets = [0, 256], sizes = [16, 128], strides = [1, 1]} : vector<16x384xf32> to vector<16x128xf32>
    %513 = vector.extract_strided_slice %510 {offsets = [0, 0], sizes = [8, 128], strides = [1, 1]} : vector<16x128xf32> to vector<8x128xf32>
    %cst_175 = arith.constant 0.176776692 : f32
    %514 = vector.broadcast %cst_175 : f32 to vector<8x128xf32>
    %515 = arith.mulf %513, %514 : vector<8x128xf32>
    %516 = vector.extract_strided_slice %511 {offsets = [0, 0], sizes = [8, 128], strides = [1, 1]} : vector<16x128xf32> to vector<8x128xf32>
    %517 = vector.extract_strided_slice %512 {offsets = [0, 0], sizes = [8, 128], strides = [1, 1]} : vector<16x128xf32> to vector<8x128xf32>
    %518 = vector.extract_strided_slice %515 {offsets = [0, 0], sizes = [8, 32], strides = [1, 1]} : vector<8x128xf32> to vector<8x32xf32>
    %519 = arith.truncf %518 : vector<8x32xf32> to vector<8x32xbf16>
    %520 = vector.extract_strided_slice %516 {offsets = [0, 0], sizes = [8, 32], strides = [1, 1]} : vector<8x128xf32> to vector<8x32xf32>
    %521 = arith.truncf %520 : vector<8x32xf32> to vector<8x32xbf16>
    %522 = vector.extract_strided_slice %517 {offsets = [0, 0], sizes = [8, 32], strides = [1, 1]} : vector<8x128xf32> to vector<8x32xf32>
    %523 = arith.truncf %522 : vector<8x32xf32> to vector<8x32xbf16>
    %cst_176 = arith.constant dense<0.000000e+00> : vector<8x8xf32>
    %524 = tpu.matmul %519, %521, %cst_176 {dimension_numbers = #tpu.dot_dimension_numbers<[1], [1], [0], [0], [0, 0, 1, 0], [], []>} : vector<8x32xbf16>, vector<8x32xbf16>, vector<8x8xf32> -> vector<8x8xf32>
    %525 = arith.addf %524, %25 : vector<8x8xf32>
    %cst_177 = arith.constant dense<0xFF800000> : vector<8xf32>
    %526 = vector.multi_reduction <maximumf>, %525, %cst_177 [1] : vector<8x8xf32> to vector<8xf32>
    %527 = vector.shape_cast %526 : vector<8xf32> to vector<8x1xf32>
    %528 = vector.broadcast %527 : vector<8x1xf32> to vector<8x8xf32>
    %529 = arith.subf %525, %528 : vector<8x8xf32>
    %530 = math.exp %529 : vector<8x8xf32>
    %cst_178 = arith.constant dense<0.000000e+00> : vector<8xf32>
    %531 = vector.multi_reduction <add>, %530, %cst_178 [1] : vector<8x8xf32> to vector<8xf32>
    %532 = vector.shape_cast %531 : vector<8xf32> to vector<8x1xf32>
    %533 = tpu.reciprocal %532 {approx = true} : vector<8x1xf32> -> vector<8x1xf32>
    %534 = vector.broadcast %533 : vector<8x1xf32> to vector<8x8xf32>
    %535 = arith.mulf %530, %534 : vector<8x8xf32>
    %536 = arith.truncf %535 : vector<8x8xf32> to vector<8x8xbf16>
    %cst_179 = arith.constant dense<0.000000e+00> : vector<8x32xf32>
    %537 = tpu.matmul %536, %523, %cst_179 {dimension_numbers = #tpu.dot_dimension_numbers<[1], [0], [0], [1], [0, 0, 1, 1], [], []>} : vector<8x8xbf16>, vector<8x32xbf16>, vector<8x32xf32> -> vector<8x32xf32>
    %538 = vector.extract_strided_slice %515 {offsets = [0, 32], sizes = [8, 32], strides = [1, 1]} : vector<8x128xf32> to vector<8x32xf32>
    %539 = arith.truncf %538 : vector<8x32xf32> to vector<8x32xbf16>
    %540 = vector.extract_strided_slice %516 {offsets = [0, 32], sizes = [8, 32], strides = [1, 1]} : vector<8x128xf32> to vector<8x32xf32>
    %541 = arith.truncf %540 : vector<8x32xf32> to vector<8x32xbf16>
    %542 = vector.extract_strided_slice %517 {offsets = [0, 32], sizes = [8, 32], strides = [1, 1]} : vector<8x128xf32> to vector<8x32xf32>
    %543 = arith.truncf %542 : vector<8x32xf32> to vector<8x32xbf16>
    %cst_180 = arith.constant dense<0.000000e+00> : vector<8x8xf32>
    %544 = tpu.matmul %539, %541, %cst_180 {dimension_numbers = #tpu.dot_dimension_numbers<[1], [1], [0], [0], [0, 0, 1, 0], [], []>} : vector<8x32xbf16>, vector<8x32xbf16>, vector<8x8xf32> -> vector<8x8xf32>
    %545 = arith.addf %544, %25 : vector<8x8xf32>
    %cst_181 = arith.constant dense<0xFF800000> : vector<8xf32>
    %546 = vector.multi_reduction <maximumf>, %545, %cst_181 [1] : vector<8x8xf32> to vector<8xf32>
    %547 = vector.shape_cast %546 : vector<8xf32> to vector<8x1xf32>
    %548 = vector.broadcast %547 : vector<8x1xf32> to vector<8x8xf32>
    %549 = arith.subf %545, %548 : vector<8x8xf32>
    %550 = math.exp %549 : vector<8x8xf32>
    %cst_182 = arith.constant dense<0.000000e+00> : vector<8xf32>
    %551 = vector.multi_reduction <add>, %550, %cst_182 [1] : vector<8x8xf32> to vector<8xf32>
    %552 = vector.shape_cast %551 : vector<8xf32> to vector<8x1xf32>
    %553 = tpu.reciprocal %552 {approx = true} : vector<8x1xf32> -> vector<8x1xf32>
    %554 = vector.broadcast %553 : vector<8x1xf32> to vector<8x8xf32>
    %555 = arith.mulf %550, %554 : vector<8x8xf32>
    %556 = arith.truncf %555 : vector<8x8xf32> to vector<8x8xbf16>
    %cst_183 = arith.constant dense<0.000000e+00> : vector<8x32xf32>
    %557 = tpu.matmul %556, %543, %cst_183 {dimension_numbers = #tpu.dot_dimension_numbers<[1], [0], [0], [1], [0, 0, 1, 1], [], []>} : vector<8x8xbf16>, vector<8x32xbf16>, vector<8x32xf32> -> vector<8x32xf32>
    %558 = vector.extract_strided_slice %515 {offsets = [0, 64], sizes = [8, 32], strides = [1, 1]} : vector<8x128xf32> to vector<8x32xf32>
    %559 = arith.truncf %558 : vector<8x32xf32> to vector<8x32xbf16>
    %560 = vector.extract_strided_slice %516 {offsets = [0, 64], sizes = [8, 32], strides = [1, 1]} : vector<8x128xf32> to vector<8x32xf32>
    %561 = arith.truncf %560 : vector<8x32xf32> to vector<8x32xbf16>
    %562 = vector.extract_strided_slice %517 {offsets = [0, 64], sizes = [8, 32], strides = [1, 1]} : vector<8x128xf32> to vector<8x32xf32>
    %563 = arith.truncf %562 : vector<8x32xf32> to vector<8x32xbf16>
    %cst_184 = arith.constant dense<0.000000e+00> : vector<8x8xf32>
    %564 = tpu.matmul %559, %561, %cst_184 {dimension_numbers = #tpu.dot_dimension_numbers<[1], [1], [0], [0], [0, 0, 1, 0], [], []>} : vector<8x32xbf16>, vector<8x32xbf16>, vector<8x8xf32> -> vector<8x8xf32>
    %565 = arith.addf %564, %25 : vector<8x8xf32>
    %cst_185 = arith.constant dense<0xFF800000> : vector<8xf32>
    %566 = vector.multi_reduction <maximumf>, %565, %cst_185 [1] : vector<8x8xf32> to vector<8xf32>
    %567 = vector.shape_cast %566 : vector<8xf32> to vector<8x1xf32>
    %568 = vector.broadcast %567 : vector<8x1xf32> to vector<8x8xf32>
    %569 = arith.subf %565, %568 : vector<8x8xf32>
    %570 = math.exp %569 : vector<8x8xf32>
    %cst_186 = arith.constant dense<0.000000e+00> : vector<8xf32>
    %571 = vector.multi_reduction <add>, %570, %cst_186 [1] : vector<8x8xf32> to vector<8xf32>
    %572 = vector.shape_cast %571 : vector<8xf32> to vector<8x1xf32>
    %573 = tpu.reciprocal %572 {approx = true} : vector<8x1xf32> -> vector<8x1xf32>
    %574 = vector.broadcast %573 : vector<8x1xf32> to vector<8x8xf32>
    %575 = arith.mulf %570, %574 : vector<8x8xf32>
    %576 = arith.truncf %575 : vector<8x8xf32> to vector<8x8xbf16>
    %cst_187 = arith.constant dense<0.000000e+00> : vector<8x32xf32>
    %577 = tpu.matmul %576, %563, %cst_187 {dimension_numbers = #tpu.dot_dimension_numbers<[1], [0], [0], [1], [0, 0, 1, 1], [], []>} : vector<8x8xbf16>, vector<8x32xbf16>, vector<8x32xf32> -> vector<8x32xf32>
    %578 = vector.extract_strided_slice %515 {offsets = [0, 96], sizes = [8, 32], strides = [1, 1]} : vector<8x128xf32> to vector<8x32xf32>
    %579 = arith.truncf %578 : vector<8x32xf32> to vector<8x32xbf16>
    %580 = vector.extract_strided_slice %516 {offsets = [0, 96], sizes = [8, 32], strides = [1, 1]} : vector<8x128xf32> to vector<8x32xf32>
    %581 = arith.truncf %580 : vector<8x32xf32> to vector<8x32xbf16>
    %582 = vector.extract_strided_slice %517 {offsets = [0, 96], sizes = [8, 32], strides = [1, 1]} : vector<8x128xf32> to vector<8x32xf32>
    %583 = arith.truncf %582 : vector<8x32xf32> to vector<8x32xbf16>
    %cst_188 = arith.constant dense<0.000000e+00> : vector<8x8xf32>
    %584 = tpu.matmul %579, %581, %cst_188 {dimension_numbers = #tpu.dot_dimension_numbers<[1], [1], [0], [0], [0, 0, 1, 0], [], []>} : vector<8x32xbf16>, vector<8x32xbf16>, vector<8x8xf32> -> vector<8x8xf32>
    %585 = arith.addf %584, %25 : vector<8x8xf32>
    %cst_189 = arith.constant dense<0xFF800000> : vector<8xf32>
    %586 = vector.multi_reduction <maximumf>, %585, %cst_189 [1] : vector<8x8xf32> to vector<8xf32>
    %587 = vector.shape_cast %586 : vector<8xf32> to vector<8x1xf32>
    %588 = vector.broadcast %587 : vector<8x1xf32> to vector<8x8xf32>
    %589 = arith.subf %585, %588 : vector<8x8xf32>
    %590 = math.exp %589 : vector<8x8xf32>
    %cst_190 = arith.constant dense<0.000000e+00> : vector<8xf32>
    %591 = vector.multi_reduction <add>, %590, %cst_190 [1] : vector<8x8xf32> to vector<8xf32>
    %592 = vector.shape_cast %591 : vector<8xf32> to vector<8x1xf32>
    %593 = tpu.reciprocal %592 {approx = true} : vector<8x1xf32> -> vector<8x1xf32>
    %594 = vector.broadcast %593 : vector<8x1xf32> to vector<8x8xf32>
    %595 = arith.mulf %590, %594 : vector<8x8xf32>
    %596 = arith.truncf %595 : vector<8x8xf32> to vector<8x8xbf16>
    %cst_191 = arith.constant dense<0.000000e+00> : vector<8x32xf32>
    %597 = tpu.matmul %596, %583, %cst_191 {dimension_numbers = #tpu.dot_dimension_numbers<[1], [0], [0], [1], [0, 0, 1, 1], [], []>} : vector<8x8xbf16>, vector<8x32xbf16>, vector<8x32xf32> -> vector<8x32xf32>
    %598 = tpu.concatenate %537, %557, %577, %597 in 1 : vector<8x32xf32>, vector<8x32xf32>, vector<8x32xf32>, vector<8x32xf32> -> vector<8x128xf32>
    %599 = vector.extract_strided_slice %510 {offsets = [8, 0], sizes = [8, 128], strides = [1, 1]} : vector<16x128xf32> to vector<8x128xf32>
    %cst_192 = arith.constant 0.176776692 : f32
    %600 = vector.broadcast %cst_192 : f32 to vector<8x128xf32>
    %601 = arith.mulf %599, %600 : vector<8x128xf32>
    %602 = vector.extract_strided_slice %511 {offsets = [8, 0], sizes = [8, 128], strides = [1, 1]} : vector<16x128xf32> to vector<8x128xf32>
    %603 = vector.extract_strided_slice %512 {offsets = [8, 0], sizes = [8, 128], strides = [1, 1]} : vector<16x128xf32> to vector<8x128xf32>
    %604 = vector.extract_strided_slice %601 {offsets = [0, 0], sizes = [8, 32], strides = [1, 1]} : vector<8x128xf32> to vector<8x32xf32>
    %605 = arith.truncf %604 : vector<8x32xf32> to vector<8x32xbf16>
    %606 = vector.extract_strided_slice %602 {offsets = [0, 0], sizes = [8, 32], strides = [1, 1]} : vector<8x128xf32> to vector<8x32xf32>
    %607 = arith.truncf %606 : vector<8x32xf32> to vector<8x32xbf16>
    %608 = vector.extract_strided_slice %603 {offsets = [0, 0], sizes = [8, 32], strides = [1, 1]} : vector<8x128xf32> to vector<8x32xf32>
    %609 = arith.truncf %608 : vector<8x32xf32> to vector<8x32xbf16>
    %cst_193 = arith.constant dense<0.000000e+00> : vector<8x8xf32>
    %610 = tpu.matmul %605, %607, %cst_193 {dimension_numbers = #tpu.dot_dimension_numbers<[1], [1], [0], [0], [0, 0, 1, 0], [], []>} : vector<8x32xbf16>, vector<8x32xbf16>, vector<8x8xf32> -> vector<8x8xf32>
    %611 = arith.addf %610, %25 : vector<8x8xf32>
    %cst_194 = arith.constant dense<0xFF800000> : vector<8xf32>
    %612 = vector.multi_reduction <maximumf>, %611, %cst_194 [1] : vector<8x8xf32> to vector<8xf32>
    %613 = vector.shape_cast %612 : vector<8xf32> to vector<8x1xf32>
    %614 = vector.broadcast %613 : vector<8x1xf32> to vector<8x8xf32>
    %615 = arith.subf %611, %614 : vector<8x8xf32>
    %616 = math.exp %615 : vector<8x8xf32>
    %cst_195 = arith.constant dense<0.000000e+00> : vector<8xf32>
    %617 = vector.multi_reduction <add>, %616, %cst_195 [1] : vector<8x8xf32> to vector<8xf32>
    %618 = vector.shape_cast %617 : vector<8xf32> to vector<8x1xf32>
    %619 = tpu.reciprocal %618 {approx = true} : vector<8x1xf32> -> vector<8x1xf32>
    %620 = vector.broadcast %619 : vector<8x1xf32> to vector<8x8xf32>
    %621 = arith.mulf %616, %620 : vector<8x8xf32>
    %622 = arith.truncf %621 : vector<8x8xf32> to vector<8x8xbf16>
    %cst_196 = arith.constant dense<0.000000e+00> : vector<8x32xf32>
    %623 = tpu.matmul %622, %609, %cst_196 {dimension_numbers = #tpu.dot_dimension_numbers<[1], [0], [0], [1], [0, 0, 1, 1], [], []>} : vector<8x8xbf16>, vector<8x32xbf16>, vector<8x32xf32> -> vector<8x32xf32>
    %624 = vector.extract_strided_slice %601 {offsets = [0, 32], sizes = [8, 32], strides = [1, 1]} : vector<8x128xf32> to vector<8x32xf32>
    %625 = arith.truncf %624 : vector<8x32xf32> to vector<8x32xbf16>
    %626 = vector.extract_strided_slice %602 {offsets = [0, 32], sizes = [8, 32], strides = [1, 1]} : vector<8x128xf32> to vector<8x32xf32>
    %627 = arith.truncf %626 : vector<8x32xf32> to vector<8x32xbf16>
    %628 = vector.extract_strided_slice %603 {offsets = [0, 32], sizes = [8, 32], strides = [1, 1]} : vector<8x128xf32> to vector<8x32xf32>
    %629 = arith.truncf %628 : vector<8x32xf32> to vector<8x32xbf16>
    %cst_197 = arith.constant dense<0.000000e+00> : vector<8x8xf32>
    %630 = tpu.matmul %625, %627, %cst_197 {dimension_numbers = #tpu.dot_dimension_numbers<[1], [1], [0], [0], [0, 0, 1, 0], [], []>} : vector<8x32xbf16>, vector<8x32xbf16>, vector<8x8xf32> -> vector<8x8xf32>
    %631 = arith.addf %630, %25 : vector<8x8xf32>
    %cst_198 = arith.constant dense<0xFF800000> : vector<8xf32>
    %632 = vector.multi_reduction <maximumf>, %631, %cst_198 [1] : vector<8x8xf32> to vector<8xf32>
    %633 = vector.shape_cast %632 : vector<8xf32> to vector<8x1xf32>
    %634 = vector.broadcast %633 : vector<8x1xf32> to vector<8x8xf32>
    %635 = arith.subf %631, %634 : vector<8x8xf32>
    %636 = math.exp %635 : vector<8x8xf32>
    %cst_199 = arith.constant dense<0.000000e+00> : vector<8xf32>
    %637 = vector.multi_reduction <add>, %636, %cst_199 [1] : vector<8x8xf32> to vector<8xf32>
    %638 = vector.shape_cast %637 : vector<8xf32> to vector<8x1xf32>
    %639 = tpu.reciprocal %638 {approx = true} : vector<8x1xf32> -> vector<8x1xf32>
    %640 = vector.broadcast %639 : vector<8x1xf32> to vector<8x8xf32>
    %641 = arith.mulf %636, %640 : vector<8x8xf32>
    %642 = arith.truncf %641 : vector<8x8xf32> to vector<8x8xbf16>
    %cst_200 = arith.constant dense<0.000000e+00> : vector<8x32xf32>
    %643 = tpu.matmul %642, %629, %cst_200 {dimension_numbers = #tpu.dot_dimension_numbers<[1], [0], [0], [1], [0, 0, 1, 1], [], []>} : vector<8x8xbf16>, vector<8x32xbf16>, vector<8x32xf32> -> vector<8x32xf32>
    %644 = vector.extract_strided_slice %601 {offsets = [0, 64], sizes = [8, 32], strides = [1, 1]} : vector<8x128xf32> to vector<8x32xf32>
    %645 = arith.truncf %644 : vector<8x32xf32> to vector<8x32xbf16>
    %646 = vector.extract_strided_slice %602 {offsets = [0, 64], sizes = [8, 32], strides = [1, 1]} : vector<8x128xf32> to vector<8x32xf32>
    %647 = arith.truncf %646 : vector<8x32xf32> to vector<8x32xbf16>
    %648 = vector.extract_strided_slice %603 {offsets = [0, 64], sizes = [8, 32], strides = [1, 1]} : vector<8x128xf32> to vector<8x32xf32>
    %649 = arith.truncf %648 : vector<8x32xf32> to vector<8x32xbf16>
    %cst_201 = arith.constant dense<0.000000e+00> : vector<8x8xf32>
    %650 = tpu.matmul %645, %647, %cst_201 {dimension_numbers = #tpu.dot_dimension_numbers<[1], [1], [0], [0], [0, 0, 1, 0], [], []>} : vector<8x32xbf16>, vector<8x32xbf16>, vector<8x8xf32> -> vector<8x8xf32>
    %651 = arith.addf %650, %25 : vector<8x8xf32>
    %cst_202 = arith.constant dense<0xFF800000> : vector<8xf32>
    %652 = vector.multi_reduction <maximumf>, %651, %cst_202 [1] : vector<8x8xf32> to vector<8xf32>
    %653 = vector.shape_cast %652 : vector<8xf32> to vector<8x1xf32>
    %654 = vector.broadcast %653 : vector<8x1xf32> to vector<8x8xf32>
    %655 = arith.subf %651, %654 : vector<8x8xf32>
    %656 = math.exp %655 : vector<8x8xf32>
    %cst_203 = arith.constant dense<0.000000e+00> : vector<8xf32>
    %657 = vector.multi_reduction <add>, %656, %cst_203 [1] : vector<8x8xf32> to vector<8xf32>
    %658 = vector.shape_cast %657 : vector<8xf32> to vector<8x1xf32>
    %659 = tpu.reciprocal %658 {approx = true} : vector<8x1xf32> -> vector<8x1xf32>
    %660 = vector.broadcast %659 : vector<8x1xf32> to vector<8x8xf32>
    %661 = arith.mulf %656, %660 : vector<8x8xf32>
    %662 = arith.truncf %661 : vector<8x8xf32> to vector<8x8xbf16>
    %cst_204 = arith.constant dense<0.000000e+00> : vector<8x32xf32>
    %663 = tpu.matmul %662, %649, %cst_204 {dimension_numbers = #tpu.dot_dimension_numbers<[1], [0], [0], [1], [0, 0, 1, 1], [], []>} : vector<8x8xbf16>, vector<8x32xbf16>, vector<8x32xf32> -> vector<8x32xf32>
    %664 = vector.extract_strided_slice %601 {offsets = [0, 96], sizes = [8, 32], strides = [1, 1]} : vector<8x128xf32> to vector<8x32xf32>
    %665 = arith.truncf %664 : vector<8x32xf32> to vector<8x32xbf16>
    %666 = vector.extract_strided_slice %602 {offsets = [0, 96], sizes = [8, 32], strides = [1, 1]} : vector<8x128xf32> to vector<8x32xf32>
    %667 = arith.truncf %666 : vector<8x32xf32> to vector<8x32xbf16>
    %668 = vector.extract_strided_slice %603 {offsets = [0, 96], sizes = [8, 32], strides = [1, 1]} : vector<8x128xf32> to vector<8x32xf32>
    %669 = arith.truncf %668 : vector<8x32xf32> to vector<8x32xbf16>
    %cst_205 = arith.constant dense<0.000000e+00> : vector<8x8xf32>
    %670 = tpu.matmul %665, %667, %cst_205 {dimension_numbers = #tpu.dot_dimension_numbers<[1], [1], [0], [0], [0, 0, 1, 0], [], []>} : vector<8x32xbf16>, vector<8x32xbf16>, vector<8x8xf32> -> vector<8x8xf32>
    %671 = arith.addf %670, %25 : vector<8x8xf32>
    %cst_206 = arith.constant dense<0xFF800000> : vector<8xf32>
    %672 = vector.multi_reduction <maximumf>, %671, %cst_206 [1] : vector<8x8xf32> to vector<8xf32>
    %673 = vector.shape_cast %672 : vector<8xf32> to vector<8x1xf32>
    %674 = vector.broadcast %673 : vector<8x1xf32> to vector<8x8xf32>
    %675 = arith.subf %671, %674 : vector<8x8xf32>
    %676 = math.exp %675 : vector<8x8xf32>
    %cst_207 = arith.constant dense<0.000000e+00> : vector<8xf32>
    %677 = vector.multi_reduction <add>, %676, %cst_207 [1] : vector<8x8xf32> to vector<8xf32>
    %678 = vector.shape_cast %677 : vector<8xf32> to vector<8x1xf32>
    %679 = tpu.reciprocal %678 {approx = true} : vector<8x1xf32> -> vector<8x1xf32>
    %680 = vector.broadcast %679 : vector<8x1xf32> to vector<8x8xf32>
    %681 = arith.mulf %676, %680 : vector<8x8xf32>
    %682 = arith.truncf %681 : vector<8x8xf32> to vector<8x8xbf16>
    %cst_208 = arith.constant dense<0.000000e+00> : vector<8x32xf32>
    %683 = tpu.matmul %682, %669, %cst_208 {dimension_numbers = #tpu.dot_dimension_numbers<[1], [0], [0], [1], [0, 0, 1, 1], [], []>} : vector<8x8xbf16>, vector<8x32xbf16>, vector<8x32xf32> -> vector<8x32xf32>
    %684 = tpu.concatenate %623, %643, %663, %683 in 1 : vector<8x32xf32>, vector<8x32xf32>, vector<8x32xf32>, vector<8x32xf32> -> vector<8x128xf32>
    %685 = tpu.concatenate %598, %684 in 0 : vector<8x128xf32>, vector<8x128xf32> -> vector<16x128xf32>
    %c1_209 = arith.constant 1 : index
    %c0_210 = arith.constant 0 : index
    %c0_211 = arith.constant 0 : index
    %686 = vector.load %arg9[%c1_209, %c0_210, %c0_211] : memref<2x128x128xbf16, #tpu.memory_space<vmem>>, vector<1x128x128xbf16>
    %687 = vector.shape_cast %686 : vector<1x128x128xbf16> to vector<128x128xbf16>
    %688 = arith.truncf %685 : vector<16x128xf32> to vector<16x128xbf16>
    %cst_212 = arith.constant dense<0.000000e+00> : vector<16x128xf32>
    %689 = tpu.matmul %688, %687, %cst_212 {dimension_numbers = #tpu.dot_dimension_numbers<[1], [0], [0], [1], [0, 0, 1, 1], [], []>} : vector<16x128xbf16>, vector<128x128xbf16>, vector<16x128xf32> -> vector<16x128xf32>
    %c1_213 = arith.constant 1 : index
    %c0_214 = arith.constant 0 : index
    %c0_215 = arith.constant 0 : index
    %690 = vector.load %arg10[%c1_213, %c0_214, %c0_215] : memref<2x1x128xf32, #tpu.memory_space<vmem>>, vector<1x1x128xf32>
    %691 = vector.shape_cast %690 : vector<1x1x128xf32> to vector<1x128xf32>
    %692 = vector.broadcast %691 : vector<1x128xf32> to vector<16x128xf32>
    %693 = arith.addf %689, %692 : vector<16x128xf32>
    %694 = arith.addf %501, %693 : vector<16x128xf32>
    %c1_216 = arith.constant 1 : index
    %c0_217 = arith.constant 0 : index
    %c0_218 = arith.constant 0 : index
    %695 = vector.load %arg21[%c1_216, %c0_217, %c0_218] : memref<2x1x128xf32, #tpu.memory_space<vmem>>, vector<1x1x128xf32>
    %696 = vector.shape_cast %695 : vector<1x1x128xf32> to vector<1x128xf32>
    %c1_219 = arith.constant 1 : index
    %c0_220 = arith.constant 0 : index
    %c0_221 = arith.constant 0 : index
    %697 = vector.load %arg22[%c1_219, %c0_220, %c0_221] : memref<2x1x128xf32, #tpu.memory_space<vmem>>, vector<1x1x128xf32>
    %698 = vector.shape_cast %697 : vector<1x1x128xf32> to vector<1x128xf32>
    %cst_222 = arith.constant dense<0.000000e+00> : vector<16xf32>
    %699 = vector.multi_reduction <add>, %694, %cst_222 [1] : vector<16x128xf32> to vector<16xf32>
    %700 = vector.shape_cast %699 : vector<16xf32> to vector<16x1xf32>
    %cst_223 = arith.constant 1.280000e+02 : f32
    %701 = vector.broadcast %cst_223 : f32 to vector<16x1xf32>
    %702 = arith.divf %700, %701 : vector<16x1xf32>
    %703 = vector.broadcast %702 : vector<16x1xf32> to vector<16x128xf32>
    %704 = arith.subf %694, %703 : vector<16x128xf32>
    %705 = arith.mulf %704, %704 : vector<16x128xf32>
    %cst_224 = arith.constant dense<0.000000e+00> : vector<16xf32>
    %706 = vector.multi_reduction <add>, %705, %cst_224 [1] : vector<16x128xf32> to vector<16xf32>
    %707 = vector.shape_cast %706 : vector<16xf32> to vector<16x1xf32>
    %cst_225 = arith.constant 1.280000e+02 : f32
    %708 = vector.broadcast %cst_225 : f32 to vector<16x1xf32>
    %709 = arith.divf %707, %708 : vector<16x1xf32>
    %cst_226 = arith.constant 9.99999974E-6 : f32
    %710 = vector.broadcast %cst_226 : f32 to vector<16x1xf32>
    %711 = arith.addf %709, %710 : vector<16x1xf32>
    %712 = math.rsqrt %711 : vector<16x1xf32>
    %713 = vector.broadcast %712 : vector<16x1xf32> to vector<16x128xf32>
    %714 = arith.mulf %704, %713 : vector<16x128xf32>
    %715 = vector.broadcast %696 : vector<1x128xf32> to vector<16x128xf32>
    %716 = arith.mulf %714, %715 : vector<16x128xf32>
    %717 = vector.broadcast %698 : vector<1x128xf32> to vector<16x128xf32>
    %718 = arith.addf %716, %717 : vector<16x128xf32>
    %c1_227 = arith.constant 1 : index
    %c0_228 = arith.constant 0 : index
    %c0_229 = arith.constant 0 : index
    %719 = vector.load %arg11[%c1_227, %c0_228, %c0_229] : memref<2x128x128xbf16, #tpu.memory_space<vmem>>, vector<1x128x128xbf16>
    %720 = vector.shape_cast %719 : vector<1x128x128xbf16> to vector<128x128xbf16>
    %721 = arith.truncf %718 : vector<16x128xf32> to vector<16x128xbf16>
    %cst_230 = arith.constant dense<0.000000e+00> : vector<16x128xf32>
    %722 = tpu.matmul %721, %720, %cst_230 {dimension_numbers = #tpu.dot_dimension_numbers<[1], [0], [0], [1], [0, 0, 1, 1], [], []>} : vector<16x128xbf16>, vector<128x128xbf16>, vector<16x128xf32> -> vector<16x128xf32>
    %c1_231 = arith.constant 1 : index
    %c0_232 = arith.constant 0 : index
    %c0_233 = arith.constant 0 : index
    %723 = vector.load %arg12[%c1_231, %c0_232, %c0_233] : memref<2x1x128xf32, #tpu.memory_space<vmem>>, vector<1x1x128xf32>
    %724 = vector.shape_cast %723 : vector<1x1x128xf32> to vector<1x128xf32>
    %725 = vector.broadcast %724 : vector<1x128xf32> to vector<16x128xf32>
    %726 = arith.addf %722, %725 : vector<16x128xf32>
    %c1_234 = arith.constant 1 : index
    %c0_235 = arith.constant 0 : index
    %c0_236 = arith.constant 0 : index
    %727 = vector.load %arg13[%c1_234, %c0_235, %c0_236] : memref<2x128x256xbf16, #tpu.memory_space<vmem>>, vector<1x128x256xbf16>
    %728 = vector.shape_cast %727 : vector<1x128x256xbf16> to vector<128x256xbf16>
    %729 = arith.truncf %18 : vector<16x128xf32> to vector<16x128xbf16>
    %cst_237 = arith.constant dense<0.000000e+00> : vector<16x256xf32>
    %730 = tpu.matmul %729, %728, %cst_237 {dimension_numbers = #tpu.dot_dimension_numbers<[1], [0], [0], [1], [0, 0, 1, 1], [], []>} : vector<16x128xbf16>, vector<128x256xbf16>, vector<16x256xf32> -> vector<16x256xf32>
    %c1_238 = arith.constant 1 : index
    %c0_239 = arith.constant 0 : index
    %c0_240 = arith.constant 0 : index
    %731 = vector.load %arg14[%c1_238, %c0_239, %c0_240] : memref<2x1x256xf32, #tpu.memory_space<vmem>>, vector<1x1x256xf32>
    %732 = vector.shape_cast %731 : vector<1x1x256xf32> to vector<1x256xf32>
    %733 = vector.broadcast %732 : vector<1x256xf32> to vector<16x256xf32>
    %734 = arith.addf %730, %733 : vector<16x256xf32>
    %735 = vector.extract_strided_slice %734 {offsets = [0, 0], sizes = [16, 128], strides = [1, 1]} : vector<16x256xf32> to vector<16x128xf32>
    %736 = vector.extract_strided_slice %734 {offsets = [0, 128], sizes = [16, 128], strides = [1, 1]} : vector<16x256xf32> to vector<16x128xf32>
    %737 = vector.extract_strided_slice %726 {offsets = [0, 0], sizes = [8, 128], strides = [1, 1]} : vector<16x128xf32> to vector<8x128xf32>
    %cst_241 = arith.constant 0.176776692 : f32
    %738 = vector.broadcast %cst_241 : f32 to vector<8x128xf32>
    %739 = arith.mulf %737, %738 : vector<8x128xf32>
    %740 = vector.extract_strided_slice %735 {offsets = [0, 0], sizes = [8, 128], strides = [1, 1]} : vector<16x128xf32> to vector<8x128xf32>
    %741 = vector.extract_strided_slice %736 {offsets = [0, 0], sizes = [8, 128], strides = [1, 1]} : vector<16x128xf32> to vector<8x128xf32>
    %742 = vector.extract_strided_slice %739 {offsets = [0, 0], sizes = [8, 32], strides = [1, 1]} : vector<8x128xf32> to vector<8x32xf32>
    %743 = arith.truncf %742 : vector<8x32xf32> to vector<8x32xbf16>
    %744 = vector.extract_strided_slice %740 {offsets = [0, 0], sizes = [8, 32], strides = [1, 1]} : vector<8x128xf32> to vector<8x32xf32>
    %745 = arith.truncf %744 : vector<8x32xf32> to vector<8x32xbf16>
    %746 = vector.extract_strided_slice %741 {offsets = [0, 0], sizes = [8, 32], strides = [1, 1]} : vector<8x128xf32> to vector<8x32xf32>
    %747 = arith.truncf %746 : vector<8x32xf32> to vector<8x32xbf16>
    %cst_242 = arith.constant dense<0.000000e+00> : vector<8x8xf32>
    %748 = tpu.matmul %743, %745, %cst_242 {dimension_numbers = #tpu.dot_dimension_numbers<[1], [1], [0], [0], [0, 0, 1, 0], [], []>} : vector<8x32xbf16>, vector<8x32xbf16>, vector<8x8xf32> -> vector<8x8xf32>
    %cst_243 = arith.constant dense<0xFF800000> : vector<8xf32>
    %749 = vector.multi_reduction <maximumf>, %748, %cst_243 [1] : vector<8x8xf32> to vector<8xf32>
    %750 = vector.shape_cast %749 : vector<8xf32> to vector<8x1xf32>
    %751 = vector.broadcast %750 : vector<8x1xf32> to vector<8x8xf32>
    %752 = arith.subf %748, %751 : vector<8x8xf32>
    %753 = math.exp %752 : vector<8x8xf32>
    %cst_244 = arith.constant dense<0.000000e+00> : vector<8xf32>
    %754 = vector.multi_reduction <add>, %753, %cst_244 [1] : vector<8x8xf32> to vector<8xf32>
    %755 = vector.shape_cast %754 : vector<8xf32> to vector<8x1xf32>
    %756 = tpu.reciprocal %755 {approx = true} : vector<8x1xf32> -> vector<8x1xf32>
    %757 = vector.broadcast %756 : vector<8x1xf32> to vector<8x8xf32>
    %758 = arith.mulf %753, %757 : vector<8x8xf32>
    %759 = arith.truncf %758 : vector<8x8xf32> to vector<8x8xbf16>
    %cst_245 = arith.constant dense<0.000000e+00> : vector<8x32xf32>
    %760 = tpu.matmul %759, %747, %cst_245 {dimension_numbers = #tpu.dot_dimension_numbers<[1], [0], [0], [1], [0, 0, 1, 1], [], []>} : vector<8x8xbf16>, vector<8x32xbf16>, vector<8x32xf32> -> vector<8x32xf32>
    %761 = vector.extract_strided_slice %739 {offsets = [0, 32], sizes = [8, 32], strides = [1, 1]} : vector<8x128xf32> to vector<8x32xf32>
    %762 = arith.truncf %761 : vector<8x32xf32> to vector<8x32xbf16>
    %763 = vector.extract_strided_slice %740 {offsets = [0, 32], sizes = [8, 32], strides = [1, 1]} : vector<8x128xf32> to vector<8x32xf32>
    %764 = arith.truncf %763 : vector<8x32xf32> to vector<8x32xbf16>
    %765 = vector.extract_strided_slice %741 {offsets = [0, 32], sizes = [8, 32], strides = [1, 1]} : vector<8x128xf32> to vector<8x32xf32>
    %766 = arith.truncf %765 : vector<8x32xf32> to vector<8x32xbf16>
    %cst_246 = arith.constant dense<0.000000e+00> : vector<8x8xf32>
    %767 = tpu.matmul %762, %764, %cst_246 {dimension_numbers = #tpu.dot_dimension_numbers<[1], [1], [0], [0], [0, 0, 1, 0], [], []>} : vector<8x32xbf16>, vector<8x32xbf16>, vector<8x8xf32> -> vector<8x8xf32>
    %cst_247 = arith.constant dense<0xFF800000> : vector<8xf32>
    %768 = vector.multi_reduction <maximumf>, %767, %cst_247 [1] : vector<8x8xf32> to vector<8xf32>
    %769 = vector.shape_cast %768 : vector<8xf32> to vector<8x1xf32>
    %770 = vector.broadcast %769 : vector<8x1xf32> to vector<8x8xf32>
    %771 = arith.subf %767, %770 : vector<8x8xf32>
    %772 = math.exp %771 : vector<8x8xf32>
    %cst_248 = arith.constant dense<0.000000e+00> : vector<8xf32>
    %773 = vector.multi_reduction <add>, %772, %cst_248 [1] : vector<8x8xf32> to vector<8xf32>
    %774 = vector.shape_cast %773 : vector<8xf32> to vector<8x1xf32>
    %775 = tpu.reciprocal %774 {approx = true} : vector<8x1xf32> -> vector<8x1xf32>
    %776 = vector.broadcast %775 : vector<8x1xf32> to vector<8x8xf32>
    %777 = arith.mulf %772, %776 : vector<8x8xf32>
    %778 = arith.truncf %777 : vector<8x8xf32> to vector<8x8xbf16>
    %cst_249 = arith.constant dense<0.000000e+00> : vector<8x32xf32>
    %779 = tpu.matmul %778, %766, %cst_249 {dimension_numbers = #tpu.dot_dimension_numbers<[1], [0], [0], [1], [0, 0, 1, 1], [], []>} : vector<8x8xbf16>, vector<8x32xbf16>, vector<8x32xf32> -> vector<8x32xf32>
    %780 = vector.extract_strided_slice %739 {offsets = [0, 64], sizes = [8, 32], strides = [1, 1]} : vector<8x128xf32> to vector<8x32xf32>
    %781 = arith.truncf %780 : vector<8x32xf32> to vector<8x32xbf16>
    %782 = vector.extract_strided_slice %740 {offsets = [0, 64], sizes = [8, 32], strides = [1, 1]} : vector<8x128xf32> to vector<8x32xf32>
    %783 = arith.truncf %782 : vector<8x32xf32> to vector<8x32xbf16>
    %784 = vector.extract_strided_slice %741 {offsets = [0, 64], sizes = [8, 32], strides = [1, 1]} : vector<8x128xf32> to vector<8x32xf32>
    %785 = arith.truncf %784 : vector<8x32xf32> to vector<8x32xbf16>
    %cst_250 = arith.constant dense<0.000000e+00> : vector<8x8xf32>
    %786 = tpu.matmul %781, %783, %cst_250 {dimension_numbers = #tpu.dot_dimension_numbers<[1], [1], [0], [0], [0, 0, 1, 0], [], []>} : vector<8x32xbf16>, vector<8x32xbf16>, vector<8x8xf32> -> vector<8x8xf32>
    %cst_251 = arith.constant dense<0xFF800000> : vector<8xf32>
    %787 = vector.multi_reduction <maximumf>, %786, %cst_251 [1] : vector<8x8xf32> to vector<8xf32>
    %788 = vector.shape_cast %787 : vector<8xf32> to vector<8x1xf32>
    %789 = vector.broadcast %788 : vector<8x1xf32> to vector<8x8xf32>
    %790 = arith.subf %786, %789 : vector<8x8xf32>
    %791 = math.exp %790 : vector<8x8xf32>
    %cst_252 = arith.constant dense<0.000000e+00> : vector<8xf32>
    %792 = vector.multi_reduction <add>, %791, %cst_252 [1] : vector<8x8xf32> to vector<8xf32>
    %793 = vector.shape_cast %792 : vector<8xf32> to vector<8x1xf32>
    %794 = tpu.reciprocal %793 {approx = true} : vector<8x1xf32> -> vector<8x1xf32>
    %795 = vector.broadcast %794 : vector<8x1xf32> to vector<8x8xf32>
    %796 = arith.mulf %791, %795 : vector<8x8xf32>
    %797 = arith.truncf %796 : vector<8x8xf32> to vector<8x8xbf16>
    %cst_253 = arith.constant dense<0.000000e+00> : vector<8x32xf32>
    %798 = tpu.matmul %797, %785, %cst_253 {dimension_numbers = #tpu.dot_dimension_numbers<[1], [0], [0], [1], [0, 0, 1, 1], [], []>} : vector<8x8xbf16>, vector<8x32xbf16>, vector<8x32xf32> -> vector<8x32xf32>
    %799 = vector.extract_strided_slice %739 {offsets = [0, 96], sizes = [8, 32], strides = [1, 1]} : vector<8x128xf32> to vector<8x32xf32>
    %800 = arith.truncf %799 : vector<8x32xf32> to vector<8x32xbf16>
    %801 = vector.extract_strided_slice %740 {offsets = [0, 96], sizes = [8, 32], strides = [1, 1]} : vector<8x128xf32> to vector<8x32xf32>
    %802 = arith.truncf %801 : vector<8x32xf32> to vector<8x32xbf16>
    %803 = vector.extract_strided_slice %741 {offsets = [0, 96], sizes = [8, 32], strides = [1, 1]} : vector<8x128xf32> to vector<8x32xf32>
    %804 = arith.truncf %803 : vector<8x32xf32> to vector<8x32xbf16>
    %cst_254 = arith.constant dense<0.000000e+00> : vector<8x8xf32>
    %805 = tpu.matmul %800, %802, %cst_254 {dimension_numbers = #tpu.dot_dimension_numbers<[1], [1], [0], [0], [0, 0, 1, 0], [], []>} : vector<8x32xbf16>, vector<8x32xbf16>, vector<8x8xf32> -> vector<8x8xf32>
    %cst_255 = arith.constant dense<0xFF800000> : vector<8xf32>
    %806 = vector.multi_reduction <maximumf>, %805, %cst_255 [1] : vector<8x8xf32> to vector<8xf32>
    %807 = vector.shape_cast %806 : vector<8xf32> to vector<8x1xf32>
    %808 = vector.broadcast %807 : vector<8x1xf32> to vector<8x8xf32>
    %809 = arith.subf %805, %808 : vector<8x8xf32>
    %810 = math.exp %809 : vector<8x8xf32>
    %cst_256 = arith.constant dense<0.000000e+00> : vector<8xf32>
    %811 = vector.multi_reduction <add>, %810, %cst_256 [1] : vector<8x8xf32> to vector<8xf32>
    %812 = vector.shape_cast %811 : vector<8xf32> to vector<8x1xf32>
    %813 = tpu.reciprocal %812 {approx = true} : vector<8x1xf32> -> vector<8x1xf32>
    %814 = vector.broadcast %813 : vector<8x1xf32> to vector<8x8xf32>
    %815 = arith.mulf %810, %814 : vector<8x8xf32>
    %816 = arith.truncf %815 : vector<8x8xf32> to vector<8x8xbf16>
    %cst_257 = arith.constant dense<0.000000e+00> : vector<8x32xf32>
    %817 = tpu.matmul %816, %804, %cst_257 {dimension_numbers = #tpu.dot_dimension_numbers<[1], [0], [0], [1], [0, 0, 1, 1], [], []>} : vector<8x8xbf16>, vector<8x32xbf16>, vector<8x32xf32> -> vector<8x32xf32>
    %818 = tpu.concatenate %760, %779, %798, %817 in 1 : vector<8x32xf32>, vector<8x32xf32>, vector<8x32xf32>, vector<8x32xf32> -> vector<8x128xf32>
    %819 = vector.extract_strided_slice %726 {offsets = [8, 0], sizes = [8, 128], strides = [1, 1]} : vector<16x128xf32> to vector<8x128xf32>
    %cst_258 = arith.constant 0.176776692 : f32
    %820 = vector.broadcast %cst_258 : f32 to vector<8x128xf32>
    %821 = arith.mulf %819, %820 : vector<8x128xf32>
    %822 = vector.extract_strided_slice %735 {offsets = [8, 0], sizes = [8, 128], strides = [1, 1]} : vector<16x128xf32> to vector<8x128xf32>
    %823 = vector.extract_strided_slice %736 {offsets = [8, 0], sizes = [8, 128], strides = [1, 1]} : vector<16x128xf32> to vector<8x128xf32>
    %824 = vector.extract_strided_slice %821 {offsets = [0, 0], sizes = [8, 32], strides = [1, 1]} : vector<8x128xf32> to vector<8x32xf32>
    %825 = arith.truncf %824 : vector<8x32xf32> to vector<8x32xbf16>
    %826 = vector.extract_strided_slice %822 {offsets = [0, 0], sizes = [8, 32], strides = [1, 1]} : vector<8x128xf32> to vector<8x32xf32>
    %827 = arith.truncf %826 : vector<8x32xf32> to vector<8x32xbf16>
    %828 = vector.extract_strided_slice %823 {offsets = [0, 0], sizes = [8, 32], strides = [1, 1]} : vector<8x128xf32> to vector<8x32xf32>
    %829 = arith.truncf %828 : vector<8x32xf32> to vector<8x32xbf16>
    %cst_259 = arith.constant dense<0.000000e+00> : vector<8x8xf32>
    %830 = tpu.matmul %825, %827, %cst_259 {dimension_numbers = #tpu.dot_dimension_numbers<[1], [1], [0], [0], [0, 0, 1, 0], [], []>} : vector<8x32xbf16>, vector<8x32xbf16>, vector<8x8xf32> -> vector<8x8xf32>
    %cst_260 = arith.constant dense<0xFF800000> : vector<8xf32>
    %831 = vector.multi_reduction <maximumf>, %830, %cst_260 [1] : vector<8x8xf32> to vector<8xf32>
    %832 = vector.shape_cast %831 : vector<8xf32> to vector<8x1xf32>
    %833 = vector.broadcast %832 : vector<8x1xf32> to vector<8x8xf32>
    %834 = arith.subf %830, %833 : vector<8x8xf32>
    %835 = math.exp %834 : vector<8x8xf32>
    %cst_261 = arith.constant dense<0.000000e+00> : vector<8xf32>
    %836 = vector.multi_reduction <add>, %835, %cst_261 [1] : vector<8x8xf32> to vector<8xf32>
    %837 = vector.shape_cast %836 : vector<8xf32> to vector<8x1xf32>
    %838 = tpu.reciprocal %837 {approx = true} : vector<8x1xf32> -> vector<8x1xf32>
    %839 = vector.broadcast %838 : vector<8x1xf32> to vector<8x8xf32>
    %840 = arith.mulf %835, %839 : vector<8x8xf32>
    %841 = arith.truncf %840 : vector<8x8xf32> to vector<8x8xbf16>
    %cst_262 = arith.constant dense<0.000000e+00> : vector<8x32xf32>
    %842 = tpu.matmul %841, %829, %cst_262 {dimension_numbers = #tpu.dot_dimension_numbers<[1], [0], [0], [1], [0, 0, 1, 1], [], []>} : vector<8x8xbf16>, vector<8x32xbf16>, vector<8x32xf32> -> vector<8x32xf32>
    %843 = vector.extract_strided_slice %821 {offsets = [0, 32], sizes = [8, 32], strides = [1, 1]} : vector<8x128xf32> to vector<8x32xf32>
    %844 = arith.truncf %843 : vector<8x32xf32> to vector<8x32xbf16>
    %845 = vector.extract_strided_slice %822 {offsets = [0, 32], sizes = [8, 32], strides = [1, 1]} : vector<8x128xf32> to vector<8x32xf32>
    %846 = arith.truncf %845 : vector<8x32xf32> to vector<8x32xbf16>
    %847 = vector.extract_strided_slice %823 {offsets = [0, 32], sizes = [8, 32], strides = [1, 1]} : vector<8x128xf32> to vector<8x32xf32>
    %848 = arith.truncf %847 : vector<8x32xf32> to vector<8x32xbf16>
    %cst_263 = arith.constant dense<0.000000e+00> : vector<8x8xf32>
    %849 = tpu.matmul %844, %846, %cst_263 {dimension_numbers = #tpu.dot_dimension_numbers<[1], [1], [0], [0], [0, 0, 1, 0], [], []>} : vector<8x32xbf16>, vector<8x32xbf16>, vector<8x8xf32> -> vector<8x8xf32>
    %cst_264 = arith.constant dense<0xFF800000> : vector<8xf32>
    %850 = vector.multi_reduction <maximumf>, %849, %cst_264 [1] : vector<8x8xf32> to vector<8xf32>
    %851 = vector.shape_cast %850 : vector<8xf32> to vector<8x1xf32>
    %852 = vector.broadcast %851 : vector<8x1xf32> to vector<8x8xf32>
    %853 = arith.subf %849, %852 : vector<8x8xf32>
    %854 = math.exp %853 : vector<8x8xf32>
    %cst_265 = arith.constant dense<0.000000e+00> : vector<8xf32>
    %855 = vector.multi_reduction <add>, %854, %cst_265 [1] : vector<8x8xf32> to vector<8xf32>
    %856 = vector.shape_cast %855 : vector<8xf32> to vector<8x1xf32>
    %857 = tpu.reciprocal %856 {approx = true} : vector<8x1xf32> -> vector<8x1xf32>
    %858 = vector.broadcast %857 : vector<8x1xf32> to vector<8x8xf32>
    %859 = arith.mulf %854, %858 : vector<8x8xf32>
    %860 = arith.truncf %859 : vector<8x8xf32> to vector<8x8xbf16>
    %cst_266 = arith.constant dense<0.000000e+00> : vector<8x32xf32>
    %861 = tpu.matmul %860, %848, %cst_266 {dimension_numbers = #tpu.dot_dimension_numbers<[1], [0], [0], [1], [0, 0, 1, 1], [], []>} : vector<8x8xbf16>, vector<8x32xbf16>, vector<8x32xf32> -> vector<8x32xf32>
    %862 = vector.extract_strided_slice %821 {offsets = [0, 64], sizes = [8, 32], strides = [1, 1]} : vector<8x128xf32> to vector<8x32xf32>
    %863 = arith.truncf %862 : vector<8x32xf32> to vector<8x32xbf16>
    %864 = vector.extract_strided_slice %822 {offsets = [0, 64], sizes = [8, 32], strides = [1, 1]} : vector<8x128xf32> to vector<8x32xf32>
    %865 = arith.truncf %864 : vector<8x32xf32> to vector<8x32xbf16>
    %866 = vector.extract_strided_slice %823 {offsets = [0, 64], sizes = [8, 32], strides = [1, 1]} : vector<8x128xf32> to vector<8x32xf32>
    %867 = arith.truncf %866 : vector<8x32xf32> to vector<8x32xbf16>
    %cst_267 = arith.constant dense<0.000000e+00> : vector<8x8xf32>
    %868 = tpu.matmul %863, %865, %cst_267 {dimension_numbers = #tpu.dot_dimension_numbers<[1], [1], [0], [0], [0, 0, 1, 0], [], []>} : vector<8x32xbf16>, vector<8x32xbf16>, vector<8x8xf32> -> vector<8x8xf32>
    %cst_268 = arith.constant dense<0xFF800000> : vector<8xf32>
    %869 = vector.multi_reduction <maximumf>, %868, %cst_268 [1] : vector<8x8xf32> to vector<8xf32>
    %870 = vector.shape_cast %869 : vector<8xf32> to vector<8x1xf32>
    %871 = vector.broadcast %870 : vector<8x1xf32> to vector<8x8xf32>
    %872 = arith.subf %868, %871 : vector<8x8xf32>
    %873 = math.exp %872 : vector<8x8xf32>
    %cst_269 = arith.constant dense<0.000000e+00> : vector<8xf32>
    %874 = vector.multi_reduction <add>, %873, %cst_269 [1] : vector<8x8xf32> to vector<8xf32>
    %875 = vector.shape_cast %874 : vector<8xf32> to vector<8x1xf32>
    %876 = tpu.reciprocal %875 {approx = true} : vector<8x1xf32> -> vector<8x1xf32>
    %877 = vector.broadcast %876 : vector<8x1xf32> to vector<8x8xf32>
    %878 = arith.mulf %873, %877 : vector<8x8xf32>
    %879 = arith.truncf %878 : vector<8x8xf32> to vector<8x8xbf16>
    %cst_270 = arith.constant dense<0.000000e+00> : vector<8x32xf32>
    %880 = tpu.matmul %879, %867, %cst_270 {dimension_numbers = #tpu.dot_dimension_numbers<[1], [0], [0], [1], [0, 0, 1, 1], [], []>} : vector<8x8xbf16>, vector<8x32xbf16>, vector<8x32xf32> -> vector<8x32xf32>
    %881 = vector.extract_strided_slice %821 {offsets = [0, 96], sizes = [8, 32], strides = [1, 1]} : vector<8x128xf32> to vector<8x32xf32>
    %882 = arith.truncf %881 : vector<8x32xf32> to vector<8x32xbf16>
    %883 = vector.extract_strided_slice %822 {offsets = [0, 96], sizes = [8, 32], strides = [1, 1]} : vector<8x128xf32> to vector<8x32xf32>
    %884 = arith.truncf %883 : vector<8x32xf32> to vector<8x32xbf16>
    %885 = vector.extract_strided_slice %823 {offsets = [0, 96], sizes = [8, 32], strides = [1, 1]} : vector<8x128xf32> to vector<8x32xf32>
    %886 = arith.truncf %885 : vector<8x32xf32> to vector<8x32xbf16>
    %cst_271 = arith.constant dense<0.000000e+00> : vector<8x8xf32>
    %887 = tpu.matmul %882, %884, %cst_271 {dimension_numbers = #tpu.dot_dimension_numbers<[1], [1], [0], [0], [0, 0, 1, 0], [], []>} : vector<8x32xbf16>, vector<8x32xbf16>, vector<8x8xf32> -> vector<8x8xf32>
    %cst_272 = arith.constant dense<0xFF800000> : vector<8xf32>
    %888 = vector.multi_reduction <maximumf>, %887, %cst_272 [1] : vector<8x8xf32> to vector<8xf32>
    %889 = vector.shape_cast %888 : vector<8xf32> to vector<8x1xf32>
    %890 = vector.broadcast %889 : vector<8x1xf32> to vector<8x8xf32>
    %891 = arith.subf %887, %890 : vector<8x8xf32>
    %892 = math.exp %891 : vector<8x8xf32>
    %cst_273 = arith.constant dense<0.000000e+00> : vector<8xf32>
    %893 = vector.multi_reduction <add>, %892, %cst_273 [1] : vector<8x8xf32> to vector<8xf32>
    %894 = vector.shape_cast %893 : vector<8xf32> to vector<8x1xf32>
    %895 = tpu.reciprocal %894 {approx = true} : vector<8x1xf32> -> vector<8x1xf32>
    %896 = vector.broadcast %895 : vector<8x1xf32> to vector<8x8xf32>
    %897 = arith.mulf %892, %896 : vector<8x8xf32>
    %898 = arith.truncf %897 : vector<8x8xf32> to vector<8x8xbf16>
    %cst_274 = arith.constant dense<0.000000e+00> : vector<8x32xf32>
    %899 = tpu.matmul %898, %886, %cst_274 {dimension_numbers = #tpu.dot_dimension_numbers<[1], [0], [0], [1], [0, 0, 1, 1], [], []>} : vector<8x8xbf16>, vector<8x32xbf16>, vector<8x32xf32> -> vector<8x32xf32>
    %900 = tpu.concatenate %842, %861, %880, %899 in 1 : vector<8x32xf32>, vector<8x32xf32>, vector<8x32xf32>, vector<8x32xf32> -> vector<8x128xf32>
    %901 = tpu.concatenate %818, %900 in 0 : vector<8x128xf32>, vector<8x128xf32> -> vector<16x128xf32>
    %c1_275 = arith.constant 1 : index
    %c0_276 = arith.constant 0 : index
    %c0_277 = arith.constant 0 : index
    %902 = vector.load %arg15[%c1_275, %c0_276, %c0_277] : memref<2x128x128xbf16, #tpu.memory_space<vmem>>, vector<1x128x128xbf16>
    %903 = vector.shape_cast %902 : vector<1x128x128xbf16> to vector<128x128xbf16>
    %904 = arith.truncf %901 : vector<16x128xf32> to vector<16x128xbf16>
    %cst_278 = arith.constant dense<0.000000e+00> : vector<16x128xf32>
    %905 = tpu.matmul %904, %903, %cst_278 {dimension_numbers = #tpu.dot_dimension_numbers<[1], [0], [0], [1], [0, 0, 1, 1], [], []>} : vector<16x128xbf16>, vector<128x128xbf16>, vector<16x128xf32> -> vector<16x128xf32>
    %c1_279 = arith.constant 1 : index
    %c0_280 = arith.constant 0 : index
    %c0_281 = arith.constant 0 : index
    %906 = vector.load %arg16[%c1_279, %c0_280, %c0_281] : memref<2x1x128xf32, #tpu.memory_space<vmem>>, vector<1x1x128xf32>
    %907 = vector.shape_cast %906 : vector<1x1x128xf32> to vector<1x128xf32>
    %908 = vector.broadcast %907 : vector<1x128xf32> to vector<16x128xf32>
    %909 = arith.addf %905, %908 : vector<16x128xf32>
    %910 = arith.addf %718, %909 : vector<16x128xf32>
    %c1_282 = arith.constant 1 : index
    %c0_283 = arith.constant 0 : index
    %c0_284 = arith.constant 0 : index
    %911 = vector.load %arg23[%c1_282, %c0_283, %c0_284] : memref<2x1x128xf32, #tpu.memory_space<vmem>>, vector<1x1x128xf32>
    %912 = vector.shape_cast %911 : vector<1x1x128xf32> to vector<1x128xf32>
    %c1_285 = arith.constant 1 : index
    %c0_286 = arith.constant 0 : index
    %c0_287 = arith.constant 0 : index
    %913 = vector.load %arg24[%c1_285, %c0_286, %c0_287] : memref<2x1x128xf32, #tpu.memory_space<vmem>>, vector<1x1x128xf32>
    %914 = vector.shape_cast %913 : vector<1x1x128xf32> to vector<1x128xf32>
    %cst_288 = arith.constant dense<0.000000e+00> : vector<16xf32>
    %915 = vector.multi_reduction <add>, %910, %cst_288 [1] : vector<16x128xf32> to vector<16xf32>
    %916 = vector.shape_cast %915 : vector<16xf32> to vector<16x1xf32>
    %cst_289 = arith.constant 1.280000e+02 : f32
    %917 = vector.broadcast %cst_289 : f32 to vector<16x1xf32>
    %918 = arith.divf %916, %917 : vector<16x1xf32>
    %919 = vector.broadcast %918 : vector<16x1xf32> to vector<16x128xf32>
    %920 = arith.subf %910, %919 : vector<16x128xf32>
    %921 = arith.mulf %920, %920 : vector<16x128xf32>
    %cst_290 = arith.constant dense<0.000000e+00> : vector<16xf32>
    %922 = vector.multi_reduction <add>, %921, %cst_290 [1] : vector<16x128xf32> to vector<16xf32>
    %923 = vector.shape_cast %922 : vector<16xf32> to vector<16x1xf32>
    %cst_291 = arith.constant 1.280000e+02 : f32
    %924 = vector.broadcast %cst_291 : f32 to vector<16x1xf32>
    %925 = arith.divf %923, %924 : vector<16x1xf32>
    %cst_292 = arith.constant 9.99999974E-6 : f32
    %926 = vector.broadcast %cst_292 : f32 to vector<16x1xf32>
    %927 = arith.addf %925, %926 : vector<16x1xf32>
    %928 = math.rsqrt %927 : vector<16x1xf32>
    %929 = vector.broadcast %928 : vector<16x1xf32> to vector<16x128xf32>
    %930 = arith.mulf %920, %929 : vector<16x128xf32>
    %931 = vector.broadcast %912 : vector<1x128xf32> to vector<16x128xf32>
    %932 = arith.mulf %930, %931 : vector<16x128xf32>
    %933 = vector.broadcast %914 : vector<1x128xf32> to vector<16x128xf32>
    %934 = arith.addf %932, %933 : vector<16x128xf32>
    %c1_293 = arith.constant 1 : index
    %c0_294 = arith.constant 0 : index
    %c0_295 = arith.constant 0 : index
    %935 = vector.load %arg17[%c1_293, %c0_294, %c0_295] : memref<2x128x128xbf16, #tpu.memory_space<vmem>>, vector<1x128x128xbf16>
    %936 = vector.shape_cast %935 : vector<1x128x128xbf16> to vector<128x128xbf16>
    %937 = arith.truncf %934 : vector<16x128xf32> to vector<16x128xbf16>
    %cst_296 = arith.constant dense<0.000000e+00> : vector<16x128xf32>
    %938 = tpu.matmul %937, %936, %cst_296 {dimension_numbers = #tpu.dot_dimension_numbers<[1], [0], [0], [1], [0, 0, 1, 1], [], []>} : vector<16x128xbf16>, vector<128x128xbf16>, vector<16x128xf32> -> vector<16x128xf32>
    %c1_297 = arith.constant 1 : index
    %c0_298 = arith.constant 0 : index
    %c0_299 = arith.constant 0 : index
    %939 = vector.load %arg18[%c1_297, %c0_298, %c0_299] : memref<2x1x128xf32, #tpu.memory_space<vmem>>, vector<1x1x128xf32>
    %940 = vector.shape_cast %939 : vector<1x1x128xf32> to vector<1x128xf32>
    %941 = vector.broadcast %940 : vector<1x128xf32> to vector<16x128xf32>
    %942 = arith.addf %938, %941 : vector<16x128xf32>
    %cst_300 = arith.constant 0.000000e+00 : f32
    %943 = vector.broadcast %cst_300 : f32 to vector<16x128xf32>
    %944 = arith.maximumf %942, %943 : vector<16x128xf32>
    %c1_301 = arith.constant 1 : index
    %c0_302 = arith.constant 0 : index
    %c0_303 = arith.constant 0 : index
    %945 = vector.load %arg19[%c1_301, %c0_302, %c0_303] : memref<2x128x128xbf16, #tpu.memory_space<vmem>>, vector<1x128x128xbf16>
    %946 = vector.shape_cast %945 : vector<1x128x128xbf16> to vector<128x128xbf16>
    %947 = arith.truncf %944 : vector<16x128xf32> to vector<16x128xbf16>
    %cst_304 = arith.constant dense<0.000000e+00> : vector<16x128xf32>
    %948 = tpu.matmul %947, %946, %cst_304 {dimension_numbers = #tpu.dot_dimension_numbers<[1], [0], [0], [1], [0, 0, 1, 1], [], []>} : vector<16x128xbf16>, vector<128x128xbf16>, vector<16x128xf32> -> vector<16x128xf32>
    %c1_305 = arith.constant 1 : index
    %c0_306 = arith.constant 0 : index
    %c0_307 = arith.constant 0 : index
    %949 = vector.load %arg20[%c1_305, %c0_306, %c0_307] : memref<2x1x128xf32, #tpu.memory_space<vmem>>, vector<1x1x128xf32>
    %950 = vector.shape_cast %949 : vector<1x1x128xf32> to vector<1x128xf32>
    %951 = vector.broadcast %950 : vector<1x128xf32> to vector<16x128xf32>
    %952 = arith.addf %948, %951 : vector<16x128xf32>
    %953 = arith.addf %934, %952 : vector<16x128xf32>
    %c1_308 = arith.constant 1 : index
    %c0_309 = arith.constant 0 : index
    %c0_310 = arith.constant 0 : index
    %954 = vector.load %arg25[%c1_308, %c0_309, %c0_310] : memref<2x1x128xf32, #tpu.memory_space<vmem>>, vector<1x1x128xf32>
    %955 = vector.shape_cast %954 : vector<1x1x128xf32> to vector<1x128xf32>
    %c1_311 = arith.constant 1 : index
    %c0_312 = arith.constant 0 : index
    %c0_313 = arith.constant 0 : index
    %956 = vector.load %arg26[%c1_311, %c0_312, %c0_313] : memref<2x1x128xf32, #tpu.memory_space<vmem>>, vector<1x1x128xf32>
    %957 = vector.shape_cast %956 : vector<1x1x128xf32> to vector<1x128xf32>
    %cst_314 = arith.constant dense<0.000000e+00> : vector<16xf32>
    %958 = vector.multi_reduction <add>, %953, %cst_314 [1] : vector<16x128xf32> to vector<16xf32>
    %959 = vector.shape_cast %958 : vector<16xf32> to vector<16x1xf32>
    %cst_315 = arith.constant 1.280000e+02 : f32
    %960 = vector.broadcast %cst_315 : f32 to vector<16x1xf32>
    %961 = arith.divf %959, %960 : vector<16x1xf32>
    %962 = vector.broadcast %961 : vector<16x1xf32> to vector<16x128xf32>
    %963 = arith.subf %953, %962 : vector<16x128xf32>
    %964 = arith.mulf %963, %963 : vector<16x128xf32>
    %cst_316 = arith.constant dense<0.000000e+00> : vector<16xf32>
    %965 = vector.multi_reduction <add>, %964, %cst_316 [1] : vector<16x128xf32> to vector<16xf32>
    %966 = vector.shape_cast %965 : vector<16xf32> to vector<16x1xf32>
    %cst_317 = arith.constant 1.280000e+02 : f32
    %967 = vector.broadcast %cst_317 : f32 to vector<16x1xf32>
    %968 = arith.divf %966, %967 : vector<16x1xf32>
    %cst_318 = arith.constant 9.99999974E-6 : f32
    %969 = vector.broadcast %cst_318 : f32 to vector<16x1xf32>
    %970 = arith.addf %968, %969 : vector<16x1xf32>
    %971 = math.rsqrt %970 : vector<16x1xf32>
    %972 = vector.broadcast %971 : vector<16x1xf32> to vector<16x128xf32>
    %973 = arith.mulf %963, %972 : vector<16x128xf32>
    %974 = vector.broadcast %955 : vector<1x128xf32> to vector<16x128xf32>
    %975 = arith.mulf %973, %974 : vector<16x128xf32>
    %976 = vector.broadcast %957 : vector<1x128xf32> to vector<16x128xf32>
    %977 = arith.addf %975, %976 : vector<16x128xf32>
    %c0_319 = arith.constant 0 : index
    %c0_320 = arith.constant 0 : index
    %978 = vector.load %arg27[%c0_319, %c0_320] : memref<128x128xbf16, #tpu.memory_space<vmem>>, vector<128x128xbf16>
    %979 = arith.truncf %977 : vector<16x128xf32> to vector<16x128xbf16>
    %cst_321 = arith.constant dense<0.000000e+00> : vector<16x128xf32>
    %980 = tpu.matmul %979, %978, %cst_321 {dimension_numbers = #tpu.dot_dimension_numbers<[1], [0], [0], [1], [0, 0, 1, 1], [], []>} : vector<16x128xbf16>, vector<128x128xbf16>, vector<16x128xf32> -> vector<16x128xf32>
    %c0_322 = arith.constant 0 : index
    %c0_323 = arith.constant 0 : index
    %981 = vector.load %arg28[%c0_322, %c0_323] : memref<1x128xf32, #tpu.memory_space<vmem>>, vector<1x128xf32>
    %982 = vector.broadcast %981 : vector<1x128xf32> to vector<16x128xf32>
    %983 = arith.addf %980, %982 : vector<16x128xf32>
    %c0_324 = arith.constant 0 : index
    %c0_325 = arith.constant 0 : index
    %984 = vector.load %arg29[%c0_324, %c0_325] : memref<16x128xf32, #tpu.memory_space<vmem>>, vector<16x128xf32>
    tpu.vector_store %arg29[%c0_324, %c0_325], %983 {strides = array<i32>} : memref<16x128xf32, #tpu.memory_space<vmem>>, vector<16x128xf32>,
    return
  }
}

</mosaic_0001>

<llo_original>
// kernel: forward.1
$region0: #{forward.1}
  #allocation0 [shape = 'u32[]', space=smem, size = 0x4, offset = 0x4, fixed_abs, tag = 'smem constant byte address 0x4 - core index']
  #allocation1 [shape = 'u32[144,128]{1,0:T(1,128)}', space=vmem, size = 0x12000, scoped, tag = 'internal scratch']
  %s0 = inlined_call_operand.smem [shape: u32[30], index: -1, kind: input, shape index: {}]
  %s1 = sld [smem:[%s0]]
  %s2 = scalar_lea.smem %s0, 1
  %s3 = sld [smem:[%s2]]
  %s4 = scalar_lea.smem %s0, 2
  %s5 = sld [smem:[%s4]]
  %s6 = scalar_lea.smem %s0, 3
  %s7 = sld [smem:[%s6]]
  %s8 = scalar_lea.smem %s0, 4
  %s9 = sld [smem:[%s8]]
  %s10 = scalar_lea.smem %s0, 5
  %s11 = sld [smem:[%s10]]
  %s12 = scalar_lea.smem %s0, 6
  %s13 = sld [smem:[%s12]]
  %s14 = scalar_lea.smem %s0, 7
  %s15 = sld [smem:[%s14]]
  %s16 = scalar_lea.smem %s0, 8
  %s17 = sld [smem:[%s16]]
  %s18 = scalar_lea.smem %s0, 9
  %s19 = sld [smem:[%s18]]
  %s20 = scalar_lea.smem %s0, 10
  %s21 = sld [smem:[%s20]]
  %s22 = scalar_lea.smem %s0, 11
  %s23 = sld [smem:[%s22]]
  %s24 = scalar_lea.smem %s0, 12
  %s25 = sld [smem:[%s24]]
  %s26 = scalar_lea.smem %s0, 13
  %s27 = sld [smem:[%s26]]
  %s28 = scalar_lea.smem %s0, 14
  %s29 = sld [smem:[%s28]]
  %s30 = scalar_lea.smem %s0, 15
  %s31 = sld [smem:[%s30]]
  %s32 = scalar_lea.smem %s0, 16
  %s33 = sld [smem:[%s32]]
  %s34 = scalar_lea.smem %s0, 17
  %s35 = sld [smem:[%s34]]
  %s36 = scalar_lea.smem %s0, 18
  %s37 = sld [smem:[%s36]]
  %s38 = scalar_lea.smem %s0, 19
  %s39 = sld [smem:[%s38]]
  %s40 = scalar_lea.smem %s0, 20
  %s41 = sld [smem:[%s40]]
  %s42 = scalar_lea.smem %s0, 21
  %s43 = sld [smem:[%s42]]
  %s44 = scalar_lea.smem %s0, 22
  %s45 = sld [smem:[%s44]]
  %s46 = scalar_lea.smem %s0, 23
  %s47 = sld [smem:[%s46]]
  %s48 = scalar_lea.smem %s0, 24
  %s49 = sld [smem:[%s48]]
  %s50 = scalar_lea.smem %s0, 25
  %s51 = sld [smem:[%s50]]
  %s52 = scalar_lea.smem %s0, 26
  %s53 = sld [smem:[%s52]]
  %s54 = scalar_lea.smem %s0, 27
  %s55 = sld [smem:[%s54]]
  %s56 = scalar_lea.smem %s0, 28
  %s57 = sld [smem:[%s56]]
  %s58 = scalar_lea.smem %s0, 29
  %s59 = sld [smem:[%s58]]
  %s60 = sld [smem:[#allocation0]]
  $region202: #{forward.1} parent=0
    _
  %s62 = ssub.s32 1, %s60
  %s63 = scalar_select 0, %s62, %s60
  $region1: #{forward.1} parent=0
    #allocation2 [shape = 'u8[8192]{0}', space=vmem, size = 0x2000, scoped, tag = 'input window, operand 2, single buffered']
    #allocation3 [shape = 's32[1]{0}', space=sflag, size = 0x4, scoped, tag = 'scoped memory for forward.1']
    #allocation4 [shape = 'u8[32768]{0}', space=vmem, size = 0x8000, scoped, tag = 'input window, operand 3, single buffered']
    #allocation5 [shape = 's32[1]{0}', space=sflag, size = 0x4, scoped, tag = 'scoped memory for forward.1']
    #allocation6 [shape = 'u8[32768]{0}', space=vmem, size = 0x8000, scoped, tag = 'input window, operand 5, single buffered']
    #allocation7 [shape = 'u8[512]{0}', space=vmem, size = 0x400, scoped, tag = 'input window, operand 6, single buffered']
    #allocation8 [shape = 's32[1]{0}', space=sflag, size = 0x4, scoped, tag = 'scoped memory for forward.1']
    #allocation9 [shape = 'u8[3072]{0}', space=vmem, size = 0xc00, scoped, tag = 'input window, operand 8, single buffered']
    #allocation10 [shape = 'u8[1024]{0}', space=vmem, size = 0x400, scoped, tag = 'input window, operand 10, single buffered']
    #allocation11 [shape = 's32[1]{0}', space=sflag, size = 0x4, scoped, tag = 'scoped memory for forward.1']
    #allocation12 [shape = 'u8[1024]{0}', space=vmem, size = 0x400, scoped, tag = 'input window, operand 12, single buffered']
    #allocation13 [shape = 'u8[65536]{0}', space=vmem, size = 0x10000, scoped, tag = 'input window, operand 17, single buffered']
    #allocation14 [shape = 's32[1]{0}', space=sflag, size = 0x4, scoped, tag = 'scoped memory for forward.1']
    #allocation15 [shape = 'u8[1024]{0}', space=vmem, size = 0x400, scoped, tag = 'input window, operand 18, single buffered']
    #allocation16 [shape = 'u8[65536]{0}', space=vmem, size = 0x10000, scoped, tag = 'input window, operand 19, single buffered']
    #allocation17 [shape = 's32[1]{0}', space=sflag, size = 0x4, scoped, tag = 'scoped memory for forward.1']
    #allocation18 [shape = 'u8[1024]{0}', space=vmem, size = 0x400, scoped, tag = 'input window, operand 20, single buffered']
    #allocation19 [shape = 'u8[1024]{0}', space=vmem, size = 0x400, scoped, tag = 'input window, operand 21, single buffered']
    #allocation20 [shape = 's32[1]{0}', space=sflag, size = 0x4, scoped, tag = 'scoped memory for forward.1']
    #allocation21 [shape = 'u8[1024]{0}', space=vmem, size = 0x400, scoped, tag = 'input window, operand 22, single buffered']
    #allocation22 [shape = 'u8[1024]{0}', space=vmem, size = 0x400, scoped, tag = 'input window, operand 23, single buffered']
    #allocation23 [shape = 's32[1]{0}', space=sflag, size = 0x4, scoped, tag = 'scoped memory for forward.1']
    #allocation24 [shape = 'u8[1024]{0}', space=vmem, size = 0x400, scoped, tag = 'input window, operand 24, single buffered']
    #allocation25 [shape = 'u8[1024]{0}', space=vmem, size = 0x400, scoped, tag = 'input window, operand 25, single buffered']
    #allocation26 [shape = 's32[1]{0}', space=sflag, size = 0x4, scoped, tag = 'scoped memory for forward.1']
    #allocation27 [shape = 'u8[1024]{0}', space=vmem, size = 0x400, scoped, tag = 'input window, operand 26, single buffered']
    #allocation28 [shape = 'u8[32768]{0}', space=vmem, size = 0x8000, scoped, tag = 'input window, operand 27, single buffered']
    #allocation29 [shape = 's32[1]{0}', space=sflag, size = 0x4, scoped, tag = 'scoped memory for forward.1']
    #allocation30 [shape = 'u8[512]{0}', space=vmem, size = 0x400, scoped, tag = 'input window, operand 28, single buffered']
    %64 = vsyncpa [#allocation3], 0
    %65 = vsyncpa [#allocation5], 0
    %66 = vsyncpa [#allocation8], 0
    %67 = vsyncpa [#allocation11], 0
    %68 = vsyncpa [#allocation14], 0
    %69 = vsyncpa [#allocation17], 0
    %70 = vsyncpa [#allocation20], 0
    %71 = vsyncpa [#allocation23], 0
    %72 = vsyncpa [#allocation26], 0
    %73 = vsyncpa [#allocation29], 0
    // Predicated region
    $region2: #{forward.1} parent=1 // pred_check
      _
    $region3: #{forward.1} parent=1 // pred_check_branch
      %75 = sbr.rel (0) target = $region5
    $region4: #{forward.1} parent=1 // pred_region
      _
    $region5: #{forward.1} parent=1 // pred_fallthru
      _
    // Predicated region
    $region6: #{forward.1} parent=1 // pred_check
      _
    $region7: #{forward.1} parent=1 // pred_check_branch
      %77 = sbr.rel (0) target = $region9
    $region8: #{forward.1} parent=1 // pred_region
      _
    $region9: #{forward.1} parent=1 // pred_fallthru
      _
    // Predicated region
    $region10: #{forward.1} parent=1 // pred_check
      _
    $region11: #{forward.1} parent=1 // pred_check_branch
      %79 = sbr.rel (0) target = $region13
    $region12: #{forward.1} parent=1 // pred_region
      %s81 = ssub.s32 256, 256
      %82 = vsyncadd [#allocation3], %s81
      %s83 = sshll.u32 [#allocation2], 4
      %s84 = int_to_ptr.vmem [resolvable:$true] %s83
      %89 = dma.hbm_to_vmem [thread:$0]  %s5, 256, %s84, [#allocation3], 128, 128, 8
    $region13: #{forward.1} parent=1 // pred_fallthru
      _
    // Predicated region
    $region14: #{forward.1} parent=1 // pred_check
      _
    $region15: #{forward.1} parent=1 // pred_check_branch
      %91 = sbr.rel (0) target = $region17
    $region16: #{forward.1} parent=1 // pred_region
      %s93 = ssub.s32 1024, 1024
      %94 = vsyncadd [#allocation5], %s93
      %s95 = sshll.u32 [#allocation4], 4
      %s96 = int_to_ptr.vmem [resolvable:$true] %s95
      %101 = dma.hbm_to_vmem [thread:$0]  %s7, 1024, %s96, [#allocation5], 64, 64, 4
    $region17: #{forward.1} parent=1 // pred_fallthru
      _
    // Predicated region
    $region18: #{forward.1} parent=1 // pred_check
      _
    $region19: #{forward.1} parent=1 // pred_check_branch
      %103 = sbr.rel (0) target = $region21
    $region20: #{forward.1} parent=1 // pred_region
      _
    $region21: #{forward.1} parent=1 // pred_fallthru
      _
    // Predicated region
    $region22: #{forward.1} parent=1 // pred_check
      _
    $region23: #{forward.1} parent=1 // pred_check_branch
      %105 = sbr.rel (0) target = $region25
    $region24: #{forward.1} parent=1 // pred_region
      %s107 = ssub.s32 1024, 1024
      %108 = vsyncadd [#allocation5], %s107
      %s109 = sshll.u32 [#allocation6], 4
      %s110 = int_to_ptr.vmem [resolvable:$true] %s109
      %115 = dma.hbm_to_vmem [thread:$0]  %s11, 1024, %s110, [#allocation5], 64, 64, 4
    $region25: #{forward.1} parent=1 // pred_fallthru
      _
    // Predicated region
    $region26: #{forward.1} parent=1 // pred_check
      _
    $region27: #{forward.1} parent=1 // pred_check_branch
      %117 = sbr.rel (0) target = $region29
    $region28: #{forward.1} parent=1 // pred_region
      %s119 = ssub.s32 16, 16
      %120 = vsyncadd [#allocation8], %s119
      %s122 = sshll.u32 [#allocation7], 4
      %s123 = int_to_ptr.vmem [resolvable:$true] %s122
      %125 = dma.hbm_to_vmem [thread:$0]  %s13, 16, %s123, [#allocation8]
    $region29: #{forward.1} parent=1 // pred_fallthru
      _
    // Predicated region
    $region30: #{forward.1} parent=1 // pred_check
      _
    $region31: #{forward.1} parent=1 // pred_check_branch
      %127 = sbr.rel (0) target = $region33
    $region32: #{forward.1} parent=1 // pred_region
      _
    $region33: #{forward.1} parent=1 // pred_fallthru
      _
    // Predicated region
    $region34: #{forward.1} parent=1 // pred_check
      _
    $region35: #{forward.1} parent=1 // pred_check_branch
      %129 = sbr.rel (0) target = $region37
    $region36: #{forward.1} parent=1 // pred_region
      %s131 = ssub.s32 96, 96
      %132 = vsyncadd [#allocation8], %s131
      %s133 = sshll.u32 [#allocation9], 4
      %s134 = int_to_ptr.vmem [resolvable:$true] %s133
      %139 = dma.hbm_to_vmem [thread:$0]  %s17, 96, %s134, [#allocation8], 48, 48, 3
    $region37: #{forward.1} parent=1 // pred_fallthru
      _
    // Predicated region
    $region38: #{forward.1} parent=1 // pred_check
      _
    $region39: #{forward.1} parent=1 // pred_check_branch
      %141 = sbr.rel (0) target = $region41
    $region40: #{forward.1} parent=1 // pred_region
      _
    $region41: #{forward.1} parent=1 // pred_fallthru
      _
    // Predicated region
    $region42: #{forward.1} parent=1 // pred_check
      _
    $region43: #{forward.1} parent=1 // pred_check_branch
      %143 = sbr.rel (0) target = $region45
    $region44: #{forward.1} parent=1 // pred_region
      %s145 = ssub.s32 32, 32
      %146 = vsyncadd [#allocation11], %s145
      %s147 = sshll.u32 [#allocation10], 4
      %s148 = int_to_ptr.vmem [resolvable:$true] %s147
      %153 = dma.hbm_to_vmem [thread:$0]  %s21, 32, %s148, [#allocation11], 16, 16, 1
    $region45: #{forward.1} parent=1 // pred_fallthru
      _
    // Predicated region
    $region46: #{forward.1} parent=1 // pred_check
      _
    $region47: #{forward.1} parent=1 // pred_check_branch
      %155 = sbr.rel (0) target = $region49
    $region48: #{forward.1} parent=1 // pred_region
      _
    $region49: #{forward.1} parent=1 // pred_fallthru
      _
    // Predicated region
    $region50: #{forward.1} parent=1 // pred_check
      _
    $region51: #{forward.1} parent=1 // pred_check_branch
      %157 = sbr.rel (0) target = $region53
    $region52: #{forward.1} parent=1 // pred_region
      %s159 = ssub.s32 32, 32
      %160 = vsyncadd [#allocation11], %s159
      %s161 = sshll.u32 [#allocation12], 4
      %s162 = int_to_ptr.vmem [resolvable:$true] %s161
      %167 = dma.hbm_to_vmem [thread:$0]  %s25, 32, %s162, [#allocation11], 16, 16, 1
    $region53: #{forward.1} parent=1 // pred_fallthru
      _
    // Predicated region
    $region54: #{forward.1} parent=1 // pred_check
      _
    $region55: #{forward.1} parent=1 // pred_check_branch
      %169 = sbr.rel (0) target = $region57
    $region56: #{forward.1} parent=1 // pred_region
      _
    $region57: #{forward.1} parent=1 // pred_fallthru
      _
    // Predicated region
    $region58: #{forward.1} parent=1 // pred_check
      _
    $region59: #{forward.1} parent=1 // pred_check_branch
      %171 = sbr.rel (0) target = $region61
    $region60: #{forward.1} parent=1 // pred_region
      _
    $region61: #{forward.1} parent=1 // pred_fallthru
      _
    // Predicated region
    $region62: #{forward.1} parent=1 // pred_check
      _
    $region63: #{forward.1} parent=1 // pred_check_branch
      %173 = sbr.rel (0) target = $region65
    $region64: #{forward.1} parent=1 // pred_region
      _
    $region65: #{forward.1} parent=1 // pred_fallthru
      _
    // Predicated region
    $region66: #{forward.1} parent=1 // pred_check
      _
    $region67: #{forward.1} parent=1 // pred_check_branch
      %175 = sbr.rel (0) target = $region69
    $region68: #{forward.1} parent=1 // pred_region
      _
    $region69: #{forward.1} parent=1 // pred_fallthru
      _
    // Predicated region
    $region70: #{forward.1} parent=1 // pred_check
      _
    $region71: #{forward.1} parent=1 // pred_check_branch
      %177 = sbr.rel (0) target = $region73
    $region72: #{forward.1} parent=1 // pred_region
      %s179 = ssub.s32 2048, 2048
      %180 = vsyncadd [#allocation14], %s179
      %s181 = sshll.u32 [#allocation13], 4
      %s182 = int_to_ptr.vmem [resolvable:$true] %s181
      %187 = dma.hbm_to_vmem [thread:$0]  %s35, 2048, %s182, [#allocation14], 64, 64, 4
    $region73: #{forward.1} parent=1 // pred_fallthru
      _
    // Predicated region
    $region74: #{forward.1} parent=1 // pred_check
      _
    $region75: #{forward.1} parent=1 // pred_check_branch
      %189 = sbr.rel (0) target = $region77
    $region76: #{forward.1} parent=1 // pred_region
      %s191 = ssub.s32 32, 32
      %192 = vsyncadd [#allocation14], %s191
      %s193 = sshll.u32 [#allocation15], 4
      %s194 = int_to_ptr.vmem [resolvable:$true] %s193
      %199 = dma.hbm_to_vmem [thread:$0]  %s37, 32, %s194, [#allocation14], 16, 16, 1
    $region77: #{forward.1} parent=1 // pred_fallthru
      _
    // Predicated region
    $region78: #{forward.1} parent=1 // pred_check
      _
    $region79: #{forward.1} parent=1 // pred_check_branch
      %201 = sbr.rel (0) target = $region81
    $region80: #{forward.1} parent=1 // pred_region
      %s203 = ssub.s32 2048, 2048
      %204 = vsyncadd [#allocation17], %s203
      %s205 = sshll.u32 [#allocation16], 4
      %s206 = int_to_ptr.vmem [resolvable:$true] %s205
      %211 = dma.hbm_to_vmem [thread:$0]  %s39, 2048, %s206, [#allocation17], 64, 64, 4
    $region81: #{forward.1} parent=1 // pred_fallthru
      _
    // Predicated region
    $region82: #{forward.1} parent=1 // pred_check
      _
    $region83: #{forward.1} parent=1 // pred_check_branch
      %213 = sbr.rel (0) target = $region85
    $region84: #{forward.1} parent=1 // pred_region
      %s215 = ssub.s32 32, 32
      %216 = vsyncadd [#allocation17], %s215
      %s217 = sshll.u32 [#allocation18], 4
      %s218 = int_to_ptr.vmem [resolvable:$true] %s217
      %223 = dma.hbm_to_vmem [thread:$0]  %s41, 32, %s218, [#allocation17], 16, 16, 1
    $region85: #{forward.1} parent=1 // pred_fallthru
      _
    // Predicated region
    $region86: #{forward.1} parent=1 // pred_check
      _
    $region87: #{forward.1} parent=1 // pred_check_branch
      %225 = sbr.rel (0) target = $region89
    $region88: #{forward.1} parent=1 // pred_region
      %s227 = ssub.s32 32, 32
      %228 = vsyncadd [#allocation20], %s227
      %s229 = sshll.u32 [#allocation19], 4
      %s230 = int_to_ptr.vmem [resolvable:$true] %s229
      %235 = dma.hbm_to_vmem [thread:$0]  %s43, 32, %s230, [#allocation20], 16, 16, 1
    $region89: #{forward.1} parent=1 // pred_fallthru
      _
    // Predicated region
    $region90: #{forward.1} parent=1 // pred_check
      _
    $region91: #{forward.1} parent=1 // pred_check_branch
      %237 = sbr.rel (0) target = $region93
    $region92: #{forward.1} parent=1 // pred_region
      %s239 = ssub.s32 32, 32
      %240 = vsyncadd [#allocation20], %s239
      %s241 = sshll.u32 [#allocation21], 4
      %s242 = int_to_ptr.vmem [resolvable:$true] %s241
      %247 = dma.hbm_to_vmem [thread:$0]  %s45, 32, %s242, [#allocation20], 16, 16, 1
    $region93: #{forward.1} parent=1 // pred_fallthru
      _
    // Predicated region
    $region94: #{forward.1} parent=1 // pred_check
      _
    $region95: #{forward.1} parent=1 // pred_check_branch
      %249 = sbr.rel (0) target = $region97
    $region96: #{forward.1} parent=1 // pred_region
      %s251 = ssub.s32 32, 32
      %252 = vsyncadd [#allocation23], %s251
      %s253 = sshll.u32 [#allocation22], 4
      %s254 = int_to_ptr.vmem [resolvable:$true] %s253
      %259 = dma.hbm_to_vmem [thread:$0]  %s47, 32, %s254, [#allocation23], 16, 16, 1
    $region97: #{forward.1} parent=1 // pred_fallthru
      _
    // Predicated region
    $region98: #{forward.1} parent=1 // pred_check
      _
    $region99: #{forward.1} parent=1 // pred_check_branch
      %261 = sbr.rel (0) target = $region101
    $region100: #{forward.1} parent=1 // pred_region
      %s263 = ssub.s32 32, 32
      %264 = vsyncadd [#allocation23], %s263
      %s265 = sshll.u32 [#allocation24], 4
      %s266 = int_to_ptr.vmem [resolvable:$true] %s265
      %271 = dma.hbm_to_vmem [thread:$0]  %s49, 32, %s266, [#allocation23], 16, 16, 1
    $region101: #{forward.1} parent=1 // pred_fallthru
      _
    // Predicated region
    $region102: #{forward.1} parent=1 // pred_check
      _
    $region103: #{forward.1} parent=1 // pred_check_branch
      %273 = sbr.rel (0) target = $region105
    $region104: #{forward.1} parent=1 // pred_region
      %s275 = ssub.s32 32, 32
      %276 = vsyncadd [#allocation26], %s275
      %s277 = sshll.u32 [#allocation25], 4
      %s278 = int_to_ptr.vmem [resolvable:$true] %s277
      %283 = dma.hbm_to_vmem [thread:$0]  %s51, 32, %s278, [#allocation26], 16, 16, 1
    $region105: #{forward.1} parent=1 // pred_fallthru
      _
    // Predicated region
    $region106: #{forward.1} parent=1 // pred_check
      _
    $region107: #{forward.1} parent=1 // pred_check_branch
      %285 = sbr.rel (0) target = $region109
    $region108: #{forward.1} parent=1 // pred_region
      %s287 = ssub.s32 32, 32
      %288 = vsyncadd [#allocation26], %s287
      %s289 = sshll.u32 [#allocation27], 4
      %s290 = int_to_ptr.vmem [resolvable:$true] %s289
      %295 = dma.hbm_to_vmem [thread:$0]  %s53, 32, %s290, [#allocation26], 16, 16, 1
    $region109: #{forward.1} parent=1 // pred_fallthru
      _
    // Predicated region
    $region110: #{forward.1} parent=1 // pred_check
      _
    $region111: #{forward.1} parent=1 // pred_check_branch
      %297 = sbr.rel (0) target = $region113
    $region112: #{forward.1} parent=1 // pred_region
      %s299 = ssub.s32 1024, 1024
      %300 = vsyncadd [#allocation29], %s299
      %s301 = sshll.u32 [#allocation28], 4
      %s302 = int_to_ptr.vmem [resolvable:$true] %s301
      %307 = dma.hbm_to_vmem [thread:$0]  %s55, 1024, %s302, [#allocation29], 64, 64, 4
    $region113: #{forward.1} parent=1 // pred_fallthru
      _
    // Predicated region
    $region114: #{forward.1} parent=1 // pred_check
      _
    $region115: #{forward.1} parent=1 // pred_check_branch
      %309 = sbr.rel (0) target = $region117
    $region116: #{forward.1} parent=1 // pred_region
      %s311 = ssub.s32 16, 16
      %312 = vsyncadd [#allocation29], %s311
      %s314 = sshll.u32 [#allocation30], 4
      %s315 = int_to_ptr.vmem [resolvable:$true] %s314
      %317 = dma.hbm_to_vmem [thread:$0]  %s57, 16, %s315, [#allocation29]
    $region117: #{forward.1} parent=1 // pred_fallthru
      _
    // Predicated region
    $region118: #{forward.1} parent=1 // pred_check
      _
    $region119: #{forward.1} parent=1 // pred_check_branch
      %319 = sbr.rel (0) target = $region121
    $region120: #{forward.1} parent=1 // pred_region
      %320 = dma.done [#allocation3], 256
    $region121: #{forward.1} parent=1 // pred_fallthru
      _
    // Predicated region
    $region122: #{forward.1} parent=1 // pred_check
      _
    $region123: #{forward.1} parent=1 // pred_check_branch
      %322 = sbr.rel (0) target = $region125
    $region124: #{forward.1} parent=1 // pred_region
      %323 = dma.done [#allocation5], 1024
    $region125: #{forward.1} parent=1 // pred_fallthru
      _
    // Predicated region
    $region126: #{forward.1} parent=1 // pred_check
      _
    $region127: #{forward.1} parent=1 // pred_check_branch
      %325 = sbr.rel (0) target = $region129
    $region128: #{forward.1} parent=1 // pred_region
      %326 = dma.done [#allocation5], 1024
    $region129: #{forward.1} parent=1 // pred_fallthru
      _
    // Predicated region
    $region130: #{forward.1} parent=1 // pred_check
      _
    $region131: #{forward.1} parent=1 // pred_check_branch
      %328 = sbr.rel (0) target = $region133
    $region132: #{forward.1} parent=1 // pred_region
      %329 = dma.done [#allocation8], 16
    $region133: #{forward.1} parent=1 // pred_fallthru
      _
    // Predicated region
    $region134: #{forward.1} parent=1 // pred_check
      _
    $region135: #{forward.1} parent=1 // pred_check_branch
      %331 = sbr.rel (0) target = $region137
    $region136: #{forward.1} parent=1 // pred_region
      %332 = dma.done [#allocation8], 96
    $region137: #{forward.1} parent=1 // pred_fallthru
      _
    // Predicated region
    $region138: #{forward.1} parent=1 // pred_check
      _
    $region139: #{forward.1} parent=1 // pred_check_branch
      %334 = sbr.rel (0) target = $region141
    $region140: #{forward.1} parent=1 // pred_region
      %335 = dma.done [#allocation11], 32
    $region141: #{forward.1} parent=1 // pred_fallthru
      _
    // Predicated region
    $region142: #{forward.1} parent=1 // pred_check
      _
    $region143: #{forward.1} parent=1 // pred_check_branch
      %337 = sbr.rel (0) target = $region145
    $region144: #{forward.1} parent=1 // pred_region
      %338 = dma.done [#allocation11], 32
    $region145: #{forward.1} parent=1 // pred_fallthru
      _
    // Predicated region
    $region146: #{forward.1} parent=1 // pred_check
      _
    $region147: #{forward.1} parent=1 // pred_check_branch
      %340 = sbr.rel (0) target = $region149
    $region148: #{forward.1} parent=1 // pred_region
      %341 = dma.done [#allocation14], 2048
    $region149: #{forward.1} parent=1 // pred_fallthru
      _
    // Predicated region
    $region150: #{forward.1} parent=1 // pred_check
      _
    $region151: #{forward.1} parent=1 // pred_check_branch
      %343 = sbr.rel (0) target = $region153
    $region152: #{forward.1} parent=1 // pred_region
      %344 = dma.done [#allocation14], 32
    $region153: #{forward.1} parent=1 // pred_fallthru
      _
    // Predicated region
    $region154: #{forward.1} parent=1 // pred_check
      _
    $region155: #{forward.1} parent=1 // pred_check_branch
      %346 = sbr.rel (0) target = $region157
    $region156: #{forward.1} parent=1 // pred_region
      %347 = dma.done [#allocation17], 2048
    $region157: #{forward.1} parent=1 // pred_fallthru
      _
    // Predicated region
    $region158: #{forward.1} parent=1 // pred_check
      _
    $region159: #{forward.1} parent=1 // pred_check_branch
      %349 = sbr.rel (0) target = $region161
    $region160: #{forward.1} parent=1 // pred_region
      %350 = dma.done [#allocation17], 32
    $region161: #{forward.1} parent=1 // pred_fallthru
      _
    // Predicated region
    $region162: #{forward.1} parent=1 // pred_check
      _
    $region163: #{forward.1} parent=1 // pred_check_branch
      %352 = sbr.rel (0) target = $region165
    $region164: #{forward.1} parent=1 // pred_region
      %353 = dma.done [#allocation20], 32
    $region165: #{forward.1} parent=1 // pred_fallthru
      _
    // Predicated region
    $region166: #{forward.1} parent=1 // pred_check
      _
    $region167: #{forward.1} parent=1 // pred_check_branch
      %355 = sbr.rel (0) target = $region169
    $region168: #{forward.1} parent=1 // pred_region
      %356 = dma.done [#allocation20], 32
    $region169: #{forward.1} parent=1 // pred_fallthru
      _
    // Predicated region
    $region170: #{forward.1} parent=1 // pred_check
      _
    $region171: #{forward.1} parent=1 // pred_check_branch
      %358 = sbr.rel (0) target = $region173
    $region172: #{forward.1} parent=1 // pred_region
      %359 = dma.done [#allocation23], 32
    $region173: #{forward.1} parent=1 // pred_fallthru
      _
    // Predicated region
    $region174: #{forward.1} parent=1 // pred_check
      _
    $region175: #{forward.1} parent=1 // pred_check_branch
      %361 = sbr.rel (0) target = $region177
    $region176: #{forward.1} parent=1 // pred_region
      %362 = dma.done [#allocation23], 32
    $region177: #{forward.1} parent=1 // pred_fallthru
      _
    // Predicated region
    $region178: #{forward.1} parent=1 // pred_check
      _
    $region179: #{forward.1} parent=1 // pred_check_branch
      %364 = sbr.rel (0) target = $region181
    $region180: #{forward.1} parent=1 // pred_region
      %365 = dma.done [#allocation26], 32
    $region181: #{forward.1} parent=1 // pred_fallthru
      _
    // Predicated region
    $region182: #{forward.1} parent=1 // pred_check
      _
    $region183: #{forward.1} parent=1 // pred_check_branch
      %367 = sbr.rel (0) target = $region185
    $region184: #{forward.1} parent=1 // pred_region
      %368 = dma.done [#allocation26], 32
    $region185: #{forward.1} parent=1 // pred_fallthru
      _
    // Predicated region
    $region186: #{forward.1} parent=1 // pred_check
      _
    $region187: #{forward.1} parent=1 // pred_check_branch
      %370 = sbr.rel (0) target = $region189
    $region188: #{forward.1} parent=1 // pred_region
      %371 = dma.done [#allocation29], 1024
    $region189: #{forward.1} parent=1 // pred_fallthru
      _
    // Predicated region
    $region190: #{forward.1} parent=1 // pred_check
      _
    $region191: #{forward.1} parent=1 // pred_check_branch
      %373 = sbr.rel (0) target = $region193
    $region192: #{forward.1} parent=1 // pred_region
      %374 = dma.done [#allocation29], 16
    $region193: #{forward.1} parent=1 // pred_fallthru
      _
    %v376 = vld [vmem:[%s1] sm:$0xff]
    %v377 = vld [vmem:[%s1 + $0x8] sm:$0xff]
    %v378 = vld [vmem:[#allocation4] sm:$0xf]
    %v379 = vld [vmem:[#allocation4 + $0x4] sm:$0xf]
    %v380 = vld [vmem:[#allocation4 + $0x8] sm:$0xf]
    %v381 = vld [vmem:[#allocation4 + $0xc] sm:$0xf]
    %v382 = vld [vmem:[#allocation4 + $0x10] sm:$0xf]
    %v383 = vld [vmem:[#allocation4 + $0x14] sm:$0xf]
    %v384 = vld [vmem:[#allocation4 + $0x18] sm:$0xf]
    %v385 = vld [vmem:[#allocation4 + $0x1c] sm:$0xf]
    %v386 = vld [vmem:[#allocation4 + $0x20] sm:$0xf]
    %v387 = vld [vmem:[#allocation4 + $0x24] sm:$0xf]
    %v388 = vld [vmem:[#allocation4 + $0x28] sm:$0xf]
    %v389 = vld [vmem:[#allocation4 + $0x2c] sm:$0xf]
    %v390 = vld [vmem:[#allocation4 + $0x30] sm:$0xf]
    %v391 = vld [vmem:[#allocation4 + $0x34] sm:$0xf]
    %v392 = vld [vmem:[#allocation4 + $0x38] sm:$0xf]
    %v393 = vld [vmem:[#allocation4 + $0x3c] sm:$0xf]
    %v394 = vpack.c.bf16 %v377, %v376
    %v395 = vld [vmem:[%s9] sm:$0x1]
    %v397 = vlaneseq
    %v398 = vshrl.u32 %v397, 7
    %v399 = vsub.s32 0, %v398
    %v400 = vrot.slane %v395, %v399
    %v418 = vunpack.c.l.b16 %v378
    %v419 = vunpack.c.l.b16 %v379
    %v420 = vunpack.c.l.b16 %v380
    %v421 = vunpack.c.l.b16 %v381
    %v422 = vunpack.c.l.b16 %v382
    %v423 = vunpack.c.l.b16 %v383
    %v424 = vunpack.c.l.b16 %v384
    %v425 = vunpack.c.l.b16 %v385
    %v426 = vunpack.c.l.b16 %v386
    %v427 = vunpack.c.l.b16 %v387
    %v428 = vunpack.c.l.b16 %v388
    %v429 = vunpack.c.l.b16 %v389
    %v430 = vunpack.c.l.b16 %v390
    %v431 = vunpack.c.l.b16 %v391
    %v432 = vunpack.c.l.b16 %v392
    %v433 = vunpack.c.l.b16 %v393
    %v434 = vpack.c.b16 %v419, %v418
    %v435 = vpack.c.b16 %v421, %v420
    %v436 = vpack.c.b16 %v423, %v422
    %v437 = vpack.c.b16 %v425, %v424
    %v438 = vpack.c.b16 %v427, %v426
    %v439 = vpack.c.b16 %v429, %v428
    %v440 = vpack.c.b16 %v431, %v430
    %v441 = vpack.c.b16 %v433, %v432
    %450 = vmatprep.subr.bf16.mxu0 0
    %451 = vmatpush1.bf16.msra.mxu0 %v434
    %452 = vmatprep.subr.bf16.mxu0 0
    %453 = vmatpush1.bf16.msra.mxu0 %v435
    %454 = vmatprep.subr.bf16.mxu0 0
    %455 = vmatpush1.bf16.msra.mxu0 %v436
    %456 = vmatprep.subr.bf16.mxu0 0
    %457 = vmatpush1.bf16.msra.mxu0 %v437
    %458 = vmatprep.subr.bf16.mxu0 0
    %459 = vmatpush1.bf16.msra.mxu0 %v438
    %460 = vmatprep.subr.bf16.mxu0 0
    %461 = vmatpush1.bf16.msra.mxu0 %v439
    %462 = vmatprep.subr.bf16.mxu0 0
    %463 = vmatpush1.bf16.msra.mxu0 %v440
    %464 = vmatprep.subr.bf16.mxu0 0
    %465 = vmatpush1.bf16.msra.mxu0 %v441
    %466 = vmatprep.subr.bf16.mxu0 0
    %467 = vmatpush1.bf16.msra.mxu0 0
    %468 = vmatprep.subr.bf16.mxu0 0
    %469 = vmatpush1.bf16.msra.mxu0 0
    %470 = vmatprep.subr.bf16.mxu0 0
    %471 = vmatpush1.bf16.msra.mxu0 0
    %472 = vmatprep.subr.bf16.mxu0 0
    %473 = vmatpush1.bf16.msra.mxu0 0
    %474 = vmatprep.subr.bf16.mxu0 0
    %475 = vmatpush1.bf16.msra.mxu0 0
    %476 = vmatprep.subr.bf16.mxu0 0
    %477 = vmatpush1.bf16.msra.mxu0 0
    %478 = vmatprep.subr.bf16.mxu0 0
    %479 = vmatpush1.bf16.msra.mxu0 0
    %480 = vmatprep.subr.bf16.mxu0 0
    %481 = vmatpush1.bf16.msra.mxu0 0
    %482 = vmatprep.mubr.bf16.mxu0 0
    %483 = vmatmul.mubr.bf16.gmra.mrb[0].mxu0 %v394
    %v484 = vpop.f32.mrb[0].mxu0
    %v485 = vadd.f32 %v400, %v484
    %v486 = vpop.f32.mrb[0].mxu0
    %v487 = vpop.f32.mrb[0].mxu0
    %v488 = vadd.f32 %v400, %v487
    %v489 = vpop.f32.mrb[0].mxu0
    %490 = vdwg.mxu0
    %v491 = vmax.f32 %v485, 0.0
    %v492 = vmax.f32 %v488, 0.0
    %v493 = vld [vmem:[#allocation6] sm:$0xf]
    %v494 = vld [vmem:[#allocation6 + $0x4] sm:$0xf]
    %v495 = vld [vmem:[#allocation6 + $0x8] sm:$0xf]
    %v496 = vld [vmem:[#allocation6 + $0xc] sm:$0xf]
    %v497 = vld [vmem:[#allocation6 + $0x10] sm:$0xf]
    %v498 = vld [vmem:[#allocation6 + $0x14] sm:$0xf]
    %v499 = vld [vmem:[#allocation6 + $0x18] sm:$0xf]
    %v500 = vld [vmem:[#allocation6 + $0x1c] sm:$0xf]
    %v501 = vld [vmem:[#allocation6 + $0x20] sm:$0xf]
    %v502 = vld [vmem:[#allocation6 + $0x24] sm:$0xf]
    %v503 = vld [vmem:[#allocation6 + $0x28] sm:$0xf]
    %v504 = vld [vmem:[#allocation6 + $0x2c] sm:$0xf]
    %v505 = vld [vmem:[#allocation6 + $0x30] sm:$0xf]
    %v506 = vld [vmem:[#allocation6 + $0x34] sm:$0xf]
    %v507 = vld [vmem:[#allocation6 + $0x38] sm:$0xf]
    %v508 = vld [vmem:[#allocation6 + $0x3c] sm:$0xf]
    %v509 = vpack.c.bf16 %v492, %v491
    %v510 = vld [vmem:[#allocation7] sm:$0x1]
    %v512 = vlaneseq
    %v513 = vshrl.u32 %v512, 7
    %v514 = vsub.s32 0, %v513
    %v515 = vrot.slane %v510, %v514
    %v533 = vunpack.c.l.b16 %v493
    %v534 = vunpack.c.l.b16 %v494
    %v535 = vunpack.c.l.b16 %v495
    %v536 = vunpack.c.l.b16 %v496
    %v537 = vunpack.c.l.b16 %v497
    %v538 = vunpack.c.l.b16 %v498
    %v539 = vunpack.c.l.b16 %v499
    %v540 = vunpack.c.l.b16 %v500
    %v541 = vunpack.c.l.b16 %v501
    %v542 = vunpack.c.l.b16 %v502
    %v543 = vunpack.c.l.b16 %v503
    %v544 = vunpack.c.l.b16 %v504
    %v545 = vunpack.c.l.b16 %v505
    %v546 = vunpack.c.l.b16 %v506
    %v547 = vunpack.c.l.b16 %v507
    %v548 = vunpack.c.l.b16 %v508
    %v549 = vpack.c.b16 %v534, %v533
    %v550 = vpack.c.b16 %v536, %v535
    %v551 = vpack.c.b16 %v538, %v537
    %v552 = vpack.c.b16 %v540, %v539
    %v553 = vpack.c.b16 %v542, %v541
    %v554 = vpack.c.b16 %v544, %v543
    %v555 = vpack.c.b16 %v546, %v545
    %v556 = vpack.c.b16 %v548, %v547
    %565 = vmatprep.subr.bf16.mxu0 0
    %566 = vmatpush1.bf16.msra.mxu0 %v549
    %567 = vmatprep.subr.bf16.mxu0 0
    %568 = vmatpush1.bf16.msra.mxu0 %v550
    %569 = vmatprep.subr.bf16.mxu0 0
    %570 = vmatpush1.bf16.msra.mxu0 %v551
    %571 = vmatprep.subr.bf16.mxu0 0
    %572 = vmatpush1.bf16.msra.mxu0 %v552
    %573 = vmatprep.subr.bf16.mxu0 0
    %574 = vmatpush1.bf16.msra.mxu0 %v553
    %575 = vmatprep.subr.bf16.mxu0 0
    %576 = vmatpush1.bf16.msra.mxu0 %v554
    %577 = vmatprep.subr.bf16.mxu0 0
    %578 = vmatpush1.bf16.msra.mxu0 %v555
    %579 = vmatprep.subr.bf16.mxu0 0
    %580 = vmatpush1.bf16.msra.mxu0 %v556
    %581 = vmatprep.subr.bf16.mxu0 0
    %582 = vmatpush1.bf16.msra.mxu0 0
    %583 = vmatprep.subr.bf16.mxu0 0
    %584 = vmatpush1.bf16.msra.mxu0 0
    %585 = vmatprep.subr.bf16.mxu0 0
    %586 = vmatpush1.bf16.msra.mxu0 0
    %587 = vmatprep.subr.bf16.mxu0 0
    %588 = vmatpush1.bf16.msra.mxu0 0
    %589 = vmatprep.subr.bf16.mxu0 0
    %590 = vmatpush1.bf16.msra.mxu0 0
    %591 = vmatprep.subr.bf16.mxu0 0
    %592 = vmatpush1.bf16.msra.mxu0 0
    %593 = vmatprep.subr.bf16.mxu0 0
    %594 = vmatpush1.bf16.msra.mxu0 0
    %595 = vmatprep.subr.bf16.mxu0 0
    %596 = vmatpush1.bf16.msra.mxu0 0
    %597 = vmatprep.mubr.bf16.mxu0 0
    %598 = vmatmul.mubr.bf16.gmra.mrb[0].mxu0 %v509
    %v599 = vpop.f32.mrb[0].mxu0
    %v600 = vadd.f32 %v515, %v599
    %v601 = vpop.f32.mrb[0].mxu0
    %v602 = vpop.f32.mrb[0].mxu0
    %v603 = vadd.f32 %v515, %v602
    %v604 = vpop.f32.mrb[0].mxu0
    %605 = vdwg.mxu0
    %v606 = vmul.f32 %v600, 11.313708
    %v607 = vmul.f32 %v603, 11.313708
    %v608 = vld [vmem:[#allocation2] sm:$0xff]
    %v609 = vld [vmem:[#allocation2 + $0x8] sm:$0xff]
    %v610 = vadd.f32 %v606, %v608
    %v611 = vadd.f32 %v607, %v609
    %v612 = vld [vmem:[%s3] sm:$0xff]
    %v613 = vld [vmem:[%s3 + $0x8] sm:$0xff]
    %v614 = vlaneseq
    %v615 = vshrl.u32 %v614, 7
    %v616 = vlaneseq
    %v617 = vand.u32 %v616, 127
    %vm618 = vcmp.le.s32.totalorder %v617, %v615
    %v619 = vsel %vm618, 0.0, -1e+30
    %v620 = vld [vmem:[%s15] sm:$0xff]
    %v621 = vld [vmem:[%s15 + $0x8] sm:$0xf]
    %v622 = vld [vmem:[%s15 + $0xc] sm:$0xff]
    %v623 = vld [vmem:[%s15 + $0x14] sm:$0xf]
    %v624 = vld [vmem:[%s15 + $0x18] sm:$0xff]
    %v625 = vld [vmem:[%s15 + $0x20] sm:$0xf]
    %v626 = vld [vmem:[%s15 + $0x24] sm:$0xff]
    %v627 = vld [vmem:[%s15 + $0x2c] sm:$0xf]
    %v628 = vld [vmem:[%s15 + $0x30] sm:$0xff]
    %v629 = vld [vmem:[%s15 + $0x38] sm:$0xf]
    %v630 = vld [vmem:[%s15 + $0x3c] sm:$0xff]
    %v631 = vld [vmem:[%s15 + $0x44] sm:$0xf]
    %v632 = vld [vmem:[%s15 + $0x48] sm:$0xff]
    %v633 = vld [vmem:[%s15 + $0x50] sm:$0xf]
    %v634 = vld [vmem:[%s15 + $0x54] sm:$0xff]
    %v635 = vld [vmem:[%s15 + $0x5c] sm:$0xf]
    %v636 = vld [vmem:[%s15 + $0x60] sm:$0xff]
    %v637 = vld [vmem:[%s15 + $0x68] sm:$0xf]
    %v638 = vld [vmem:[%s15 + $0x6c] sm:$0xff]
    %v639 = vld [vmem:[%s15 + $0x74] sm:$0xf]
    %v640 = vld [vmem:[%s15 + $0x78] sm:$0xff]
    %v641 = vld [vmem:[%s15 + $0x80] sm:$0xf]
    %v642 = vld [vmem:[%s15 + $0x84] sm:$0xff]
    %v643 = vld [vmem:[%s15 + $0x8c] sm:$0xf]
    %v644 = vld [vmem:[%s15 + $0x90] sm:$0xff]
    %v645 = vld [vmem:[%s15 + $0x98] sm:$0xf]
    %v646 = vld [vmem:[%s15 + $0x9c] sm:$0xff]
    %v647 = vld [vmem:[%s15 + $0xa4] sm:$0xf]
    %v648 = vld [vmem:[%s15 + $0xa8] sm:$0xff]
    %v649 = vld [vmem:[%s15 + $0xb0] sm:$0xf]
    %v650 = vld [vmem:[%s15 + $0xb4] sm:$0xff]
    %v651 = vld [vmem:[%s15 + $0xbc] sm:$0xf]
    %v652 = vpack.c.bf16 %v613, %v612
    %v653 = vld [vmem:[#allocation9] sm:$0x7]
    %v655 = vlaneseq
    %v656 = vshrl.u32 %v655, 7
    %v657 = vsub.s32 0, %v656
    %v658 = vrot.slane %v653, %v657
    %v659 = vlaneseq
    %v660 = vshrl.u32 %v659, 7
    %v661 = vsub.s32 1, %v660
    %v662 = vrot.slane %v653, %v661
    %v663 = vlaneseq
    %v664 = vshrl.u32 %v663, 7
    %v665 = vsub.s32 2, %v664
    %v666 = vrot.slane %v653, %v665
    %v702 = vunpack.c.l.b16 %v620
    %v703 = vunpack.c.h.b16 %v620
    %v704 = vunpack.c.l.b16 %v621
    %v705 = vunpack.c.l.b16 %v622
    %v706 = vunpack.c.h.b16 %v622
    %v707 = vunpack.c.l.b16 %v623
    %v708 = vunpack.c.l.b16 %v624
    %v709 = vunpack.c.h.b16 %v624
    %v710 = vunpack.c.l.b16 %v625
    %v711 = vunpack.c.l.b16 %v626
    %v712 = vunpack.c.h.b16 %v626
    %v713 = vunpack.c.l.b16 %v627
    %v714 = vunpack.c.l.b16 %v628
    %v715 = vunpack.c.h.b16 %v628
    %v716 = vunpack.c.l.b16 %v629
    %v717 = vunpack.c.l.b16 %v630
    %v718 = vunpack.c.h.b16 %v630
    %v719 = vunpack.c.l.b16 %v631
    %v720 = vunpack.c.l.b16 %v632
    %v721 = vunpack.c.h.b16 %v632
    %v722 = vunpack.c.l.b16 %v633
    %v723 = vunpack.c.l.b16 %v634
    %v724 = vunpack.c.h.b16 %v634
    %v725 = vunpack.c.l.b16 %v635
    %v726 = vunpack.c.l.b16 %v636
    %v727 = vunpack.c.h.b16 %v636
    %v728 = vunpack.c.l.b16 %v637
    %v729 = vunpack.c.l.b16 %v638
    %v730 = vunpack.c.h.b16 %v638
    %v731 = vunpack.c.l.b16 %v639
    %v732 = vunpack.c.l.b16 %v640
    %v733 = vunpack.c.h.b16 %v640
    %v734 = vunpack.c.l.b16 %v641
    %v735 = vunpack.c.l.b16 %v642
    %v736 = vunpack.c.h.b16 %v642
    %v737 = vunpack.c.l.b16 %v643
    %v738 = vunpack.c.l.b16 %v644
    %v739 = vunpack.c.h.b16 %v644
    %v740 = vunpack.c.l.b16 %v645
    %v741 = vunpack.c.l.b16 %v646
    %v742 = vunpack.c.h.b16 %v646
    %v743 = vunpack.c.l.b16 %v647
    %v744 = vunpack.c.l.b16 %v648
    %v745 = vunpack.c.h.b16 %v648
    %v746 = vunpack.c.l.b16 %v649
    %v747 = vunpack.c.l.b16 %v650
    %v748 = vunpack.c.h.b16 %v650
    %v749 = vunpack.c.l.b16 %v651
    %v750 = vpack.c.b16 %v705, %v702
    %v751 = vpack.c.b16 %v706, %v703
    %v752 = vpack.c.b16 %v707, %v704
    %v753 = vpack.c.b16 %v711, %v708
    %v754 = vpack.c.b16 %v712, %v709
    %v755 = vpack.c.b16 %v713, %v710
    %v756 = vpack.c.b16 %v717, %v714
    %v757 = vpack.c.b16 %v718, %v715
    %v758 = vpack.c.b16 %v719, %v716
    %v759 = vpack.c.b16 %v723, %v720
    %v760 = vpack.c.b16 %v724, %v721
    %v761 = vpack.c.b16 %v725, %v722
    %v762 = vpack.c.b16 %v729, %v726
    %v763 = vpack.c.b16 %v730, %v727
    %v764 = vpack.c.b16 %v731, %v728
    %v765 = vpack.c.b16 %v735, %v732
    %v766 = vpack.c.b16 %v736, %v733
    %v767 = vpack.c.b16 %v737, %v734
    %v768 = vpack.c.b16 %v741, %v738
    %v769 = vpack.c.b16 %v742, %v739
    %v770 = vpack.c.b16 %v743, %v740
    %v771 = vpack.c.b16 %v747, %v744
    %v772 = vpack.c.b16 %v748, %v745
    %v773 = vpack.c.b16 %v749, %v746
    %798 = vmatprep.subr.bf16.mxu0 %v751
    %799 = vmatpush1.bf16.msra.mxu0 %v750
    %800 = vmatprep.subr.bf16.mxu0 %v754
    %801 = vmatpush1.bf16.msra.mxu0 %v753
    %802 = vmatprep.subr.bf16.mxu0 %v757
    %803 = vmatpush1.bf16.msra.mxu0 %v756
    %804 = vmatprep.subr.bf16.mxu0 %v760
    %805 = vmatpush1.bf16.msra.mxu0 %v759
    %806 = vmatprep.subr.bf16.mxu0 %v763
    %807 = vmatpush1.bf16.msra.mxu0 %v762
    %808 = vmatprep.subr.bf16.mxu0 %v766
    %809 = vmatpush1.bf16.msra.mxu0 %v765
    %810 = vmatprep.subr.bf16.mxu0 %v769
    %811 = vmatpush1.bf16.msra.mxu0 %v768
    %812 = vmatprep.subr.bf16.mxu0 %v772
    %813 = vmatpush1.bf16.msra.mxu0 %v771
    %814 = vmatprep.subr.bf16.mxu0 0
    %815 = vmatpush1.bf16.msra.mxu0 0
    %816 = vmatprep.subr.bf16.mxu0 0
    %817 = vmatpush1.bf16.msra.mxu0 0
    %818 = vmatprep.subr.bf16.mxu0 0
    %819 = vmatpush1.bf16.msra.mxu0 0
    %820 = vmatprep.subr.bf16.mxu0 0
    %821 = vmatpush1.bf16.msra.mxu0 0
    %822 = vmatprep.subr.bf16.mxu0 0
    %823 = vmatpush1.bf16.msra.mxu0 0
    %824 = vmatprep.subr.bf16.mxu0 0
    %825 = vmatpush1.bf16.msra.mxu0 0
    %826 = vmatprep.subr.bf16.mxu0 0
    %827 = vmatpush1.bf16.msra.mxu0 0
    %828 = vmatprep.subr.bf16.mxu0 0
    %829 = vmatpush1.bf16.msra.mxu0 0
    %830 = vmatprep.mubr.bf16.mxu0 0
    %831 = vmatmul.mubr.bf16.gmra.mrb[0].mxu0 %v652
    %v832 = vpop.f32.mrb[0].mxu0
    %v833 = vadd.f32 %v658, %v832
    %v834 = vpop.f32.mrb[0].mxu0
    %v835 = vadd.f32 %v662, %v834
    %v836 = vpop.f32.mrb[0].mxu0
    %v837 = vadd.f32 %v658, %v836
    %v838 = vpop.f32.mrb[0].mxu0
    %v839 = vadd.f32 %v662, %v838
    %840 = vdwg.mxu0
    %841 = vmatprep.subr.bf16.mxu0 0
    %842 = vmatpush1.bf16.msra.mxu0 %v752
    %843 = vmatprep.subr.bf16.mxu0 0
    %844 = vmatpush1.bf16.msra.mxu0 %v755
    %845 = vmatprep.subr.bf16.mxu0 0
    %846 = vmatpush1.bf16.msra.mxu0 %v758
    %847 = vmatprep.subr.bf16.mxu0 0
    %848 = vmatpush1.bf16.msra.mxu0 %v761
    %849 = vmatprep.subr.bf16.mxu0 0
    %850 = vmatpush1.bf16.msra.mxu0 %v764
    %851 = vmatprep.subr.bf16.mxu0 0
    %852 = vmatpush1.bf16.msra.mxu0 %v767
    %853 = vmatprep.subr.bf16.mxu0 0
    %854 = vmatpush1.bf16.msra.mxu0 %v770
    %855 = vmatprep.subr.bf16.mxu0 0
    %856 = vmatpush1.bf16.msra.mxu0 %v773
    %857 = vmatprep.subr.bf16.mxu0 0
    %858 = vmatpush1.bf16.msra.mxu0 0
    %859 = vmatprep.subr.bf16.mxu0 0
    %860 = vmatpush1.bf16.msra.mxu0 0
    %861 = vmatprep.subr.bf16.mxu0 0
    %862 = vmatpush1.bf16.msra.mxu0 0
    %863 = vmatprep.subr.bf16.mxu0 0
    %864 = vmatpush1.bf16.msra.mxu0 0
    %865 = vmatprep.subr.bf16.mxu0 0
    %866 = vmatpush1.bf16.msra.mxu0 0
    %867 = vmatprep.subr.bf16.mxu0 0
    %868 = vmatpush1.bf16.msra.mxu0 0
    %869 = vmatprep.subr.bf16.mxu0 0
    %870 = vmatpush1.bf16.msra.mxu0 0
    %871 = vmatprep.subr.bf16.mxu0 0
    %872 = vmatpush1.bf16.msra.mxu0 0
    %873 = vmatprep.mubr.bf16.mxu0 0
    %874 = vmatmul.mubr.bf16.gmra.mrb[0].mxu0 %v652
    %v875 = vpop.f32.mrb[0].mxu0
    %v876 = vadd.f32 %v666, %v875
    %v877 = vpop.f32.mrb[0].mxu0
    %v878 = vpop.f32.mrb[0].mxu0
    %v879 = vadd.f32 %v666, %v878
    %v880 = vpop.f32.mrb[0].mxu0
    %881 = vdwg.mxu0
    %v882 = vmul.f32 %v833, 0.17677669
    %v883 = vpack.c.bf16 %v882, %v882
    %v884 = vpack.c.bf16 %v835, %v835
    %v885 = vpack.c.bf16 %v876, %v876
    %vm886 = vcmask 261120
    %v888 = vsel %vm886, %v883, 0
    %v891 = vsel %vm886, %v884, 0
    %893 = vmatprep.subr.bf16.mxu0 0
    %894 = vmatpush1.bf16.xpose.msra.mxu0 %v891
    %895 = vmatprep.subr.bf16.mxu0 0
    %896 = vmatpush1.bf16.xpose.msra.mxu0 0
    %897 = vmatprep.subr.bf16.mxu0 0
    %898 = vmatpush1.bf16.xpose.msra.mxu0 0
    %899 = vmatprep.subr.bf16.mxu0 0
    %900 = vmatpush1.bf16.xpose.msra.mxu0 0
    %901 = vmatprep.subr.bf16.mxu0 0
    %902 = vmatpush1.bf16.xpose.msra.mxu0 0
    %903 = vmatprep.subr.bf16.mxu0 0
    %904 = vmatpush1.bf16.xpose.msra.mxu0 0
    %905 = vmatprep.subr.bf16.mxu0 0
    %906 = vmatpush1.bf16.xpose.msra.mxu0 0
    %907 = vmatprep.subr.bf16.mxu0 0
    %908 = vmatpush1.bf16.xpose.msra.mxu0 0
    %909 = vmatprep.subr.bf16.mxu0 0
    %910 = vmatpush1.bf16.xpose.msra.mxu0 0
    %911 = vmatprep.subr.bf16.mxu0 0
    %912 = vmatpush1.bf16.xpose.msra.mxu0 0
    %913 = vmatprep.subr.bf16.mxu0 0
    %914 = vmatpush1.bf16.xpose.msra.mxu0 0
    %915 = vmatprep.subr.bf16.mxu0 0
    %916 = vmatpush1.bf16.xpose.msra.mxu0 0
    %917 = vmatprep.subr.bf16.mxu0 0
    %918 = vmatpush1.bf16.xpose.msra.mxu0 0
    %919 = vmatprep.subr.bf16.mxu0 0
    %920 = vmatpush1.bf16.xpose.msra.mxu0 0
    %921 = vmatprep.subr.bf16.mxu0 0
    %922 = vmatpush1.bf16.xpose.msra.mxu0 0
    %923 = vmatprep.subr.bf16.mxu0 0
    %924 = vmatpush1.bf16.xpose.msra.mxu0 0
    %925 = vmatprep.mubr.bf16.mxu0 0
    %926 = vmatmul.mubr.bf16.gmra.mrb[0].mxu0 %v888
    %v927 = vpop.f32.mrb[0].mxu0
    %v928 = vadd.f32 %v619, %v927
    %v929 = vpop.f32.mrb[0].mxu0
    %v930 = vpop.f32.mrb[0].mxu0
    %v931 = vpop.f32.mrb[0].mxu0
    %932 = vdwg.mxu0
    %vm933 = vcmask 64512
    %v934 = vsel %vm933, %v928, -inf
    %935 = vmax.xlane.f32.xlu0 %v934
    %v936 = vpop.xlane.xlu0 %935
    %v937 = vsub.f32 %v928, %v936
    %v938 = vmul.f32 %v937, 1.442695
    %v939 = vpow.pop %v938
    %v940 = vsel %vm933, %v939, 0.0
    %941 = vadd.xlane.f32.xlu0 %v940
    %v942 = vpop.xlane.xlu0 %941
    %v943 = vrcp.pop %v942
    %v944 = vmul.f32 %v939, %v943
    %v945 = vpack.c.bf16 %v944, %v944
    %v947 = vsel %vm933, %v945, 0
    %vm949 = vcmask 1043456
    %v951 = vsel %vm949, %v885, 0
    %953 = vmatprep.subr.bf16.mxu0 0
    %954 = vmatpush1.bf16.msra.mxu0 %v951
    %955 = vmatprep.subr.bf16.mxu0 0
    %956 = vmatpush1.bf16.msra.mxu0 0
    %957 = vmatprep.subr.bf16.mxu0 0
    %958 = vmatpush1.bf16.msra.mxu0 0
    %959 = vmatprep.subr.bf16.mxu0 0
    %960 = vmatpush1.bf16.msra.mxu0 0
    %961 = vmatprep.subr.bf16.mxu0 0
    %962 = vmatpush1.bf16.msra.mxu0 0
    %963 = vmatprep.subr.bf16.mxu0 0
    %964 = vmatpush1.bf16.msra.mxu0 0
    %965 = vmatprep.subr.bf16.mxu0 0
    %966 = vmatpush1.bf16.msra.mxu0 0
    %967 = vmatprep.subr.bf16.mxu0 0
    %968 = vmatpush1.bf16.msra.mxu0 0
    %969 = vmatprep.subr.bf16.mxu0 0
    %970 = vmatpush1.bf16.msra.mxu0 0
    %971 = vmatprep.subr.bf16.mxu0 0
    %972 = vmatpush1.bf16.msra.mxu0 0
    %973 = vmatprep.subr.bf16.mxu0 0
    %974 = vmatpush1.bf16.msra.mxu0 0
    %975 = vmatprep.subr.bf16.mxu0 0
    %976 = vmatpush1.bf16.msra.mxu0 0
    %977 = vmatprep.subr.bf16.mxu0 0
    %978 = vmatpush1.bf16.msra.mxu0 0
    %979 = vmatprep.subr.bf16.mxu0 0
    %980 = vmatpush1.bf16.msra.mxu0 0
    %981 = vmatprep.subr.bf16.mxu0 0
    %982 = vmatpush1.bf16.msra.mxu0 0
    %983 = vmatprep.subr.bf16.mxu0 0
    %984 = vmatpush1.bf16.msra.mxu0 0
    %985 = vmatprep.mubr.bf16.mxu0 0
    %986 = vmatmul.mubr.bf16.gmra.mrb[0].mxu0 %v947
    %v987 = vpop.f32.mrb[0].mxu0
    %v988 = vadd.f32 0.0, %v987
    %v989 = vpop.f32.mrb[0].mxu0
    %v990 = vpop.f32.mrb[0].mxu0
    %v991 = vpop.f32.mrb[0].mxu0
    %992 = vdwg.mxu0
    %994 = vrot.lane.b32.xlu0 %v883, 96
    %v995 = vpop.permute.xlu0 %994
    %997 = vrot.lane.b32.xlu0 %v884, 96
    %v998 = vpop.permute.xlu0 %997
    %v1000 = vsel %vm886, %v995, 0
    %v1003 = vsel %vm886, %v998, 0
    %1005 = vmatprep.subr.bf16.mxu0 0
    %1006 = vmatpush1.bf16.xpose.msra.mxu0 %v1003
    %1007 = vmatprep.subr.bf16.mxu0 0
    %1008 = vmatpush1.bf16.xpose.msra.mxu0 0
    %1009 = vmatprep.subr.bf16.mxu0 0
    %1010 = vmatpush1.bf16.xpose.msra.mxu0 0
    %1011 = vmatprep.subr.bf16.mxu0 0
    %1012 = vmatpush1.bf16.xpose.msra.mxu0 0
    %1013 = vmatprep.subr.bf16.mxu0 0
    %1014 = vmatpush1.bf16.xpose.msra.mxu0 0
    %1015 = vmatprep.subr.bf16.mxu0 0
    %1016 = vmatpush1.bf16.xpose.msra.mxu0 0
    %1017 = vmatprep.subr.bf16.mxu0 0
    %1018 = vmatpush1.bf16.xpose.msra.mxu0 0
    %1019 = vmatprep.subr.bf16.mxu0 0
    %1020 = vmatpush1.bf16.xpose.msra.mxu0 0
    %1021 = vmatprep.subr.bf16.mxu0 0
    %1022 = vmatpush1.bf16.xpose.msra.mxu0 0
    %1023 = vmatprep.subr.bf16.mxu0 0
    %1024 = vmatpush1.bf16.xpose.msra.mxu0 0
    %1025 = vmatprep.subr.bf16.mxu0 0
    %1026 = vmatpush1.bf16.xpose.msra.mxu0 0
    %1027 = vmatprep.subr.bf16.mxu0 0
    %1028 = vmatpush1.bf16.xpose.msra.mxu0 0
    %1029 = vmatprep.subr.bf16.mxu0 0
    %1030 = vmatpush1.bf16.xpose.msra.mxu0 0
    %1031 = vmatprep.subr.bf16.mxu0 0
    %1032 = vmatpush1.bf16.xpose.msra.mxu0 0
    %1033 = vmatprep.subr.bf16.mxu0 0
    %1034 = vmatpush1.bf16.xpose.msra.mxu0 0
    %1035 = vmatprep.subr.bf16.mxu0 0
    %1036 = vmatpush1.bf16.xpose.msra.mxu0 0
    %1037 = vmatprep.mubr.bf16.mxu0 0
    %1038 = vmatmul.mubr.bf16.gmra.mrb[0].mxu0 %v1000
    %v1039 = vpop.f32.mrb[0].mxu0
    %v1040 = vadd.f32 %v619, %v1039
    %v1041 = vpop.f32.mrb[0].mxu0
    %v1042 = vpop.f32.mrb[0].mxu0
    %v1043 = vpop.f32.mrb[0].mxu0
    %1044 = vdwg.mxu0
    %v1045 = vsel %vm933, %v1040, -inf
    %1046 = vmax.xlane.f32.xlu0 %v1045
    %v1047 = vpop.xlane.xlu0 %1046
    %v1048 = vsub.f32 %v1040, %v1047
    %v1049 = vmul.f32 %v1048, 1.442695
    %v1050 = vpow.pop %v1049
    %v1051 = vsel %vm933, %v1050, 0.0
    %1052 = vadd.xlane.f32.xlu0 %v1051
    %v1053 = vpop.xlane.xlu0 %1052
    %v1054 = vrcp.pop %v1053
    %v1055 = vmul.f32 %v1050, %v1054
    %v1056 = vpack.c.bf16 %v1055, %v1055
    %1058 = vrot.lane.b32.xlu0 %v885, 96
    %v1059 = vpop.permute.xlu0 %1058
    %v1061 = vsel %vm933, %v1056, 0
    %v1064 = vsel %vm949, %v1059, 0
    %1066 = vmatprep.subr.bf16.mxu0 0
    %1067 = vmatpush1.bf16.msra.mxu0 %v1064
    %1068 = vmatprep.subr.bf16.mxu0 0
    %1069 = vmatpush1.bf16.msra.mxu0 0
    %1070 = vmatprep.subr.bf16.mxu0 0
    %1071 = vmatpush1.bf16.msra.mxu0 0
    %1072 = vmatprep.subr.bf16.mxu0 0
    %1073 = vmatpush1.bf16.msra.mxu0 0
    %1074 = vmatprep.subr.bf16.mxu0 0
    %1075 = vmatpush1.bf16.msra.mxu0 0
    %1076 = vmatprep.subr.bf16.mxu0 0
    %1077 = vmatpush1.bf16.msra.mxu0 0
    %1078 = vmatprep.subr.bf16.mxu0 0
    %1079 = vmatpush1.bf16.msra.mxu0 0
    %1080 = vmatprep.subr.bf16.mxu0 0
    %1081 = vmatpush1.bf16.msra.mxu0 0
    %1082 = vmatprep.subr.bf16.mxu0 0
    %1083 = vmatpush1.bf16.msra.mxu0 0
    %1084 = vmatprep.subr.bf16.mxu0 0
    %1085 = vmatpush1.bf16.msra.mxu0 0
    %1086 = vmatprep.subr.bf16.mxu0 0
    %1087 = vmatpush1.bf16.msra.mxu0 0
    %1088 = vmatprep.subr.bf16.mxu0 0
    %1089 = vmatpush1.bf16.msra.mxu0 0
    %1090 = vmatprep.subr.bf16.mxu0 0
    %1091 = vmatpush1.bf16.msra.mxu0 0
    %1092 = vmatprep.subr.bf16.mxu0 0
    %1093 = vmatpush1.bf16.msra.mxu0 0
    %1094 = vmatprep.subr.bf16.mxu0 0
    %1095 = vmatpush1.bf16.msra.mxu0 0
    %1096 = vmatprep.subr.bf16.mxu0 0
    %1097 = vmatpush1.bf16.msra.mxu0 0
    %1098 = vmatprep.mubr.bf16.mxu0 0
    %1099 = vmatmul.mubr.bf16.gmra.mrb[0].mxu0 %v1061
    %v1100 = vpop.f32.mrb[0].mxu0
    %v1101 = vadd.f32 0.0, %v1100
    %v1102 = vpop.f32.mrb[0].mxu0
    %v1103 = vpop.f32.mrb[0].mxu0
    %v1104 = vpop.f32.mrb[0].mxu0
    %1105 = vdwg.mxu0
    %1106 = vrot.lane.b32.xlu0 %v883, 64
    %v1107 = vpop.permute.xlu0 %1106
    %1108 = vrot.lane.b32.xlu0 %v884, 64
    %v1109 = vpop.permute.xlu0 %1108
    %v1111 = vsel %vm886, %v1107, 0
    %v1114 = vsel %vm886, %v1109, 0
    %1116 = vmatprep.subr.bf16.mxu0 0
    %1117 = vmatpush1.bf16.xpose.msra.mxu0 %v1114
    %1118 = vmatprep.subr.bf16.mxu0 0
    %1119 = vmatpush1.bf16.xpose.msra.mxu0 0
    %1120 = vmatprep.subr.bf16.mxu0 0
    %1121 = vmatpush1.bf16.xpose.msra.mxu0 0
    %1122 = vmatprep.subr.bf16.mxu0 0
    %1123 = vmatpush1.bf16.xpose.msra.mxu0 0
    %1124 = vmatprep.subr.bf16.mxu0 0
    %1125 = vmatpush1.bf16.xpose.msra.mxu0 0
    %1126 = vmatprep.subr.bf16.mxu0 0
    %1127 = vmatpush1.bf16.xpose.msra.mxu0 0
    %1128 = vmatprep.subr.bf16.mxu0 0
    %1129 = vmatpush1.bf16.xpose.msra.mxu0 0
    %1130 = vmatprep.subr.bf16.mxu0 0
    %1131 = vmatpush1.bf16.xpose.msra.mxu0 0
    %1132 = vmatprep.subr.bf16.mxu0 0
    %1133 = vmatpush1.bf16.xpose.msra.mxu0 0
    %1134 = vmatprep.subr.bf16.mxu0 0
    %1135 = vmatpush1.bf16.xpose.msra.mxu0 0
    %1136 = vmatprep.subr.bf16.mxu0 0
    %1137 = vmatpush1.bf16.xpose.msra.mxu0 0
    %1138 = vmatprep.subr.bf16.mxu0 0
    %1139 = vmatpush1.bf16.xpose.msra.mxu0 0
    %1140 = vmatprep.subr.bf16.mxu0 0
    %1141 = vmatpush1.bf16.xpose.msra.mxu0 0
    %1142 = vmatprep.subr.bf16.mxu0 0
    %1143 = vmatpush1.bf16.xpose.msra.mxu0 0
    %1144 = vmatprep.subr.bf16.mxu0 0
    %1145 = vmatpush1.bf16.xpose.msra.mxu0 0
    %1146 = vmatprep.subr.bf16.mxu0 0
    %1147 = vmatpush1.bf16.xpose.msra.mxu0 0
    %1148 = vmatprep.mubr.bf16.mxu0 0
    %1149 = vmatmul.mubr.bf16.gmra.mrb[0].mxu0 %v1111
    %v1150 = vpop.f32.mrb[0].mxu0
    %v1151 = vadd.f32 %v619, %v1150
    %v1152 = vpop.f32.mrb[0].mxu0
    %v1153 = vpop.f32.mrb[0].mxu0
    %v1154 = vpop.f32.mrb[0].mxu0
    %1155 = vdwg.mxu0
    %v1156 = vsel %vm933, %v1151, -inf
    %1157 = vmax.xlane.f32.xlu0 %v1156
    %v1158 = vpop.xlane.xlu0 %1157
    %v1159 = vsub.f32 %v1151, %v1158
    %v1160 = vmul.f32 %v1159, 1.442695
    %v1161 = vpow.pop %v1160
    %v1162 = vsel %vm933, %v1161, 0.0
    %1163 = vadd.xlane.f32.xlu0 %v1162
    %v1164 = vpop.xlane.xlu0 %1163
    %v1165 = vrcp.pop %v1164
    %v1166 = vmul.f32 %v1161, %v1165
    %v1167 = vpack.c.bf16 %v1166, %v1166
    %1168 = vrot.lane.b32.xlu0 %v885, 64
    %v1169 = vpop.permute.xlu0 %1168
    %v1171 = vsel %vm933, %v1167, 0
    %v1174 = vsel %vm949, %v1169, 0
    %1176 = vmatprep.subr.bf16.mxu0 0
    %1177 = vmatpush1.bf16.msra.mxu0 %v1174
    %1178 = vmatprep.subr.bf16.mxu0 0
    %1179 = vmatpush1.bf16.msra.mxu0 0
    %1180 = vmatprep.subr.bf16.mxu0 0
    %1181 = vmatpush1.bf16.msra.mxu0 0
    %1182 = vmatprep.subr.bf16.mxu0 0
    %1183 = vmatpush1.bf16.msra.mxu0 0
    %1184 = vmatprep.subr.bf16.mxu0 0
    %1185 = vmatpush1.bf16.msra.mxu0 0
    %1186 = vmatprep.subr.bf16.mxu0 0
    %1187 = vmatpush1.bf16.msra.mxu0 0
    %1188 = vmatprep.subr.bf16.mxu0 0
    %1189 = vmatpush1.bf16.msra.mxu0 0
    %1190 = vmatprep.subr.bf16.mxu0 0
    %1191 = vmatpush1.bf16.msra.mxu0 0
    %1192 = vmatprep.subr.bf16.mxu0 0
    %1193 = vmatpush1.bf16.msra.mxu0 0
    %1194 = vmatprep.subr.bf16.mxu0 0
    %1195 = vmatpush1.bf16.msra.mxu0 0
    %1196 = vmatprep.subr.bf16.mxu0 0
    %1197 = vmatpush1.bf16.msra.mxu0 0
    %1198 = vmatprep.subr.bf16.mxu0 0
    %1199 = vmatpush1.bf16.msra.mxu0 0
    %1200 = vmatprep.subr.bf16.mxu0 0
    %1201 = vmatpush1.bf16.msra.mxu0 0
    %1202 = vmatprep.subr.bf16.mxu0 0
    %1203 = vmatpush1.bf16.msra.mxu0 0
    %1204 = vmatprep.subr.bf16.mxu0 0
    %1205 = vmatpush1.bf16.msra.mxu0 0
    %1206 = vmatprep.subr.bf16.mxu0 0
    %1207 = vmatpush1.bf16.msra.mxu0 0
    %1208 = vmatprep.mubr.bf16.mxu0 0
    %1209 = vmatmul.mubr.bf16.gmra.mrb[0].mxu0 %v1171
    %v1210 = vpop.f32.mrb[0].mxu0
    %v1211 = vadd.f32 0.0, %v1210
    %v1212 = vpop.f32.mrb[0].mxu0
    %v1213 = vpop.f32.mrb[0].mxu0
    %v1214 = vpop.f32.mrb[0].mxu0
    %1215 = vdwg.mxu0
    %1216 = vrot.lane.b32.xlu0 %v883, 32
    %v1217 = vpop.permute.xlu0 %1216
    %1218 = vrot.lane.b32.xlu0 %v884, 32
    %v1219 = vpop.permute.xlu0 %1218
    %v1221 = vsel %vm886, %v1217, 0
    %v1224 = vsel %vm886, %v1219, 0
    %1226 = vmatprep.subr.bf16.mxu0 0
    %1227 = vmatpush1.bf16.xpose.msra.mxu0 %v1224
    %1228 = vmatprep.subr.bf16.mxu0 0
    %1229 = vmatpush1.bf16.xpose.msra.mxu0 0
    %1230 = vmatprep.subr.bf16.mxu0 0
    %1231 = vmatpush1.bf16.xpose.msra.mxu0 0
    %1232 = vmatprep.subr.bf16.mxu0 0
    %1233 = vmatpush1.bf16.xpose.msra.mxu0 0
    %1234 = vmatprep.subr.bf16.mxu0 0
    %1235 = vmatpush1.bf16.xpose.msra.mxu0 0
    %1236 = vmatprep.subr.bf16.mxu0 0
    %1237 = vmatpush1.bf16.xpose.msra.mxu0 0
    %1238 = vmatprep.subr.bf16.mxu0 0
    %1239 = vmatpush1.bf16.xpose.msra.mxu0 0
    %1240 = vmatprep.subr.bf16.mxu0 0
    %1241 = vmatpush1.bf16.xpose.msra.mxu0 0
    %1242 = vmatprep.subr.bf16.mxu0 0
    %1243 = vmatpush1.bf16.xpose.msra.mxu0 0
    %1244 = vmatprep.subr.bf16.mxu0 0
    %1245 = vmatpush1.bf16.xpose.msra.mxu0 0
    %1246 = vmatprep.subr.bf16.mxu0 0
    %1247 = vmatpush1.bf16.xpose.msra.mxu0 0
    %1248 = vmatprep.subr.bf16.mxu0 0
    %1249 = vmatpush1.bf16.xpose.msra.mxu0 0
    %1250 = vmatprep.subr.bf16.mxu0 0
    %1251 = vmatpush1.bf16.xpose.msra.mxu0 0
    %1252 = vmatprep.subr.bf16.mxu0 0
    %1253 = vmatpush1.bf16.xpose.msra.mxu0 0
    %1254 = vmatprep.subr.bf16.mxu0 0
    %1255 = vmatpush1.bf16.xpose.msra.mxu0 0
    %1256 = vmatprep.subr.bf16.mxu0 0
    %1257 = vmatpush1.bf16.xpose.msra.mxu0 0
    %1258 = vmatprep.mubr.bf16.mxu0 0
    %1259 = vmatmul.mubr.bf16.gmra.mrb[0].mxu0 %v1221
    %v1260 = vpop.f32.mrb[0].mxu0
    %v1261 = vadd.f32 %v619, %v1260
    %v1262 = vpop.f32.mrb[0].mxu0
    %v1263 = vpop.f32.mrb[0].mxu0
    %v1264 = vpop.f32.mrb[0].mxu0
    %1265 = vdwg.mxu0
    %v1266 = vsel %vm933, %v1261, -inf
    %1267 = vmax.xlane.f32.xlu0 %v1266
    %v1268 = vpop.xlane.xlu0 %1267
    %v1269 = vsub.f32 %v1261, %v1268
    %v1270 = vmul.f32 %v1269, 1.442695
    %v1271 = vpow.pop %v1270
    %v1272 = vsel %vm933, %v1271, 0.0
    %1273 = vadd.xlane.f32.xlu0 %v1272
    %v1274 = vpop.xlane.xlu0 %1273
    %v1275 = vrcp.pop %v1274
    %v1276 = vmul.f32 %v1271, %v1275
    %v1277 = vpack.c.bf16 %v1276, %v1276
    %1278 = vrot.lane.b32.xlu0 %v885, 32
    %v1279 = vpop.permute.xlu0 %1278
    %v1281 = vsel %vm933, %v1277, 0
    %v1284 = vsel %vm949, %v1279, 0
    %1286 = vmatprep.subr.bf16.mxu0 0
    %1287 = vmatpush1.bf16.msra.mxu0 %v1284
    %1288 = vmatprep.subr.bf16.mxu0 0
    %1289 = vmatpush1.bf16.msra.mxu0 0
    %1290 = vmatprep.subr.bf16.mxu0 0
    %1291 = vmatpush1.bf16.msra.mxu0 0
    %1292 = vmatprep.subr.bf16.mxu0 0
    %1293 = vmatpush1.bf16.msra.mxu0 0
    %1294 = vmatprep.subr.bf16.mxu0 0
    %1295 = vmatpush1.bf16.msra.mxu0 0
    %1296 = vmatprep.subr.bf16.mxu0 0
    %1297 = vmatpush1.bf16.msra.mxu0 0
    %1298 = vmatprep.subr.bf16.mxu0 0
    %1299 = vmatpush1.bf16.msra.mxu0 0
    %1300 = vmatprep.subr.bf16.mxu0 0
    %1301 = vmatpush1.bf16.msra.mxu0 0
    %1302 = vmatprep.subr.bf16.mxu0 0
    %1303 = vmatpush1.bf16.msra.mxu0 0
    %1304 = vmatprep.subr.bf16.mxu0 0
    %1305 = vmatpush1.bf16.msra.mxu0 0
    %1306 = vmatprep.subr.bf16.mxu0 0
    %1307 = vmatpush1.bf16.msra.mxu0 0
    %1308 = vmatprep.subr.bf16.mxu0 0
    %1309 = vmatpush1.bf16.msra.mxu0 0
    %1310 = vmatprep.subr.bf16.mxu0 0
    %1311 = vmatpush1.bf16.msra.mxu0 0
    %1312 = vmatprep.subr.bf16.mxu0 0
    %1313 = vmatpush1.bf16.msra.mxu0 0
    %1314 = vmatprep.subr.bf16.mxu0 0
    %1315 = vmatpush1.bf16.msra.mxu0 0
    %1316 = vmatprep.subr.bf16.mxu0 0
    %1317 = vmatpush1.bf16.msra.mxu0 0
    %1318 = vmatprep.mubr.bf16.mxu0 0
    %1319 = vmatmul.mubr.bf16.gmra.mrb[0].mxu0 %v1281
    %v1320 = vpop.f32.mrb[0].mxu0
    %v1321 = vadd.f32 0.0, %v1320
    %v1322 = vpop.f32.mrb[0].mxu0
    %v1323 = vpop.f32.mrb[0].mxu0
    %v1324 = vpop.f32.mrb[0].mxu0
    %1325 = vdwg.mxu0
    %1327 = vrot.lane.b32.xlu0 %v1101, 32
    %v1328 = vpop.permute.xlu0 %1327
    %1331 = vrot.lane.b32.xlu0 %v1211, 64
    %v1332 = vpop.permute.xlu0 %1331
    %1335 = vrot.lane.b32.xlu0 %v1321, 96
    %v1336 = vpop.permute.xlu0 %1335
    %v1338 = vsel %vm886, %v988, %v1328
    %vm1339 = vcmask 523264
    %v1340 = vsel %vm1339, %v1338, %v1332
    %vm1341 = vcmask 785408
    %v1342 = vsel %vm1341, %v1340, %v1336
    %v1343 = vmul.f32 %v837, 0.17677669
    %v1344 = vpack.c.bf16 %v1343, %v1343
    %v1345 = vpack.c.bf16 %v839, %v839
    %v1346 = vpack.c.bf16 %v879, %v879
    %v1348 = vsel %vm886, %v1344, 0
    %v1351 = vsel %vm886, %v1345, 0
    %1353 = vmatprep.subr.bf16.mxu0 0
    %1354 = vmatpush1.bf16.xpose.msra.mxu0 %v1351
    %1355 = vmatprep.subr.bf16.mxu0 0
    %1356 = vmatpush1.bf16.xpose.msra.mxu0 0
    %1357 = vmatprep.subr.bf16.mxu0 0
    %1358 = vmatpush1.bf16.xpose.msra.mxu0 0
    %1359 = vmatprep.subr.bf16.mxu0 0
    %1360 = vmatpush1.bf16.xpose.msra.mxu0 0
    %1361 = vmatprep.subr.bf16.mxu0 0
    %1362 = vmatpush1.bf16.xpose.msra.mxu0 0
    %1363 = vmatprep.subr.bf16.mxu0 0
    %1364 = vmatpush1.bf16.xpose.msra.mxu0 0
    %1365 = vmatprep.subr.bf16.mxu0 0
    %1366 = vmatpush1.bf16.xpose.msra.mxu0 0
    %1367 = vmatprep.subr.bf16.mxu0 0
    %1368 = vmatpush1.bf16.xpose.msra.mxu0 0
    %1369 = vmatprep.subr.bf16.mxu0 0
    %1370 = vmatpush1.bf16.xpose.msra.mxu0 0
    %1371 = vmatprep.subr.bf16.mxu0 0
    %1372 = vmatpush1.bf16.xpose.msra.mxu0 0
    %1373 = vmatprep.subr.bf16.mxu0 0
    %1374 = vmatpush1.bf16.xpose.msra.mxu0 0
    %1375 = vmatprep.subr.bf16.mxu0 0
    %1376 = vmatpush1.bf16.xpose.msra.mxu0 0
    %1377 = vmatprep.subr.bf16.mxu0 0
    %1378 = vmatpush1.bf16.xpose.msra.mxu0 0
    %1379 = vmatprep.subr.bf16.mxu0 0
    %1380 = vmatpush1.bf16.xpose.msra.mxu0 0
    %1381 = vmatprep.subr.bf16.mxu0 0
    %1382 = vmatpush1.bf16.xpose.msra.mxu0 0
    %1383 = vmatprep.subr.bf16.mxu0 0
    %1384 = vmatpush1.bf16.xpose.msra.mxu0 0
    %1385 = vmatprep.mubr.bf16.mxu0 0
    %1386 = vmatmul.mubr.bf16.gmra.mrb[0].mxu0 %v1348
    %v1387 = vpop.f32.mrb[0].mxu0
    %v1388 = vadd.f32 %v619, %v1387
    %v1389 = vpop.f32.mrb[0].mxu0
    %v1390 = vpop.f32.mrb[0].mxu0
    %v1391 = vpop.f32.mrb[0].mxu0
    %1392 = vdwg.mxu0
    %v1393 = vsel %vm933, %v1388, -inf
    %1394 = vmax.xlane.f32.xlu0 %v1393
    %v1395 = vpop.xlane.xlu0 %1394
    %v1396 = vsub.f32 %v1388, %v1395
    %v1397 = vmul.f32 %v1396, 1.442695
    %v1398 = vpow.pop %v1397
    %v1399 = vsel %vm933, %v1398, 0.0
    %1400 = vadd.xlane.f32.xlu0 %v1399
    %v1401 = vpop.xlane.xlu0 %1400
    %v1402 = vrcp.pop %v1401
    %v1403 = vmul.f32 %v1398, %v1402
    %v1404 = vpack.c.bf16 %v1403, %v1403
    %v1406 = vsel %vm933, %v1404, 0
    %v1409 = vsel %vm949, %v1346, 0
    %1411 = vmatprep.subr.bf16.mxu0 0
    %1412 = vmatpush1.bf16.msra.mxu0 %v1409
    %1413 = vmatprep.subr.bf16.mxu0 0
    %1414 = vmatpush1.bf16.msra.mxu0 0
    %1415 = vmatprep.subr.bf16.mxu0 0
    %1416 = vmatpush1.bf16.msra.mxu0 0
    %1417 = vmatprep.subr.bf16.mxu0 0
    %1418 = vmatpush1.bf16.msra.mxu0 0
    %1419 = vmatprep.subr.bf16.mxu0 0
    %1420 = vmatpush1.bf16.msra.mxu0 0
    %1421 = vmatprep.subr.bf16.mxu0 0
    %1422 = vmatpush1.bf16.msra.mxu0 0
    %1423 = vmatprep.subr.bf16.mxu0 0
    %1424 = vmatpush1.bf16.msra.mxu0 0
    %1425 = vmatprep.subr.bf16.mxu0 0
    %1426 = vmatpush1.bf16.msra.mxu0 0
    %1427 = vmatprep.subr.bf16.mxu0 0
    %1428 = vmatpush1.bf16.msra.mxu0 0
    %1429 = vmatprep.subr.bf16.mxu0 0
    %1430 = vmatpush1.bf16.msra.mxu0 0
    %1431 = vmatprep.subr.bf16.mxu0 0
    %1432 = vmatpush1.bf16.msra.mxu0 0
    %1433 = vmatprep.subr.bf16.mxu0 0
    %1434 = vmatpush1.bf16.msra.mxu0 0
    %1435 = vmatprep.subr.bf16.mxu0 0
    %1436 = vmatpush1.bf16.msra.mxu0 0
    %1437 = vmatprep.subr.bf16.mxu0 0
    %1438 = vmatpush1.bf16.msra.mxu0 0
    %1439 = vmatprep.subr.bf16.mxu0 0
    %1440 = vmatpush1.bf16.msra.mxu0 0
    %1441 = vmatprep.subr.bf16.mxu0 0
    %1442 = vmatpush1.bf16.msra.mxu0 0
    %1443 = vmatprep.mubr.bf16.mxu0 0
    %1444 = vmatmul.mubr.bf16.gmra.mrb[0].mxu0 %v1406
    %v1445 = vpop.f32.mrb[0].mxu0
    %v1446 = vadd.f32 0.0, %v1445
    %v1447 = vpop.f32.mrb[0].mxu0
    %v1448 = vpop.f32.mrb[0].mxu0
    %v1449 = vpop.f32.mrb[0].mxu0
    %1450 = vdwg.mxu0
    %1452 = vrot.lane.b32.xlu0 %v1344, 96
    %v1453 = vpop.permute.xlu0 %1452
    %1455 = vrot.lane.b32.xlu0 %v1345, 96
    %v1456 = vpop.permute.xlu0 %1455
    %v1458 = vsel %vm886, %v1453, 0
    %v1461 = vsel %vm886, %v1456, 0
    %1463 = vmatprep.subr.bf16.mxu0 0
    %1464 = vmatpush1.bf16.xpose.msra.mxu0 %v1461
    %1465 = vmatprep.subr.bf16.mxu0 0
    %1466 = vmatpush1.bf16.xpose.msra.mxu0 0
    %1467 = vmatprep.subr.bf16.mxu0 0
    %1468 = vmatpush1.bf16.xpose.msra.mxu0 0
    %1469 = vmatprep.subr.bf16.mxu0 0
    %1470 = vmatpush1.bf16.xpose.msra.mxu0 0
    %1471 = vmatprep.subr.bf16.mxu0 0
    %1472 = vmatpush1.bf16.xpose.msra.mxu0 0
    %1473 = vmatprep.subr.bf16.mxu0 0
    %1474 = vmatpush1.bf16.xpose.msra.mxu0 0
    %1475 = vmatprep.subr.bf16.mxu0 0
    %1476 = vmatpush1.bf16.xpose.msra.mxu0 0
    %1477 = vmatprep.subr.bf16.mxu0 0
    %1478 = vmatpush1.bf16.xpose.msra.mxu0 0
    %1479 = vmatprep.subr.bf16.mxu0 0
    %1480 = vmatpush1.bf16.xpose.msra.mxu0 0
    %1481 = vmatprep.subr.bf16.mxu0 0
    %1482 = vmatpush1.bf16.xpose.msra.mxu0 0
    %1483 = vmatprep.subr.bf16.mxu0 0
    %1484 = vmatpush1.bf16.xpose.msra.mxu0 0
    %1485 = vmatprep.subr.bf16.mxu0 0
    %1486 = vmatpush1.bf16.xpose.msra.mxu0 0
    %1487 = vmatprep.subr.bf16.mxu0 0
    %1488 = vmatpush1.bf16.xpose.msra.mxu0 0
    %1489 = vmatprep.subr.bf16.mxu0 0
    %1490 = vmatpush1.bf16.xpose.msra.mxu0 0
    %1491 = vmatprep.subr.bf16.mxu0 0
    %1492 = vmatpush1.bf16.xpose.msra.mxu0 0
    %1493 = vmatprep.subr.bf16.mxu0 0
    %1494 = vmatpush1.bf16.xpose.msra.mxu0 0
    %1495 = vmatprep.mubr.bf16.mxu0 0
    %1496 = vmatmul.mubr.bf16.gmra.mrb[0].mxu0 %v1458
    %v1497 = vpop.f32.mrb[0].mxu0
    %v1498 = vadd.f32 %v619, %v1497
    %v1499 = vpop.f32.mrb[0].mxu0
    %v1500 = vpop.f32.mrb[0].mxu0
    %v1501 = vpop.f32.mrb[0].mxu0
    %1502 = vdwg.mxu0
    %v1503 = vsel %vm933, %v1498, -inf
    %1504 = vmax.xlane.f32.xlu0 %v1503
    %v1505 = vpop.xlane.xlu0 %1504
    %v1506 = vsub.f32 %v1498, %v1505
    %v1507 = vmul.f32 %v1506, 1.442695
    %v1508 = vpow.pop %v1507
    %v1509 = vsel %vm933, %v1508, 0.0
    %1510 = vadd.xlane.f32.xlu0 %v1509
    %v1511 = vpop.xlane.xlu0 %1510
    %v1512 = vrcp.pop %v1511
    %v1513 = vmul.f32 %v1508, %v1512
    %v1514 = vpack.c.bf16 %v1513, %v1513
    %1516 = vrot.lane.b32.xlu0 %v1346, 96
    %v1517 = vpop.permute.xlu0 %1516
    %v1519 = vsel %vm933, %v1514, 0
    %v1522 = vsel %vm949, %v1517, 0
    %1524 = vmatprep.subr.bf16.mxu0 0
    %1525 = vmatpush1.bf16.msra.mxu0 %v1522
    %1526 = vmatprep.subr.bf16.mxu0 0
    %1527 = vmatpush1.bf16.msra.mxu0 0
    %1528 = vmatprep.subr.bf16.mxu0 0
    %1529 = vmatpush1.bf16.msra.mxu0 0
    %1530 = vmatprep.subr.bf16.mxu0 0
    %1531 = vmatpush1.bf16.msra.mxu0 0
    %1532 = vmatprep.subr.bf16.mxu0 0
    %1533 = vmatpush1.bf16.msra.mxu0 0
    %1534 = vmatprep.subr.bf16.mxu0 0
    %1535 = vmatpush1.bf16.msra.mxu0 0
    %1536 = vmatprep.subr.bf16.mxu0 0
    %1537 = vmatpush1.bf16.msra.mxu0 0
    %1538 = vmatprep.subr.bf16.mxu0 0
    %1539 = vmatpush1.bf16.msra.mxu0 0
    %1540 = vmatprep.subr.bf16.mxu0 0
    %1541 = vmatpush1.bf16.msra.mxu0 0
    %1542 = vmatprep.subr.bf16.mxu0 0
    %1543 = vmatpush1.bf16.msra.mxu0 0
    %1544 = vmatprep.subr.bf16.mxu0 0
    %1545 = vmatpush1.bf16.msra.mxu0 0
    %1546 = vmatprep.subr.bf16.mxu0 0
    %1547 = vmatpush1.bf16.msra.mxu0 0
    %1548 = vmatprep.subr.bf16.mxu0 0
    %1549 = vmatpush1.bf16.msra.mxu0 0
    %1550 = vmatprep.subr.bf16.mxu0 0
    %1551 = vmatpush1.bf16.msra.mxu0 0
    %1552 = vmatprep.subr.bf16.mxu0 0
    %1553 = vmatpush1.bf16.msra.mxu0 0
    %1554 = vmatprep.subr.bf16.mxu0 0
    %1555 = vmatpush1.bf16.msra.mxu0 0
    %1556 = vmatprep.mubr.bf16.mxu0 0
    %1557 = vmatmul.mubr.bf16.gmra.mrb[0].mxu0 %v1519
    %v1558 = vpop.f32.mrb[0].mxu0
    %v1559 = vadd.f32 0.0, %v1558
    %v1560 = vpop.f32.mrb[0].mxu0
    %v1561 = vpop.f32.mrb[0].mxu0
    %v1562 = vpop.f32.mrb[0].mxu0
    %1563 = vdwg.mxu0
    %1564 = vrot.lane.b32.xlu0 %v1344, 64
    %v1565 = vpop.permute.xlu0 %1564
    %1566 = vrot.lane.b32.xlu0 %v1345, 64
    %v1567 = vpop.permute.xlu0 %1566
    %v1569 = vsel %vm886, %v1565, 0
    %v1572 = vsel %vm886, %v1567, 0
    %1574 = vmatprep.subr.bf16.mxu0 0
    %1575 = vmatpush1.bf16.xpose.msra.mxu0 %v1572
    %1576 = vmatprep.subr.bf16.mxu0 0
    %1577 = vmatpush1.bf16.xpose.msra.mxu0 0
    %1578 = vmatprep.subr.bf16.mxu0 0
    %1579 = vmatpush1.bf16.xpose.msra.mxu0 0
    %1580 = vmatprep.subr.bf16.mxu0 0
    %1581 = vmatpush1.bf16.xpose.msra.mxu0 0
    %1582 = vmatprep.subr.bf16.mxu0 0
    %1583 = vmatpush1.bf16.xpose.msra.mxu0 0
    %1584 = vmatprep.subr.bf16.mxu0 0
    %1585 = vmatpush1.bf16.xpose.msra.mxu0 0
    %1586 = vmatprep.subr.bf16.mxu0 0
    %1587 = vmatpush1.bf16.xpose.msra.mxu0 0
    %1588 = vmatprep.subr.bf16.mxu0 0
    %1589 = vmatpush1.bf16.xpose.msra.mxu0 0
    %1590 = vmatprep.subr.bf16.mxu0 0
    %1591 = vmatpush1.bf16.xpose.msra.mxu0 0
    %1592 = vmatprep.subr.bf16.mxu0 0
    %1593 = vmatpush1.bf16.xpose.msra.mxu0 0
    %1594 = vmatprep.subr.bf16.mxu0 0
    %1595 = vmatpush1.bf16.xpose.msra.mxu0 0
    %1596 = vmatprep.subr.bf16.mxu0 0
    %1597 = vmatpush1.bf16.xpose.msra.mxu0 0
    %1598 = vmatprep.subr.bf16.mxu0 0
    %1599 = vmatpush1.bf16.xpose.msra.mxu0 0
    %1600 = vmatprep.subr.bf16.mxu0 0
    %1601 = vmatpush1.bf16.xpose.msra.mxu0 0
    %1602 = vmatprep.subr.bf16.mxu0 0
    %1603 = vmatpush1.bf16.xpose.msra.mxu0 0
    %1604 = vmatprep.subr.bf16.mxu0 0
    %1605 = vmatpush1.bf16.xpose.msra.mxu0 0
    %1606 = vmatprep.mubr.bf16.mxu0 0
    %1607 = vmatmul.mubr.bf16.gmra.mrb[0].mxu0 %v1569
    %v1608 = vpop.f32.mrb[0].mxu0
    %v1609 = vadd.f32 %v619, %v1608
    %v1610 = vpop.f32.mrb[0].mxu0
    %v1611 = vpop.f32.mrb[0].mxu0
    %v1612 = vpop.f32.mrb[0].mxu0
    %1613 = vdwg.mxu0
    %v1614 = vsel %vm933, %v1609, -inf
    %1615 = vmax.xlane.f32.xlu0 %v1614
    %v1616 = vpop.xlane.xlu0 %1615
    %v1617 = vsub.f32 %v1609, %v1616
    %v1618 = vmul.f32 %v1617, 1.442695
    %v1619 = vpow.pop %v1618
    %v1620 = vsel %vm933, %v1619, 0.0
    %1621 = vadd.xlane.f32.xlu0 %v1620
    %v1622 = vpop.xlane.xlu0 %1621
    %v1623 = vrcp.pop %v1622
    %v1624 = vmul.f32 %v1619, %v1623
    %v1625 = vpack.c.bf16 %v1624, %v1624
    %1626 = vrot.lane.b32.xlu0 %v1346, 64
    %v1627 = vpop.permute.xlu0 %1626
    %v1629 = vsel %vm933, %v1625, 0
    %v1632 = vsel %vm949, %v1627, 0
    %1634 = vmatprep.subr.bf16.mxu0 0
    %1635 = vmatpush1.bf16.msra.mxu0 %v1632
    %1636 = vmatprep.subr.bf16.mxu0 0
    %1637 = vmatpush1.bf16.msra.mxu0 0
    %1638 = vmatprep.subr.bf16.mxu0 0
    %1639 = vmatpush1.bf16.msra.mxu0 0
    %1640 = vmatprep.subr.bf16.mxu0 0
    %1641 = vmatpush1.bf16.msra.mxu0 0
    %1642 = vmatprep.subr.bf16.mxu0 0
    %1643 = vmatpush1.bf16.msra.mxu0 0
    %1644 = vmatprep.subr.bf16.mxu0 0
    %1645 = vmatpush1.bf16.msra.mxu0 0
    %1646 = vmatprep.subr.bf16.mxu0 0
    %1647 = vmatpush1.bf16.msra.mxu0 0
    %1648 = vmatprep.subr.bf16.mxu0 0
    %1649 = vmatpush1.bf16.msra.mxu0 0
    %1650 = vmatprep.subr.bf16.mxu0 0
    %1651 = vmatpush1.bf16.msra.mxu0 0
    %1652 = vmatprep.subr.bf16.mxu0 0
    %1653 = vmatpush1.bf16.msra.mxu0 0
    %1654 = vmatprep.subr.bf16.mxu0 0
    %1655 = vmatpush1.bf16.msra.mxu0 0
    %1656 = vmatprep.subr.bf16.mxu0 0
    %1657 = vmatpush1.bf16.msra.mxu0 0
    %1658 = vmatprep.subr.bf16.mxu0 0
    %1659 = vmatpush1.bf16.msra.mxu0 0
    %1660 = vmatprep.subr.bf16.mxu0 0
    %1661 = vmatpush1.bf16.msra.mxu0 0
    %1662 = vmatprep.subr.bf16.mxu0 0
    %1663 = vmatpush1.bf16.msra.mxu0 0
    %1664 = vmatprep.subr.bf16.mxu0 0
    %1665 = vmatpush1.bf16.msra.mxu0 0
    %1666 = vmatprep.mubr.bf16.mxu0 0
    %1667 = vmatmul.mubr.bf16.gmra.mrb[0].mxu0 %v1629
    %v1668 = vpop.f32.mrb[0].mxu0
    %v1669 = vadd.f32 0.0, %v1668
    %v1670 = vpop.f32.mrb[0].mxu0
    %v1671 = vpop.f32.mrb[0].mxu0
    %v1672 = vpop.f32.mrb[0].mxu0
    %1673 = vdwg.mxu0
    %1674 = vrot.lane.b32.xlu0 %v1344, 32
    %v1675 = vpop.permute.xlu0 %1674
    %1676 = vrot.lane.b32.xlu0 %v1345, 32
    %v1677 = vpop.permute.xlu0 %1676
    %v1679 = vsel %vm886, %v1675, 0
    %v1682 = vsel %vm886, %v1677, 0
    %1684 = vmatprep.subr.bf16.mxu0 0
    %1685 = vmatpush1.bf16.xpose.msra.mxu0 %v1682
    %1686 = vmatprep.subr.bf16.mxu0 0
    %1687 = vmatpush1.bf16.xpose.msra.mxu0 0
    %1688 = vmatprep.subr.bf16.mxu0 0
    %1689 = vmatpush1.bf16.xpose.msra.mxu0 0
    %1690 = vmatprep.subr.bf16.mxu0 0
    %1691 = vmatpush1.bf16.xpose.msra.mxu0 0
    %1692 = vmatprep.subr.bf16.mxu0 0
    %1693 = vmatpush1.bf16.xpose.msra.mxu0 0
    %1694 = vmatprep.subr.bf16.mxu0 0
    %1695 = vmatpush1.bf16.xpose.msra.mxu0 0
    %1696 = vmatprep.subr.bf16.mxu0 0
    %1697 = vmatpush1.bf16.xpose.msra.mxu0 0
    %1698 = vmatprep.subr.bf16.mxu0 0
    %1699 = vmatpush1.bf16.xpose.msra.mxu0 0
    %1700 = vmatprep.subr.bf16.mxu0 0
    %1701 = vmatpush1.bf16.xpose.msra.mxu0 0
    %1702 = vmatprep.subr.bf16.mxu0 0
    %1703 = vmatpush1.bf16.xpose.msra.mxu0 0
    %1704 = vmatprep.subr.bf16.mxu0 0
    %1705 = vmatpush1.bf16.xpose.msra.mxu0 0
    %1706 = vmatprep.subr.bf16.mxu0 0
    %1707 = vmatpush1.bf16.xpose.msra.mxu0 0
    %1708 = vmatprep.subr.bf16.mxu0 0
    %1709 = vmatpush1.bf16.xpose.msra.mxu0 0
    %1710 = vmatprep.subr.bf16.mxu0 0
    %1711 = vmatpush1.bf16.xpose.msra.mxu0 0
    %1712 = vmatprep.subr.bf16.mxu0 0
    %1713 = vmatpush1.bf16.xpose.msra.mxu0 0
    %1714 = vmatprep.subr.bf16.mxu0 0
    %1715 = vmatpush1.bf16.xpose.msra.mxu0 0
    %1716 = vmatprep.mubr.bf16.mxu0 0
    %1717 = vmatmul.mubr.bf16.gmra.mrb[0].mxu0 %v1679
    %v1718 = vpop.f32.mrb[0].mxu0
    %v1719 = vadd.f32 %v619, %v1718
    %v1720 = vpop.f32.mrb[0].mxu0
    %v1721 = vpop.f32.mrb[0].mxu0
    %v1722 = vpop.f32.mrb[0].mxu0
    %1723 = vdwg.mxu0
    %v1724 = vsel %vm933, %v1719, -inf
    %1725 = vmax.xlane.f32.xlu0 %v1724
    %v1726 = vpop.xlane.xlu0 %1725
    %v1727 = vsub.f32 %v1719, %v1726
    %v1728 = vmul.f32 %v1727, 1.442695
    %v1729 = vpow.pop %v1728
    %v1730 = vsel %vm933, %v1729, 0.0
    %1731 = vadd.xlane.f32.xlu0 %v1730
    %v1732 = vpop.xlane.xlu0 %1731
    %v1733 = vrcp.pop %v1732
    %v1734 = vmul.f32 %v1729, %v1733
    %v1735 = vpack.c.bf16 %v1734, %v1734
    %1736 = vrot.lane.b32.xlu0 %v1346, 32
    %v1737 = vpop.permute.xlu0 %1736
    %v1739 = vsel %vm933, %v1735, 0
    %v1742 = vsel %vm949, %v1737, 0
    %1744 = vmatprep.subr.bf16.mxu0 0
    %1745 = vmatpush1.bf16.msra.mxu0 %v1742
    %1746 = vmatprep.subr.bf16.mxu0 0
    %1747 = vmatpush1.bf16.msra.mxu0 0
    %1748 = vmatprep.subr.bf16.mxu0 0
    %1749 = vmatpush1.bf16.msra.mxu0 0
    %1750 = vmatprep.subr.bf16.mxu0 0
    %1751 = vmatpush1.bf16.msra.mxu0 0
    %1752 = vmatprep.subr.bf16.mxu0 0
    %1753 = vmatpush1.bf16.msra.mxu0 0
    %1754 = vmatprep.subr.bf16.mxu0 0
    %1755 = vmatpush1.bf16.msra.mxu0 0
    %1756 = vmatprep.subr.bf16.mxu0 0
    %1757 = vmatpush1.bf16.msra.mxu0 0
    %1758 = vmatprep.subr.bf16.mxu0 0
    %1759 = vmatpush1.bf16.msra.mxu0 0
    %1760 = vmatprep.subr.bf16.mxu0 0
    %1761 = vmatpush1.bf16.msra.mxu0 0
    %1762 = vmatprep.subr.bf16.mxu0 0
    %1763 = vmatpush1.bf16.msra.mxu0 0
    %1764 = vmatprep.subr.bf16.mxu0 0
    %1765 = vmatpush1.bf16.msra.mxu0 0
    %1766 = vmatprep.subr.bf16.mxu0 0
    %1767 = vmatpush1.bf16.msra.mxu0 0
    %1768 = vmatprep.subr.bf16.mxu0 0
    %1769 = vmatpush1.bf16.msra.mxu0 0
    %1770 = vmatprep.subr.bf16.mxu0 0
    %1771 = vmatpush1.bf16.msra.mxu0 0
    %1772 = vmatprep.subr.bf16.mxu0 0
    %1773 = vmatpush1.bf16.msra.mxu0 0
    %1774 = vmatprep.subr.bf16.mxu0 0
    %1775 = vmatpush1.bf16.msra.mxu0 0
    %1776 = vmatprep.mubr.bf16.mxu0 0
    %1777 = vmatmul.mubr.bf16.gmra.mrb[0].mxu0 %v1739
    %v1778 = vpop.f32.mrb[0].mxu0
    %v1779 = vadd.f32 0.0, %v1778
    %v1780 = vpop.f32.mrb[0].mxu0
    %v1781 = vpop.f32.mrb[0].mxu0
    %v1782 = vpop.f32.mrb[0].mxu0
    %1783 = vdwg.mxu0
    %1785 = vrot.lane.b32.xlu0 %v1559, 32
    %v1786 = vpop.permute.xlu0 %1785
    %1789 = vrot.lane.b32.xlu0 %v1669, 64
    %v1790 = vpop.permute.xlu0 %1789
    %1793 = vrot.lane.b32.xlu0 %v1779, 96
    %v1794 = vpop.permute.xlu0 %1793
    %v1796 = vsel %vm886, %v1446, %v1786
    %v1797 = vsel %vm1339, %v1796, %v1790
    %v1798 = vsel %vm1341, %v1797, %v1794
    %v1799 = vld [vmem:[%s19] sm:$0xf]
    %v1800 = vld [vmem:[%s19 + $0x4] sm:$0xf]
    %v1801 = vld [vmem:[%s19 + $0x8] sm:$0xf]
    %v1802 = vld [vmem:[%s19 + $0xc] sm:$0xf]
    %v1803 = vld [vmem:[%s19 + $0x10] sm:$0xf]
    %v1804 = vld [vmem:[%s19 + $0x14] sm:$0xf]
    %v1805 = vld [vmem:[%s19 + $0x18] sm:$0xf]
    %v1806 = vld [vmem:[%s19 + $0x1c] sm:$0xf]
    %v1807 = vld [vmem:[%s19 + $0x20] sm:$0xf]
    %v1808 = vld [vmem:[%s19 + $0x24] sm:$0xf]
    %v1809 = vld [vmem:[%s19 + $0x28] sm:$0xf]
    %v1810 = vld [vmem:[%s19 + $0x2c] sm:$0xf]
    %v1811 = vld [vmem:[%s19 + $0x30] sm:$0xf]
    %v1812 = vld [vmem:[%s19 + $0x34] sm:$0xf]
    %v1813 = vld [vmem:[%s19 + $0x38] sm:$0xf]
    %v1814 = vld [vmem:[%s19 + $0x3c] sm:$0xf]
    %v1815 = vpack.c.bf16 %v1798, %v1342
    %v1816 = vld [vmem:[#allocation10] sm:$0x1]
    %v1818 = vlaneseq
    %v1819 = vshrl.u32 %v1818, 7
    %v1820 = vsub.s32 0, %v1819
    %v1821 = vrot.slane %v1816, %v1820
    %v1839 = vunpack.c.l.b16 %v1799
    %v1840 = vunpack.c.l.b16 %v1800
    %v1841 = vunpack.c.l.b16 %v1801
    %v1842 = vunpack.c.l.b16 %v1802
    %v1843 = vunpack.c.l.b16 %v1803
    %v1844 = vunpack.c.l.b16 %v1804
    %v1845 = vunpack.c.l.b16 %v1805
    %v1846 = vunpack.c.l.b16 %v1806
    %v1847 = vunpack.c.l.b16 %v1807
    %v1848 = vunpack.c.l.b16 %v1808
    %v1849 = vunpack.c.l.b16 %v1809
    %v1850 = vunpack.c.l.b16 %v1810
    %v1851 = vunpack.c.l.b16 %v1811
    %v1852 = vunpack.c.l.b16 %v1812
    %v1853 = vunpack.c.l.b16 %v1813
    %v1854 = vunpack.c.l.b16 %v1814
    %v1855 = vpack.c.b16 %v1840, %v1839
    %v1856 = vpack.c.b16 %v1842, %v1841
    %v1857 = vpack.c.b16 %v1844, %v1843
    %v1858 = vpack.c.b16 %v1846, %v1845
    %v1859 = vpack.c.b16 %v1848, %v1847
    %v1860 = vpack.c.b16 %v1850, %v1849
    %v1861 = vpack.c.b16 %v1852, %v1851
    %v1862 = vpack.c.b16 %v1854, %v1853
    %1871 = vmatprep.subr.bf16.mxu0 0
    %1872 = vmatpush1.bf16.msra.mxu0 %v1855
    %1873 = vmatprep.subr.bf16.mxu0 0
    %1874 = vmatpush1.bf16.msra.mxu0 %v1856
    %1875 = vmatprep.subr.bf16.mxu0 0
    %1876 = vmatpush1.bf16.msra.mxu0 %v1857
    %1877 = vmatprep.subr.bf16.mxu0 0
    %1878 = vmatpush1.bf16.msra.mxu0 %v1858
    %1879 = vmatprep.subr.bf16.mxu0 0
    %1880 = vmatpush1.bf16.msra.mxu0 %v1859
    %1881 = vmatprep.subr.bf16.mxu0 0
    %1882 = vmatpush1.bf16.msra.mxu0 %v1860
    %1883 = vmatprep.subr.bf16.mxu0 0
    %1884 = vmatpush1.bf16.msra.mxu0 %v1861
    %1885 = vmatprep.subr.bf16.mxu0 0
    %1886 = vmatpush1.bf16.msra.mxu0 %v1862
    %1887 = vmatprep.subr.bf16.mxu0 0
    %1888 = vmatpush1.bf16.msra.mxu0 0
    %1889 = vmatprep.subr.bf16.mxu0 0
    %1890 = vmatpush1.bf16.msra.mxu0 0
    %1891 = vmatprep.subr.bf16.mxu0 0
    %1892 = vmatpush1.bf16.msra.mxu0 0
    %1893 = vmatprep.subr.bf16.mxu0 0
    %1894 = vmatpush1.bf16.msra.mxu0 0
    %1895 = vmatprep.subr.bf16.mxu0 0
    %1896 = vmatpush1.bf16.msra.mxu0 0
    %1897 = vmatprep.subr.bf16.mxu0 0
    %1898 = vmatpush1.bf16.msra.mxu0 0
    %1899 = vmatprep.subr.bf16.mxu0 0
    %1900 = vmatpush1.bf16.msra.mxu0 0
    %1901 = vmatprep.subr.bf16.mxu0 0
    %1902 = vmatpush1.bf16.msra.mxu0 0
    %1903 = vmatprep.mubr.bf16.mxu0 0
    %1904 = vmatmul.mubr.bf16.gmra.mrb[0].mxu0 %v1815
    %v1905 = vpop.f32.mrb[0].mxu0
    %v1906 = vadd.f32 %v1821, %v1905
    %v1907 = vpop.f32.mrb[0].mxu0
    %v1908 = vpop.f32.mrb[0].mxu0
    %v1909 = vadd.f32 %v1821, %v1908
    %v1910 = vpop.f32.mrb[0].mxu0
    %1911 = vdwg.mxu0
    %v1912 = vadd.f32 %v612, %v1906
    %v1913 = vadd.f32 %v613, %v1909
    %v1914 = vld [vmem:[#allocation19] sm:$0x1]
    %v1915 = vld [vmem:[#allocation21] sm:$0x1]
    %1916 = vadd.xlane.f32.xlu0 %v1912
    %v1917 = vpop.xlane.xlu0 %1916
    %1918 = vadd.xlane.f32.xlu0 %v1913
    %v1919 = vpop.xlane.xlu0 %1918
    %v1920 = vrcp.pop 128.0
    %v1921 = vmul.f32 %v1917, %v1920
    %v1922 = vmul.f32 %v1919, %v1920
    %v1923 = vsub.f32 %v1912, %v1921
    %v1924 = vsub.f32 %v1913, %v1922
    %v1925 = vmul.f32 %v1923, %v1923
    %v1926 = vmul.f32 %v1924, %v1924
    %1927 = vadd.xlane.f32.xlu0 %v1925
    %v1928 = vpop.xlane.xlu0 %1927
    %1929 = vadd.xlane.f32.xlu0 %v1926
    %v1930 = vpop.xlane.xlu0 %1929
    %v1931 = vmul.f32 %v1928, %v1920
    %v1932 = vmul.f32 %v1930, %v1920
    %v1933 = vadd.f32 %v1931, 1e-05
    %v1934 = vadd.f32 %v1932, 1e-05
    %v1935 = vrsqrt.pop %v1933
    %v1936 = vrsqrt.pop %v1934
    %v1937 = vmul.f32 %v1923, %v1935
    %v1938 = vmul.f32 %v1924, %v1936
    %v1940 = vlaneseq
    %v1941 = vshrl.u32 %v1940, 7
    %v1942 = vsub.s32 0, %v1941
    %v1943 = vrot.slane %v1914, %v1942
    %v1945 = vmul.f32 %v1937, %v1943
    %v1946 = vmul.f32 %v1938, %v1943
    %v1948 = vlaneseq
    %v1949 = vshrl.u32 %v1948, 7
    %v1950 = vsub.s32 0, %v1949
    %v1951 = vrot.slane %v1915, %v1950
    %v1953 = vadd.f32 %v1945, %v1951
    %v1954 = vadd.f32 %v1946, %v1951
    %v1955 = vld [vmem:[%s23] sm:$0xf]
    %v1956 = vld [vmem:[%s23 + $0x4] sm:$0xf]
    %v1957 = vld [vmem:[%s23 + $0x8] sm:$0xf]
    %v1958 = vld [vmem:[%s23 + $0xc] sm:$0xf]
    %v1959 = vld [vmem:[%s23 + $0x10] sm:$0xf]
    %v1960 = vld [vmem:[%s23 + $0x14] sm:$0xf]
    %v1961 = vld [vmem:[%s23 + $0x18] sm:$0xf]
    %v1962 = vld [vmem:[%s23 + $0x1c] sm:$0xf]
    %v1963 = vld [vmem:[%s23 + $0x20] sm:$0xf]
    %v1964 = vld [vmem:[%s23 + $0x24] sm:$0xf]
    %v1965 = vld [vmem:[%s23 + $0x28] sm:$0xf]
    %v1966 = vld [vmem:[%s23 + $0x2c] sm:$0xf]
    %v1967 = vld [vmem:[%s23 + $0x30] sm:$0xf]
    %v1968 = vld [vmem:[%s23 + $0x34] sm:$0xf]
    %v1969 = vld [vmem:[%s23 + $0x38] sm:$0xf]
    %v1970 = vld [vmem:[%s23 + $0x3c] sm:$0xf]
    %v1971 = vpack.c.bf16 %v1954, %v1953
    %v1972 = vld [vmem:[#allocation12] sm:$0x1]
    %v1974 = vlaneseq
    %v1975 = vshrl.u32 %v1974, 7
    %v1976 = vsub.s32 0, %v1975
    %v1977 = vrot.slane %v1972, %v1976
    %v1995 = vunpack.c.l.b16 %v1955
    %v1996 = vunpack.c.l.b16 %v1956
    %v1997 = vunpack.c.l.b16 %v1957
    %v1998 = vunpack.c.l.b16 %v1958
    %v1999 = vunpack.c.l.b16 %v1959
    %v2000 = vunpack.c.l.b16 %v1960
    %v2001 = vunpack.c.l.b16 %v1961
    %v2002 = vunpack.c.l.b16 %v1962
    %v2003 = vunpack.c.l.b16 %v1963
    %v2004 = vunpack.c.l.b16 %v1964
    %v2005 = vunpack.c.l.b16 %v1965
    %v2006 = vunpack.c.l.b16 %v1966
    %v2007 = vunpack.c.l.b16 %v1967
    %v2008 = vunpack.c.l.b16 %v1968
    %v2009 = vunpack.c.l.b16 %v1969
    %v2010 = vunpack.c.l.b16 %v1970
    %v2011 = vpack.c.b16 %v1996, %v1995
    %v2012 = vpack.c.b16 %v1998, %v1997
    %v2013 = vpack.c.b16 %v2000, %v1999
    %v2014 = vpack.c.b16 %v2002, %v2001
    %v2015 = vpack.c.b16 %v2004, %v2003
    %v2016 = vpack.c.b16 %v2006, %v2005
    %v2017 = vpack.c.b16 %v2008, %v2007
    %v2018 = vpack.c.b16 %v2010, %v2009
    %2027 = vmatprep.subr.bf16.mxu0 0
    %2028 = vmatpush1.bf16.msra.mxu0 %v2011
    %2029 = vmatprep.subr.bf16.mxu0 0
    %2030 = vmatpush1.bf16.msra.mxu0 %v2012
    %2031 = vmatprep.subr.bf16.mxu0 0
    %2032 = vmatpush1.bf16.msra.mxu0 %v2013
    %2033 = vmatprep.subr.bf16.mxu0 0
    %2034 = vmatpush1.bf16.msra.mxu0 %v2014
    %2035 = vmatprep.subr.bf16.mxu0 0
    %2036 = vmatpush1.bf16.msra.mxu0 %v2015
    %2037 = vmatprep.subr.bf16.mxu0 0
    %2038 = vmatpush1.bf16.msra.mxu0 %v2016
    %2039 = vmatprep.subr.bf16.mxu0 0
    %2040 = vmatpush1.bf16.msra.mxu0 %v2017
    %2041 = vmatprep.subr.bf16.mxu0 0
    %2042 = vmatpush1.bf16.msra.mxu0 %v2018
    %2043 = vmatprep.subr.bf16.mxu0 0
    %2044 = vmatpush1.bf16.msra.mxu0 0
    %2045 = vmatprep.subr.bf16.mxu0 0
    %2046 = vmatpush1.bf16.msra.mxu0 0
    %2047 = vmatprep.subr.bf16.mxu0 0
    %2048 = vmatpush1.bf16.msra.mxu0 0
    %2049 = vmatprep.subr.bf16.mxu0 0
    %2050 = vmatpush1.bf16.msra.mxu0 0
    %2051 = vmatprep.subr.bf16.mxu0 0
    %2052 = vmatpush1.bf16.msra.mxu0 0
    %2053 = vmatprep.subr.bf16.mxu0 0
    %2054 = vmatpush1.bf16.msra.mxu0 0
    %2055 = vmatprep.subr.bf16.mxu0 0
    %2056 = vmatpush1.bf16.msra.mxu0 0
    %2057 = vmatprep.subr.bf16.mxu0 0
    %2058 = vmatpush1.bf16.msra.mxu0 0
    %2059 = vmatprep.mubr.bf16.mxu0 0
    %2060 = vmatmul.mubr.bf16.gmra.mrb[0].mxu0 %v1971
    %v2061 = vpop.f32.mrb[0].mxu0
    %v2062 = vadd.f32 %v1977, %v2061
    %v2063 = vpop.f32.mrb[0].mxu0
    %v2064 = vpop.f32.mrb[0].mxu0
    %v2065 = vadd.f32 %v1977, %v2064
    %v2066 = vpop.f32.mrb[0].mxu0
    %2067 = vdwg.mxu0
    %v2068 = vld [vmem:[%s27] sm:$0xff]
    %v2069 = vld [vmem:[%s27 + $0x8] sm:$0xff]
    %v2070 = vld [vmem:[%s27 + $0x10] sm:$0xff]
    %v2071 = vld [vmem:[%s27 + $0x18] sm:$0xff]
    %v2072 = vld [vmem:[%s27 + $0x20] sm:$0xff]
    %v2073 = vld [vmem:[%s27 + $0x28] sm:$0xff]
    %v2074 = vld [vmem:[%s27 + $0x30] sm:$0xff]
    %v2075 = vld [vmem:[%s27 + $0x38] sm:$0xff]
    %v2076 = vld [vmem:[%s27 + $0x40] sm:$0xff]
    %v2077 = vld [vmem:[%s27 + $0x48] sm:$0xff]
    %v2078 = vld [vmem:[%s27 + $0x50] sm:$0xff]
    %v2079 = vld [vmem:[%s27 + $0x58] sm:$0xff]
    %v2080 = vld [vmem:[%s27 + $0x60] sm:$0xff]
    %v2081 = vld [vmem:[%s27 + $0x68] sm:$0xff]
    %v2082 = vld [vmem:[%s27 + $0x70] sm:$0xff]
    %v2083 = vld [vmem:[%s27 + $0x78] sm:$0xff]
    %v2084 = vpack.c.bf16 %v611, %v610
    %v2085 = vld [vmem:[%s29] sm:$0x3]
    %v2087 = vlaneseq
    %v2088 = vshrl.u32 %v2087, 7
    %v2089 = vsub.s32 0, %v2088
    %v2090 = vrot.slane %v2085, %v2089
    %v2091 = vlaneseq
    %v2092 = vshrl.u32 %v2091, 7
    %v2093 = vsub.s32 1, %v2092
    %v2094 = vrot.slane %v2085, %v2093
    %v2113 = vunpack.c.l.b16 %v2068
    %v2114 = vunpack.c.h.b16 %v2068
    %v2115 = vunpack.c.l.b16 %v2069
    %v2116 = vunpack.c.h.b16 %v2069
    %v2117 = vunpack.c.l.b16 %v2070
    %v2118 = vunpack.c.h.b16 %v2070
    %v2119 = vunpack.c.l.b16 %v2071
    %v2120 = vunpack.c.h.b16 %v2071
    %v2121 = vunpack.c.l.b16 %v2072
    %v2122 = vunpack.c.h.b16 %v2072
    %v2123 = vunpack.c.l.b16 %v2073
    %v2124 = vunpack.c.h.b16 %v2073
    %v2125 = vunpack.c.l.b16 %v2074
    %v2126 = vunpack.c.h.b16 %v2074
    %v2127 = vunpack.c.l.b16 %v2075
    %v2128 = vunpack.c.h.b16 %v2075
    %v2129 = vunpack.c.l.b16 %v2076
    %v2130 = vunpack.c.h.b16 %v2076
    %v2131 = vunpack.c.l.b16 %v2077
    %v2132 = vunpack.c.h.b16 %v2077
    %v2133 = vunpack.c.l.b16 %v2078
    %v2134 = vunpack.c.h.b16 %v2078
    %v2135 = vunpack.c.l.b16 %v2079
    %v2136 = vunpack.c.h.b16 %v2079
    %v2137 = vunpack.c.l.b16 %v2080
    %v2138 = vunpack.c.h.b16 %v2080
    %v2139 = vunpack.c.l.b16 %v2081
    %v2140 = vunpack.c.h.b16 %v2081
    %v2141 = vunpack.c.l.b16 %v2082
    %v2142 = vunpack.c.h.b16 %v2082
    %v2143 = vunpack.c.l.b16 %v2083
    %v2144 = vunpack.c.h.b16 %v2083
    %v2145 = vpack.c.b16 %v2115, %v2113
    %v2146 = vpack.c.b16 %v2116, %v2114
    %v2147 = vpack.c.b16 %v2119, %v2117
    %v2148 = vpack.c.b16 %v2120, %v2118
    %v2149 = vpack.c.b16 %v2123, %v2121
    %v2150 = vpack.c.b16 %v2124, %v2122
    %v2151 = vpack.c.b16 %v2127, %v2125
    %v2152 = vpack.c.b16 %v2128, %v2126
    %v2153 = vpack.c.b16 %v2131, %v2129
    %v2154 = vpack.c.b16 %v2132, %v2130
    %v2155 = vpack.c.b16 %v2135, %v2133
    %v2156 = vpack.c.b16 %v2136, %v2134
    %v2157 = vpack.c.b16 %v2139, %v2137
    %v2158 = vpack.c.b16 %v2140, %v2138
    %v2159 = vpack.c.b16 %v2143, %v2141
    %v2160 = vpack.c.b16 %v2144, %v2142
    %2177 = vmatprep.subr.bf16.mxu0 %v2146
    %2178 = vmatpush1.bf16.msra.mxu0 %v2145
    %2179 = vmatprep.subr.bf16.mxu0 %v2148
    %2180 = vmatpush1.bf16.msra.mxu0 %v2147
    %2181 = vmatprep.subr.bf16.mxu0 %v2150
    %2182 = vmatpush1.bf16.msra.mxu0 %v2149
    %2183 = vmatprep.subr.bf16.mxu0 %v2152
    %2184 = vmatpush1.bf16.msra.mxu0 %v2151
    %2185 = vmatprep.subr.bf16.mxu0 %v2154
    %2186 = vmatpush1.bf16.msra.mxu0 %v2153
    %2187 = vmatprep.subr.bf16.mxu0 %v2156
    %2188 = vmatpush1.bf16.msra.mxu0 %v2155
    %2189 = vmatprep.subr.bf16.mxu0 %v2158
    %2190 = vmatpush1.bf16.msra.mxu0 %v2157
    %2191 = vmatprep.subr.bf16.mxu0 %v2160
    %2192 = vmatpush1.bf16.msra.mxu0 %v2159
    %2193 = vmatprep.subr.bf16.mxu0 0
    %2194 = vmatpush1.bf16.msra.mxu0 0
    %2195 = vmatprep.subr.bf16.mxu0 0
    %2196 = vmatpush1.bf16.msra.mxu0 0
    %2197 = vmatprep.subr.bf16.mxu0 0
    %2198 = vmatpush1.bf16.msra.mxu0 0
    %2199 = vmatprep.subr.bf16.mxu0 0
    %2200 = vmatpush1.bf16.msra.mxu0 0
    %2201 = vmatprep.subr.bf16.mxu0 0
    %2202 = vmatpush1.bf16.msra.mxu0 0
    %2203 = vmatprep.subr.bf16.mxu0 0
    %2204 = vmatpush1.bf16.msra.mxu0 0
    %2205 = vmatprep.subr.bf16.mxu0 0
    %2206 = vmatpush1.bf16.msra.mxu0 0
    %2207 = vmatprep.subr.bf16.mxu0 0
    %2208 = vmatpush1.bf16.msra.mxu0 0
    %2209 = vmatprep.mubr.bf16.mxu0 0
    %2210 = vmatmul.mubr.bf16.gmra.mrb[0].mxu0 %v2084
    %v2211 = vpop.f32.mrb[0].mxu0
    %v2212 = vadd.f32 %v2090, %v2211
    %v2213 = vpop.f32.mrb[0].mxu0
    %v2214 = vadd.f32 %v2094, %v2213
    %v2215 = vpop.f32.mrb[0].mxu0
    %v2216 = vadd.f32 %v2090, %v2215
    %v2217 = vpop.f32.mrb[0].mxu0
    %v2218 = vadd.f32 %v2094, %v2217
    %2219 = vdwg.mxu0
    %v2220 = vmul.f32 %v2062, 0.17677669
    %v2221 = vpack.c.bf16 %v2220, %v2220
    %v2222 = vpack.c.bf16 %v2212, %v2212
    %v2223 = vpack.c.bf16 %v2214, %v2214
    %v2225 = vsel %vm886, %v2221, 0
    %v2228 = vsel %vm886, %v2222, 0
    %2230 = vmatprep.subr.bf16.mxu0 0
    %2231 = vmatpush1.bf16.xpose.msra.mxu0 %v2228
    %2232 = vmatprep.subr.bf16.mxu0 0
    %2233 = vmatpush1.bf16.xpose.msra.mxu0 0
    %2234 = vmatprep.subr.bf16.mxu0 0
    %2235 = vmatpush1.bf16.xpose.msra.mxu0 0
    %2236 = vmatprep.subr.bf16.mxu0 0
    %2237 = vmatpush1.bf16.xpose.msra.mxu0 0
    %2238 = vmatprep.subr.bf16.mxu0 0
    %2239 = vmatpush1.bf16.xpose.msra.mxu0 0
    %2240 = vmatprep.subr.bf16.mxu0 0
    %2241 = vmatpush1.bf16.xpose.msra.mxu0 0
    %2242 = vmatprep.subr.bf16.mxu0 0
    %2243 = vmatpush1.bf16.xpose.msra.mxu0 0
    %2244 = vmatprep.subr.bf16.mxu0 0
    %2245 = vmatpush1.bf16.xpose.msra.mxu0 0
    %2246 = vmatprep.subr.bf16.mxu0 0
    %2247 = vmatpush1.bf16.xpose.msra.mxu0 0
    %2248 = vmatprep.subr.bf16.mxu0 0
    %2249 = vmatpush1.bf16.xpose.msra.mxu0 0
    %2250 = vmatprep.subr.bf16.mxu0 0
    %2251 = vmatpush1.bf16.xpose.msra.mxu0 0
    %2252 = vmatprep.subr.bf16.mxu0 0
    %2253 = vmatpush1.bf16.xpose.msra.mxu0 0
    %2254 = vmatprep.subr.bf16.mxu0 0
    %2255 = vmatpush1.bf16.xpose.msra.mxu0 0
    %2256 = vmatprep.subr.bf16.mxu0 0
    %2257 = vmatpush1.bf16.xpose.msra.mxu0 0
    %2258 = vmatprep.subr.bf16.mxu0 0
    %2259 = vmatpush1.bf16.xpose.msra.mxu0 0
    %2260 = vmatprep.subr.bf16.mxu0 0
    %2261 = vmatpush1.bf16.xpose.msra.mxu0 0
    %2262 = vmatprep.mubr.bf16.mxu0 0
    %2263 = vmatmul.mubr.bf16.gmra.mrb[0].mxu0 %v2225
    %v2264 = vpop.f32.mrb[0].mxu0
    %v2265 = vadd.f32 0.0, %v2264
    %v2266 = vpop.f32.mrb[0].mxu0
    %v2267 = vpop.f32.mrb[0].mxu0
    %v2268 = vpop.f32.mrb[0].mxu0
    %2269 = vdwg.mxu0
    %v2270 = vsel %vm933, %v2265, -inf
    %2271 = vmax.xlane.f32.xlu0 %v2270
    %v2272 = vpop.xlane.xlu0 %2271
    %v2273 = vsub.f32 %v2265, %v2272
    %v2274 = vmul.f32 %v2273, 1.442695
    %v2275 = vpow.pop %v2274
    %v2276 = vsel %vm933, %v2275, 0.0
    %2277 = vadd.xlane.f32.xlu0 %v2276
    %v2278 = vpop.xlane.xlu0 %2277
    %v2279 = vrcp.pop %v2278
    %v2280 = vmul.f32 %v2275, %v2279
    %v2281 = vpack.c.bf16 %v2280, %v2280
    %v2283 = vsel %vm933, %v2281, 0
    %v2286 = vsel %vm949, %v2223, 0
    %2288 = vmatprep.subr.bf16.mxu0 0
    %2289 = vmatpush1.bf16.msra.mxu0 %v2286
    %2290 = vmatprep.subr.bf16.mxu0 0
    %2291 = vmatpush1.bf16.msra.mxu0 0
    %2292 = vmatprep.subr.bf16.mxu0 0
    %2293 = vmatpush1.bf16.msra.mxu0 0
    %2294 = vmatprep.subr.bf16.mxu0 0
    %2295 = vmatpush1.bf16.msra.mxu0 0
    %2296 = vmatprep.subr.bf16.mxu0 0
    %2297 = vmatpush1.bf16.msra.mxu0 0
    %2298 = vmatprep.subr.bf16.mxu0 0
    %2299 = vmatpush1.bf16.msra.mxu0 0
    %2300 = vmatprep.subr.bf16.mxu0 0
    %2301 = vmatpush1.bf16.msra.mxu0 0
    %2302 = vmatprep.subr.bf16.mxu0 0
    %2303 = vmatpush1.bf16.msra.mxu0 0
    %2304 = vmatprep.subr.bf16.mxu0 0
    %2305 = vmatpush1.bf16.msra.mxu0 0
    %2306 = vmatprep.subr.bf16.mxu0 0
    %2307 = vmatpush1.bf16.msra.mxu0 0
    %2308 = vmatprep.subr.bf16.mxu0 0
    %2309 = vmatpush1.bf16.msra.mxu0 0
    %2310 = vmatprep.subr.bf16.mxu0 0
    %2311 = vmatpush1.bf16.msra.mxu0 0
    %2312 = vmatprep.subr.bf16.mxu0 0
    %2313 = vmatpush1.bf16.msra.mxu0 0
    %2314 = vmatprep.subr.bf16.mxu0 0
    %2315 = vmatpush1.bf16.msra.mxu0 0
    %2316 = vmatprep.subr.bf16.mxu0 0
    %2317 = vmatpush1.bf16.msra.mxu0 0
    %2318 = vmatprep.subr.bf16.mxu0 0
    %2319 = vmatpush1.bf16.msra.mxu0 0
    %2320 = vmatprep.mubr.bf16.mxu0 0
    %2321 = vmatmul.mubr.bf16.gmra.mrb[0].mxu0 %v2283
    %v2322 = vpop.f32.mrb[0].mxu0
    %v2323 = vadd.f32 0.0, %v2322
    %v2324 = vpop.f32.mrb[0].mxu0
    %v2325 = vpop.f32.mrb[0].mxu0
    %v2326 = vpop.f32.mrb[0].mxu0
    %2327 = vdwg.mxu0
    %2329 = vrot.lane.b32.xlu0 %v2221, 96
    %v2330 = vpop.permute.xlu0 %2329
    %2332 = vrot.lane.b32.xlu0 %v2222, 96
    %v2333 = vpop.permute.xlu0 %2332
    %v2335 = vsel %vm886, %v2330, 0
    %v2338 = vsel %vm886, %v2333, 0
    %2340 = vmatprep.subr.bf16.mxu0 0
    %2341 = vmatpush1.bf16.xpose.msra.mxu0 %v2338
    %2342 = vmatprep.subr.bf16.mxu0 0
    %2343 = vmatpush1.bf16.xpose.msra.mxu0 0
    %2344 = vmatprep.subr.bf16.mxu0 0
    %2345 = vmatpush1.bf16.xpose.msra.mxu0 0
    %2346 = vmatprep.subr.bf16.mxu0 0
    %2347 = vmatpush1.bf16.xpose.msra.mxu0 0
    %2348 = vmatprep.subr.bf16.mxu0 0
    %2349 = vmatpush1.bf16.xpose.msra.mxu0 0
    %2350 = vmatprep.subr.bf16.mxu0 0
    %2351 = vmatpush1.bf16.xpose.msra.mxu0 0
    %2352 = vmatprep.subr.bf16.mxu0 0
    %2353 = vmatpush1.bf16.xpose.msra.mxu0 0
    %2354 = vmatprep.subr.bf16.mxu0 0
    %2355 = vmatpush1.bf16.xpose.msra.mxu0 0
    %2356 = vmatprep.subr.bf16.mxu0 0
    %2357 = vmatpush1.bf16.xpose.msra.mxu0 0
    %2358 = vmatprep.subr.bf16.mxu0 0
    %2359 = vmatpush1.bf16.xpose.msra.mxu0 0
    %2360 = vmatprep.subr.bf16.mxu0 0
    %2361 = vmatpush1.bf16.xpose.msra.mxu0 0
    %2362 = vmatprep.subr.bf16.mxu0 0
    %2363 = vmatpush1.bf16.xpose.msra.mxu0 0
    %2364 = vmatprep.subr.bf16.mxu0 0
    %2365 = vmatpush1.bf16.xpose.msra.mxu0 0
    %2366 = vmatprep.subr.bf16.mxu0 0
    %2367 = vmatpush1.bf16.xpose.msra.mxu0 0
    %2368 = vmatprep.subr.bf16.mxu0 0
    %2369 = vmatpush1.bf16.xpose.msra.mxu0 0
    %2370 = vmatprep.subr.bf16.mxu0 0
    %2371 = vmatpush1.bf16.xpose.msra.mxu0 0
    %2372 = vmatprep.mubr.bf16.mxu0 0
    %2373 = vmatmul.mubr.bf16.gmra.mrb[0].mxu0 %v2335
    %v2374 = vpop.f32.mrb[0].mxu0
    %v2375 = vadd.f32 0.0, %v2374
    %v2376 = vpop.f32.mrb[0].mxu0
    %v2377 = vpop.f32.mrb[0].mxu0
    %v2378 = vpop.f32.mrb[0].mxu0
    %2379 = vdwg.mxu0
    %v2380 = vsel %vm933, %v2375, -inf
    %2381 = vmax.xlane.f32.xlu0 %v2380
    %v2382 = vpop.xlane.xlu0 %2381
    %v2383 = vsub.f32 %v2375, %v2382
    %v2384 = vmul.f32 %v2383, 1.442695
    %v2385 = vpow.pop %v2384
    %v2386 = vsel %vm933, %v2385, 0.0
    %2387 = vadd.xlane.f32.xlu0 %v2386
    %v2388 = vpop.xlane.xlu0 %2387
    %v2389 = vrcp.pop %v2388
    %v2390 = vmul.f32 %v2385, %v2389
    %v2391 = vpack.c.bf16 %v2390, %v2390
    %2393 = vrot.lane.b32.xlu0 %v2223, 96
    %v2394 = vpop.permute.xlu0 %2393
    %v2396 = vsel %vm933, %v2391, 0
    %v2399 = vsel %vm949, %v2394, 0
    %2401 = vmatprep.subr.bf16.mxu0 0
    %2402 = vmatpush1.bf16.msra.mxu0 %v2399
    %2403 = vmatprep.subr.bf16.mxu0 0
    %2404 = vmatpush1.bf16.msra.mxu0 0
    %2405 = vmatprep.subr.bf16.mxu0 0
    %2406 = vmatpush1.bf16.msra.mxu0 0
    %2407 = vmatprep.subr.bf16.mxu0 0
    %2408 = vmatpush1.bf16.msra.mxu0 0
    %2409 = vmatprep.subr.bf16.mxu0 0
    %2410 = vmatpush1.bf16.msra.mxu0 0
    %2411 = vmatprep.subr.bf16.mxu0 0
    %2412 = vmatpush1.bf16.msra.mxu0 0
    %2413 = vmatprep.subr.bf16.mxu0 0
    %2414 = vmatpush1.bf16.msra.mxu0 0
    %2415 = vmatprep.subr.bf16.mxu0 0
    %2416 = vmatpush1.bf16.msra.mxu0 0
    %2417 = vmatprep.subr.bf16.mxu0 0
    %2418 = vmatpush1.bf16.msra.mxu0 0
    %2419 = vmatprep.subr.bf16.mxu0 0
    %2420 = vmatpush1.bf16.msra.mxu0 0
    %2421 = vmatprep.subr.bf16.mxu0 0
    %2422 = vmatpush1.bf16.msra.mxu0 0
    %2423 = vmatprep.subr.bf16.mxu0 0
    %2424 = vmatpush1.bf16.msra.mxu0 0
    %2425 = vmatprep.subr.bf16.mxu0 0
    %2426 = vmatpush1.bf16.msra.mxu0 0
    %2427 = vmatprep.subr.bf16.mxu0 0
    %2428 = vmatpush1.bf16.msra.mxu0 0
    %2429 = vmatprep.subr.bf16.mxu0 0
    %2430 = vmatpush1.bf16.msra.mxu0 0
    %2431 = vmatprep.subr.bf16.mxu0 0
    %2432 = vmatpush1.bf16.msra.mxu0 0
    %2433 = vmatprep.mubr.bf16.mxu0 0
    %2434 = vmatmul.mubr.bf16.gmra.mrb[0].mxu0 %v2396
    %v2435 = vpop.f32.mrb[0].mxu0
    %v2436 = vadd.f32 0.0, %v2435
    %v2437 = vpop.f32.mrb[0].mxu0
    %v2438 = vpop.f32.mrb[0].mxu0
    %v2439 = vpop.f32.mrb[0].mxu0
    %2440 = vdwg.mxu0
    %2441 = vrot.lane.b32.xlu0 %v2221, 64
    %v2442 = vpop.permute.xlu0 %2441
    %2443 = vrot.lane.b32.xlu0 %v2222, 64
    %v2444 = vpop.permute.xlu0 %2443
    %v2446 = vsel %vm886, %v2442, 0
    %v2449 = vsel %vm886, %v2444, 0
    %2451 = vmatprep.subr.bf16.mxu0 0
    %2452 = vmatpush1.bf16.xpose.msra.mxu0 %v2449
    %2453 = vmatprep.subr.bf16.mxu0 0
    %2454 = vmatpush1.bf16.xpose.msra.mxu0 0
    %2455 = vmatprep.subr.bf16.mxu0 0
    %2456 = vmatpush1.bf16.xpose.msra.mxu0 0
    %2457 = vmatprep.subr.bf16.mxu0 0
    %2458 = vmatpush1.bf16.xpose.msra.mxu0 0
    %2459 = vmatprep.subr.bf16.mxu0 0
    %2460 = vmatpush1.bf16.xpose.msra.mxu0 0
    %2461 = vmatprep.subr.bf16.mxu0 0
    %2462 = vmatpush1.bf16.xpose.msra.mxu0 0
    %2463 = vmatprep.subr.bf16.mxu0 0
    %2464 = vmatpush1.bf16.xpose.msra.mxu0 0
    %2465 = vmatprep.subr.bf16.mxu0 0
    %2466 = vmatpush1.bf16.xpose.msra.mxu0 0
    %2467 = vmatprep.subr.bf16.mxu0 0
    %2468 = vmatpush1.bf16.xpose.msra.mxu0 0
    %2469 = vmatprep.subr.bf16.mxu0 0
    %2470 = vmatpush1.bf16.xpose.msra.mxu0 0
    %2471 = vmatprep.subr.bf16.mxu0 0
    %2472 = vmatpush1.bf16.xpose.msra.mxu0 0
    %2473 = vmatprep.subr.bf16.mxu0 0
    %2474 = vmatpush1.bf16.xpose.msra.mxu0 0
    %2475 = vmatprep.subr.bf16.mxu0 0
    %2476 = vmatpush1.bf16.xpose.msra.mxu0 0
    %2477 = vmatprep.subr.bf16.mxu0 0
    %2478 = vmatpush1.bf16.xpose.msra.mxu0 0
    %2479 = vmatprep.subr.bf16.mxu0 0
    %2480 = vmatpush1.bf16.xpose.msra.mxu0 0
    %2481 = vmatprep.subr.bf16.mxu0 0
    %2482 = vmatpush1.bf16.xpose.msra.mxu0 0
    %2483 = vmatprep.mubr.bf16.mxu0 0
    %2484 = vmatmul.mubr.bf16.gmra.mrb[0].mxu0 %v2446
    %v2485 = vpop.f32.mrb[0].mxu0
    %v2486 = vadd.f32 0.0, %v2485
    %v2487 = vpop.f32.mrb[0].mxu0
    %v2488 = vpop.f32.mrb[0].mxu0
    %v2489 = vpop.f32.mrb[0].mxu0
    %2490 = vdwg.mxu0
    %v2491 = vsel %vm933, %v2486, -inf
    %2492 = vmax.xlane.f32.xlu0 %v2491
    %v2493 = vpop.xlane.xlu0 %2492
    %v2494 = vsub.f32 %v2486, %v2493
    %v2495 = vmul.f32 %v2494, 1.442695
    %v2496 = vpow.pop %v2495
    %v2497 = vsel %vm933, %v2496, 0.0
    %2498 = vadd.xlane.f32.xlu0 %v2497
    %v2499 = vpop.xlane.xlu0 %2498
    %v2500 = vrcp.pop %v2499
    %v2501 = vmul.f32 %v2496, %v2500
    %v2502 = vpack.c.bf16 %v2501, %v2501
    %2503 = vrot.lane.b32.xlu0 %v2223, 64
    %v2504 = vpop.permute.xlu0 %2503
    %v2506 = vsel %vm933, %v2502, 0
    %v2509 = vsel %vm949, %v2504, 0
    %2511 = vmatprep.subr.bf16.mxu0 0
    %2512 = vmatpush1.bf16.msra.mxu0 %v2509
    %2513 = vmatprep.subr.bf16.mxu0 0
    %2514 = vmatpush1.bf16.msra.mxu0 0
    %2515 = vmatprep.subr.bf16.mxu0 0
    %2516 = vmatpush1.bf16.msra.mxu0 0
    %2517 = vmatprep.subr.bf16.mxu0 0
    %2518 = vmatpush1.bf16.msra.mxu0 0
    %2519 = vmatprep.subr.bf16.mxu0 0
    %2520 = vmatpush1.bf16.msra.mxu0 0
    %2521 = vmatprep.subr.bf16.mxu0 0
    %2522 = vmatpush1.bf16.msra.mxu0 0
    %2523 = vmatprep.subr.bf16.mxu0 0
    %2524 = vmatpush1.bf16.msra.mxu0 0
    %2525 = vmatprep.subr.bf16.mxu0 0
    %2526 = vmatpush1.bf16.msra.mxu0 0
    %2527 = vmatprep.subr.bf16.mxu0 0
    %2528 = vmatpush1.bf16.msra.mxu0 0
    %2529 = vmatprep.subr.bf16.mxu0 0
    %2530 = vmatpush1.bf16.msra.mxu0 0
    %2531 = vmatprep.subr.bf16.mxu0 0
    %2532 = vmatpush1.bf16.msra.mxu0 0
    %2533 = vmatprep.subr.bf16.mxu0 0
    %2534 = vmatpush1.bf16.msra.mxu0 0
    %2535 = vmatprep.subr.bf16.mxu0 0
    %2536 = vmatpush1.bf16.msra.mxu0 0
    %2537 = vmatprep.subr.bf16.mxu0 0
    %2538 = vmatpush1.bf16.msra.mxu0 0
    %2539 = vmatprep.subr.bf16.mxu0 0
    %2540 = vmatpush1.bf16.msra.mxu0 0
    %2541 = vmatprep.subr.bf16.mxu0 0
    %2542 = vmatpush1.bf16.msra.mxu0 0
    %2543 = vmatprep.mubr.bf16.mxu0 0
    %2544 = vmatmul.mubr.bf16.gmra.mrb[0].mxu0 %v2506
    %v2545 = vpop.f32.mrb[0].mxu0
    %v2546 = vadd.f32 0.0, %v2545
    %v2547 = vpop.f32.mrb[0].mxu0
    %v2548 = vpop.f32.mrb[0].mxu0
    %v2549 = vpop.f32.mrb[0].mxu0
    %2550 = vdwg.mxu0
    %2551 = vrot.lane.b32.xlu0 %v2221, 32
    %v2552 = vpop.permute.xlu0 %2551
    %2553 = vrot.lane.b32.xlu0 %v2222, 32
    %v2554 = vpop.permute.xlu0 %2553
    %v2556 = vsel %vm886, %v2552, 0
    %v2559 = vsel %vm886, %v2554, 0
    %2561 = vmatprep.subr.bf16.mxu0 0
    %2562 = vmatpush1.bf16.xpose.msra.mxu0 %v2559
    %2563 = vmatprep.subr.bf16.mxu0 0
    %2564 = vmatpush1.bf16.xpose.msra.mxu0 0
    %2565 = vmatprep.subr.bf16.mxu0 0
    %2566 = vmatpush1.bf16.xpose.msra.mxu0 0
    %2567 = vmatprep.subr.bf16.mxu0 0
    %2568 = vmatpush1.bf16.xpose.msra.mxu0 0
    %2569 = vmatprep.subr.bf16.mxu0 0
    %2570 = vmatpush1.bf16.xpose.msra.mxu0 0
    %2571 = vmatprep.subr.bf16.mxu0 0
    %2572 = vmatpush1.bf16.xpose.msra.mxu0 0
    %2573 = vmatprep.subr.bf16.mxu0 0
    %2574 = vmatpush1.bf16.xpose.msra.mxu0 0
    %2575 = vmatprep.subr.bf16.mxu0 0
    %2576 = vmatpush1.bf16.xpose.msra.mxu0 0
    %2577 = vmatprep.subr.bf16.mxu0 0
    %2578 = vmatpush1.bf16.xpose.msra.mxu0 0
    %2579 = vmatprep.subr.bf16.mxu0 0
    %2580 = vmatpush1.bf16.xpose.msra.mxu0 0
    %2581 = vmatprep.subr.bf16.mxu0 0
    %2582 = vmatpush1.bf16.xpose.msra.mxu0 0
    %2583 = vmatprep.subr.bf16.mxu0 0
    %2584 = vmatpush1.bf16.xpose.msra.mxu0 0
    %2585 = vmatprep.subr.bf16.mxu0 0
    %2586 = vmatpush1.bf16.xpose.msra.mxu0 0
    %2587 = vmatprep.subr.bf16.mxu0 0
    %2588 = vmatpush1.bf16.xpose.msra.mxu0 0
    %2589 = vmatprep.subr.bf16.mxu0 0
    %2590 = vmatpush1.bf16.xpose.msra.mxu0 0
    %2591 = vmatprep.subr.bf16.mxu0 0
    %2592 = vmatpush1.bf16.xpose.msra.mxu0 0
    %2593 = vmatprep.mubr.bf16.mxu0 0
    %2594 = vmatmul.mubr.bf16.gmra.mrb[0].mxu0 %v2556
    %v2595 = vpop.f32.mrb[0].mxu0
    %v2596 = vadd.f32 0.0, %v2595
    %v2597 = vpop.f32.mrb[0].mxu0
    %v2598 = vpop.f32.mrb[0].mxu0
    %v2599 = vpop.f32.mrb[0].mxu0
    %2600 = vdwg.mxu0
    %v2601 = vsel %vm933, %v2596, -inf
    %2602 = vmax.xlane.f32.xlu0 %v2601
    %v2603 = vpop.xlane.xlu0 %2602
    %v2604 = vsub.f32 %v2596, %v2603
    %v2605 = vmul.f32 %v2604, 1.442695
    %v2606 = vpow.pop %v2605
    %v2607 = vsel %vm933, %v2606, 0.0
    %2608 = vadd.xlane.f32.xlu0 %v2607
    %v2609 = vpop.xlane.xlu0 %2608
    %v2610 = vrcp.pop %v2609
    %v2611 = vmul.f32 %v2606, %v2610
    %v2612 = vpack.c.bf16 %v2611, %v2611
    %2613 = vrot.lane.b32.xlu0 %v2223, 32
    %v2614 = vpop.permute.xlu0 %2613
    %v2616 = vsel %vm933, %v2612, 0
    %v2619 = vsel %vm949, %v2614, 0
    %2621 = vmatprep.subr.bf16.mxu0 0
    %2622 = vmatpush1.bf16.msra.mxu0 %v2619
    %2623 = vmatprep.subr.bf16.mxu0 0
    %2624 = vmatpush1.bf16.msra.mxu0 0
    %2625 = vmatprep.subr.bf16.mxu0 0
    %2626 = vmatpush1.bf16.msra.mxu0 0
    %2627 = vmatprep.subr.bf16.mxu0 0
    %2628 = vmatpush1.bf16.msra.mxu0 0
    %2629 = vmatprep.subr.bf16.mxu0 0
    %2630 = vmatpush1.bf16.msra.mxu0 0
    %2631 = vmatprep.subr.bf16.mxu0 0
    %2632 = vmatpush1.bf16.msra.mxu0 0
    %2633 = vmatprep.subr.bf16.mxu0 0
    %2634 = vmatpush1.bf16.msra.mxu0 0
    %2635 = vmatprep.subr.bf16.mxu0 0
    %2636 = vmatpush1.bf16.msra.mxu0 0
    %2637 = vmatprep.subr.bf16.mxu0 0
    %2638 = vmatpush1.bf16.msra.mxu0 0
    %2639 = vmatprep.subr.bf16.mxu0 0
    %2640 = vmatpush1.bf16.msra.mxu0 0
    %2641 = vmatprep.subr.bf16.mxu0 0
    %2642 = vmatpush1.bf16.msra.mxu0 0
    %2643 = vmatprep.subr.bf16.mxu0 0
    %2644 = vmatpush1.bf16.msra.mxu0 0
    %2645 = vmatprep.subr.bf16.mxu0 0
    %2646 = vmatpush1.bf16.msra.mxu0 0
    %2647 = vmatprep.subr.bf16.mxu0 0
    %2648 = vmatpush1.bf16.msra.mxu0 0
    %2649 = vmatprep.subr.bf16.mxu0 0
    %2650 = vmatpush1.bf16.msra.mxu0 0
    %2651 = vmatprep.subr.bf16.mxu0 0
    %2652 = vmatpush1.bf16.msra.mxu0 0
    %2653 = vmatprep.mubr.bf16.mxu0 0
    %2654 = vmatmul.mubr.bf16.gmra.mrb[0].mxu0 %v2616
    %v2655 = vpop.f32.mrb[0].mxu0
    %v2656 = vadd.f32 0.0, %v2655
    %v2657 = vpop.f32.mrb[0].mxu0
    %v2658 = vpop.f32.mrb[0].mxu0
    %v2659 = vpop.f32.mrb[0].mxu0
    %2660 = vdwg.mxu0
    %2662 = vrot.lane.b32.xlu0 %v2436, 32
    %v2663 = vpop.permute.xlu0 %2662
    %2666 = vrot.lane.b32.xlu0 %v2546, 64
    %v2667 = vpop.permute.xlu0 %2666
    %2670 = vrot.lane.b32.xlu0 %v2656, 96
    %v2671 = vpop.permute.xlu0 %2670
    %v2673 = vsel %vm886, %v2323, %v2663
    %v2674 = vsel %vm1339, %v2673, %v2667
    %v2675 = vsel %vm1341, %v2674, %v2671
    %v2676 = vmul.f32 %v2065, 0.17677669
    %v2677 = vpack.c.bf16 %v2676, %v2676
    %v2678 = vpack.c.bf16 %v2216, %v2216
    %v2679 = vpack.c.bf16 %v2218, %v2218
    %v2681 = vsel %vm886, %v2677, 0
    %v2684 = vsel %vm886, %v2678, 0
    %2686 = vmatprep.subr.bf16.mxu0 0
    %2687 = vmatpush1.bf16.xpose.msra.mxu0 %v2684
    %2688 = vmatprep.subr.bf16.mxu0 0
    %2689 = vmatpush1.bf16.xpose.msra.mxu0 0
    %2690 = vmatprep.subr.bf16.mxu0 0
    %2691 = vmatpush1.bf16.xpose.msra.mxu0 0
    %2692 = vmatprep.subr.bf16.mxu0 0
    %2693 = vmatpush1.bf16.xpose.msra.mxu0 0
    %2694 = vmatprep.subr.bf16.mxu0 0
    %2695 = vmatpush1.bf16.xpose.msra.mxu0 0
    %2696 = vmatprep.subr.bf16.mxu0 0
    %2697 = vmatpush1.bf16.xpose.msra.mxu0 0
    %2698 = vmatprep.subr.bf16.mxu0 0
    %2699 = vmatpush1.bf16.xpose.msra.mxu0 0
    %2700 = vmatprep.subr.bf16.mxu0 0
    %2701 = vmatpush1.bf16.xpose.msra.mxu0 0
    %2702 = vmatprep.subr.bf16.mxu0 0
    %2703 = vmatpush1.bf16.xpose.msra.mxu0 0
    %2704 = vmatprep.subr.bf16.mxu0 0
    %2705 = vmatpush1.bf16.xpose.msra.mxu0 0
    %2706 = vmatprep.subr.bf16.mxu0 0
    %2707 = vmatpush1.bf16.xpose.msra.mxu0 0
    %2708 = vmatprep.subr.bf16.mxu0 0
    %2709 = vmatpush1.bf16.xpose.msra.mxu0 0
    %2710 = vmatprep.subr.bf16.mxu0 0
    %2711 = vmatpush1.bf16.xpose.msra.mxu0 0
    %2712 = vmatprep.subr.bf16.mxu0 0
    %2713 = vmatpush1.bf16.xpose.msra.mxu0 0
    %2714 = vmatprep.subr.bf16.mxu0 0
    %2715 = vmatpush1.bf16.xpose.msra.mxu0 0
    %2716 = vmatprep.subr.bf16.mxu0 0
    %2717 = vmatpush1.bf16.xpose.msra.mxu0 0
    %2718 = vmatprep.mubr.bf16.mxu0 0
    %2719 = vmatmul.mubr.bf16.gmra.mrb[0].mxu0 %v2681
    %v2720 = vpop.f32.mrb[0].mxu0
    %v2721 = vadd.f32 0.0, %v2720
    %v2722 = vpop.f32.mrb[0].mxu0
    %v2723 = vpop.f32.mrb[0].mxu0
    %v2724 = vpop.f32.mrb[0].mxu0
    %2725 = vdwg.mxu0
    %v2726 = vsel %vm933, %v2721, -inf
    %2727 = vmax.xlane.f32.xlu0 %v2726
    %v2728 = vpop.xlane.xlu0 %2727
    %v2729 = vsub.f32 %v2721, %v2728
    %v2730 = vmul.f32 %v2729, 1.442695
    %v2731 = vpow.pop %v2730
    %v2732 = vsel %vm933, %v2731, 0.0
    %2733 = vadd.xlane.f32.xlu0 %v2732
    %v2734 = vpop.xlane.xlu0 %2733
    %v2735 = vrcp.pop %v2734
    %v2736 = vmul.f32 %v2731, %v2735
    %v2737 = vpack.c.bf16 %v2736, %v2736
    %v2739 = vsel %vm933, %v2737, 0
    %v2742 = vsel %vm949, %v2679, 0
    %2744 = vmatprep.subr.bf16.mxu0 0
    %2745 = vmatpush1.bf16.msra.mxu0 %v2742
    %2746 = vmatprep.subr.bf16.mxu0 0
    %2747 = vmatpush1.bf16.msra.mxu0 0
    %2748 = vmatprep.subr.bf16.mxu0 0
    %2749 = vmatpush1.bf16.msra.mxu0 0
    %2750 = vmatprep.subr.bf16.mxu0 0
    %2751 = vmatpush1.bf16.msra.mxu0 0
    %2752 = vmatprep.subr.bf16.mxu0 0
    %2753 = vmatpush1.bf16.msra.mxu0 0
    %2754 = vmatprep.subr.bf16.mxu0 0
    %2755 = vmatpush1.bf16.msra.mxu0 0
    %2756 = vmatprep.subr.bf16.mxu0 0
    %2757 = vmatpush1.bf16.msra.mxu0 0
    %2758 = vmatprep.subr.bf16.mxu0 0
    %2759 = vmatpush1.bf16.msra.mxu0 0
    %2760 = vmatprep.subr.bf16.mxu0 0
    %2761 = vmatpush1.bf16.msra.mxu0 0
    %2762 = vmatprep.subr.bf16.mxu0 0
    %2763 = vmatpush1.bf16.msra.mxu0 0
    %2764 = vmatprep.subr.bf16.mxu0 0
    %2765 = vmatpush1.bf16.msra.mxu0 0
    %2766 = vmatprep.subr.bf16.mxu0 0
    %2767 = vmatpush1.bf16.msra.mxu0 0
    %2768 = vmatprep.subr.bf16.mxu0 0
    %2769 = vmatpush1.bf16.msra.mxu0 0
    %2770 = vmatprep.subr.bf16.mxu0 0
    %2771 = vmatpush1.bf16.msra.mxu0 0
    %2772 = vmatprep.subr.bf16.mxu0 0
    %2773 = vmatpush1.bf16.msra.mxu0 0
    %2774 = vmatprep.subr.bf16.mxu0 0
    %2775 = vmatpush1.bf16.msra.mxu0 0
    %2776 = vmatprep.mubr.bf16.mxu0 0
    %2777 = vmatmul.mubr.bf16.gmra.mrb[0].mxu0 %v2739
    %v2778 = vpop.f32.mrb[0].mxu0
    %v2779 = vadd.f32 0.0, %v2778
    %v2780 = vpop.f32.mrb[0].mxu0
    %v2781 = vpop.f32.mrb[0].mxu0
    %v2782 = vpop.f32.mrb[0].mxu0
    %2783 = vdwg.mxu0
    %2785 = vrot.lane.b32.xlu0 %v2677, 96
    %v2786 = vpop.permute.xlu0 %2785
    %2788 = vrot.lane.b32.xlu0 %v2678, 96
    %v2789 = vpop.permute.xlu0 %2788
    %v2791 = vsel %vm886, %v2786, 0
    %v2794 = vsel %vm886, %v2789, 0
    %2796 = vmatprep.subr.bf16.mxu0 0
    %2797 = vmatpush1.bf16.xpose.msra.mxu0 %v2794
    %2798 = vmatprep.subr.bf16.mxu0 0
    %2799 = vmatpush1.bf16.xpose.msra.mxu0 0
    %2800 = vmatprep.subr.bf16.mxu0 0
    %2801 = vmatpush1.bf16.xpose.msra.mxu0 0
    %2802 = vmatprep.subr.bf16.mxu0 0
    %2803 = vmatpush1.bf16.xpose.msra.mxu0 0
    %2804 = vmatprep.subr.bf16.mxu0 0
    %2805 = vmatpush1.bf16.xpose.msra.mxu0 0
    %2806 = vmatprep.subr.bf16.mxu0 0
    %2807 = vmatpush1.bf16.xpose.msra.mxu0 0
    %2808 = vmatprep.subr.bf16.mxu0 0
    %2809 = vmatpush1.bf16.xpose.msra.mxu0 0
    %2810 = vmatprep.subr.bf16.mxu0 0
    %2811 = vmatpush1.bf16.xpose.msra.mxu0 0
    %2812 = vmatprep.subr.bf16.mxu0 0
    %2813 = vmatpush1.bf16.xpose.msra.mxu0 0
    %2814 = vmatprep.subr.bf16.mxu0 0
    %2815 = vmatpush1.bf16.xpose.msra.mxu0 0
    %2816 = vmatprep.subr.bf16.mxu0 0
    %2817 = vmatpush1.bf16.xpose.msra.mxu0 0
    %2818 = vmatprep.subr.bf16.mxu0 0
    %2819 = vmatpush1.bf16.xpose.msra.mxu0 0
    %2820 = vmatprep.subr.bf16.mxu0 0
    %2821 = vmatpush1.bf16.xpose.msra.mxu0 0
    %2822 = vmatprep.subr.bf16.mxu0 0
    %2823 = vmatpush1.bf16.xpose.msra.mxu0 0
    %2824 = vmatprep.subr.bf16.mxu0 0
    %2825 = vmatpush1.bf16.xpose.msra.mxu0 0
    %2826 = vmatprep.subr.bf16.mxu0 0
    %2827 = vmatpush1.bf16.xpose.msra.mxu0 0
    %2828 = vmatprep.mubr.bf16.mxu0 0
    %2829 = vmatmul.mubr.bf16.gmra.mrb[0].mxu0 %v2791
    %v2830 = vpop.f32.mrb[0].mxu0
    %v2831 = vadd.f32 0.0, %v2830
    %v2832 = vpop.f32.mrb[0].mxu0
    %v2833 = vpop.f32.mrb[0].mxu0
    %v2834 = vpop.f32.mrb[0].mxu0
    %2835 = vdwg.mxu0
    %v2836 = vsel %vm933, %v2831, -inf
    %2837 = vmax.xlane.f32.xlu0 %v2836
    %v2838 = vpop.xlane.xlu0 %2837
    %v2839 = vsub.f32 %v2831, %v2838
    %v2840 = vmul.f32 %v2839, 1.442695
    %v2841 = vpow.pop %v2840
    %v2842 = vsel %vm933, %v2841, 0.0
    %2843 = vadd.xlane.f32.xlu0 %v2842
    %v2844 = vpop.xlane.xlu0 %2843
    %v2845 = vrcp.pop %v2844
    %v2846 = vmul.f32 %v2841, %v2845
    %v2847 = vpack.c.bf16 %v2846, %v2846
    %2849 = vrot.lane.b32.xlu0 %v2679, 96
    %v2850 = vpop.permute.xlu0 %2849
    %v2852 = vsel %vm933, %v2847, 0
    %v2855 = vsel %vm949, %v2850, 0
    %2857 = vmatprep.subr.bf16.mxu0 0
    %2858 = vmatpush1.bf16.msra.mxu0 %v2855
    %2859 = vmatprep.subr.bf16.mxu0 0
    %2860 = vmatpush1.bf16.msra.mxu0 0
    %2861 = vmatprep.subr.bf16.mxu0 0
    %2862 = vmatpush1.bf16.msra.mxu0 0
    %2863 = vmatprep.subr.bf16.mxu0 0
    %2864 = vmatpush1.bf16.msra.mxu0 0
    %2865 = vmatprep.subr.bf16.mxu0 0
    %2866 = vmatpush1.bf16.msra.mxu0 0
    %2867 = vmatprep.subr.bf16.mxu0 0
    %2868 = vmatpush1.bf16.msra.mxu0 0
    %2869 = vmatprep.subr.bf16.mxu0 0
    %2870 = vmatpush1.bf16.msra.mxu0 0
    %2871 = vmatprep.subr.bf16.mxu0 0
    %2872 = vmatpush1.bf16.msra.mxu0 0
    %2873 = vmatprep.subr.bf16.mxu0 0
    %2874 = vmatpush1.bf16.msra.mxu0 0
    %2875 = vmatprep.subr.bf16.mxu0 0
    %2876 = vmatpush1.bf16.msra.mxu0 0
    %2877 = vmatprep.subr.bf16.mxu0 0
    %2878 = vmatpush1.bf16.msra.mxu0 0
    %2879 = vmatprep.subr.bf16.mxu0 0
    %2880 = vmatpush1.bf16.msra.mxu0 0
    %2881 = vmatprep.subr.bf16.mxu0 0
    %2882 = vmatpush1.bf16.msra.mxu0 0
    %2883 = vmatprep.subr.bf16.mxu0 0
    %2884 = vmatpush1.bf16.msra.mxu0 0
    %2885 = vmatprep.subr.bf16.mxu0 0
    %2886 = vmatpush1.bf16.msra.mxu0 0
    %2887 = vmatprep.subr.bf16.mxu0 0
    %2888 = vmatpush1.bf16.msra.mxu0 0
    %2889 = vmatprep.mubr.bf16.mxu0 0
    %2890 = vmatmul.mubr.bf16.gmra.mrb[0].mxu0 %v2852
    %v2891 = vpop.f32.mrb[0].mxu0
    %v2892 = vadd.f32 0.0, %v2891
    %v2893 = vpop.f32.mrb[0].mxu0
    %v2894 = vpop.f32.mrb[0].mxu0
    %v2895 = vpop.f32.mrb[0].mxu0
    %2896 = vdwg.mxu0
    %2897 = vrot.lane.b32.xlu0 %v2677, 64
    %v2898 = vpop.permute.xlu0 %2897
    %2899 = vrot.lane.b32.xlu0 %v2678, 64
    %v2900 = vpop.permute.xlu0 %2899
    %v2902 = vsel %vm886, %v2898, 0
    %v2905 = vsel %vm886, %v2900, 0
    %2907 = vmatprep.subr.bf16.mxu0 0
    %2908 = vmatpush1.bf16.xpose.msra.mxu0 %v2905
    %2909 = vmatprep.subr.bf16.mxu0 0
    %2910 = vmatpush1.bf16.xpose.msra.mxu0 0
    %2911 = vmatprep.subr.bf16.mxu0 0
    %2912 = vmatpush1.bf16.xpose.msra.mxu0 0
    %2913 = vmatprep.subr.bf16.mxu0 0
    %2914 = vmatpush1.bf16.xpose.msra.mxu0 0
    %2915 = vmatprep.subr.bf16.mxu0 0
    %2916 = vmatpush1.bf16.xpose.msra.mxu0 0
    %2917 = vmatprep.subr.bf16.mxu0 0
    %2918 = vmatpush1.bf16.xpose.msra.mxu0 0
    %2919 = vmatprep.subr.bf16.mxu0 0
    %2920 = vmatpush1.bf16.xpose.msra.mxu0 0
    %2921 = vmatprep.subr.bf16.mxu0 0
    %2922 = vmatpush1.bf16.xpose.msra.mxu0 0
    %2923 = vmatprep.subr.bf16.mxu0 0
    %2924 = vmatpush1.bf16.xpose.msra.mxu0 0
    %2925 = vmatprep.subr.bf16.mxu0 0
    %2926 = vmatpush1.bf16.xpose.msra.mxu0 0
    %2927 = vmatprep.subr.bf16.mxu0 0
    %2928 = vmatpush1.bf16.xpose.msra.mxu0 0
    %2929 = vmatprep.subr.bf16.mxu0 0
    %2930 = vmatpush1.bf16.xpose.msra.mxu0 0
    %2931 = vmatprep.subr.bf16.mxu0 0
    %2932 = vmatpush1.bf16.xpose.msra.mxu0 0
    %2933 = vmatprep.subr.bf16.mxu0 0
    %2934 = vmatpush1.bf16.xpose.msra.mxu0 0
    %2935 = vmatprep.subr.bf16.mxu0 0
    %2936 = vmatpush1.bf16.xpose.msra.mxu0 0
    %2937 = vmatprep.subr.bf16.mxu0 0
    %2938 = vmatpush1.bf16.xpose.msra.mxu0 0
    %2939 = vmatprep.mubr.bf16.mxu0 0
    %2940 = vmatmul.mubr.bf16.gmra.mrb[0].mxu0 %v2902
    %v2941 = vpop.f32.mrb[0].mxu0
    %v2942 = vadd.f32 0.0, %v2941
    %v2943 = vpop.f32.mrb[0].mxu0
    %v2944 = vpop.f32.mrb[0].mxu0
    %v2945 = vpop.f32.mrb[0].mxu0
    %2946 = vdwg.mxu0
    %v2947 = vsel %vm933, %v2942, -inf
    %2948 = vmax.xlane.f32.xlu0 %v2947
    %v2949 = vpop.xlane.xlu0 %2948
    %v2950 = vsub.f32 %v2942, %v2949
    %v2951 = vmul.f32 %v2950, 1.442695
    %v2952 = vpow.pop %v2951
    %v2953 = vsel %vm933, %v2952, 0.0
    %2954 = vadd.xlane.f32.xlu0 %v2953
    %v2955 = vpop.xlane.xlu0 %2954
    %v2956 = vrcp.pop %v2955
    %v2957 = vmul.f32 %v2952, %v2956
    %v2958 = vpack.c.bf16 %v2957, %v2957
    %2959 = vrot.lane.b32.xlu0 %v2679, 64
    %v2960 = vpop.permute.xlu0 %2959
    %v2962 = vsel %vm933, %v2958, 0
    %v2965 = vsel %vm949, %v2960, 0
    %2967 = vmatprep.subr.bf16.mxu0 0
    %2968 = vmatpush1.bf16.msra.mxu0 %v2965
    %2969 = vmatprep.subr.bf16.mxu0 0
    %2970 = vmatpush1.bf16.msra.mxu0 0
    %2971 = vmatprep.subr.bf16.mxu0 0
    %2972 = vmatpush1.bf16.msra.mxu0 0
    %2973 = vmatprep.subr.bf16.mxu0 0
    %2974 = vmatpush1.bf16.msra.mxu0 0
    %2975 = vmatprep.subr.bf16.mxu0 0
    %2976 = vmatpush1.bf16.msra.mxu0 0
    %2977 = vmatprep.subr.bf16.mxu0 0
    %2978 = vmatpush1.bf16.msra.mxu0 0
    %2979 = vmatprep.subr.bf16.mxu0 0
    %2980 = vmatpush1.bf16.msra.mxu0 0
    %2981 = vmatprep.subr.bf16.mxu0 0
    %2982 = vmatpush1.bf16.msra.mxu0 0
    %2983 = vmatprep.subr.bf16.mxu0 0
    %2984 = vmatpush1.bf16.msra.mxu0 0
    %2985 = vmatprep.subr.bf16.mxu0 0
    %2986 = vmatpush1.bf16.msra.mxu0 0
    %2987 = vmatprep.subr.bf16.mxu0 0
    %2988 = vmatpush1.bf16.msra.mxu0 0
    %2989 = vmatprep.subr.bf16.mxu0 0
    %2990 = vmatpush1.bf16.msra.mxu0 0
    %2991 = vmatprep.subr.bf16.mxu0 0
    %2992 = vmatpush1.bf16.msra.mxu0 0
    %2993 = vmatprep.subr.bf16.mxu0 0
    %2994 = vmatpush1.bf16.msra.mxu0 0
    %2995 = vmatprep.subr.bf16.mxu0 0
    %2996 = vmatpush1.bf16.msra.mxu0 0
    %2997 = vmatprep.subr.bf16.mxu0 0
    %2998 = vmatpush1.bf16.msra.mxu0 0
    %2999 = vmatprep.mubr.bf16.mxu0 0
    %3000 = vmatmul.mubr.bf16.gmra.mrb[0].mxu0 %v2962
    %v3001 = vpop.f32.mrb[0].mxu0
    %v3002 = vadd.f32 0.0, %v3001
    %v3003 = vpop.f32.mrb[0].mxu0
    %v3004 = vpop.f32.mrb[0].mxu0
    %v3005 = vpop.f32.mrb[0].mxu0
    %3006 = vdwg.mxu0
    %3007 = vrot.lane.b32.xlu0 %v2677, 32
    %v3008 = vpop.permute.xlu0 %3007
    %3009 = vrot.lane.b32.xlu0 %v2678, 32
    %v3010 = vpop.permute.xlu0 %3009
    %v3012 = vsel %vm886, %v3008, 0
    %v3015 = vsel %vm886, %v3010, 0
    %3017 = vmatprep.subr.bf16.mxu0 0
    %3018 = vmatpush1.bf16.xpose.msra.mxu0 %v3015
    %3019 = vmatprep.subr.bf16.mxu0 0
    %3020 = vmatpush1.bf16.xpose.msra.mxu0 0
    %3021 = vmatprep.subr.bf16.mxu0 0
    %3022 = vmatpush1.bf16.xpose.msra.mxu0 0
    %3023 = vmatprep.subr.bf16.mxu0 0
    %3024 = vmatpush1.bf16.xpose.msra.mxu0 0
    %3025 = vmatprep.subr.bf16.mxu0 0
    %3026 = vmatpush1.bf16.xpose.msra.mxu0 0
    %3027 = vmatprep.subr.bf16.mxu0 0
    %3028 = vmatpush1.bf16.xpose.msra.mxu0 0
    %3029 = vmatprep.subr.bf16.mxu0 0
    %3030 = vmatpush1.bf16.xpose.msra.mxu0 0
    %3031 = vmatprep.subr.bf16.mxu0 0
    %3032 = vmatpush1.bf16.xpose.msra.mxu0 0
    %3033 = vmatprep.subr.bf16.mxu0 0
    %3034 = vmatpush1.bf16.xpose.msra.mxu0 0
    %3035 = vmatprep.subr.bf16.mxu0 0
    %3036 = vmatpush1.bf16.xpose.msra.mxu0 0
    %3037 = vmatprep.subr.bf16.mxu0 0
    %3038 = vmatpush1.bf16.xpose.msra.mxu0 0
    %3039 = vmatprep.subr.bf16.mxu0 0
    %3040 = vmatpush1.bf16.xpose.msra.mxu0 0
    %3041 = vmatprep.subr.bf16.mxu0 0
    %3042 = vmatpush1.bf16.xpose.msra.mxu0 0
    %3043 = vmatprep.subr.bf16.mxu0 0
    %3044 = vmatpush1.bf16.xpose.msra.mxu0 0
    %3045 = vmatprep.subr.bf16.mxu0 0
    %3046 = vmatpush1.bf16.xpose.msra.mxu0 0
    %3047 = vmatprep.subr.bf16.mxu0 0
    %3048 = vmatpush1.bf16.xpose.msra.mxu0 0
    %3049 = vmatprep.mubr.bf16.mxu0 0
    %3050 = vmatmul.mubr.bf16.gmra.mrb[0].mxu0 %v3012
    %v3051 = vpop.f32.mrb[0].mxu0
    %v3052 = vadd.f32 0.0, %v3051
    %v3053 = vpop.f32.mrb[0].mxu0
    %v3054 = vpop.f32.mrb[0].mxu0
    %v3055 = vpop.f32.mrb[0].mxu0
    %3056 = vdwg.mxu0
    %v3057 = vsel %vm933, %v3052, -inf
    %3058 = vmax.xlane.f32.xlu0 %v3057
    %v3059 = vpop.xlane.xlu0 %3058
    %v3060 = vsub.f32 %v3052, %v3059
    %v3061 = vmul.f32 %v3060, 1.442695
    %v3062 = vpow.pop %v3061
    %v3063 = vsel %vm933, %v3062, 0.0
    %3064 = vadd.xlane.f32.xlu0 %v3063
    %v3065 = vpop.xlane.xlu0 %3064
    %v3066 = vrcp.pop %v3065
    %v3067 = vmul.f32 %v3062, %v3066
    %v3068 = vpack.c.bf16 %v3067, %v3067
    %3069 = vrot.lane.b32.xlu0 %v2679, 32
    %v3070 = vpop.permute.xlu0 %3069
    %v3072 = vsel %vm933, %v3068, 0
    %v3075 = vsel %vm949, %v3070, 0
    %3077 = vmatprep.subr.bf16.mxu0 0
    %3078 = vmatpush1.bf16.msra.mxu0 %v3075
    %3079 = vmatprep.subr.bf16.mxu0 0
    %3080 = vmatpush1.bf16.msra.mxu0 0
    %3081 = vmatprep.subr.bf16.mxu0 0
    %3082 = vmatpush1.bf16.msra.mxu0 0
    %3083 = vmatprep.subr.bf16.mxu0 0
    %3084 = vmatpush1.bf16.msra.mxu0 0
    %3085 = vmatprep.subr.bf16.mxu0 0
    %3086 = vmatpush1.bf16.msra.mxu0 0
    %3087 = vmatprep.subr.bf16.mxu0 0
    %3088 = vmatpush1.bf16.msra.mxu0 0
    %3089 = vmatprep.subr.bf16.mxu0 0
    %3090 = vmatpush1.bf16.msra.mxu0 0
    %3091 = vmatprep.subr.bf16.mxu0 0
    %3092 = vmatpush1.bf16.msra.mxu0 0
    %3093 = vmatprep.subr.bf16.mxu0 0
    %3094 = vmatpush1.bf16.msra.mxu0 0
    %3095 = vmatprep.subr.bf16.mxu0 0
    %3096 = vmatpush1.bf16.msra.mxu0 0
    %3097 = vmatprep.subr.bf16.mxu0 0
    %3098 = vmatpush1.bf16.msra.mxu0 0
    %3099 = vmatprep.subr.bf16.mxu0 0
    %3100 = vmatpush1.bf16.msra.mxu0 0
    %3101 = vmatprep.subr.bf16.mxu0 0
    %3102 = vmatpush1.bf16.msra.mxu0 0
    %3103 = vmatprep.subr.bf16.mxu0 0
    %3104 = vmatpush1.bf16.msra.mxu0 0
    %3105 = vmatprep.subr.bf16.mxu0 0
    %3106 = vmatpush1.bf16.msra.mxu0 0
    %3107 = vmatprep.subr.bf16.mxu0 0
    %3108 = vmatpush1.bf16.msra.mxu0 0
    %3109 = vmatprep.mubr.bf16.mxu0 0
    %3110 = vmatmul.mubr.bf16.gmra.mrb[0].mxu0 %v3072
    %v3111 = vpop.f32.mrb[0].mxu0
    %v3112 = vadd.f32 0.0, %v3111
    %v3113 = vpop.f32.mrb[0].mxu0
    %v3114 = vpop.f32.mrb[0].mxu0
    %v3115 = vpop.f32.mrb[0].mxu0
    %3116 = vdwg.mxu0
    %3118 = vrot.lane.b32.xlu0 %v2892, 32
    %v3119 = vpop.permute.xlu0 %3118
    %3122 = vrot.lane.b32.xlu0 %v3002, 64
    %v3123 = vpop.permute.xlu0 %3122
    %3126 = vrot.lane.b32.xlu0 %v3112, 96
    %v3127 = vpop.permute.xlu0 %3126
    %v3129 = vsel %vm886, %v2779, %v3119
    %v3130 = vsel %vm1339, %v3129, %v3123
    %v3131 = vsel %vm1341, %v3130, %v3127
    %v3132 = vld [vmem:[%s31] sm:$0xf]
    %v3133 = vld [vmem:[%s31 + $0x4] sm:$0xf]
    %v3134 = vld [vmem:[%s31 + $0x8] sm:$0xf]
    %v3135 = vld [vmem:[%s31 + $0xc] sm:$0xf]
    %v3136 = vld [vmem:[%s31 + $0x10] sm:$0xf]
    %v3137 = vld [vmem:[%s31 + $0x14] sm:$0xf]
    %v3138 = vld [vmem:[%s31 + $0x18] sm:$0xf]
    %v3139 = vld [vmem:[%s31 + $0x1c] sm:$0xf]
    %v3140 = vld [vmem:[%s31 + $0x20] sm:$0xf]
    %v3141 = vld [vmem:[%s31 + $0x24] sm:$0xf]
    %v3142 = vld [vmem:[%s31 + $0x28] sm:$0xf]
    %v3143 = vld [vmem:[%s31 + $0x2c] sm:$0xf]
    %v3144 = vld [vmem:[%s31 + $0x30] sm:$0xf]
    %v3145 = vld [vmem:[%s31 + $0x34] sm:$0xf]
    %v3146 = vld [vmem:[%s31 + $0x38] sm:$0xf]
    %v3147 = vld [vmem:[%s31 + $0x3c] sm:$0xf]
    %v3148 = vpack.c.bf16 %v3131, %v2675
    %v3149 = vld [vmem:[%s33] sm:$0x1]
    %v3151 = vlaneseq
    %v3152 = vshrl.u32 %v3151, 7
    %v3153 = vsub.s32 0, %v3152
    %v3154 = vrot.slane %v3149, %v3153
    %v3172 = vunpack.c.l.b16 %v3132
    %v3173 = vunpack.c.l.b16 %v3133
    %v3174 = vunpack.c.l.b16 %v3134
    %v3175 = vunpack.c.l.b16 %v3135
    %v3176 = vunpack.c.l.b16 %v3136
    %v3177 = vunpack.c.l.b16 %v3137
    %v3178 = vunpack.c.l.b16 %v3138
    %v3179 = vunpack.c.l.b16 %v3139
    %v3180 = vunpack.c.l.b16 %v3140
    %v3181 = vunpack.c.l.b16 %v3141
    %v3182 = vunpack.c.l.b16 %v3142
    %v3183 = vunpack.c.l.b16 %v3143
    %v3184 = vunpack.c.l.b16 %v3144
    %v3185 = vunpack.c.l.b16 %v3145
    %v3186 = vunpack.c.l.b16 %v3146
    %v3187 = vunpack.c.l.b16 %v3147
    %v3188 = vpack.c.b16 %v3173, %v3172
    %v3189 = vpack.c.b16 %v3175, %v3174
    %v3190 = vpack.c.b16 %v3177, %v3176
    %v3191 = vpack.c.b16 %v3179, %v3178
    %v3192 = vpack.c.b16 %v3181, %v3180
    %v3193 = vpack.c.b16 %v3183, %v3182
    %v3194 = vpack.c.b16 %v3185, %v3184
    %v3195 = vpack.c.b16 %v3187, %v3186
    %3204 = vmatprep.subr.bf16.mxu0 0
    %3205 = vmatpush1.bf16.msra.mxu0 %v3188
    %3206 = vmatprep.subr.bf16.mxu0 0
    %3207 = vmatpush1.bf16.msra.mxu0 %v3189
    %3208 = vmatprep.subr.bf16.mxu0 0
    %3209 = vmatpush1.bf16.msra.mxu0 %v3190
    %3210 = vmatprep.subr.bf16.mxu0 0
    %3211 = vmatpush1.bf16.msra.mxu0 %v3191
    %3212 = vmatprep.subr.bf16.mxu0 0
    %3213 = vmatpush1.bf16.msra.mxu0 %v3192
    %3214 = vmatprep.subr.bf16.mxu0 0
    %3215 = vmatpush1.bf16.msra.mxu0 %v3193
    %3216 = vmatprep.subr.bf16.mxu0 0
    %3217 = vmatpush1.bf16.msra.mxu0 %v3194
    %3218 = vmatprep.subr.bf16.mxu0 0
    %3219 = vmatpush1.bf16.msra.mxu0 %v3195
    %3220 = vmatprep.subr.bf16.mxu0 0
    %3221 = vmatpush1.bf16.msra.mxu0 0
    %3222 = vmatprep.subr.bf16.mxu0 0
    %3223 = vmatpush1.bf16.msra.mxu0 0
    %3224 = vmatprep.subr.bf16.mxu0 0
    %3225 = vmatpush1.bf16.msra.mxu0 0
    %3226 = vmatprep.subr.bf16.mxu0 0
    %3227 = vmatpush1.bf16.msra.mxu0 0
    %3228 = vmatprep.subr.bf16.mxu0 0
    %3229 = vmatpush1.bf16.msra.mxu0 0
    %3230 = vmatprep.subr.bf16.mxu0 0
    %3231 = vmatpush1.bf16.msra.mxu0 0
    %3232 = vmatprep.subr.bf16.mxu0 0
    %3233 = vmatpush1.bf16.msra.mxu0 0
    %3234 = vmatprep.subr.bf16.mxu0 0
    %3235 = vmatpush1.bf16.msra.mxu0 0
    %3236 = vmatprep.mubr.bf16.mxu0 0
    %3237 = vmatmul.mubr.bf16.gmra.mrb[0].mxu0 %v3148
    %v3238 = vpop.f32.mrb[0].mxu0
    %v3239 = vadd.f32 %v3154, %v3238
    %v3240 = vpop.f32.mrb[0].mxu0
    %v3241 = vpop.f32.mrb[0].mxu0
    %v3242 = vadd.f32 %v3154, %v3241
    %v3243 = vpop.f32.mrb[0].mxu0
    %3244 = vdwg.mxu0
    %v3245 = vadd.f32 %v1953, %v3239
    %v3246 = vadd.f32 %v1954, %v3242
    %v3247 = vld [vmem:[#allocation22] sm:$0x1]
    %v3248 = vld [vmem:[#allocation24] sm:$0x1]
    %3249 = vadd.xlane.f32.xlu0 %v3245
    %v3250 = vpop.xlane.xlu0 %3249
    %3251 = vadd.xlane.f32.xlu0 %v3246
    %v3252 = vpop.xlane.xlu0 %3251
    %v3253 = vmul.f32 %v3250, %v1920
    %v3254 = vmul.f32 %v3252, %v1920
    %v3255 = vsub.f32 %v3245, %v3253
    %v3256 = vsub.f32 %v3246, %v3254
    %v3257 = vmul.f32 %v3255, %v3255
    %v3258 = vmul.f32 %v3256, %v3256
    %3259 = vadd.xlane.f32.xlu0 %v3257
    %v3260 = vpop.xlane.xlu0 %3259
    %3261 = vadd.xlane.f32.xlu0 %v3258
    %v3262 = vpop.xlane.xlu0 %3261
    %v3263 = vmul.f32 %v3260, %v1920
    %v3264 = vmul.f32 %v3262, %v1920
    %v3265 = vadd.f32 %v3263, 1e-05
    %v3266 = vadd.f32 %v3264, 1e-05
    %v3267 = vrsqrt.pop %v3265
    %v3268 = vrsqrt.pop %v3266
    %v3269 = vmul.f32 %v3255, %v3267
    %v3270 = vmul.f32 %v3256, %v3268
    %v3272 = vlaneseq
    %v3273 = vshrl.u32 %v3272, 7
    %v3274 = vsub.s32 0, %v3273
    %v3275 = vrot.slane %v3247, %v3274
    %v3277 = vmul.f32 %v3269, %v3275
    %v3278 = vmul.f32 %v3270, %v3275
    %v3280 = vlaneseq
    %v3281 = vshrl.u32 %v3280, 7
    %v3282 = vsub.s32 0, %v3281
    %v3283 = vrot.slane %v3248, %v3282
    %v3285 = vadd.f32 %v3277, %v3283
    %v3286 = vadd.f32 %v3278, %v3283
    %v3287 = vld [vmem:[#allocation13] sm:$0xf]
    %v3288 = vld [vmem:[#allocation13 + $0x4] sm:$0xf]
    %v3289 = vld [vmem:[#allocation13 + $0x8] sm:$0xf]
    %v3290 = vld [vmem:[#allocation13 + $0xc] sm:$0xf]
    %v3291 = vld [vmem:[#allocation13 + $0x10] sm:$0xf]
    %v3292 = vld [vmem:[#allocation13 + $0x14] sm:$0xf]
    %v3293 = vld [vmem:[#allocation13 + $0x18] sm:$0xf]
    %v3294 = vld [vmem:[#allocation13 + $0x1c] sm:$0xf]
    %v3295 = vld [vmem:[#allocation13 + $0x20] sm:$0xf]
    %v3296 = vld [vmem:[#allocation13 + $0x24] sm:$0xf]
    %v3297 = vld [vmem:[#allocation13 + $0x28] sm:$0xf]
    %v3298 = vld [vmem:[#allocation13 + $0x2c] sm:$0xf]
    %v3299 = vld [vmem:[#allocation13 + $0x30] sm:$0xf]
    %v3300 = vld [vmem:[#allocation13 + $0x34] sm:$0xf]
    %v3301 = vld [vmem:[#allocation13 + $0x38] sm:$0xf]
    %v3302 = vld [vmem:[#allocation13 + $0x3c] sm:$0xf]
    %v3303 = vpack.c.bf16 %v3286, %v3285
    %v3304 = vld [vmem:[#allocation15] sm:$0x1]
    %v3306 = vlaneseq
    %v3307 = vshrl.u32 %v3306, 7
    %v3308 = vsub.s32 0, %v3307
    %v3309 = vrot.slane %v3304, %v3308
    %v3327 = vunpack.c.l.b16 %v3287
    %v3328 = vunpack.c.l.b16 %v3288
    %v3329 = vunpack.c.l.b16 %v3289
    %v3330 = vunpack.c.l.b16 %v3290
    %v3331 = vunpack.c.l.b16 %v3291
    %v3332 = vunpack.c.l.b16 %v3292
    %v3333 = vunpack.c.l.b16 %v3293
    %v3334 = vunpack.c.l.b16 %v3294
    %v3335 = vunpack.c.l.b16 %v3295
    %v3336 = vunpack.c.l.b16 %v3296
    %v3337 = vunpack.c.l.b16 %v3297
    %v3338 = vunpack.c.l.b16 %v3298
    %v3339 = vunpack.c.l.b16 %v3299
    %v3340 = vunpack.c.l.b16 %v3300
    %v3341 = vunpack.c.l.b16 %v3301
    %v3342 = vunpack.c.l.b16 %v3302
    %v3343 = vpack.c.b16 %v3328, %v3327
    %v3344 = vpack.c.b16 %v3330, %v3329
    %v3345 = vpack.c.b16 %v3332, %v3331
    %v3346 = vpack.c.b16 %v3334, %v3333
    %v3347 = vpack.c.b16 %v3336, %v3335
    %v3348 = vpack.c.b16 %v3338, %v3337
    %v3349 = vpack.c.b16 %v3340, %v3339
    %v3350 = vpack.c.b16 %v3342, %v3341
    %3359 = vmatprep.subr.bf16.mxu0 0
    %3360 = vmatpush1.bf16.msra.mxu0 %v3343
    %3361 = vmatprep.subr.bf16.mxu0 0
    %3362 = vmatpush1.bf16.msra.mxu0 %v3344
    %3363 = vmatprep.subr.bf16.mxu0 0
    %3364 = vmatpush1.bf16.msra.mxu0 %v3345
    %3365 = vmatprep.subr.bf16.mxu0 0
    %3366 = vmatpush1.bf16.msra.mxu0 %v3346
    %3367 = vmatprep.subr.bf16.mxu0 0
    %3368 = vmatpush1.bf16.msra.mxu0 %v3347
    %3369 = vmatprep.subr.bf16.mxu0 0
    %3370 = vmatpush1.bf16.msra.mxu0 %v3348
    %3371 = vmatprep.subr.bf16.mxu0 0
    %3372 = vmatpush1.bf16.msra.mxu0 %v3349
    %3373 = vmatprep.subr.bf16.mxu0 0
    %3374 = vmatpush1.bf16.msra.mxu0 %v3350
    %3375 = vmatprep.subr.bf16.mxu0 0
    %3376 = vmatpush1.bf16.msra.mxu0 0
    %3377 = vmatprep.subr.bf16.mxu0 0
    %3378 = vmatpush1.bf16.msra.mxu0 0
    %3379 = vmatprep.subr.bf16.mxu0 0
    %3380 = vmatpush1.bf16.msra.mxu0 0
    %3381 = vmatprep.subr.bf16.mxu0 0
    %3382 = vmatpush1.bf16.msra.mxu0 0
    %3383 = vmatprep.subr.bf16.mxu0 0
    %3384 = vmatpush1.bf16.msra.mxu0 0
    %3385 = vmatprep.subr.bf16.mxu0 0
    %3386 = vmatpush1.bf16.msra.mxu0 0
    %3387 = vmatprep.subr.bf16.mxu0 0
    %3388 = vmatpush1.bf16.msra.mxu0 0
    %3389 = vmatprep.subr.bf16.mxu0 0
    %3390 = vmatpush1.bf16.msra.mxu0 0
    %3391 = vmatprep.mubr.bf16.mxu0 0
    %3392 = vmatmul.mubr.bf16.gmra.mrb[0].mxu0 %v3303
    %v3393 = vpop.f32.mrb[0].mxu0
    %v3394 = vadd.f32 %v3309, %v3393
    %v3395 = vpop.f32.mrb[0].mxu0
    %v3396 = vpop.f32.mrb[0].mxu0
    %v3397 = vadd.f32 %v3309, %v3396
    %v3398 = vpop.f32.mrb[0].mxu0
    %3399 = vdwg.mxu0
    %v3400 = vmax.f32 %v3394, 0.0
    %v3401 = vmax.f32 %v3397, 0.0
    %v3402 = vld [vmem:[#allocation16] sm:$0xf]
    %v3403 = vld [vmem:[#allocation16 + $0x4] sm:$0xf]
    %v3404 = vld [vmem:[#allocation16 + $0x8] sm:$0xf]
    %v3405 = vld [vmem:[#allocation16 + $0xc] sm:$0xf]
    %v3406 = vld [vmem:[#allocation16 + $0x10] sm:$0xf]
    %v3407 = vld [vmem:[#allocation16 + $0x14] sm:$0xf]
    %v3408 = vld [vmem:[#allocation16 + $0x18] sm:$0xf]
    %v3409 = vld [vmem:[#allocation16 + $0x1c] sm:$0xf]
    %v3410 = vld [vmem:[#allocation16 + $0x20] sm:$0xf]
    %v3411 = vld [vmem:[#allocation16 + $0x24] sm:$0xf]
    %v3412 = vld [vmem:[#allocation16 + $0x28] sm:$0xf]
    %v3413 = vld [vmem:[#allocation16 + $0x2c] sm:$0xf]
    %v3414 = vld [vmem:[#allocation16 + $0x30] sm:$0xf]
    %v3415 = vld [vmem:[#allocation16 + $0x34] sm:$0xf]
    %v3416 = vld [vmem:[#allocation16 + $0x38] sm:$0xf]
    %v3417 = vld [vmem:[#allocation16 + $0x3c] sm:$0xf]
    %v3418 = vpack.c.bf16 %v3401, %v3400
    %v3419 = vld [vmem:[#allocation18] sm:$0x1]
    %v3421 = vlaneseq
    %v3422 = vshrl.u32 %v3421, 7
    %v3423 = vsub.s32 0, %v3422
    %v3424 = vrot.slane %v3419, %v3423
    %v3442 = vunpack.c.l.b16 %v3402
    %v3443 = vunpack.c.l.b16 %v3403
    %v3444 = vunpack.c.l.b16 %v3404
    %v3445 = vunpack.c.l.b16 %v3405
    %v3446 = vunpack.c.l.b16 %v3406
    %v3447 = vunpack.c.l.b16 %v3407
    %v3448 = vunpack.c.l.b16 %v3408
    %v3449 = vunpack.c.l.b16 %v3409
    %v3450 = vunpack.c.l.b16 %v3410
    %v3451 = vunpack.c.l.b16 %v3411
    %v3452 = vunpack.c.l.b16 %v3412
    %v3453 = vunpack.c.l.b16 %v3413
    %v3454 = vunpack.c.l.b16 %v3414
    %v3455 = vunpack.c.l.b16 %v3415
    %v3456 = vunpack.c.l.b16 %v3416
    %v3457 = vunpack.c.l.b16 %v3417
    %v3458 = vpack.c.b16 %v3443, %v3442
    %v3459 = vpack.c.b16 %v3445, %v3444
    %v3460 = vpack.c.b16 %v3447, %v3446
    %v3461 = vpack.c.b16 %v3449, %v3448
    %v3462 = vpack.c.b16 %v3451, %v3450
    %v3463 = vpack.c.b16 %v3453, %v3452
    %v3464 = vpack.c.b16 %v3455, %v3454
    %v3465 = vpack.c.b16 %v3457, %v3456
    %3474 = vmatprep.subr.bf16.mxu0 0
    %3475 = vmatpush1.bf16.msra.mxu0 %v3458
    %3476 = vmatprep.subr.bf16.mxu0 0
    %3477 = vmatpush1.bf16.msra.mxu0 %v3459
    %3478 = vmatprep.subr.bf16.mxu0 0
    %3479 = vmatpush1.bf16.msra.mxu0 %v3460
    %3480 = vmatprep.subr.bf16.mxu0 0
    %3481 = vmatpush1.bf16.msra.mxu0 %v3461
    %3482 = vmatprep.subr.bf16.mxu0 0
    %3483 = vmatpush1.bf16.msra.mxu0 %v3462
    %3484 = vmatprep.subr.bf16.mxu0 0
    %3485 = vmatpush1.bf16.msra.mxu0 %v3463
    %3486 = vmatprep.subr.bf16.mxu0 0
    %3487 = vmatpush1.bf16.msra.mxu0 %v3464
    %3488 = vmatprep.subr.bf16.mxu0 0
    %3489 = vmatpush1.bf16.msra.mxu0 %v3465
    %3490 = vmatprep.subr.bf16.mxu0 0
    %3491 = vmatpush1.bf16.msra.mxu0 0
    %3492 = vmatprep.subr.bf16.mxu0 0
    %3493 = vmatpush1.bf16.msra.mxu0 0
    %3494 = vmatprep.subr.bf16.mxu0 0
    %3495 = vmatpush1.bf16.msra.mxu0 0
    %3496 = vmatprep.subr.bf16.mxu0 0
    %3497 = vmatpush1.bf16.msra.mxu0 0
    %3498 = vmatprep.subr.bf16.mxu0 0
    %3499 = vmatpush1.bf16.msra.mxu0 0
    %3500 = vmatprep.subr.bf16.mxu0 0
    %3501 = vmatpush1.bf16.msra.mxu0 0
    %3502 = vmatprep.subr.bf16.mxu0 0
    %3503 = vmatpush1.bf16.msra.mxu0 0
    %3504 = vmatprep.subr.bf16.mxu0 0
    %3505 = vmatpush1.bf16.msra.mxu0 0
    %3506 = vmatprep.mubr.bf16.mxu0 0
    %3507 = vmatmul.mubr.bf16.gmra.mrb[0].mxu0 %v3418
    %v3508 = vpop.f32.mrb[0].mxu0
    %v3509 = vadd.f32 %v3424, %v3508
    %v3510 = vpop.f32.mrb[0].mxu0
    %v3511 = vpop.f32.mrb[0].mxu0
    %v3512 = vadd.f32 %v3424, %v3511
    %v3513 = vpop.f32.mrb[0].mxu0
    %3514 = vdwg.mxu0
    %v3515 = vadd.f32 %v3285, %v3509
    %v3516 = vadd.f32 %v3286, %v3512
    %v3517 = vld [vmem:[#allocation25] sm:$0x1]
    %v3518 = vld [vmem:[#allocation27] sm:$0x1]
    %3519 = vadd.xlane.f32.xlu0 %v3515
    %v3520 = vpop.xlane.xlu0 %3519
    %3521 = vadd.xlane.f32.xlu0 %v3516
    %v3522 = vpop.xlane.xlu0 %3521
    %v3523 = vmul.f32 %v3520, %v1920
    %v3524 = vmul.f32 %v3522, %v1920
    %v3525 = vsub.f32 %v3515, %v3523
    %v3526 = vsub.f32 %v3516, %v3524
    %v3527 = vmul.f32 %v3525, %v3525
    %v3528 = vmul.f32 %v3526, %v3526
    %3529 = vadd.xlane.f32.xlu0 %v3527
    %v3530 = vpop.xlane.xlu0 %3529
    %3531 = vadd.xlane.f32.xlu0 %v3528
    %v3532 = vpop.xlane.xlu0 %3531
    %v3533 = vmul.f32 %v3530, %v1920
    %v3534 = vmul.f32 %v3532, %v1920
    %v3535 = vadd.f32 %v3533, 1e-05
    %v3536 = vadd.f32 %v3534, 1e-05
    %v3537 = vrsqrt.pop %v3535
    %v3538 = vrsqrt.pop %v3536
    %v3539 = vmul.f32 %v3525, %v3537
    %v3540 = vmul.f32 %v3526, %v3538
    %v3542 = vlaneseq
    %v3543 = vshrl.u32 %v3542, 7
    %v3544 = vsub.s32 0, %v3543
    %v3545 = vrot.slane %v3517, %v3544
    %v3547 = vmul.f32 %v3539, %v3545
    %v3548 = vmul.f32 %v3540, %v3545
    %v3550 = vlaneseq
    %v3551 = vshrl.u32 %v3550, 7
    %v3552 = vsub.s32 0, %v3551
    %v3553 = vrot.slane %v3518, %v3552
    %v3555 = vadd.f32 %v3547, %v3553
    %v3556 = vadd.f32 %v3548, %v3553
    %s3557 = scalar_lea.vmem %s15, 192
    %v3558 = vld [vmem:[%s3557] sm:$0xff]
    %v3559 = vld [vmem:[%s3557 + $0x8] sm:$0xf]
    %v3560 = vld [vmem:[%s3557 + $0xc] sm:$0xff]
    %v3561 = vld [vmem:[%s3557 + $0x14] sm:$0xf]
    %v3562 = vld [vmem:[%s3557 + $0x18] sm:$0xff]
    %v3563 = vld [vmem:[%s3557 + $0x20] sm:$0xf]
    %v3564 = vld [vmem:[%s3557 + $0x24] sm:$0xff]
    %v3565 = vld [vmem:[%s3557 + $0x2c] sm:$0xf]
    %v3566 = vld [vmem:[%s3557 + $0x30] sm:$0xff]
    %v3567 = vld [vmem:[%s3557 + $0x38] sm:$0xf]
    %v3568 = vld [vmem:[%s3557 + $0x3c] sm:$0xff]
    %v3569 = vld [vmem:[%s3557 + $0x44] sm:$0xf]
    %v3570 = vld [vmem:[%s3557 + $0x48] sm:$0xff]
    %v3571 = vld [vmem:[%s3557 + $0x50] sm:$0xf]
    %v3572 = vld [vmem:[%s3557 + $0x54] sm:$0xff]
    %v3573 = vld [vmem:[%s3557 + $0x5c] sm:$0xf]
    %v3574 = vld [vmem:[%s3557 + $0x60] sm:$0xff]
    %v3575 = vld [vmem:[%s3557 + $0x68] sm:$0xf]
    %v3576 = vld [vmem:[%s3557 + $0x6c] sm:$0xff]
    %v3577 = vld [vmem:[%s3557 + $0x74] sm:$0xf]
    %v3578 = vld [vmem:[%s3557 + $0x78] sm:$0xff]
    %v3579 = vld [vmem:[%s3557 + $0x80] sm:$0xf]
    %v3580 = vld [vmem:[%s3557 + $0x84] sm:$0xff]
    %v3581 = vld [vmem:[%s3557 + $0x8c] sm:$0xf]
    %v3582 = vld [vmem:[%s3557 + $0x90] sm:$0xff]
    %v3583 = vld [vmem:[%s3557 + $0x98] sm:$0xf]
    %v3584 = vld [vmem:[%s3557 + $0x9c] sm:$0xff]
    %v3585 = vld [vmem:[%s3557 + $0xa4] sm:$0xf]
    %v3586 = vld [vmem:[%s3557 + $0xa8] sm:$0xff]
    %v3587 = vld [vmem:[%s3557 + $0xb0] sm:$0xf]
    %v3588 = vld [vmem:[%s3557 + $0xb4] sm:$0xff]
    %v3589 = vld [vmem:[%s3557 + $0xbc] sm:$0xf]
    %v3590 = vpack.c.bf16 %v3556, %v3555
    %s3591 = scalar_lea.vmem [#allocation9], 3
    %v3592 = vld [vmem:[%s3591] sm:$0x7]
    %v3594 = vlaneseq
    %v3595 = vshrl.u32 %v3594, 7
    %v3596 = vsub.s32 0, %v3595
    %v3597 = vrot.slane %v3592, %v3596
    %v3598 = vlaneseq
    %v3599 = vshrl.u32 %v3598, 7
    %v3600 = vsub.s32 1, %v3599
    %v3601 = vrot.slane %v3592, %v3600
    %v3602 = vlaneseq
    %v3603 = vshrl.u32 %v3602, 7
    %v3604 = vsub.s32 2, %v3603
    %v3605 = vrot.slane %v3592, %v3604
    %v3641 = vunpack.c.l.b16 %v3558
    %v3642 = vunpack.c.h.b16 %v3558
    %v3643 = vunpack.c.l.b16 %v3559
    %v3644 = vunpack.c.l.b16 %v3560
    %v3645 = vunpack.c.h.b16 %v3560
    %v3646 = vunpack.c.l.b16 %v3561
    %v3647 = vunpack.c.l.b16 %v3562
    %v3648 = vunpack.c.h.b16 %v3562
    %v3649 = vunpack.c.l.b16 %v3563
    %v3650 = vunpack.c.l.b16 %v3564
    %v3651 = vunpack.c.h.b16 %v3564
    %v3652 = vunpack.c.l.b16 %v3565
    %v3653 = vunpack.c.l.b16 %v3566
    %v3654 = vunpack.c.h.b16 %v3566
    %v3655 = vunpack.c.l.b16 %v3567
    %v3656 = vunpack.c.l.b16 %v3568
    %v3657 = vunpack.c.h.b16 %v3568
    %v3658 = vunpack.c.l.b16 %v3569
    %v3659 = vunpack.c.l.b16 %v3570
    %v3660 = vunpack.c.h.b16 %v3570
    %v3661 = vunpack.c.l.b16 %v3571
    %v3662 = vunpack.c.l.b16 %v3572
    %v3663 = vunpack.c.h.b16 %v3572
    %v3664 = vunpack.c.l.b16 %v3573
    %v3665 = vunpack.c.l.b16 %v3574
    %v3666 = vunpack.c.h.b16 %v3574
    %v3667 = vunpack.c.l.b16 %v3575
    %v3668 = vunpack.c.l.b16 %v3576
    %v3669 = vunpack.c.h.b16 %v3576
    %v3670 = vunpack.c.l.b16 %v3577
    %v3671 = vunpack.c.l.b16 %v3578
    %v3672 = vunpack.c.h.b16 %v3578
    %v3673 = vunpack.c.l.b16 %v3579
    %v3674 = vunpack.c.l.b16 %v3580
    %v3675 = vunpack.c.h.b16 %v3580
    %v3676 = vunpack.c.l.b16 %v3581
    %v3677 = vunpack.c.l.b16 %v3582
    %v3678 = vunpack.c.h.b16 %v3582
    %v3679 = vunpack.c.l.b16 %v3583
    %v3680 = vunpack.c.l.b16 %v3584
    %v3681 = vunpack.c.h.b16 %v3584
    %v3682 = vunpack.c.l.b16 %v3585
    %v3683 = vunpack.c.l.b16 %v3586
    %v3684 = vunpack.c.h.b16 %v3586
    %v3685 = vunpack.c.l.b16 %v3587
    %v3686 = vunpack.c.l.b16 %v3588
    %v3687 = vunpack.c.h.b16 %v3588
    %v3688 = vunpack.c.l.b16 %v3589
    %v3689 = vpack.c.b16 %v3644, %v3641
    %v3690 = vpack.c.b16 %v3645, %v3642
    %v3691 = vpack.c.b16 %v3646, %v3643
    %v3692 = vpack.c.b16 %v3650, %v3647
    %v3693 = vpack.c.b16 %v3651, %v3648
    %v3694 = vpack.c.b16 %v3652, %v3649
    %v3695 = vpack.c.b16 %v3656, %v3653
    %v3696 = vpack.c.b16 %v3657, %v3654
    %v3697 = vpack.c.b16 %v3658, %v3655
    %v3698 = vpack.c.b16 %v3662, %v3659
    %v3699 = vpack.c.b16 %v3663, %v3660
    %v3700 = vpack.c.b16 %v3664, %v3661
    %v3701 = vpack.c.b16 %v3668, %v3665
    %v3702 = vpack.c.b16 %v3669, %v3666
    %v3703 = vpack.c.b16 %v3670, %v3667
    %v3704 = vpack.c.b16 %v3674, %v3671
    %v3705 = vpack.c.b16 %v3675, %v3672
    %v3706 = vpack.c.b16 %v3676, %v3673
    %v3707 = vpack.c.b16 %v3680, %v3677
    %v3708 = vpack.c.b16 %v3681, %v3678
    %v3709 = vpack.c.b16 %v3682, %v3679
    %v3710 = vpack.c.b16 %v3686, %v3683
    %v3711 = vpack.c.b16 %v3687, %v3684
    %v3712 = vpack.c.b16 %v3688, %v3685
    %3737 = vmatprep.subr.bf16.mxu0 %v3690
    %3738 = vmatpush1.bf16.msra.mxu0 %v3689
    %3739 = vmatprep.subr.bf16.mxu0 %v3693
    %3740 = vmatpush1.bf16.msra.mxu0 %v3692
    %3741 = vmatprep.subr.bf16.mxu0 %v3696
    %3742 = vmatpush1.bf16.msra.mxu0 %v3695
    %3743 = vmatprep.subr.bf16.mxu0 %v3699
    %3744 = vmatpush1.bf16.msra.mxu0 %v3698
    %3745 = vmatprep.subr.bf16.mxu0 %v3702
    %3746 = vmatpush1.bf16.msra.mxu0 %v3701
    %3747 = vmatprep.subr.bf16.mxu0 %v3705
    %3748 = vmatpush1.bf16.msra.mxu0 %v3704
    %3749 = vmatprep.subr.bf16.mxu0 %v3708
    %3750 = vmatpush1.bf16.msra.mxu0 %v3707
    %3751 = vmatprep.subr.bf16.mxu0 %v3711
    %3752 = vmatpush1.bf16.msra.mxu0 %v3710
    %3753 = vmatprep.subr.bf16.mxu0 0
    %3754 = vmatpush1.bf16.msra.mxu0 0
    %3755 = vmatprep.subr.bf16.mxu0 0
    %3756 = vmatpush1.bf16.msra.mxu0 0
    %3757 = vmatprep.subr.bf16.mxu0 0
    %3758 = vmatpush1.bf16.msra.mxu0 0
    %3759 = vmatprep.subr.bf16.mxu0 0
    %3760 = vmatpush1.bf16.msra.mxu0 0
    %3761 = vmatprep.subr.bf16.mxu0 0
    %3762 = vmatpush1.bf16.msra.mxu0 0
    %3763 = vmatprep.subr.bf16.mxu0 0
    %3764 = vmatpush1.bf16.msra.mxu0 0
    %3765 = vmatprep.subr.bf16.mxu0 0
    %3766 = vmatpush1.bf16.msra.mxu0 0
    %3767 = vmatprep.subr.bf16.mxu0 0
    %3768 = vmatpush1.bf16.msra.mxu0 0
    %3769 = vmatprep.mubr.bf16.mxu0 0
    %3770 = vmatmul.mubr.bf16.gmra.mrb[0].mxu0 %v3590
    %v3771 = vpop.f32.mrb[0].mxu0
    %v3772 = vadd.f32 %v3597, %v3771
    %v3773 = vpop.f32.mrb[0].mxu0
    %v3774 = vadd.f32 %v3601, %v3773
    %v3775 = vpop.f32.mrb[0].mxu0
    %v3776 = vadd.f32 %v3597, %v3775
    %v3777 = vpop.f32.mrb[0].mxu0
    %v3778 = vadd.f32 %v3601, %v3777
    %3779 = vdwg.mxu0
    %3780 = vmatprep.subr.bf16.mxu0 0
    %3781 = vmatpush1.bf16.msra.mxu0 %v3691
    %3782 = vmatprep.subr.bf16.mxu0 0
    %3783 = vmatpush1.bf16.msra.mxu0 %v3694
    %3784 = vmatprep.subr.bf16.mxu0 0
    %3785 = vmatpush1.bf16.msra.mxu0 %v3697
    %3786 = vmatprep.subr.bf16.mxu0 0
    %3787 = vmatpush1.bf16.msra.mxu0 %v3700
    %3788 = vmatprep.subr.bf16.mxu0 0
    %3789 = vmatpush1.bf16.msra.mxu0 %v3703
    %3790 = vmatprep.subr.bf16.mxu0 0
    %3791 = vmatpush1.bf16.msra.mxu0 %v3706
    %3792 = vmatprep.subr.bf16.mxu0 0
    %3793 = vmatpush1.bf16.msra.mxu0 %v3709
    %3794 = vmatprep.subr.bf16.mxu0 0
    %3795 = vmatpush1.bf16.msra.mxu0 %v3712
    %3796 = vmatprep.subr.bf16.mxu0 0
    %3797 = vmatpush1.bf16.msra.mxu0 0
    %3798 = vmatprep.subr.bf16.mxu0 0
    %3799 = vmatpush1.bf16.msra.mxu0 0
    %3800 = vmatprep.subr.bf16.mxu0 0
    %3801 = vmatpush1.bf16.msra.mxu0 0
    %3802 = vmatprep.subr.bf16.mxu0 0
    %3803 = vmatpush1.bf16.msra.mxu0 0
    %3804 = vmatprep.subr.bf16.mxu0 0
    %3805 = vmatpush1.bf16.msra.mxu0 0
    %3806 = vmatprep.subr.bf16.mxu0 0
    %3807 = vmatpush1.bf16.msra.mxu0 0
    %3808 = vmatprep.subr.bf16.mxu0 0
    %3809 = vmatpush1.bf16.msra.mxu0 0
    %3810 = vmatprep.subr.bf16.mxu0 0
    %3811 = vmatpush1.bf16.msra.mxu0 0
    %3812 = vmatprep.mubr.bf16.mxu0 0
    %3813 = vmatmul.mubr.bf16.gmra.mrb[0].mxu0 %v3590
    %v3814 = vpop.f32.mrb[0].mxu0
    %v3815 = vadd.f32 %v3605, %v3814
    %v3816 = vpop.f32.mrb[0].mxu0
    %v3817 = vpop.f32.mrb[0].mxu0
    %v3818 = vadd.f32 %v3605, %v3817
    %v3819 = vpop.f32.mrb[0].mxu0
    %3820 = vdwg.mxu0
    %v3821 = vmul.f32 %v3772, 0.17677669
    %v3822 = vpack.c.bf16 %v3821, %v3821
    %v3823 = vpack.c.bf16 %v3774, %v3774
    %v3824 = vpack.c.bf16 %v3815, %v3815
    %v3826 = vsel %vm886, %v3822, 0
    %v3829 = vsel %vm886, %v3823, 0
    %3831 = vmatprep.subr.bf16.mxu0 0
    %3832 = vmatpush1.bf16.xpose.msra.mxu0 %v3829
    %3833 = vmatprep.subr.bf16.mxu0 0
    %3834 = vmatpush1.bf16.xpose.msra.mxu0 0
    %3835 = vmatprep.subr.bf16.mxu0 0
    %3836 = vmatpush1.bf16.xpose.msra.mxu0 0
    %3837 = vmatprep.subr.bf16.mxu0 0
    %3838 = vmatpush1.bf16.xpose.msra.mxu0 0
    %3839 = vmatprep.subr.bf16.mxu0 0
    %3840 = vmatpush1.bf16.xpose.msra.mxu0 0
    %3841 = vmatprep.subr.bf16.mxu0 0
    %3842 = vmatpush1.bf16.xpose.msra.mxu0 0
    %3843 = vmatprep.subr.bf16.mxu0 0
    %3844 = vmatpush1.bf16.xpose.msra.mxu0 0
    %3845 = vmatprep.subr.bf16.mxu0 0
    %3846 = vmatpush1.bf16.xpose.msra.mxu0 0
    %3847 = vmatprep.subr.bf16.mxu0 0
    %3848 = vmatpush1.bf16.xpose.msra.mxu0 0
    %3849 = vmatprep.subr.bf16.mxu0 0
    %3850 = vmatpush1.bf16.xpose.msra.mxu0 0
    %3851 = vmatprep.subr.bf16.mxu0 0
    %3852 = vmatpush1.bf16.xpose.msra.mxu0 0
    %3853 = vmatprep.subr.bf16.mxu0 0
    %3854 = vmatpush1.bf16.xpose.msra.mxu0 0
    %3855 = vmatprep.subr.bf16.mxu0 0
    %3856 = vmatpush1.bf16.xpose.msra.mxu0 0
    %3857 = vmatprep.subr.bf16.mxu0 0
    %3858 = vmatpush1.bf16.xpose.msra.mxu0 0
    %3859 = vmatprep.subr.bf16.mxu0 0
    %3860 = vmatpush1.bf16.xpose.msra.mxu0 0
    %3861 = vmatprep.subr.bf16.mxu0 0
    %3862 = vmatpush1.bf16.xpose.msra.mxu0 0
    %3863 = vmatprep.mubr.bf16.mxu0 0
    %3864 = vmatmul.mubr.bf16.gmra.mrb[0].mxu0 %v3826
    %v3865 = vpop.f32.mrb[0].mxu0
    %v3866 = vadd.f32 %v619, %v3865
    %v3867 = vpop.f32.mrb[0].mxu0
    %v3868 = vpop.f32.mrb[0].mxu0
    %v3869 = vpop.f32.mrb[0].mxu0
    %3870 = vdwg.mxu0
    %v3871 = vsel %vm933, %v3866, -inf
    %3872 = vmax.xlane.f32.xlu0 %v3871
    %v3873 = vpop.xlane.xlu0 %3872
    %v3874 = vsub.f32 %v3866, %v3873
    %v3875 = vmul.f32 %v3874, 1.442695
    %v3876 = vpow.pop %v3875
    %v3877 = vsel %vm933, %v3876, 0.0
    %3878 = vadd.xlane.f32.xlu0 %v3877
    %v3879 = vpop.xlane.xlu0 %3878
    %v3880 = vrcp.pop %v3879
    %v3881 = vmul.f32 %v3876, %v3880
    %v3882 = vpack.c.bf16 %v3881, %v3881
    %v3884 = vsel %vm933, %v3882, 0
    %v3887 = vsel %vm949, %v3824, 0
    %3889 = vmatprep.subr.bf16.mxu0 0
    %3890 = vmatpush1.bf16.msra.mxu0 %v3887
    %3891 = vmatprep.subr.bf16.mxu0 0
    %3892 = vmatpush1.bf16.msra.mxu0 0
    %3893 = vmatprep.subr.bf16.mxu0 0
    %3894 = vmatpush1.bf16.msra.mxu0 0
    %3895 = vmatprep.subr.bf16.mxu0 0
    %3896 = vmatpush1.bf16.msra.mxu0 0
    %3897 = vmatprep.subr.bf16.mxu0 0
    %3898 = vmatpush1.bf16.msra.mxu0 0
    %3899 = vmatprep.subr.bf16.mxu0 0
    %3900 = vmatpush1.bf16.msra.mxu0 0
    %3901 = vmatprep.subr.bf16.mxu0 0
    %3902 = vmatpush1.bf16.msra.mxu0 0
    %3903 = vmatprep.subr.bf16.mxu0 0
    %3904 = vmatpush1.bf16.msra.mxu0 0
    %3905 = vmatprep.subr.bf16.mxu0 0
    %3906 = vmatpush1.bf16.msra.mxu0 0
    %3907 = vmatprep.subr.bf16.mxu0 0
    %3908 = vmatpush1.bf16.msra.mxu0 0
    %3909 = vmatprep.subr.bf16.mxu0 0
    %3910 = vmatpush1.bf16.msra.mxu0 0
    %3911 = vmatprep.subr.bf16.mxu0 0
    %3912 = vmatpush1.bf16.msra.mxu0 0
    %3913 = vmatprep.subr.bf16.mxu0 0
    %3914 = vmatpush1.bf16.msra.mxu0 0
    %3915 = vmatprep.subr.bf16.mxu0 0
    %3916 = vmatpush1.bf16.msra.mxu0 0
    %3917 = vmatprep.subr.bf16.mxu0 0
    %3918 = vmatpush1.bf16.msra.mxu0 0
    %3919 = vmatprep.subr.bf16.mxu0 0
    %3920 = vmatpush1.bf16.msra.mxu0 0
    %3921 = vmatprep.mubr.bf16.mxu0 0
    %3922 = vmatmul.mubr.bf16.gmra.mrb[0].mxu0 %v3884
    %v3923 = vpop.f32.mrb[0].mxu0
    %v3924 = vadd.f32 0.0, %v3923
    %v3925 = vpop.f32.mrb[0].mxu0
    %v3926 = vpop.f32.mrb[0].mxu0
    %v3927 = vpop.f32.mrb[0].mxu0
    %3928 = vdwg.mxu0
    %3930 = vrot.lane.b32.xlu0 %v3822, 96
    %v3931 = vpop.permute.xlu0 %3930
    %3933 = vrot.lane.b32.xlu0 %v3823, 96
    %v3934 = vpop.permute.xlu0 %3933
    %v3936 = vsel %vm886, %v3931, 0
    %v3939 = vsel %vm886, %v3934, 0
    %3941 = vmatprep.subr.bf16.mxu0 0
    %3942 = vmatpush1.bf16.xpose.msra.mxu0 %v3939
    %3943 = vmatprep.subr.bf16.mxu0 0
    %3944 = vmatpush1.bf16.xpose.msra.mxu0 0
    %3945 = vmatprep.subr.bf16.mxu0 0
    %3946 = vmatpush1.bf16.xpose.msra.mxu0 0
    %3947 = vmatprep.subr.bf16.mxu0 0
    %3948 = vmatpush1.bf16.xpose.msra.mxu0 0
    %3949 = vmatprep.subr.bf16.mxu0 0
    %3950 = vmatpush1.bf16.xpose.msra.mxu0 0
    %3951 = vmatprep.subr.bf16.mxu0 0
    %3952 = vmatpush1.bf16.xpose.msra.mxu0 0
    %3953 = vmatprep.subr.bf16.mxu0 0
    %3954 = vmatpush1.bf16.xpose.msra.mxu0 0
    %3955 = vmatprep.subr.bf16.mxu0 0
    %3956 = vmatpush1.bf16.xpose.msra.mxu0 0
    %3957 = vmatprep.subr.bf16.mxu0 0
    %3958 = vmatpush1.bf16.xpose.msra.mxu0 0
    %3959 = vmatprep.subr.bf16.mxu0 0
    %3960 = vmatpush1.bf16.xpose.msra.mxu0 0
    %3961 = vmatprep.subr.bf16.mxu0 0
    %3962 = vmatpush1.bf16.xpose.msra.mxu0 0
    %3963 = vmatprep.subr.bf16.mxu0 0
    %3964 = vmatpush1.bf16.xpose.msra.mxu0 0
    %3965 = vmatprep.subr.bf16.mxu0 0
    %3966 = vmatpush1.bf16.xpose.msra.mxu0 0
    %3967 = vmatprep.subr.bf16.mxu0 0
    %3968 = vmatpush1.bf16.xpose.msra.mxu0 0
    %3969 = vmatprep.subr.bf16.mxu0 0
    %3970 = vmatpush1.bf16.xpose.msra.mxu0 0
    %3971 = vmatprep.subr.bf16.mxu0 0
    %3972 = vmatpush1.bf16.xpose.msra.mxu0 0
    %3973 = vmatprep.mubr.bf16.mxu0 0
    %3974 = vmatmul.mubr.bf16.gmra.mrb[0].mxu0 %v3936
    %v3975 = vpop.f32.mrb[0].mxu0
    %v3976 = vadd.f32 %v619, %v3975
    %v3977 = vpop.f32.mrb[0].mxu0
    %v3978 = vpop.f32.mrb[0].mxu0
    %v3979 = vpop.f32.mrb[0].mxu0
    %3980 = vdwg.mxu0
    %v3981 = vsel %vm933, %v3976, -inf
    %3982 = vmax.xlane.f32.xlu0 %v3981
    %v3983 = vpop.xlane.xlu0 %3982
    %v3984 = vsub.f32 %v3976, %v3983
    %v3985 = vmul.f32 %v3984, 1.442695
    %v3986 = vpow.pop %v3985
    %v3987 = vsel %vm933, %v3986, 0.0
    %3988 = vadd.xlane.f32.xlu0 %v3987
    %v3989 = vpop.xlane.xlu0 %3988
    %v3990 = vrcp.pop %v3989
    %v3991 = vmul.f32 %v3986, %v3990
    %v3992 = vpack.c.bf16 %v3991, %v3991
    %3994 = vrot.lane.b32.xlu0 %v3824, 96
    %v3995 = vpop.permute.xlu0 %3994
    %v3997 = vsel %vm933, %v3992, 0
    %v4000 = vsel %vm949, %v3995, 0
    %4002 = vmatprep.subr.bf16.mxu0 0
    %4003 = vmatpush1.bf16.msra.mxu0 %v4000
    %4004 = vmatprep.subr.bf16.mxu0 0
    %4005 = vmatpush1.bf16.msra.mxu0 0
    %4006 = vmatprep.subr.bf16.mxu0 0
    %4007 = vmatpush1.bf16.msra.mxu0 0
    %4008 = vmatprep.subr.bf16.mxu0 0
    %4009 = vmatpush1.bf16.msra.mxu0 0
    %4010 = vmatprep.subr.bf16.mxu0 0
    %4011 = vmatpush1.bf16.msra.mxu0 0
    %4012 = vmatprep.subr.bf16.mxu0 0
    %4013 = vmatpush1.bf16.msra.mxu0 0
    %4014 = vmatprep.subr.bf16.mxu0 0
    %4015 = vmatpush1.bf16.msra.mxu0 0
    %4016 = vmatprep.subr.bf16.mxu0 0
    %4017 = vmatpush1.bf16.msra.mxu0 0
    %4018 = vmatprep.subr.bf16.mxu0 0
    %4019 = vmatpush1.bf16.msra.mxu0 0
    %4020 = vmatprep.subr.bf16.mxu0 0
    %4021 = vmatpush1.bf16.msra.mxu0 0
    %4022 = vmatprep.subr.bf16.mxu0 0
    %4023 = vmatpush1.bf16.msra.mxu0 0
    %4024 = vmatprep.subr.bf16.mxu0 0
    %4025 = vmatpush1.bf16.msra.mxu0 0
    %4026 = vmatprep.subr.bf16.mxu0 0
    %4027 = vmatpush1.bf16.msra.mxu0 0
    %4028 = vmatprep.subr.bf16.mxu0 0
    %4029 = vmatpush1.bf16.msra.mxu0 0
    %4030 = vmatprep.subr.bf16.mxu0 0
    %4031 = vmatpush1.bf16.msra.mxu0 0
    %4032 = vmatprep.subr.bf16.mxu0 0
    %4033 = vmatpush1.bf16.msra.mxu0 0
    %4034 = vmatprep.mubr.bf16.mxu0 0
    %4035 = vmatmul.mubr.bf16.gmra.mrb[0].mxu0 %v3997
    %v4036 = vpop.f32.mrb[0].mxu0
    %v4037 = vadd.f32 0.0, %v4036
    %v4038 = vpop.f32.mrb[0].mxu0
    %v4039 = vpop.f32.mrb[0].mxu0
    %v4040 = vpop.f32.mrb[0].mxu0
    %4041 = vdwg.mxu0
    %4042 = vrot.lane.b32.xlu0 %v3822, 64
    %v4043 = vpop.permute.xlu0 %4042
    %4044 = vrot.lane.b32.xlu0 %v3823, 64
    %v4045 = vpop.permute.xlu0 %4044
    %v4047 = vsel %vm886, %v4043, 0
    %v4050 = vsel %vm886, %v4045, 0
    %4052 = vmatprep.subr.bf16.mxu0 0
    %4053 = vmatpush1.bf16.xpose.msra.mxu0 %v4050
    %4054 = vmatprep.subr.bf16.mxu0 0
    %4055 = vmatpush1.bf16.xpose.msra.mxu0 0
    %4056 = vmatprep.subr.bf16.mxu0 0
    %4057 = vmatpush1.bf16.xpose.msra.mxu0 0
    %4058 = vmatprep.subr.bf16.mxu0 0
    %4059 = vmatpush1.bf16.xpose.msra.mxu0 0
    %4060 = vmatprep.subr.bf16.mxu0 0
    %4061 = vmatpush1.bf16.xpose.msra.mxu0 0
    %4062 = vmatprep.subr.bf16.mxu0 0
    %4063 = vmatpush1.bf16.xpose.msra.mxu0 0
    %4064 = vmatprep.subr.bf16.mxu0 0
    %4065 = vmatpush1.bf16.xpose.msra.mxu0 0
    %4066 = vmatprep.subr.bf16.mxu0 0
    %4067 = vmatpush1.bf16.xpose.msra.mxu0 0
    %4068 = vmatprep.subr.bf16.mxu0 0
    %4069 = vmatpush1.bf16.xpose.msra.mxu0 0
    %4070 = vmatprep.subr.bf16.mxu0 0
    %4071 = vmatpush1.bf16.xpose.msra.mxu0 0
    %4072 = vmatprep.subr.bf16.mxu0 0
    %4073 = vmatpush1.bf16.xpose.msra.mxu0 0
    %4074 = vmatprep.subr.bf16.mxu0 0
    %4075 = vmatpush1.bf16.xpose.msra.mxu0 0
    %4076 = vmatprep.subr.bf16.mxu0 0
    %4077 = vmatpush1.bf16.xpose.msra.mxu0 0
    %4078 = vmatprep.subr.bf16.mxu0 0
    %4079 = vmatpush1.bf16.xpose.msra.mxu0 0
    %4080 = vmatprep.subr.bf16.mxu0 0
    %4081 = vmatpush1.bf16.xpose.msra.mxu0 0
    %4082 = vmatprep.subr.bf16.mxu0 0
    %4083 = vmatpush1.bf16.xpose.msra.mxu0 0
    %4084 = vmatprep.mubr.bf16.mxu0 0
    %4085 = vmatmul.mubr.bf16.gmra.mrb[0].mxu0 %v4047
    %v4086 = vpop.f32.mrb[0].mxu0
    %v4087 = vadd.f32 %v619, %v4086
    %v4088 = vpop.f32.mrb[0].mxu0
    %v4089 = vpop.f32.mrb[0].mxu0
    %v4090 = vpop.f32.mrb[0].mxu0
    %4091 = vdwg.mxu0
    %v4092 = vsel %vm933, %v4087, -inf
    %4093 = vmax.xlane.f32.xlu0 %v4092
    %v4094 = vpop.xlane.xlu0 %4093
    %v4095 = vsub.f32 %v4087, %v4094
    %v4096 = vmul.f32 %v4095, 1.442695
    %v4097 = vpow.pop %v4096
    %v4098 = vsel %vm933, %v4097, 0.0
    %4099 = vadd.xlane.f32.xlu0 %v4098
    %v4100 = vpop.xlane.xlu0 %4099
    %v4101 = vrcp.pop %v4100
    %v4102 = vmul.f32 %v4097, %v4101
    %v4103 = vpack.c.bf16 %v4102, %v4102
    %4104 = vrot.lane.b32.xlu0 %v3824, 64
    %v4105 = vpop.permute.xlu0 %4104
    %v4107 = vsel %vm933, %v4103, 0
    %v4110 = vsel %vm949, %v4105, 0
    %4112 = vmatprep.subr.bf16.mxu0 0
    %4113 = vmatpush1.bf16.msra.mxu0 %v4110
    %4114 = vmatprep.subr.bf16.mxu0 0
    %4115 = vmatpush1.bf16.msra.mxu0 0
    %4116 = vmatprep.subr.bf16.mxu0 0
    %4117 = vmatpush1.bf16.msra.mxu0 0
    %4118 = vmatprep.subr.bf16.mxu0 0
    %4119 = vmatpush1.bf16.msra.mxu0 0
    %4120 = vmatprep.subr.bf16.mxu0 0
    %4121 = vmatpush1.bf16.msra.mxu0 0
    %4122 = vmatprep.subr.bf16.mxu0 0
    %4123 = vmatpush1.bf16.msra.mxu0 0
    %4124 = vmatprep.subr.bf16.mxu0 0
    %4125 = vmatpush1.bf16.msra.mxu0 0
    %4126 = vmatprep.subr.bf16.mxu0 0
    %4127 = vmatpush1.bf16.msra.mxu0 0
    %4128 = vmatprep.subr.bf16.mxu0 0
    %4129 = vmatpush1.bf16.msra.mxu0 0
    %4130 = vmatprep.subr.bf16.mxu0 0
    %4131 = vmatpush1.bf16.msra.mxu0 0
    %4132 = vmatprep.subr.bf16.mxu0 0
    %4133 = vmatpush1.bf16.msra.mxu0 0
    %4134 = vmatprep.subr.bf16.mxu0 0
    %4135 = vmatpush1.bf16.msra.mxu0 0
    %4136 = vmatprep.subr.bf16.mxu0 0
    %4137 = vmatpush1.bf16.msra.mxu0 0
    %4138 = vmatprep.subr.bf16.mxu0 0
    %4139 = vmatpush1.bf16.msra.mxu0 0
    %4140 = vmatprep.subr.bf16.mxu0 0
    %4141 = vmatpush1.bf16.msra.mxu0 0
    %4142 = vmatprep.subr.bf16.mxu0 0
    %4143 = vmatpush1.bf16.msra.mxu0 0
    %4144 = vmatprep.mubr.bf16.mxu0 0
    %4145 = vmatmul.mubr.bf16.gmra.mrb[0].mxu0 %v4107
    %v4146 = vpop.f32.mrb[0].mxu0
    %v4147 = vadd.f32 0.0, %v4146
    %v4148 = vpop.f32.mrb[0].mxu0
    %v4149 = vpop.f32.mrb[0].mxu0
    %v4150 = vpop.f32.mrb[0].mxu0
    %4151 = vdwg.mxu0
    %4152 = vrot.lane.b32.xlu0 %v3822, 32
    %v4153 = vpop.permute.xlu0 %4152
    %4154 = vrot.lane.b32.xlu0 %v3823, 32
    %v4155 = vpop.permute.xlu0 %4154
    %v4157 = vsel %vm886, %v4153, 0
    %v4160 = vsel %vm886, %v4155, 0
    %4162 = vmatprep.subr.bf16.mxu0 0
    %4163 = vmatpush1.bf16.xpose.msra.mxu0 %v4160
    %4164 = vmatprep.subr.bf16.mxu0 0
    %4165 = vmatpush1.bf16.xpose.msra.mxu0 0
    %4166 = vmatprep.subr.bf16.mxu0 0
    %4167 = vmatpush1.bf16.xpose.msra.mxu0 0
    %4168 = vmatprep.subr.bf16.mxu0 0
    %4169 = vmatpush1.bf16.xpose.msra.mxu0 0
    %4170 = vmatprep.subr.bf16.mxu0 0
    %4171 = vmatpush1.bf16.xpose.msra.mxu0 0
    %4172 = vmatprep.subr.bf16.mxu0 0
    %4173 = vmatpush1.bf16.xpose.msra.mxu0 0
    %4174 = vmatprep.subr.bf16.mxu0 0
    %4175 = vmatpush1.bf16.xpose.msra.mxu0 0
    %4176 = vmatprep.subr.bf16.mxu0 0
    %4177 = vmatpush1.bf16.xpose.msra.mxu0 0
    %4178 = vmatprep.subr.bf16.mxu0 0
    %4179 = vmatpush1.bf16.xpose.msra.mxu0 0
    %4180 = vmatprep.subr.bf16.mxu0 0
    %4181 = vmatpush1.bf16.xpose.msra.mxu0 0
    %4182 = vmatprep.subr.bf16.mxu0 0
    %4183 = vmatpush1.bf16.xpose.msra.mxu0 0
    %4184 = vmatprep.subr.bf16.mxu0 0
    %4185 = vmatpush1.bf16.xpose.msra.mxu0 0
    %4186 = vmatprep.subr.bf16.mxu0 0
    %4187 = vmatpush1.bf16.xpose.msra.mxu0 0
    %4188 = vmatprep.subr.bf16.mxu0 0
    %4189 = vmatpush1.bf16.xpose.msra.mxu0 0
    %4190 = vmatprep.subr.bf16.mxu0 0
    %4191 = vmatpush1.bf16.xpose.msra.mxu0 0
    %4192 = vmatprep.subr.bf16.mxu0 0
    %4193 = vmatpush1.bf16.xpose.msra.mxu0 0
    %4194 = vmatprep.mubr.bf16.mxu0 0
    %4195 = vmatmul.mubr.bf16.gmra.mrb[0].mxu0 %v4157
    %v4196 = vpop.f32.mrb[0].mxu0
    %v4197 = vadd.f32 %v619, %v4196
    %v4198 = vpop.f32.mrb[0].mxu0
    %v4199 = vpop.f32.mrb[0].mxu0
    %v4200 = vpop.f32.mrb[0].mxu0
    %4201 = vdwg.mxu0
    %v4202 = vsel %vm933, %v4197, -inf
    %4203 = vmax.xlane.f32.xlu0 %v4202
    %v4204 = vpop.xlane.xlu0 %4203
    %v4205 = vsub.f32 %v4197, %v4204
    %v4206 = vmul.f32 %v4205, 1.442695
    %v4207 = vpow.pop %v4206
    %v4208 = vsel %vm933, %v4207, 0.0
    %4209 = vadd.xlane.f32.xlu0 %v4208
    %v4210 = vpop.xlane.xlu0 %4209
    %v4211 = vrcp.pop %v4210
    %v4212 = vmul.f32 %v4207, %v4211
    %v4213 = vpack.c.bf16 %v4212, %v4212
    %4214 = vrot.lane.b32.xlu0 %v3824, 32
    %v4215 = vpop.permute.xlu0 %4214
    %v4217 = vsel %vm933, %v4213, 0
    %v4220 = vsel %vm949, %v4215, 0
    %4222 = vmatprep.subr.bf16.mxu0 0
    %4223 = vmatpush1.bf16.msra.mxu0 %v4220
    %4224 = vmatprep.subr.bf16.mxu0 0
    %4225 = vmatpush1.bf16.msra.mxu0 0
    %4226 = vmatprep.subr.bf16.mxu0 0
    %4227 = vmatpush1.bf16.msra.mxu0 0
    %4228 = vmatprep.subr.bf16.mxu0 0
    %4229 = vmatpush1.bf16.msra.mxu0 0
    %4230 = vmatprep.subr.bf16.mxu0 0
    %4231 = vmatpush1.bf16.msra.mxu0 0
    %4232 = vmatprep.subr.bf16.mxu0 0
    %4233 = vmatpush1.bf16.msra.mxu0 0
    %4234 = vmatprep.subr.bf16.mxu0 0
    %4235 = vmatpush1.bf16.msra.mxu0 0
    %4236 = vmatprep.subr.bf16.mxu0 0
    %4237 = vmatpush1.bf16.msra.mxu0 0
    %4238 = vmatprep.subr.bf16.mxu0 0
    %4239 = vmatpush1.bf16.msra.mxu0 0
    %4240 = vmatprep.subr.bf16.mxu0 0
    %4241 = vmatpush1.bf16.msra.mxu0 0
    %4242 = vmatprep.subr.bf16.mxu0 0
    %4243 = vmatpush1.bf16.msra.mxu0 0
    %4244 = vmatprep.subr.bf16.mxu0 0
    %4245 = vmatpush1.bf16.msra.mxu0 0
    %4246 = vmatprep.subr.bf16.mxu0 0
    %4247 = vmatpush1.bf16.msra.mxu0 0
    %4248 = vmatprep.subr.bf16.mxu0 0
    %4249 = vmatpush1.bf16.msra.mxu0 0
    %4250 = vmatprep.subr.bf16.mxu0 0
    %4251 = vmatpush1.bf16.msra.mxu0 0
    %4252 = vmatprep.subr.bf16.mxu0 0
    %4253 = vmatpush1.bf16.msra.mxu0 0
    %4254 = vmatprep.mubr.bf16.mxu0 0
    %4255 = vmatmul.mubr.bf16.gmra.mrb[0].mxu0 %v4217
    %v4256 = vpop.f32.mrb[0].mxu0
    %v4257 = vadd.f32 0.0, %v4256
    %v4258 = vpop.f32.mrb[0].mxu0
    %v4259 = vpop.f32.mrb[0].mxu0
    %v4260 = vpop.f32.mrb[0].mxu0
    %4261 = vdwg.mxu0
    %4263 = vrot.lane.b32.xlu0 %v4037, 32
    %v4264 = vpop.permute.xlu0 %4263
    %4267 = vrot.lane.b32.xlu0 %v4147, 64
    %v4268 = vpop.permute.xlu0 %4267
    %4271 = vrot.lane.b32.xlu0 %v4257, 96
    %v4272 = vpop.permute.xlu0 %4271
    %v4274 = vsel %vm886, %v3924, %v4264
    %v4275 = vsel %vm1339, %v4274, %v4268
    %v4276 = vsel %vm1341, %v4275, %v4272
    %v4277 = vmul.f32 %v3776, 0.17677669
    %v4278 = vpack.c.bf16 %v4277, %v4277
    %v4279 = vpack.c.bf16 %v3778, %v3778
    %v4280 = vpack.c.bf16 %v3818, %v3818
    %v4282 = vsel %vm886, %v4278, 0
    %v4285 = vsel %vm886, %v4279, 0
    %4287 = vmatprep.subr.bf16.mxu0 0
    %4288 = vmatpush1.bf16.xpose.msra.mxu0 %v4285
    %4289 = vmatprep.subr.bf16.mxu0 0
    %4290 = vmatpush1.bf16.xpose.msra.mxu0 0
    %4291 = vmatprep.subr.bf16.mxu0 0
    %4292 = vmatpush1.bf16.xpose.msra.mxu0 0
    %4293 = vmatprep.subr.bf16.mxu0 0
    %4294 = vmatpush1.bf16.xpose.msra.mxu0 0
    %4295 = vmatprep.subr.bf16.mxu0 0
    %4296 = vmatpush1.bf16.xpose.msra.mxu0 0
    %4297 = vmatprep.subr.bf16.mxu0 0
    %4298 = vmatpush1.bf16.xpose.msra.mxu0 0
    %4299 = vmatprep.subr.bf16.mxu0 0
    %4300 = vmatpush1.bf16.xpose.msra.mxu0 0
    %4301 = vmatprep.subr.bf16.mxu0 0
    %4302 = vmatpush1.bf16.xpose.msra.mxu0 0
    %4303 = vmatprep.subr.bf16.mxu0 0
    %4304 = vmatpush1.bf16.xpose.msra.mxu0 0
    %4305 = vmatprep.subr.bf16.mxu0 0
    %4306 = vmatpush1.bf16.xpose.msra.mxu0 0
    %4307 = vmatprep.subr.bf16.mxu0 0
    %4308 = vmatpush1.bf16.xpose.msra.mxu0 0
    %4309 = vmatprep.subr.bf16.mxu0 0
    %4310 = vmatpush1.bf16.xpose.msra.mxu0 0
    %4311 = vmatprep.subr.bf16.mxu0 0
    %4312 = vmatpush1.bf16.xpose.msra.mxu0 0
    %4313 = vmatprep.subr.bf16.mxu0 0
    %4314 = vmatpush1.bf16.xpose.msra.mxu0 0
    %4315 = vmatprep.subr.bf16.mxu0 0
    %4316 = vmatpush1.bf16.xpose.msra.mxu0 0
    %4317 = vmatprep.subr.bf16.mxu0 0
    %4318 = vmatpush1.bf16.xpose.msra.mxu0 0
    %4319 = vmatprep.mubr.bf16.mxu0 0
    %4320 = vmatmul.mubr.bf16.gmra.mrb[0].mxu0 %v4282
    %v4321 = vpop.f32.mrb[0].mxu0
    %v4322 = vadd.f32 %v619, %v4321
    %v4323 = vpop.f32.mrb[0].mxu0
    %v4324 = vpop.f32.mrb[0].mxu0
    %v4325 = vpop.f32.mrb[0].mxu0
    %4326 = vdwg.mxu0
    %v4327 = vsel %vm933, %v4322, -inf
    %4328 = vmax.xlane.f32.xlu0 %v4327
    %v4329 = vpop.xlane.xlu0 %4328
    %v4330 = vsub.f32 %v4322, %v4329
    %v4331 = vmul.f32 %v4330, 1.442695
    %v4332 = vpow.pop %v4331
    %v4333 = vsel %vm933, %v4332, 0.0
    %4334 = vadd.xlane.f32.xlu0 %v4333
    %v4335 = vpop.xlane.xlu0 %4334
    %v4336 = vrcp.pop %v4335
    %v4337 = vmul.f32 %v4332, %v4336
    %v4338 = vpack.c.bf16 %v4337, %v4337
    %v4340 = vsel %vm933, %v4338, 0
    %v4343 = vsel %vm949, %v4280, 0
    %4345 = vmatprep.subr.bf16.mxu0 0
    %4346 = vmatpush1.bf16.msra.mxu0 %v4343
    %4347 = vmatprep.subr.bf16.mxu0 0
    %4348 = vmatpush1.bf16.msra.mxu0 0
    %4349 = vmatprep.subr.bf16.mxu0 0
    %4350 = vmatpush1.bf16.msra.mxu0 0
    %4351 = vmatprep.subr.bf16.mxu0 0
    %4352 = vmatpush1.bf16.msra.mxu0 0
    %4353 = vmatprep.subr.bf16.mxu0 0
    %4354 = vmatpush1.bf16.msra.mxu0 0
    %4355 = vmatprep.subr.bf16.mxu0 0
    %4356 = vmatpush1.bf16.msra.mxu0 0
    %4357 = vmatprep.subr.bf16.mxu0 0
    %4358 = vmatpush1.bf16.msra.mxu0 0
    %4359 = vmatprep.subr.bf16.mxu0 0
    %4360 = vmatpush1.bf16.msra.mxu0 0
    %4361 = vmatprep.subr.bf16.mxu0 0
    %4362 = vmatpush1.bf16.msra.mxu0 0
    %4363 = vmatprep.subr.bf16.mxu0 0
    %4364 = vmatpush1.bf16.msra.mxu0 0
    %4365 = vmatprep.subr.bf16.mxu0 0
    %4366 = vmatpush1.bf16.msra.mxu0 0
    %4367 = vmatprep.subr.bf16.mxu0 0
    %4368 = vmatpush1.bf16.msra.mxu0 0
    %4369 = vmatprep.subr.bf16.mxu0 0
    %4370 = vmatpush1.bf16.msra.mxu0 0
    %4371 = vmatprep.subr.bf16.mxu0 0
    %4372 = vmatpush1.bf16.msra.mxu0 0
    %4373 = vmatprep.subr.bf16.mxu0 0
    %4374 = vmatpush1.bf16.msra.mxu0 0
    %4375 = vmatprep.subr.bf16.mxu0 0
    %4376 = vmatpush1.bf16.msra.mxu0 0
    %4377 = vmatprep.mubr.bf16.mxu0 0
    %4378 = vmatmul.mubr.bf16.gmra.mrb[0].mxu0 %v4340
    %v4379 = vpop.f32.mrb[0].mxu0
    %v4380 = vadd.f32 0.0, %v4379
    %v4381 = vpop.f32.mrb[0].mxu0
    %v4382 = vpop.f32.mrb[0].mxu0
    %v4383 = vpop.f32.mrb[0].mxu0
    %4384 = vdwg.mxu0
    %4386 = vrot.lane.b32.xlu0 %v4278, 96
    %v4387 = vpop.permute.xlu0 %4386
    %4389 = vrot.lane.b32.xlu0 %v4279, 96
    %v4390 = vpop.permute.xlu0 %4389
    %v4392 = vsel %vm886, %v4387, 0
    %v4395 = vsel %vm886, %v4390, 0
    %4397 = vmatprep.subr.bf16.mxu0 0
    %4398 = vmatpush1.bf16.xpose.msra.mxu0 %v4395
    %4399 = vmatprep.subr.bf16.mxu0 0
    %4400 = vmatpush1.bf16.xpose.msra.mxu0 0
    %4401 = vmatprep.subr.bf16.mxu0 0
    %4402 = vmatpush1.bf16.xpose.msra.mxu0 0
    %4403 = vmatprep.subr.bf16.mxu0 0
    %4404 = vmatpush1.bf16.xpose.msra.mxu0 0
    %4405 = vmatprep.subr.bf16.mxu0 0
    %4406 = vmatpush1.bf16.xpose.msra.mxu0 0
    %4407 = vmatprep.subr.bf16.mxu0 0
    %4408 = vmatpush1.bf16.xpose.msra.mxu0 0
    %4409 = vmatprep.subr.bf16.mxu0 0
    %4410 = vmatpush1.bf16.xpose.msra.mxu0 0
    %4411 = vmatprep.subr.bf16.mxu0 0
    %4412 = vmatpush1.bf16.xpose.msra.mxu0 0
    %4413 = vmatprep.subr.bf16.mxu0 0
    %4414 = vmatpush1.bf16.xpose.msra.mxu0 0
    %4415 = vmatprep.subr.bf16.mxu0 0
    %4416 = vmatpush1.bf16.xpose.msra.mxu0 0
    %4417 = vmatprep.subr.bf16.mxu0 0
    %4418 = vmatpush1.bf16.xpose.msra.mxu0 0
    %4419 = vmatprep.subr.bf16.mxu0 0
    %4420 = vmatpush1.bf16.xpose.msra.mxu0 0
    %4421 = vmatprep.subr.bf16.mxu0 0
    %4422 = vmatpush1.bf16.xpose.msra.mxu0 0
    %4423 = vmatprep.subr.bf16.mxu0 0
    %4424 = vmatpush1.bf16.xpose.msra.mxu0 0
    %4425 = vmatprep.subr.bf16.mxu0 0
    %4426 = vmatpush1.bf16.xpose.msra.mxu0 0
    %4427 = vmatprep.subr.bf16.mxu0 0
    %4428 = vmatpush1.bf16.xpose.msra.mxu0 0
    %4429 = vmatprep.mubr.bf16.mxu0 0
    %4430 = vmatmul.mubr.bf16.gmra.mrb[0].mxu0 %v4392
    %v4431 = vpop.f32.mrb[0].mxu0
    %v4432 = vadd.f32 %v619, %v4431
    %v4433 = vpop.f32.mrb[0].mxu0
    %v4434 = vpop.f32.mrb[0].mxu0
    %v4435 = vpop.f32.mrb[0].mxu0
    %4436 = vdwg.mxu0
    %v4437 = vsel %vm933, %v4432, -inf
    %4438 = vmax.xlane.f32.xlu0 %v4437
    %v4439 = vpop.xlane.xlu0 %4438
    %v4440 = vsub.f32 %v4432, %v4439
    %v4441 = vmul.f32 %v4440, 1.442695
    %v4442 = vpow.pop %v4441
    %v4443 = vsel %vm933, %v4442, 0.0
    %4444 = vadd.xlane.f32.xlu0 %v4443
    %v4445 = vpop.xlane.xlu0 %4444
    %v4446 = vrcp.pop %v4445
    %v4447 = vmul.f32 %v4442, %v4446
    %v4448 = vpack.c.bf16 %v4447, %v4447
    %4450 = vrot.lane.b32.xlu0 %v4280, 96
    %v4451 = vpop.permute.xlu0 %4450
    %v4453 = vsel %vm933, %v4448, 0
    %v4456 = vsel %vm949, %v4451, 0
    %4458 = vmatprep.subr.bf16.mxu0 0
    %4459 = vmatpush1.bf16.msra.mxu0 %v4456
    %4460 = vmatprep.subr.bf16.mxu0 0
    %4461 = vmatpush1.bf16.msra.mxu0 0
    %4462 = vmatprep.subr.bf16.mxu0 0
    %4463 = vmatpush1.bf16.msra.mxu0 0
    %4464 = vmatprep.subr.bf16.mxu0 0
    %4465 = vmatpush1.bf16.msra.mxu0 0
    %4466 = vmatprep.subr.bf16.mxu0 0
    %4467 = vmatpush1.bf16.msra.mxu0 0
    %4468 = vmatprep.subr.bf16.mxu0 0
    %4469 = vmatpush1.bf16.msra.mxu0 0
    %4470 = vmatprep.subr.bf16.mxu0 0
    %4471 = vmatpush1.bf16.msra.mxu0 0
    %4472 = vmatprep.subr.bf16.mxu0 0
    %4473 = vmatpush1.bf16.msra.mxu0 0
    %4474 = vmatprep.subr.bf16.mxu0 0
    %4475 = vmatpush1.bf16.msra.mxu0 0
    %4476 = vmatprep.subr.bf16.mxu0 0
    %4477 = vmatpush1.bf16.msra.mxu0 0
    %4478 = vmatprep.subr.bf16.mxu0 0
    %4479 = vmatpush1.bf16.msra.mxu0 0
    %4480 = vmatprep.subr.bf16.mxu0 0
    %4481 = vmatpush1.bf16.msra.mxu0 0
    %4482 = vmatprep.subr.bf16.mxu0 0
    %4483 = vmatpush1.bf16.msra.mxu0 0
    %4484 = vmatprep.subr.bf16.mxu0 0
    %4485 = vmatpush1.bf16.msra.mxu0 0
    %4486 = vmatprep.subr.bf16.mxu0 0
    %4487 = vmatpush1.bf16.msra.mxu0 0
    %4488 = vmatprep.subr.bf16.mxu0 0
    %4489 = vmatpush1.bf16.msra.mxu0 0
    %4490 = vmatprep.mubr.bf16.mxu0 0
    %4491 = vmatmul.mubr.bf16.gmra.mrb[0].mxu0 %v4453
    %v4492 = vpop.f32.mrb[0].mxu0
    %v4493 = vadd.f32 0.0, %v4492
    %v4494 = vpop.f32.mrb[0].mxu0
    %v4495 = vpop.f32.mrb[0].mxu0
    %v4496 = vpop.f32.mrb[0].mxu0
    %4497 = vdwg.mxu0
    %4498 = vrot.lane.b32.xlu0 %v4278, 64
    %v4499 = vpop.permute.xlu0 %4498
    %4500 = vrot.lane.b32.xlu0 %v4279, 64
    %v4501 = vpop.permute.xlu0 %4500
    %v4503 = vsel %vm886, %v4499, 0
    %v4506 = vsel %vm886, %v4501, 0
    %4508 = vmatprep.subr.bf16.mxu0 0
    %4509 = vmatpush1.bf16.xpose.msra.mxu0 %v4506
    %4510 = vmatprep.subr.bf16.mxu0 0
    %4511 = vmatpush1.bf16.xpose.msra.mxu0 0
    %4512 = vmatprep.subr.bf16.mxu0 0
    %4513 = vmatpush1.bf16.xpose.msra.mxu0 0
    %4514 = vmatprep.subr.bf16.mxu0 0
    %4515 = vmatpush1.bf16.xpose.msra.mxu0 0
    %4516 = vmatprep.subr.bf16.mxu0 0
    %4517 = vmatpush1.bf16.xpose.msra.mxu0 0
    %4518 = vmatprep.subr.bf16.mxu0 0
    %4519 = vmatpush1.bf16.xpose.msra.mxu0 0
    %4520 = vmatprep.subr.bf16.mxu0 0
    %4521 = vmatpush1.bf16.xpose.msra.mxu0 0
    %4522 = vmatprep.subr.bf16.mxu0 0
    %4523 = vmatpush1.bf16.xpose.msra.mxu0 0
    %4524 = vmatprep.subr.bf16.mxu0 0
    %4525 = vmatpush1.bf16.xpose.msra.mxu0 0
    %4526 = vmatprep.subr.bf16.mxu0 0
    %4527 = vmatpush1.bf16.xpose.msra.mxu0 0
    %4528 = vmatprep.subr.bf16.mxu0 0
    %4529 = vmatpush1.bf16.xpose.msra.mxu0 0
    %4530 = vmatprep.subr.bf16.mxu0 0
    %4531 = vmatpush1.bf16.xpose.msra.mxu0 0
    %4532 = vmatprep.subr.bf16.mxu0 0
    %4533 = vmatpush1.bf16.xpose.msra.mxu0 0
    %4534 = vmatprep.subr.bf16.mxu0 0
    %4535 = vmatpush1.bf16.xpose.msra.mxu0 0
    %4536 = vmatprep.subr.bf16.mxu0 0
    %4537 = vmatpush1.bf16.xpose.msra.mxu0 0
    %4538 = vmatprep.subr.bf16.mxu0 0
    %4539 = vmatpush1.bf16.xpose.msra.mxu0 0
    %4540 = vmatprep.mubr.bf16.mxu0 0
    %4541 = vmatmul.mubr.bf16.gmra.mrb[0].mxu0 %v4503
    %v4542 = vpop.f32.mrb[0].mxu0
    %v4543 = vadd.f32 %v619, %v4542
    %v4544 = vpop.f32.mrb[0].mxu0
    %v4545 = vpop.f32.mrb[0].mxu0
    %v4546 = vpop.f32.mrb[0].mxu0
    %4547 = vdwg.mxu0
    %v4548 = vsel %vm933, %v4543, -inf
    %4549 = vmax.xlane.f32.xlu0 %v4548
    %v4550 = vpop.xlane.xlu0 %4549
    %v4551 = vsub.f32 %v4543, %v4550
    %v4552 = vmul.f32 %v4551, 1.442695
    %v4553 = vpow.pop %v4552
    %v4554 = vsel %vm933, %v4553, 0.0
    %4555 = vadd.xlane.f32.xlu0 %v4554
    %v4556 = vpop.xlane.xlu0 %4555
    %v4557 = vrcp.pop %v4556
    %v4558 = vmul.f32 %v4553, %v4557
    %v4559 = vpack.c.bf16 %v4558, %v4558
    %4560 = vrot.lane.b32.xlu0 %v4280, 64
    %v4561 = vpop.permute.xlu0 %4560
    %v4563 = vsel %vm933, %v4559, 0
    %v4566 = vsel %vm949, %v4561, 0
    %4568 = vmatprep.subr.bf16.mxu0 0
    %4569 = vmatpush1.bf16.msra.mxu0 %v4566
    %4570 = vmatprep.subr.bf16.mxu0 0
    %4571 = vmatpush1.bf16.msra.mxu0 0
    %4572 = vmatprep.subr.bf16.mxu0 0
    %4573 = vmatpush1.bf16.msra.mxu0 0
    %4574 = vmatprep.subr.bf16.mxu0 0
    %4575 = vmatpush1.bf16.msra.mxu0 0
    %4576 = vmatprep.subr.bf16.mxu0 0
    %4577 = vmatpush1.bf16.msra.mxu0 0
    %4578 = vmatprep.subr.bf16.mxu0 0
    %4579 = vmatpush1.bf16.msra.mxu0 0
    %4580 = vmatprep.subr.bf16.mxu0 0
    %4581 = vmatpush1.bf16.msra.mxu0 0
    %4582 = vmatprep.subr.bf16.mxu0 0
    %4583 = vmatpush1.bf16.msra.mxu0 0
    %4584 = vmatprep.subr.bf16.mxu0 0
    %4585 = vmatpush1.bf16.msra.mxu0 0
    %4586 = vmatprep.subr.bf16.mxu0 0
    %4587 = vmatpush1.bf16.msra.mxu0 0
    %4588 = vmatprep.subr.bf16.mxu0 0
    %4589 = vmatpush1.bf16.msra.mxu0 0
    %4590 = vmatprep.subr.bf16.mxu0 0
    %4591 = vmatpush1.bf16.msra.mxu0 0
    %4592 = vmatprep.subr.bf16.mxu0 0
    %4593 = vmatpush1.bf16.msra.mxu0 0
    %4594 = vmatprep.subr.bf16.mxu0 0
    %4595 = vmatpush1.bf16.msra.mxu0 0
    %4596 = vmatprep.subr.bf16.mxu0 0
    %4597 = vmatpush1.bf16.msra.mxu0 0
    %4598 = vmatprep.subr.bf16.mxu0 0
    %4599 = vmatpush1.bf16.msra.mxu0 0
    %4600 = vmatprep.mubr.bf16.mxu0 0
    %4601 = vmatmul.mubr.bf16.gmra.mrb[0].mxu0 %v4563
    %v4602 = vpop.f32.mrb[0].mxu0
    %v4603 = vadd.f32 0.0, %v4602
    %v4604 = vpop.f32.mrb[0].mxu0
    %v4605 = vpop.f32.mrb[0].mxu0
    %v4606 = vpop.f32.mrb[0].mxu0
    %4607 = vdwg.mxu0
    %4608 = vrot.lane.b32.xlu0 %v4278, 32
    %v4609 = vpop.permute.xlu0 %4608
    %4610 = vrot.lane.b32.xlu0 %v4279, 32
    %v4611 = vpop.permute.xlu0 %4610
    %v4613 = vsel %vm886, %v4609, 0
    %v4616 = vsel %vm886, %v4611, 0
    %4618 = vmatprep.subr.bf16.mxu0 0
    %4619 = vmatpush1.bf16.xpose.msra.mxu0 %v4616
    %4620 = vmatprep.subr.bf16.mxu0 0
    %4621 = vmatpush1.bf16.xpose.msra.mxu0 0
    %4622 = vmatprep.subr.bf16.mxu0 0
    %4623 = vmatpush1.bf16.xpose.msra.mxu0 0
    %4624 = vmatprep.subr.bf16.mxu0 0
    %4625 = vmatpush1.bf16.xpose.msra.mxu0 0
    %4626 = vmatprep.subr.bf16.mxu0 0
    %4627 = vmatpush1.bf16.xpose.msra.mxu0 0
    %4628 = vmatprep.subr.bf16.mxu0 0
    %4629 = vmatpush1.bf16.xpose.msra.mxu0 0
    %4630 = vmatprep.subr.bf16.mxu0 0
    %4631 = vmatpush1.bf16.xpose.msra.mxu0 0
    %4632 = vmatprep.subr.bf16.mxu0 0
    %4633 = vmatpush1.bf16.xpose.msra.mxu0 0
    %4634 = vmatprep.subr.bf16.mxu0 0
    %4635 = vmatpush1.bf16.xpose.msra.mxu0 0
    %4636 = vmatprep.subr.bf16.mxu0 0
    %4637 = vmatpush1.bf16.xpose.msra.mxu0 0
    %4638 = vmatprep.subr.bf16.mxu0 0
    %4639 = vmatpush1.bf16.xpose.msra.mxu0 0
    %4640 = vmatprep.subr.bf16.mxu0 0
    %4641 = vmatpush1.bf16.xpose.msra.mxu0 0
    %4642 = vmatprep.subr.bf16.mxu0 0
    %4643 = vmatpush1.bf16.xpose.msra.mxu0 0
    %4644 = vmatprep.subr.bf16.mxu0 0
    %4645 = vmatpush1.bf16.xpose.msra.mxu0 0
    %4646 = vmatprep.subr.bf16.mxu0 0
    %4647 = vmatpush1.bf16.xpose.msra.mxu0 0
    %4648 = vmatprep.subr.bf16.mxu0 0
    %4649 = vmatpush1.bf16.xpose.msra.mxu0 0
    %4650 = vmatprep.mubr.bf16.mxu0 0
    %4651 = vmatmul.mubr.bf16.gmra.mrb[0].mxu0 %v4613
    %v4652 = vpop.f32.mrb[0].mxu0
    %v4653 = vadd.f32 %v619, %v4652
    %v4654 = vpop.f32.mrb[0].mxu0
    %v4655 = vpop.f32.mrb[0].mxu0
    %v4656 = vpop.f32.mrb[0].mxu0
    %4657 = vdwg.mxu0
    %v4658 = vsel %vm933, %v4653, -inf
    %4659 = vmax.xlane.f32.xlu0 %v4658
    %v4660 = vpop.xlane.xlu0 %4659
    %v4661 = vsub.f32 %v4653, %v4660
    %v4662 = vmul.f32 %v4661, 1.442695
    %v4663 = vpow.pop %v4662
    %v4664 = vsel %vm933, %v4663, 0.0
    %4665 = vadd.xlane.f32.xlu0 %v4664
    %v4666 = vpop.xlane.xlu0 %4665
    %v4667 = vrcp.pop %v4666
    %v4668 = vmul.f32 %v4663, %v4667
    %v4669 = vpack.c.bf16 %v4668, %v4668
    %4670 = vrot.lane.b32.xlu0 %v4280, 32
    %v4671 = vpop.permute.xlu0 %4670
    %v4673 = vsel %vm933, %v4669, 0
    %v4676 = vsel %vm949, %v4671, 0
    %4678 = vmatprep.subr.bf16.mxu0 0
    %4679 = vmatpush1.bf16.msra.mxu0 %v4676
    %4680 = vmatprep.subr.bf16.mxu0 0
    %4681 = vmatpush1.bf16.msra.mxu0 0
    %4682 = vmatprep.subr.bf16.mxu0 0
    %4683 = vmatpush1.bf16.msra.mxu0 0
    %4684 = vmatprep.subr.bf16.mxu0 0
    %4685 = vmatpush1.bf16.msra.mxu0 0
    %4686 = vmatprep.subr.bf16.mxu0 0
    %4687 = vmatpush1.bf16.msra.mxu0 0
    %4688 = vmatprep.subr.bf16.mxu0 0
    %4689 = vmatpush1.bf16.msra.mxu0 0
    %4690 = vmatprep.subr.bf16.mxu0 0
    %4691 = vmatpush1.bf16.msra.mxu0 0
    %4692 = vmatprep.subr.bf16.mxu0 0
    %4693 = vmatpush1.bf16.msra.mxu0 0
    %4694 = vmatprep.subr.bf16.mxu0 0
    %4695 = vmatpush1.bf16.msra.mxu0 0
    %4696 = vmatprep.subr.bf16.mxu0 0
    %4697 = vmatpush1.bf16.msra.mxu0 0
    %4698 = vmatprep.subr.bf16.mxu0 0
    %4699 = vmatpush1.bf16.msra.mxu0 0
    %4700 = vmatprep.subr.bf16.mxu0 0
    %4701 = vmatpush1.bf16.msra.mxu0 0
    %4702 = vmatprep.subr.bf16.mxu0 0
    %4703 = vmatpush1.bf16.msra.mxu0 0
    %4704 = vmatprep.subr.bf16.mxu0 0
    %4705 = vmatpush1.bf16.msra.mxu0 0
    %4706 = vmatprep.subr.bf16.mxu0 0
    %4707 = vmatpush1.bf16.msra.mxu0 0
    %4708 = vmatprep.subr.bf16.mxu0 0
    %4709 = vmatpush1.bf16.msra.mxu0 0
    %4710 = vmatprep.mubr.bf16.mxu0 0
    %4711 = vmatmul.mubr.bf16.gmra.mrb[0].mxu0 %v4673
    %v4712 = vpop.f32.mrb[0].mxu0
    %v4713 = vadd.f32 0.0, %v4712
    %v4714 = vpop.f32.mrb[0].mxu0
    %v4715 = vpop.f32.mrb[0].mxu0
    %v4716 = vpop.f32.mrb[0].mxu0
    %4717 = vdwg.mxu0
    %4719 = vrot.lane.b32.xlu0 %v4493, 32
    %v4720 = vpop.permute.xlu0 %4719
    %4723 = vrot.lane.b32.xlu0 %v4603, 64
    %v4724 = vpop.permute.xlu0 %4723
    %4727 = vrot.lane.b32.xlu0 %v4713, 96
    %v4728 = vpop.permute.xlu0 %4727
    %v4730 = vsel %vm886, %v4380, %v4720
    %v4731 = vsel %vm1339, %v4730, %v4724
    %v4732 = vsel %vm1341, %v4731, %v4728
    %s4733 = scalar_lea.vmem %s19, 64
    %v4734 = vld [vmem:[%s4733] sm:$0xf]
    %v4735 = vld [vmem:[%s4733 + $0x4] sm:$0xf]
    %v4736 = vld [vmem:[%s4733 + $0x8] sm:$0xf]
    %v4737 = vld [vmem:[%s4733 + $0xc] sm:$0xf]
    %v4738 = vld [vmem:[%s4733 + $0x10] sm:$0xf]
    %v4739 = vld [vmem:[%s4733 + $0x14] sm:$0xf]
    %v4740 = vld [vmem:[%s4733 + $0x18] sm:$0xf]
    %v4741 = vld [vmem:[%s4733 + $0x1c] sm:$0xf]
    %v4742 = vld [vmem:[%s4733 + $0x20] sm:$0xf]
    %v4743 = vld [vmem:[%s4733 + $0x24] sm:$0xf]
    %v4744 = vld [vmem:[%s4733 + $0x28] sm:$0xf]
    %v4745 = vld [vmem:[%s4733 + $0x2c] sm:$0xf]
    %v4746 = vld [vmem:[%s4733 + $0x30] sm:$0xf]
    %v4747 = vld [vmem:[%s4733 + $0x34] sm:$0xf]
    %v4748 = vld [vmem:[%s4733 + $0x38] sm:$0xf]
    %v4749 = vld [vmem:[%s4733 + $0x3c] sm:$0xf]
    %v4750 = vpack.c.bf16 %v4732, %v4276
    %s4751 = scalar_lea.vmem [#allocation10], 1
    %v4752 = vld [vmem:[%s4751] sm:$0x1]
    %v4754 = vlaneseq
    %v4755 = vshrl.u32 %v4754, 7
    %v4756 = vsub.s32 0, %v4755
    %v4757 = vrot.slane %v4752, %v4756
    %v4775 = vunpack.c.l.b16 %v4734
    %v4776 = vunpack.c.l.b16 %v4735
    %v4777 = vunpack.c.l.b16 %v4736
    %v4778 = vunpack.c.l.b16 %v4737
    %v4779 = vunpack.c.l.b16 %v4738
    %v4780 = vunpack.c.l.b16 %v4739
    %v4781 = vunpack.c.l.b16 %v4740
    %v4782 = vunpack.c.l.b16 %v4741
    %v4783 = vunpack.c.l.b16 %v4742
    %v4784 = vunpack.c.l.b16 %v4743
    %v4785 = vunpack.c.l.b16 %v4744
    %v4786 = vunpack.c.l.b16 %v4745
    %v4787 = vunpack.c.l.b16 %v4746
    %v4788 = vunpack.c.l.b16 %v4747
    %v4789 = vunpack.c.l.b16 %v4748
    %v4790 = vunpack.c.l.b16 %v4749
    %v4791 = vpack.c.b16 %v4776, %v4775
    %v4792 = vpack.c.b16 %v4778, %v4777
    %v4793 = vpack.c.b16 %v4780, %v4779
    %v4794 = vpack.c.b16 %v4782, %v4781
    %v4795 = vpack.c.b16 %v4784, %v4783
    %v4796 = vpack.c.b16 %v4786, %v4785
    %v4797 = vpack.c.b16 %v4788, %v4787
    %v4798 = vpack.c.b16 %v4790, %v4789
    %4807 = vmatprep.subr.bf16.mxu0 0
    %4808 = vmatpush1.bf16.msra.mxu0 %v4791
    %4809 = vmatprep.subr.bf16.mxu0 0
    %4810 = vmatpush1.bf16.msra.mxu0 %v4792
    %4811 = vmatprep.subr.bf16.mxu0 0
    %4812 = vmatpush1.bf16.msra.mxu0 %v4793
    %4813 = vmatprep.subr.bf16.mxu0 0
    %4814 = vmatpush1.bf16.msra.mxu0 %v4794
    %4815 = vmatprep.subr.bf16.mxu0 0
    %4816 = vmatpush1.bf16.msra.mxu0 %v4795
    %4817 = vmatprep.subr.bf16.mxu0 0
    %4818 = vmatpush1.bf16.msra.mxu0 %v4796
    %4819 = vmatprep.subr.bf16.mxu0 0
    %4820 = vmatpush1.bf16.msra.mxu0 %v4797
    %4821 = vmatprep.subr.bf16.mxu0 0
    %4822 = vmatpush1.bf16.msra.mxu0 %v4798
    %4823 = vmatprep.subr.bf16.mxu0 0
    %4824 = vmatpush1.bf16.msra.mxu0 0
    %4825 = vmatprep.subr.bf16.mxu0 0
    %4826 = vmatpush1.bf16.msra.mxu0 0
    %4827 = vmatprep.subr.bf16.mxu0 0
    %4828 = vmatpush1.bf16.msra.mxu0 0
    %4829 = vmatprep.subr.bf16.mxu0 0
    %4830 = vmatpush1.bf16.msra.mxu0 0
    %4831 = vmatprep.subr.bf16.mxu0 0
    %4832 = vmatpush1.bf16.msra.mxu0 0
    %4833 = vmatprep.subr.bf16.mxu0 0
    %4834 = vmatpush1.bf16.msra.mxu0 0
    %4835 = vmatprep.subr.bf16.mxu0 0
    %4836 = vmatpush1.bf16.msra.mxu0 0
    %4837 = vmatprep.subr.bf16.mxu0 0
    %4838 = vmatpush1.bf16.msra.mxu0 0
    %4839 = vmatprep.mubr.bf16.mxu0 0
    %4840 = vmatmul.mubr.bf16.gmra.mrb[0].mxu0 %v4750
    %v4841 = vpop.f32.mrb[0].mxu0
    %v4842 = vadd.f32 %v4757, %v4841
    %v4843 = vpop.f32.mrb[0].mxu0
    %v4844 = vpop.f32.mrb[0].mxu0
    %v4845 = vadd.f32 %v4757, %v4844
    %v4846 = vpop.f32.mrb[0].mxu0
    %4847 = vdwg.mxu0
    %v4848 = vadd.f32 %v3555, %v4842
    %v4849 = vadd.f32 %v3556, %v4845
    %s4850 = scalar_lea.vmem [#allocation19], 1
    %v4851 = vld [vmem:[%s4850] sm:$0x1]
    %s4852 = scalar_lea.vmem [#allocation21], 1
    %v4853 = vld [vmem:[%s4852] sm:$0x1]
    %4854 = vadd.xlane.f32.xlu0 %v4848
    %v4855 = vpop.xlane.xlu0 %4854
    %4856 = vadd.xlane.f32.xlu0 %v4849
    %v4857 = vpop.xlane.xlu0 %4856
    %v4858 = vmul.f32 %v4855, %v1920
    %v4859 = vmul.f32 %v4857, %v1920
    %v4860 = vsub.f32 %v4848, %v4858
    %v4861 = vsub.f32 %v4849, %v4859
    %v4862 = vmul.f32 %v4860, %v4860
    %v4863 = vmul.f32 %v4861, %v4861
    %4864 = vadd.xlane.f32.xlu0 %v4862
    %v4865 = vpop.xlane.xlu0 %4864
    %4866 = vadd.xlane.f32.xlu0 %v4863
    %v4867 = vpop.xlane.xlu0 %4866
    %v4868 = vmul.f32 %v4865, %v1920
    %v4869 = vmul.f32 %v4867, %v1920
    %v4870 = vadd.f32 %v4868, 1e-05
    %v4871 = vadd.f32 %v4869, 1e-05
    %v4872 = vrsqrt.pop %v4870
    %v4873 = vrsqrt.pop %v4871
    %v4874 = vmul.f32 %v4860, %v4872
    %v4875 = vmul.f32 %v4861, %v4873
    %v4877 = vlaneseq
    %v4878 = vshrl.u32 %v4877, 7
    %v4879 = vsub.s32 0, %v4878
    %v4880 = vrot.slane %v4851, %v4879
    %v4882 = vmul.f32 %v4874, %v4880
    %v4883 = vmul.f32 %v4875, %v4880
    %v4885 = vlaneseq
    %v4886 = vshrl.u32 %v4885, 7
    %v4887 = vsub.s32 0, %v4886
    %v4888 = vrot.slane %v4853, %v4887
    %v4890 = vadd.f32 %v4882, %v4888
    %v4891 = vadd.f32 %v4883, %v4888
    %s4892 = scalar_lea.vmem %s23, 64
    %v4893 = vld [vmem:[%s4892] sm:$0xf]
    %v4894 = vld [vmem:[%s4892 + $0x4] sm:$0xf]
    %v4895 = vld [vmem:[%s4892 + $0x8] sm:$0xf]
    %v4896 = vld [vmem:[%s4892 + $0xc] sm:$0xf]
    %v4897 = vld [vmem:[%s4892 + $0x10] sm:$0xf]
    %v4898 = vld [vmem:[%s4892 + $0x14] sm:$0xf]
    %v4899 = vld [vmem:[%s4892 + $0x18] sm:$0xf]
    %v4900 = vld [vmem:[%s4892 + $0x1c] sm:$0xf]
    %v4901 = vld [vmem:[%s4892 + $0x20] sm:$0xf]
    %v4902 = vld [vmem:[%s4892 + $0x24] sm:$0xf]
    %v4903 = vld [vmem:[%s4892 + $0x28] sm:$0xf]
    %v4904 = vld [vmem:[%s4892 + $0x2c] sm:$0xf]
    %v4905 = vld [vmem:[%s4892 + $0x30] sm:$0xf]
    %v4906 = vld [vmem:[%s4892 + $0x34] sm:$0xf]
    %v4907 = vld [vmem:[%s4892 + $0x38] sm:$0xf]
    %v4908 = vld [vmem:[%s4892 + $0x3c] sm:$0xf]
    %v4909 = vpack.c.bf16 %v4891, %v4890
    %s4910 = scalar_lea.vmem [#allocation12], 1
    %v4911 = vld [vmem:[%s4910] sm:$0x1]
    %v4913 = vlaneseq
    %v4914 = vshrl.u32 %v4913, 7
    %v4915 = vsub.s32 0, %v4914
    %v4916 = vrot.slane %v4911, %v4915
    %v4934 = vunpack.c.l.b16 %v4893
    %v4935 = vunpack.c.l.b16 %v4894
    %v4936 = vunpack.c.l.b16 %v4895
    %v4937 = vunpack.c.l.b16 %v4896
    %v4938 = vunpack.c.l.b16 %v4897
    %v4939 = vunpack.c.l.b16 %v4898
    %v4940 = vunpack.c.l.b16 %v4899
    %v4941 = vunpack.c.l.b16 %v4900
    %v4942 = vunpack.c.l.b16 %v4901
    %v4943 = vunpack.c.l.b16 %v4902
    %v4944 = vunpack.c.l.b16 %v4903
    %v4945 = vunpack.c.l.b16 %v4904
    %v4946 = vunpack.c.l.b16 %v4905
    %v4947 = vunpack.c.l.b16 %v4906
    %v4948 = vunpack.c.l.b16 %v4907
    %v4949 = vunpack.c.l.b16 %v4908
    %v4950 = vpack.c.b16 %v4935, %v4934
    %v4951 = vpack.c.b16 %v4937, %v4936
    %v4952 = vpack.c.b16 %v4939, %v4938
    %v4953 = vpack.c.b16 %v4941, %v4940
    %v4954 = vpack.c.b16 %v4943, %v4942
    %v4955 = vpack.c.b16 %v4945, %v4944
    %v4956 = vpack.c.b16 %v4947, %v4946
    %v4957 = vpack.c.b16 %v4949, %v4948
    %4966 = vmatprep.subr.bf16.mxu0 0
    %4967 = vmatpush1.bf16.msra.mxu0 %v4950
    %4968 = vmatprep.subr.bf16.mxu0 0
    %4969 = vmatpush1.bf16.msra.mxu0 %v4951
    %4970 = vmatprep.subr.bf16.mxu0 0
    %4971 = vmatpush1.bf16.msra.mxu0 %v4952
    %4972 = vmatprep.subr.bf16.mxu0 0
    %4973 = vmatpush1.bf16.msra.mxu0 %v4953
    %4974 = vmatprep.subr.bf16.mxu0 0
    %4975 = vmatpush1.bf16.msra.mxu0 %v4954
    %4976 = vmatprep.subr.bf16.mxu0 0
    %4977 = vmatpush1.bf16.msra.mxu0 %v4955
    %4978 = vmatprep.subr.bf16.mxu0 0
    %4979 = vmatpush1.bf16.msra.mxu0 %v4956
    %4980 = vmatprep.subr.bf16.mxu0 0
    %4981 = vmatpush1.bf16.msra.mxu0 %v4957
    %4982 = vmatprep.subr.bf16.mxu0 0
    %4983 = vmatpush1.bf16.msra.mxu0 0
    %4984 = vmatprep.subr.bf16.mxu0 0
    %4985 = vmatpush1.bf16.msra.mxu0 0
    %4986 = vmatprep.subr.bf16.mxu0 0
    %4987 = vmatpush1.bf16.msra.mxu0 0
    %4988 = vmatprep.subr.bf16.mxu0 0
    %4989 = vmatpush1.bf16.msra.mxu0 0
    %4990 = vmatprep.subr.bf16.mxu0 0
    %4991 = vmatpush1.bf16.msra.mxu0 0
    %4992 = vmatprep.subr.bf16.mxu0 0
    %4993 = vmatpush1.bf16.msra.mxu0 0
    %4994 = vmatprep.subr.bf16.mxu0 0
    %4995 = vmatpush1.bf16.msra.mxu0 0
    %4996 = vmatprep.subr.bf16.mxu0 0
    %4997 = vmatpush1.bf16.msra.mxu0 0
    %4998 = vmatprep.mubr.bf16.mxu0 0
    %4999 = vmatmul.mubr.bf16.gmra.mrb[0].mxu0 %v4909
    %v5000 = vpop.f32.mrb[0].mxu0
    %v5001 = vadd.f32 %v4916, %v5000
    %v5002 = vpop.f32.mrb[0].mxu0
    %v5003 = vpop.f32.mrb[0].mxu0
    %v5004 = vadd.f32 %v4916, %v5003
    %v5005 = vpop.f32.mrb[0].mxu0
    %5006 = vdwg.mxu0
    %s5007 = scalar_lea.vmem %s27, 128
    %v5008 = vld [vmem:[%s5007] sm:$0xff]
    %v5009 = vld [vmem:[%s5007 + $0x8] sm:$0xff]
    %v5010 = vld [vmem:[%s5007 + $0x10] sm:$0xff]
    %v5011 = vld [vmem:[%s5007 + $0x18] sm:$0xff]
    %v5012 = vld [vmem:[%s5007 + $0x20] sm:$0xff]
    %v5013 = vld [vmem:[%s5007 + $0x28] sm:$0xff]
    %v5014 = vld [vmem:[%s5007 + $0x30] sm:$0xff]
    %v5015 = vld [vmem:[%s5007 + $0x38] sm:$0xff]
    %v5016 = vld [vmem:[%s5007 + $0x40] sm:$0xff]
    %v5017 = vld [vmem:[%s5007 + $0x48] sm:$0xff]
    %v5018 = vld [vmem:[%s5007 + $0x50] sm:$0xff]
    %v5019 = vld [vmem:[%s5007 + $0x58] sm:$0xff]
    %v5020 = vld [vmem:[%s5007 + $0x60] sm:$0xff]
    %v5021 = vld [vmem:[%s5007 + $0x68] sm:$0xff]
    %v5022 = vld [vmem:[%s5007 + $0x70] sm:$0xff]
    %v5023 = vld [vmem:[%s5007 + $0x78] sm:$0xff]
    %s5024 = scalar_lea.vmem %s29, 2
    %v5025 = vld [vmem:[%s5024] sm:$0x3]
    %v5027 = vlaneseq
    %v5028 = vshrl.u32 %v5027, 7
    %v5029 = vsub.s32 0, %v5028
    %v5030 = vrot.slane %v5025, %v5029
    %v5031 = vlaneseq
    %v5032 = vshrl.u32 %v5031, 7
    %v5033 = vsub.s32 1, %v5032
    %v5034 = vrot.slane %v5025, %v5033
    %v5053 = vunpack.c.l.b16 %v5008
    %v5054 = vunpack.c.h.b16 %v5008
    %v5055 = vunpack.c.l.b16 %v5009
    %v5056 = vunpack.c.h.b16 %v5009
    %v5057 = vunpack.c.l.b16 %v5010
    %v5058 = vunpack.c.h.b16 %v5010
    %v5059 = vunpack.c.l.b16 %v5011
    %v5060 = vunpack.c.h.b16 %v5011
    %v5061 = vunpack.c.l.b16 %v5012
    %v5062 = vunpack.c.h.b16 %v5012
    %v5063 = vunpack.c.l.b16 %v5013
    %v5064 = vunpack.c.h.b16 %v5013
    %v5065 = vunpack.c.l.b16 %v5014
    %v5066 = vunpack.c.h.b16 %v5014
    %v5067 = vunpack.c.l.b16 %v5015
    %v5068 = vunpack.c.h.b16 %v5015
    %v5069 = vunpack.c.l.b16 %v5016
    %v5070 = vunpack.c.h.b16 %v5016
    %v5071 = vunpack.c.l.b16 %v5017
    %v5072 = vunpack.c.h.b16 %v5017
    %v5073 = vunpack.c.l.b16 %v5018
    %v5074 = vunpack.c.h.b16 %v5018
    %v5075 = vunpack.c.l.b16 %v5019
    %v5076 = vunpack.c.h.b16 %v5019
    %v5077 = vunpack.c.l.b16 %v5020
    %v5078 = vunpack.c.h.b16 %v5020
    %v5079 = vunpack.c.l.b16 %v5021
    %v5080 = vunpack.c.h.b16 %v5021
    %v5081 = vunpack.c.l.b16 %v5022
    %v5082 = vunpack.c.h.b16 %v5022
    %v5083 = vunpack.c.l.b16 %v5023
    %v5084 = vunpack.c.h.b16 %v5023
    %v5085 = vpack.c.b16 %v5055, %v5053
    %v5086 = vpack.c.b16 %v5056, %v5054
    %v5087 = vpack.c.b16 %v5059, %v5057
    %v5088 = vpack.c.b16 %v5060, %v5058
    %v5089 = vpack.c.b16 %v5063, %v5061
    %v5090 = vpack.c.b16 %v5064, %v5062
    %v5091 = vpack.c.b16 %v5067, %v5065
    %v5092 = vpack.c.b16 %v5068, %v5066
    %v5093 = vpack.c.b16 %v5071, %v5069
    %v5094 = vpack.c.b16 %v5072, %v5070
    %v5095 = vpack.c.b16 %v5075, %v5073
    %v5096 = vpack.c.b16 %v5076, %v5074
    %v5097 = vpack.c.b16 %v5079, %v5077
    %v5098 = vpack.c.b16 %v5080, %v5078
    %v5099 = vpack.c.b16 %v5083, %v5081
    %v5100 = vpack.c.b16 %v5084, %v5082
    %5117 = vmatprep.subr.bf16.mxu0 %v5086
    %5118 = vmatpush1.bf16.msra.mxu0 %v5085
    %5119 = vmatprep.subr.bf16.mxu0 %v5088
    %5120 = vmatpush1.bf16.msra.mxu0 %v5087
    %5121 = vmatprep.subr.bf16.mxu0 %v5090
    %5122 = vmatpush1.bf16.msra.mxu0 %v5089
    %5123 = vmatprep.subr.bf16.mxu0 %v5092
    %5124 = vmatpush1.bf16.msra.mxu0 %v5091
    %5125 = vmatprep.subr.bf16.mxu0 %v5094
    %5126 = vmatpush1.bf16.msra.mxu0 %v5093
    %5127 = vmatprep.subr.bf16.mxu0 %v5096
    %5128 = vmatpush1.bf16.msra.mxu0 %v5095
    %5129 = vmatprep.subr.bf16.mxu0 %v5098
    %5130 = vmatpush1.bf16.msra.mxu0 %v5097
    %5131 = vmatprep.subr.bf16.mxu0 %v5100
    %5132 = vmatpush1.bf16.msra.mxu0 %v5099
    %5133 = vmatprep.subr.bf16.mxu0 0
    %5134 = vmatpush1.bf16.msra.mxu0 0
    %5135 = vmatprep.subr.bf16.mxu0 0
    %5136 = vmatpush1.bf16.msra.mxu0 0
    %5137 = vmatprep.subr.bf16.mxu0 0
    %5138 = vmatpush1.bf16.msra.mxu0 0
    %5139 = vmatprep.subr.bf16.mxu0 0
    %5140 = vmatpush1.bf16.msra.mxu0 0
    %5141 = vmatprep.subr.bf16.mxu0 0
    %5142 = vmatpush1.bf16.msra.mxu0 0
    %5143 = vmatprep.subr.bf16.mxu0 0
    %5144 = vmatpush1.bf16.msra.mxu0 0
    %5145 = vmatprep.subr.bf16.mxu0 0
    %5146 = vmatpush1.bf16.msra.mxu0 0
    %5147 = vmatprep.subr.bf16.mxu0 0
    %5148 = vmatpush1.bf16.msra.mxu0 0
    %5149 = vmatprep.mubr.bf16.mxu0 0
    %5150 = vmatmul.mubr.bf16.gmra.mrb[0].mxu0 %v2084
    %v5151 = vpop.f32.mrb[0].mxu0
    %v5152 = vadd.f32 %v5030, %v5151
    %v5153 = vpop.f32.mrb[0].mxu0
    %v5154 = vadd.f32 %v5034, %v5153
    %v5155 = vpop.f32.mrb[0].mxu0
    %v5156 = vadd.f32 %v5030, %v5155
    %v5157 = vpop.f32.mrb[0].mxu0
    %v5158 = vadd.f32 %v5034, %v5157
    %5159 = vdwg.mxu0
    %v5160 = vmul.f32 %v5001, 0.17677669
    %v5161 = vpack.c.bf16 %v5160, %v5160
    %v5162 = vpack.c.bf16 %v5152, %v5152
    %v5163 = vpack.c.bf16 %v5154, %v5154
    %v5165 = vsel %vm886, %v5161, 0
    %v5168 = vsel %vm886, %v5162, 0
    %5170 = vmatprep.subr.bf16.mxu0 0
    %5171 = vmatpush1.bf16.xpose.msra.mxu0 %v5168
    %5172 = vmatprep.subr.bf16.mxu0 0
    %5173 = vmatpush1.bf16.xpose.msra.mxu0 0
    %5174 = vmatprep.subr.bf16.mxu0 0
    %5175 = vmatpush1.bf16.xpose.msra.mxu0 0
    %5176 = vmatprep.subr.bf16.mxu0 0
    %5177 = vmatpush1.bf16.xpose.msra.mxu0 0
    %5178 = vmatprep.subr.bf16.mxu0 0
    %5179 = vmatpush1.bf16.xpose.msra.mxu0 0
    %5180 = vmatprep.subr.bf16.mxu0 0
    %5181 = vmatpush1.bf16.xpose.msra.mxu0 0
    %5182 = vmatprep.subr.bf16.mxu0 0
    %5183 = vmatpush1.bf16.xpose.msra.mxu0 0
    %5184 = vmatprep.subr.bf16.mxu0 0
    %5185 = vmatpush1.bf16.xpose.msra.mxu0 0
    %5186 = vmatprep.subr.bf16.mxu0 0
    %5187 = vmatpush1.bf16.xpose.msra.mxu0 0
    %5188 = vmatprep.subr.bf16.mxu0 0
    %5189 = vmatpush1.bf16.xpose.msra.mxu0 0
    %5190 = vmatprep.subr.bf16.mxu0 0
    %5191 = vmatpush1.bf16.xpose.msra.mxu0 0
    %5192 = vmatprep.subr.bf16.mxu0 0
    %5193 = vmatpush1.bf16.xpose.msra.mxu0 0
    %5194 = vmatprep.subr.bf16.mxu0 0
    %5195 = vmatpush1.bf16.xpose.msra.mxu0 0
    %5196 = vmatprep.subr.bf16.mxu0 0
    %5197 = vmatpush1.bf16.xpose.msra.mxu0 0
    %5198 = vmatprep.subr.bf16.mxu0 0
    %5199 = vmatpush1.bf16.xpose.msra.mxu0 0
    %5200 = vmatprep.subr.bf16.mxu0 0
    %5201 = vmatpush1.bf16.xpose.msra.mxu0 0
    %5202 = vmatprep.mubr.bf16.mxu0 0
    %5203 = vmatmul.mubr.bf16.gmra.mrb[0].mxu0 %v5165
    %v5204 = vpop.f32.mrb[0].mxu0
    %v5205 = vadd.f32 0.0, %v5204
    %v5206 = vpop.f32.mrb[0].mxu0
    %v5207 = vpop.f32.mrb[0].mxu0
    %v5208 = vpop.f32.mrb[0].mxu0
    %5209 = vdwg.mxu0
    %v5210 = vsel %vm933, %v5205, -inf
    %5211 = vmax.xlane.f32.xlu0 %v5210
    %v5212 = vpop.xlane.xlu0 %5211
    %v5213 = vsub.f32 %v5205, %v5212
    %v5214 = vmul.f32 %v5213, 1.442695
    %v5215 = vpow.pop %v5214
    %v5216 = vsel %vm933, %v5215, 0.0
    %5217 = vadd.xlane.f32.xlu0 %v5216
    %v5218 = vpop.xlane.xlu0 %5217
    %v5219 = vrcp.pop %v5218
    %v5220 = vmul.f32 %v5215, %v5219
    %v5221 = vpack.c.bf16 %v5220, %v5220
    %v5223 = vsel %vm933, %v5221, 0
    %v5226 = vsel %vm949, %v5163, 0
    %5228 = vmatprep.subr.bf16.mxu0 0
    %5229 = vmatpush1.bf16.msra.mxu0 %v5226
    %5230 = vmatprep.subr.bf16.mxu0 0
    %5231 = vmatpush1.bf16.msra.mxu0 0
    %5232 = vmatprep.subr.bf16.mxu0 0
    %5233 = vmatpush1.bf16.msra.mxu0 0
    %5234 = vmatprep.subr.bf16.mxu0 0
    %5235 = vmatpush1.bf16.msra.mxu0 0
    %5236 = vmatprep.subr.bf16.mxu0 0
    %5237 = vmatpush1.bf16.msra.mxu0 0
    %5238 = vmatprep.subr.bf16.mxu0 0
    %5239 = vmatpush1.bf16.msra.mxu0 0
    %5240 = vmatprep.subr.bf16.mxu0 0
    %5241 = vmatpush1.bf16.msra.mxu0 0
    %5242 = vmatprep.subr.bf16.mxu0 0
    %5243 = vmatpush1.bf16.msra.mxu0 0
    %5244 = vmatprep.subr.bf16.mxu0 0
    %5245 = vmatpush1.bf16.msra.mxu0 0
    %5246 = vmatprep.subr.bf16.mxu0 0
    %5247 = vmatpush1.bf16.msra.mxu0 0
    %5248 = vmatprep.subr.bf16.mxu0 0
    %5249 = vmatpush1.bf16.msra.mxu0 0
    %5250 = vmatprep.subr.bf16.mxu0 0
    %5251 = vmatpush1.bf16.msra.mxu0 0
    %5252 = vmatprep.subr.bf16.mxu0 0
    %5253 = vmatpush1.bf16.msra.mxu0 0
    %5254 = vmatprep.subr.bf16.mxu0 0
    %5255 = vmatpush1.bf16.msra.mxu0 0
    %5256 = vmatprep.subr.bf16.mxu0 0
    %5257 = vmatpush1.bf16.msra.mxu0 0
    %5258 = vmatprep.subr.bf16.mxu0 0
    %5259 = vmatpush1.bf16.msra.mxu0 0
    %5260 = vmatprep.mubr.bf16.mxu0 0
    %5261 = vmatmul.mubr.bf16.gmra.mrb[0].mxu0 %v5223
    %v5262 = vpop.f32.mrb[0].mxu0
    %v5263 = vadd.f32 0.0, %v5262
    %v5264 = vpop.f32.mrb[0].mxu0
    %v5265 = vpop.f32.mrb[0].mxu0
    %v5266 = vpop.f32.mrb[0].mxu0
    %5267 = vdwg.mxu0
    %5269 = vrot.lane.b32.xlu0 %v5161, 96
    %v5270 = vpop.permute.xlu0 %5269
    %5272 = vrot.lane.b32.xlu0 %v5162, 96
    %v5273 = vpop.permute.xlu0 %5272
    %v5275 = vsel %vm886, %v5270, 0
    %v5278 = vsel %vm886, %v5273, 0
    %5280 = vmatprep.subr.bf16.mxu0 0
    %5281 = vmatpush1.bf16.xpose.msra.mxu0 %v5278
    %5282 = vmatprep.subr.bf16.mxu0 0
    %5283 = vmatpush1.bf16.xpose.msra.mxu0 0
    %5284 = vmatprep.subr.bf16.mxu0 0
    %5285 = vmatpush1.bf16.xpose.msra.mxu0 0
    %5286 = vmatprep.subr.bf16.mxu0 0
    %5287 = vmatpush1.bf16.xpose.msra.mxu0 0
    %5288 = vmatprep.subr.bf16.mxu0 0
    %5289 = vmatpush1.bf16.xpose.msra.mxu0 0
    %5290 = vmatprep.subr.bf16.mxu0 0
    %5291 = vmatpush1.bf16.xpose.msra.mxu0 0
    %5292 = vmatprep.subr.bf16.mxu0 0
    %5293 = vmatpush1.bf16.xpose.msra.mxu0 0
    %5294 = vmatprep.subr.bf16.mxu0 0
    %5295 = vmatpush1.bf16.xpose.msra.mxu0 0
    %5296 = vmatprep.subr.bf16.mxu0 0
    %5297 = vmatpush1.bf16.xpose.msra.mxu0 0
    %5298 = vmatprep.subr.bf16.mxu0 0
    %5299 = vmatpush1.bf16.xpose.msra.mxu0 0
    %5300 = vmatprep.subr.bf16.mxu0 0
    %5301 = vmatpush1.bf16.xpose.msra.mxu0 0
    %5302 = vmatprep.subr.bf16.mxu0 0
    %5303 = vmatpush1.bf16.xpose.msra.mxu0 0
    %5304 = vmatprep.subr.bf16.mxu0 0
    %5305 = vmatpush1.bf16.xpose.msra.mxu0 0
    %5306 = vmatprep.subr.bf16.mxu0 0
    %5307 = vmatpush1.bf16.xpose.msra.mxu0 0
    %5308 = vmatprep.subr.bf16.mxu0 0
    %5309 = vmatpush1.bf16.xpose.msra.mxu0 0
    %5310 = vmatprep.subr.bf16.mxu0 0
    %5311 = vmatpush1.bf16.xpose.msra.mxu0 0
    %5312 = vmatprep.mubr.bf16.mxu0 0
    %5313 = vmatmul.mubr.bf16.gmra.mrb[0].mxu0 %v5275
    %v5314 = vpop.f32.mrb[0].mxu0
    %v5315 = vadd.f32 0.0, %v5314
    %v5316 = vpop.f32.mrb[0].mxu0
    %v5317 = vpop.f32.mrb[0].mxu0
    %v5318 = vpop.f32.mrb[0].mxu0
    %5319 = vdwg.mxu0
    %v5320 = vsel %vm933, %v5315, -inf
    %5321 = vmax.xlane.f32.xlu0 %v5320
    %v5322 = vpop.xlane.xlu0 %5321
    %v5323 = vsub.f32 %v5315, %v5322
    %v5324 = vmul.f32 %v5323, 1.442695
    %v5325 = vpow.pop %v5324
    %v5326 = vsel %vm933, %v5325, 0.0
    %5327 = vadd.xlane.f32.xlu0 %v5326
    %v5328 = vpop.xlane.xlu0 %5327
    %v5329 = vrcp.pop %v5328
    %v5330 = vmul.f32 %v5325, %v5329
    %v5331 = vpack.c.bf16 %v5330, %v5330
    %5333 = vrot.lane.b32.xlu0 %v5163, 96
    %v5334 = vpop.permute.xlu0 %5333
    %v5336 = vsel %vm933, %v5331, 0
    %v5339 = vsel %vm949, %v5334, 0
    %5341 = vmatprep.subr.bf16.mxu0 0
    %5342 = vmatpush1.bf16.msra.mxu0 %v5339
    %5343 = vmatprep.subr.bf16.mxu0 0
    %5344 = vmatpush1.bf16.msra.mxu0 0
    %5345 = vmatprep.subr.bf16.mxu0 0
    %5346 = vmatpush1.bf16.msra.mxu0 0
    %5347 = vmatprep.subr.bf16.mxu0 0
    %5348 = vmatpush1.bf16.msra.mxu0 0
    %5349 = vmatprep.subr.bf16.mxu0 0
    %5350 = vmatpush1.bf16.msra.mxu0 0
    %5351 = vmatprep.subr.bf16.mxu0 0
    %5352 = vmatpush1.bf16.msra.mxu0 0
    %5353 = vmatprep.subr.bf16.mxu0 0
    %5354 = vmatpush1.bf16.msra.mxu0 0
    %5355 = vmatprep.subr.bf16.mxu0 0
    %5356 = vmatpush1.bf16.msra.mxu0 0
    %5357 = vmatprep.subr.bf16.mxu0 0
    %5358 = vmatpush1.bf16.msra.mxu0 0
    %5359 = vmatprep.subr.bf16.mxu0 0
    %5360 = vmatpush1.bf16.msra.mxu0 0
    %5361 = vmatprep.subr.bf16.mxu0 0
    %5362 = vmatpush1.bf16.msra.mxu0 0
    %5363 = vmatprep.subr.bf16.mxu0 0
    %5364 = vmatpush1.bf16.msra.mxu0 0
    %5365 = vmatprep.subr.bf16.mxu0 0
    %5366 = vmatpush1.bf16.msra.mxu0 0
    %5367 = vmatprep.subr.bf16.mxu0 0
    %5368 = vmatpush1.bf16.msra.mxu0 0
    %5369 = vmatprep.subr.bf16.mxu0 0
    %5370 = vmatpush1.bf16.msra.mxu0 0
    %5371 = vmatprep.subr.bf16.mxu0 0
    %5372 = vmatpush1.bf16.msra.mxu0 0
    %5373 = vmatprep.mubr.bf16.mxu0 0
    %5374 = vmatmul.mubr.bf16.gmra.mrb[0].mxu0 %v5336
    %v5375 = vpop.f32.mrb[0].mxu0
    %v5376 = vadd.f32 0.0, %v5375
    %v5377 = vpop.f32.mrb[0].mxu0
    %v5378 = vpop.f32.mrb[0].mxu0
    %v5379 = vpop.f32.mrb[0].mxu0
    %5380 = vdwg.mxu0
    %5381 = vrot.lane.b32.xlu0 %v5161, 64
    %v5382 = vpop.permute.xlu0 %5381
    %5383 = vrot.lane.b32.xlu0 %v5162, 64
    %v5384 = vpop.permute.xlu0 %5383
    %v5386 = vsel %vm886, %v5382, 0
    %v5389 = vsel %vm886, %v5384, 0
    %5391 = vmatprep.subr.bf16.mxu0 0
    %5392 = vmatpush1.bf16.xpose.msra.mxu0 %v5389
    %5393 = vmatprep.subr.bf16.mxu0 0
    %5394 = vmatpush1.bf16.xpose.msra.mxu0 0
    %5395 = vmatprep.subr.bf16.mxu0 0
    %5396 = vmatpush1.bf16.xpose.msra.mxu0 0
    %5397 = vmatprep.subr.bf16.mxu0 0
    %5398 = vmatpush1.bf16.xpose.msra.mxu0 0
    %5399 = vmatprep.subr.bf16.mxu0 0
    %5400 = vmatpush1.bf16.xpose.msra.mxu0 0
    %5401 = vmatprep.subr.bf16.mxu0 0
    %5402 = vmatpush1.bf16.xpose.msra.mxu0 0
    %5403 = vmatprep.subr.bf16.mxu0 0
    %5404 = vmatpush1.bf16.xpose.msra.mxu0 0
    %5405 = vmatprep.subr.bf16.mxu0 0
    %5406 = vmatpush1.bf16.xpose.msra.mxu0 0
    %5407 = vmatprep.subr.bf16.mxu0 0
    %5408 = vmatpush1.bf16.xpose.msra.mxu0 0
    %5409 = vmatprep.subr.bf16.mxu0 0
    %5410 = vmatpush1.bf16.xpose.msra.mxu0 0
    %5411 = vmatprep.subr.bf16.mxu0 0
    %5412 = vmatpush1.bf16.xpose.msra.mxu0 0
    %5413 = vmatprep.subr.bf16.mxu0 0
    %5414 = vmatpush1.bf16.xpose.msra.mxu0 0
    %5415 = vmatprep.subr.bf16.mxu0 0
    %5416 = vmatpush1.bf16.xpose.msra.mxu0 0
    %5417 = vmatprep.subr.bf16.mxu0 0
    %5418 = vmatpush1.bf16.xpose.msra.mxu0 0
    %5419 = vmatprep.subr.bf16.mxu0 0
    %5420 = vmatpush1.bf16.xpose.msra.mxu0 0
    %5421 = vmatprep.subr.bf16.mxu0 0
    %5422 = vmatpush1.bf16.xpose.msra.mxu0 0
    %5423 = vmatprep.mubr.bf16.mxu0 0
    %5424 = vmatmul.mubr.bf16.gmra.mrb[0].mxu0 %v5386
    %v5425 = vpop.f32.mrb[0].mxu0
    %v5426 = vadd.f32 0.0, %v5425
    %v5427 = vpop.f32.mrb[0].mxu0
    %v5428 = vpop.f32.mrb[0].mxu0
    %v5429 = vpop.f32.mrb[0].mxu0
    %5430 = vdwg.mxu0
    %v5431 = vsel %vm933, %v5426, -inf
    %5432 = vmax.xlane.f32.xlu0 %v5431
    %v5433 = vpop.xlane.xlu0 %5432
    %v5434 = vsub.f32 %v5426, %v5433
    %v5435 = vmul.f32 %v5434, 1.442695
    %v5436 = vpow.pop %v5435
    %v5437 = vsel %vm933, %v5436, 0.0
    %5438 = vadd.xlane.f32.xlu0 %v5437
    %v5439 = vpop.xlane.xlu0 %5438
    %v5440 = vrcp.pop %v5439
    %v5441 = vmul.f32 %v5436, %v5440
    %v5442 = vpack.c.bf16 %v5441, %v5441
    %5443 = vrot.lane.b32.xlu0 %v5163, 64
    %v5444 = vpop.permute.xlu0 %5443
    %v5446 = vsel %vm933, %v5442, 0
    %v5449 = vsel %vm949, %v5444, 0
    %5451 = vmatprep.subr.bf16.mxu0 0
    %5452 = vmatpush1.bf16.msra.mxu0 %v5449
    %5453 = vmatprep.subr.bf16.mxu0 0
    %5454 = vmatpush1.bf16.msra.mxu0 0
    %5455 = vmatprep.subr.bf16.mxu0 0
    %5456 = vmatpush1.bf16.msra.mxu0 0
    %5457 = vmatprep.subr.bf16.mxu0 0
    %5458 = vmatpush1.bf16.msra.mxu0 0
    %5459 = vmatprep.subr.bf16.mxu0 0
    %5460 = vmatpush1.bf16.msra.mxu0 0
    %5461 = vmatprep.subr.bf16.mxu0 0
    %5462 = vmatpush1.bf16.msra.mxu0 0
    %5463 = vmatprep.subr.bf16.mxu0 0
    %5464 = vmatpush1.bf16.msra.mxu0 0
    %5465 = vmatprep.subr.bf16.mxu0 0
    %5466 = vmatpush1.bf16.msra.mxu0 0
    %5467 = vmatprep.subr.bf16.mxu0 0
    %5468 = vmatpush1.bf16.msra.mxu0 0
    %5469 = vmatprep.subr.bf16.mxu0 0
    %5470 = vmatpush1.bf16.msra.mxu0 0
    %5471 = vmatprep.subr.bf16.mxu0 0
    %5472 = vmatpush1.bf16.msra.mxu0 0
    %5473 = vmatprep.subr.bf16.mxu0 0
    %5474 = vmatpush1.bf16.msra.mxu0 0
    %5475 = vmatprep.subr.bf16.mxu0 0
    %5476 = vmatpush1.bf16.msra.mxu0 0
    %5477 = vmatprep.subr.bf16.mxu0 0
    %5478 = vmatpush1.bf16.msra.mxu0 0
    %5479 = vmatprep.subr.bf16.mxu0 0
    %5480 = vmatpush1.bf16.msra.mxu0 0
    %5481 = vmatprep.subr.bf16.mxu0 0
    %5482 = vmatpush1.bf16.msra.mxu0 0
    %5483 = vmatprep.mubr.bf16.mxu0 0
    %5484 = vmatmul.mubr.bf16.gmra.mrb[0].mxu0 %v5446
    %v5485 = vpop.f32.mrb[0].mxu0
    %v5486 = vadd.f32 0.0, %v5485
    %v5487 = vpop.f32.mrb[0].mxu0
    %v5488 = vpop.f32.mrb[0].mxu0
    %v5489 = vpop.f32.mrb[0].mxu0
    %5490 = vdwg.mxu0
    %5491 = vrot.lane.b32.xlu0 %v5161, 32
    %v5492 = vpop.permute.xlu0 %5491
    %5493 = vrot.lane.b32.xlu0 %v5162, 32
    %v5494 = vpop.permute.xlu0 %5493
    %v5496 = vsel %vm886, %v5492, 0
    %v5499 = vsel %vm886, %v5494, 0
    %5501 = vmatprep.subr.bf16.mxu0 0
    %5502 = vmatpush1.bf16.xpose.msra.mxu0 %v5499
    %5503 = vmatprep.subr.bf16.mxu0 0
    %5504 = vmatpush1.bf16.xpose.msra.mxu0 0
    %5505 = vmatprep.subr.bf16.mxu0 0
    %5506 = vmatpush1.bf16.xpose.msra.mxu0 0
    %5507 = vmatprep.subr.bf16.mxu0 0
    %5508 = vmatpush1.bf16.xpose.msra.mxu0 0
    %5509 = vmatprep.subr.bf16.mxu0 0
    %5510 = vmatpush1.bf16.xpose.msra.mxu0 0
    %5511 = vmatprep.subr.bf16.mxu0 0
    %5512 = vmatpush1.bf16.xpose.msra.mxu0 0
    %5513 = vmatprep.subr.bf16.mxu0 0
    %5514 = vmatpush1.bf16.xpose.msra.mxu0 0
    %5515 = vmatprep.subr.bf16.mxu0 0
    %5516 = vmatpush1.bf16.xpose.msra.mxu0 0
    %5517 = vmatprep.subr.bf16.mxu0 0
    %5518 = vmatpush1.bf16.xpose.msra.mxu0 0
    %5519 = vmatprep.subr.bf16.mxu0 0
    %5520 = vmatpush1.bf16.xpose.msra.mxu0 0
    %5521 = vmatprep.subr.bf16.mxu0 0
    %5522 = vmatpush1.bf16.xpose.msra.mxu0 0
    %5523 = vmatprep.subr.bf16.mxu0 0
    %5524 = vmatpush1.bf16.xpose.msra.mxu0 0
    %5525 = vmatprep.subr.bf16.mxu0 0
    %5526 = vmatpush1.bf16.xpose.msra.mxu0 0
    %5527 = vmatprep.subr.bf16.mxu0 0
    %5528 = vmatpush1.bf16.xpose.msra.mxu0 0
    %5529 = vmatprep.subr.bf16.mxu0 0
    %5530 = vmatpush1.bf16.xpose.msra.mxu0 0
    %5531 = vmatprep.subr.bf16.mxu0 0
    %5532 = vmatpush1.bf16.xpose.msra.mxu0 0
    %5533 = vmatprep.mubr.bf16.mxu0 0
    %5534 = vmatmul.mubr.bf16.gmra.mrb[0].mxu0 %v5496
    %v5535 = vpop.f32.mrb[0].mxu0
    %v5536 = vadd.f32 0.0, %v5535
    %v5537 = vpop.f32.mrb[0].mxu0
    %v5538 = vpop.f32.mrb[0].mxu0
    %v5539 = vpop.f32.mrb[0].mxu0
    %5540 = vdwg.mxu0
    %v5541 = vsel %vm933, %v5536, -inf
    %5542 = vmax.xlane.f32.xlu0 %v5541
    %v5543 = vpop.xlane.xlu0 %5542
    %v5544 = vsub.f32 %v5536, %v5543
    %v5545 = vmul.f32 %v5544, 1.442695
    %v5546 = vpow.pop %v5545
    %v5547 = vsel %vm933, %v5546, 0.0
    %5548 = vadd.xlane.f32.xlu0 %v5547
    %v5549 = vpop.xlane.xlu0 %5548
    %v5550 = vrcp.pop %v5549
    %v5551 = vmul.f32 %v5546, %v5550
    %v5552 = vpack.c.bf16 %v5551, %v5551
    %5553 = vrot.lane.b32.xlu0 %v5163, 32
    %v5554 = vpop.permute.xlu0 %5553
    %v5556 = vsel %vm933, %v5552, 0
    %v5559 = vsel %vm949, %v5554, 0
    %5561 = vmatprep.subr.bf16.mxu0 0
    %5562 = vmatpush1.bf16.msra.mxu0 %v5559
    %5563 = vmatprep.subr.bf16.mxu0 0
    %5564 = vmatpush1.bf16.msra.mxu0 0
    %5565 = vmatprep.subr.bf16.mxu0 0
    %5566 = vmatpush1.bf16.msra.mxu0 0
    %5567 = vmatprep.subr.bf16.mxu0 0
    %5568 = vmatpush1.bf16.msra.mxu0 0
    %5569 = vmatprep.subr.bf16.mxu0 0
    %5570 = vmatpush1.bf16.msra.mxu0 0
    %5571 = vmatprep.subr.bf16.mxu0 0
    %5572 = vmatpush1.bf16.msra.mxu0 0
    %5573 = vmatprep.subr.bf16.mxu0 0
    %5574 = vmatpush1.bf16.msra.mxu0 0
    %5575 = vmatprep.subr.bf16.mxu0 0
    %5576 = vmatpush1.bf16.msra.mxu0 0
    %5577 = vmatprep.subr.bf16.mxu0 0
    %5578 = vmatpush1.bf16.msra.mxu0 0
    %5579 = vmatprep.subr.bf16.mxu0 0
    %5580 = vmatpush1.bf16.msra.mxu0 0
    %5581 = vmatprep.subr.bf16.mxu0 0
    %5582 = vmatpush1.bf16.msra.mxu0 0
    %5583 = vmatprep.subr.bf16.mxu0 0
    %5584 = vmatpush1.bf16.msra.mxu0 0
    %5585 = vmatprep.subr.bf16.mxu0 0
    %5586 = vmatpush1.bf16.msra.mxu0 0
    %5587 = vmatprep.subr.bf16.mxu0 0
    %5588 = vmatpush1.bf16.msra.mxu0 0
    %5589 = vmatprep.subr.bf16.mxu0 0
    %5590 = vmatpush1.bf16.msra.mxu0 0
    %5591 = vmatprep.subr.bf16.mxu0 0
    %5592 = vmatpush1.bf16.msra.mxu0 0
    %5593 = vmatprep.mubr.bf16.mxu0 0
    %5594 = vmatmul.mubr.bf16.gmra.mrb[0].mxu0 %v5556
    %v5595 = vpop.f32.mrb[0].mxu0
    %v5596 = vadd.f32 0.0, %v5595
    %v5597 = vpop.f32.mrb[0].mxu0
    %v5598 = vpop.f32.mrb[0].mxu0
    %v5599 = vpop.f32.mrb[0].mxu0
    %5600 = vdwg.mxu0
    %5602 = vrot.lane.b32.xlu0 %v5376, 32
    %v5603 = vpop.permute.xlu0 %5602
    %5606 = vrot.lane.b32.xlu0 %v5486, 64
    %v5607 = vpop.permute.xlu0 %5606
    %5610 = vrot.lane.b32.xlu0 %v5596, 96
    %v5611 = vpop.permute.xlu0 %5610
    %v5613 = vsel %vm886, %v5263, %v5603
    %v5614 = vsel %vm1339, %v5613, %v5607
    %v5615 = vsel %vm1341, %v5614, %v5611
    %v5616 = vmul.f32 %v5004, 0.17677669
    %v5617 = vpack.c.bf16 %v5616, %v5616
    %v5618 = vpack.c.bf16 %v5156, %v5156
    %v5619 = vpack.c.bf16 %v5158, %v5158
    %v5621 = vsel %vm886, %v5617, 0
    %v5624 = vsel %vm886, %v5618, 0
    %5626 = vmatprep.subr.bf16.mxu0 0
    %5627 = vmatpush1.bf16.xpose.msra.mxu0 %v5624
    %5628 = vmatprep.subr.bf16.mxu0 0
    %5629 = vmatpush1.bf16.xpose.msra.mxu0 0
    %5630 = vmatprep.subr.bf16.mxu0 0
    %5631 = vmatpush1.bf16.xpose.msra.mxu0 0
    %5632 = vmatprep.subr.bf16.mxu0 0
    %5633 = vmatpush1.bf16.xpose.msra.mxu0 0
    %5634 = vmatprep.subr.bf16.mxu0 0
    %5635 = vmatpush1.bf16.xpose.msra.mxu0 0
    %5636 = vmatprep.subr.bf16.mxu0 0
    %5637 = vmatpush1.bf16.xpose.msra.mxu0 0
    %5638 = vmatprep.subr.bf16.mxu0 0
    %5639 = vmatpush1.bf16.xpose.msra.mxu0 0
    %5640 = vmatprep.subr.bf16.mxu0 0
    %5641 = vmatpush1.bf16.xpose.msra.mxu0 0
    %5642 = vmatprep.subr.bf16.mxu0 0
    %5643 = vmatpush1.bf16.xpose.msra.mxu0 0
    %5644 = vmatprep.subr.bf16.mxu0 0
    %5645 = vmatpush1.bf16.xpose.msra.mxu0 0
    %5646 = vmatprep.subr.bf16.mxu0 0
    %5647 = vmatpush1.bf16.xpose.msra.mxu0 0
    %5648 = vmatprep.subr.bf16.mxu0 0
    %5649 = vmatpush1.bf16.xpose.msra.mxu0 0
    %5650 = vmatprep.subr.bf16.mxu0 0
    %5651 = vmatpush1.bf16.xpose.msra.mxu0 0
    %5652 = vmatprep.subr.bf16.mxu0 0
    %5653 = vmatpush1.bf16.xpose.msra.mxu0 0
    %5654 = vmatprep.subr.bf16.mxu0 0
    %5655 = vmatpush1.bf16.xpose.msra.mxu0 0
    %5656 = vmatprep.subr.bf16.mxu0 0
    %5657 = vmatpush1.bf16.xpose.msra.mxu0 0
    %5658 = vmatprep.mubr.bf16.mxu0 0
    %5659 = vmatmul.mubr.bf16.gmra.mrb[0].mxu0 %v5621
    %v5660 = vpop.f32.mrb[0].mxu0
    %v5661 = vadd.f32 0.0, %v5660
    %v5662 = vpop.f32.mrb[0].mxu0
    %v5663 = vpop.f32.mrb[0].mxu0
    %v5664 = vpop.f32.mrb[0].mxu0
    %5665 = vdwg.mxu0
    %v5666 = vsel %vm933, %v5661, -inf
    %5667 = vmax.xlane.f32.xlu0 %v5666
    %v5668 = vpop.xlane.xlu0 %5667
    %v5669 = vsub.f32 %v5661, %v5668
    %v5670 = vmul.f32 %v5669, 1.442695
    %v5671 = vpow.pop %v5670
    %v5672 = vsel %vm933, %v5671, 0.0
    %5673 = vadd.xlane.f32.xlu0 %v5672
    %v5674 = vpop.xlane.xlu0 %5673
    %v5675 = vrcp.pop %v5674
    %v5676 = vmul.f32 %v5671, %v5675
    %v5677 = vpack.c.bf16 %v5676, %v5676
    %v5679 = vsel %vm933, %v5677, 0
    %v5682 = vsel %vm949, %v5619, 0
    %5684 = vmatprep.subr.bf16.mxu0 0
    %5685 = vmatpush1.bf16.msra.mxu0 %v5682
    %5686 = vmatprep.subr.bf16.mxu0 0
    %5687 = vmatpush1.bf16.msra.mxu0 0
    %5688 = vmatprep.subr.bf16.mxu0 0
    %5689 = vmatpush1.bf16.msra.mxu0 0
    %5690 = vmatprep.subr.bf16.mxu0 0
    %5691 = vmatpush1.bf16.msra.mxu0 0
    %5692 = vmatprep.subr.bf16.mxu0 0
    %5693 = vmatpush1.bf16.msra.mxu0 0
    %5694 = vmatprep.subr.bf16.mxu0 0
    %5695 = vmatpush1.bf16.msra.mxu0 0
    %5696 = vmatprep.subr.bf16.mxu0 0
    %5697 = vmatpush1.bf16.msra.mxu0 0
    %5698 = vmatprep.subr.bf16.mxu0 0
    %5699 = vmatpush1.bf16.msra.mxu0 0
    %5700 = vmatprep.subr.bf16.mxu0 0
    %5701 = vmatpush1.bf16.msra.mxu0 0
    %5702 = vmatprep.subr.bf16.mxu0 0
    %5703 = vmatpush1.bf16.msra.mxu0 0
    %5704 = vmatprep.subr.bf16.mxu0 0
    %5705 = vmatpush1.bf16.msra.mxu0 0
    %5706 = vmatprep.subr.bf16.mxu0 0
    %5707 = vmatpush1.bf16.msra.mxu0 0
    %5708 = vmatprep.subr.bf16.mxu0 0
    %5709 = vmatpush1.bf16.msra.mxu0 0
    %5710 = vmatprep.subr.bf16.mxu0 0
    %5711 = vmatpush1.bf16.msra.mxu0 0
    %5712 = vmatprep.subr.bf16.mxu0 0
    %5713 = vmatpush1.bf16.msra.mxu0 0
    %5714 = vmatprep.subr.bf16.mxu0 0
    %5715 = vmatpush1.bf16.msra.mxu0 0
    %5716 = vmatprep.mubr.bf16.mxu0 0
    %5717 = vmatmul.mubr.bf16.gmra.mrb[0].mxu0 %v5679
    %v5718 = vpop.f32.mrb[0].mxu0
    %v5719 = vadd.f32 0.0, %v5718
    %v5720 = vpop.f32.mrb[0].mxu0
    %v5721 = vpop.f32.mrb[0].mxu0
    %v5722 = vpop.f32.mrb[0].mxu0
    %5723 = vdwg.mxu0
    %5725 = vrot.lane.b32.xlu0 %v5617, 96
    %v5726 = vpop.permute.xlu0 %5725
    %5728 = vrot.lane.b32.xlu0 %v5618, 96
    %v5729 = vpop.permute.xlu0 %5728
    %v5731 = vsel %vm886, %v5726, 0
    %v5734 = vsel %vm886, %v5729, 0
    %5736 = vmatprep.subr.bf16.mxu0 0
    %5737 = vmatpush1.bf16.xpose.msra.mxu0 %v5734
    %5738 = vmatprep.subr.bf16.mxu0 0
    %5739 = vmatpush1.bf16.xpose.msra.mxu0 0
    %5740 = vmatprep.subr.bf16.mxu0 0
    %5741 = vmatpush1.bf16.xpose.msra.mxu0 0
    %5742 = vmatprep.subr.bf16.mxu0 0
    %5743 = vmatpush1.bf16.xpose.msra.mxu0 0
    %5744 = vmatprep.subr.bf16.mxu0 0
    %5745 = vmatpush1.bf16.xpose.msra.mxu0 0
    %5746 = vmatprep.subr.bf16.mxu0 0
    %5747 = vmatpush1.bf16.xpose.msra.mxu0 0
    %5748 = vmatprep.subr.bf16.mxu0 0
    %5749 = vmatpush1.bf16.xpose.msra.mxu0 0
    %5750 = vmatprep.subr.bf16.mxu0 0
    %5751 = vmatpush1.bf16.xpose.msra.mxu0 0
    %5752 = vmatprep.subr.bf16.mxu0 0
    %5753 = vmatpush1.bf16.xpose.msra.mxu0 0
    %5754 = vmatprep.subr.bf16.mxu0 0
    %5755 = vmatpush1.bf16.xpose.msra.mxu0 0
    %5756 = vmatprep.subr.bf16.mxu0 0
    %5757 = vmatpush1.bf16.xpose.msra.mxu0 0
    %5758 = vmatprep.subr.bf16.mxu0 0
    %5759 = vmatpush1.bf16.xpose.msra.mxu0 0
    %5760 = vmatprep.subr.bf16.mxu0 0
    %5761 = vmatpush1.bf16.xpose.msra.mxu0 0
    %5762 = vmatprep.subr.bf16.mxu0 0
    %5763 = vmatpush1.bf16.xpose.msra.mxu0 0
    %5764 = vmatprep.subr.bf16.mxu0 0
    %5765 = vmatpush1.bf16.xpose.msra.mxu0 0
    %5766 = vmatprep.subr.bf16.mxu0 0
    %5767 = vmatpush1.bf16.xpose.msra.mxu0 0
    %5768 = vmatprep.mubr.bf16.mxu0 0
    %5769 = vmatmul.mubr.bf16.gmra.mrb[0].mxu0 %v5731
    %v5770 = vpop.f32.mrb[0].mxu0
    %v5771 = vadd.f32 0.0, %v5770
    %v5772 = vpop.f32.mrb[0].mxu0
    %v5773 = vpop.f32.mrb[0].mxu0
    %v5774 = vpop.f32.mrb[0].mxu0
    %5775 = vdwg.mxu0
    %v5776 = vsel %vm933, %v5771, -inf
    %5777 = vmax.xlane.f32.xlu0 %v5776
    %v5778 = vpop.xlane.xlu0 %5777
    %v5779 = vsub.f32 %v5771, %v5778
    %v5780 = vmul.f32 %v5779, 1.442695
    %v5781 = vpow.pop %v5780
    %v5782 = vsel %vm933, %v5781, 0.0
    %5783 = vadd.xlane.f32.xlu0 %v5782
    %v5784 = vpop.xlane.xlu0 %5783
    %v5785 = vrcp.pop %v5784
    %v5786 = vmul.f32 %v5781, %v5785
    %v5787 = vpack.c.bf16 %v5786, %v5786
    %5789 = vrot.lane.b32.xlu0 %v5619, 96
    %v5790 = vpop.permute.xlu0 %5789
    %v5792 = vsel %vm933, %v5787, 0
    %v5795 = vsel %vm949, %v5790, 0
    %5797 = vmatprep.subr.bf16.mxu0 0
    %5798 = vmatpush1.bf16.msra.mxu0 %v5795
    %5799 = vmatprep.subr.bf16.mxu0 0
    %5800 = vmatpush1.bf16.msra.mxu0 0
    %5801 = vmatprep.subr.bf16.mxu0 0
    %5802 = vmatpush1.bf16.msra.mxu0 0
    %5803 = vmatprep.subr.bf16.mxu0 0
    %5804 = vmatpush1.bf16.msra.mxu0 0
    %5805 = vmatprep.subr.bf16.mxu0 0
    %5806 = vmatpush1.bf16.msra.mxu0 0
    %5807 = vmatprep.subr.bf16.mxu0 0
    %5808 = vmatpush1.bf16.msra.mxu0 0
    %5809 = vmatprep.subr.bf16.mxu0 0
    %5810 = vmatpush1.bf16.msra.mxu0 0
    %5811 = vmatprep.subr.bf16.mxu0 0
    %5812 = vmatpush1.bf16.msra.mxu0 0
    %5813 = vmatprep.subr.bf16.mxu0 0
    %5814 = vmatpush1.bf16.msra.mxu0 0
    %5815 = vmatprep.subr.bf16.mxu0 0
    %5816 = vmatpush1.bf16.msra.mxu0 0
    %5817 = vmatprep.subr.bf16.mxu0 0
    %5818 = vmatpush1.bf16.msra.mxu0 0
    %5819 = vmatprep.subr.bf16.mxu0 0
    %5820 = vmatpush1.bf16.msra.mxu0 0
    %5821 = vmatprep.subr.bf16.mxu0 0
    %5822 = vmatpush1.bf16.msra.mxu0 0
    %5823 = vmatprep.subr.bf16.mxu0 0
    %5824 = vmatpush1.bf16.msra.mxu0 0
    %5825 = vmatprep.subr.bf16.mxu0 0
    %5826 = vmatpush1.bf16.msra.mxu0 0
    %5827 = vmatprep.subr.bf16.mxu0 0
    %5828 = vmatpush1.bf16.msra.mxu0 0
    %5829 = vmatprep.mubr.bf16.mxu0 0
    %5830 = vmatmul.mubr.bf16.gmra.mrb[0].mxu0 %v5792
    %v5831 = vpop.f32.mrb[0].mxu0
    %v5832 = vadd.f32 0.0, %v5831
    %v5833 = vpop.f32.mrb[0].mxu0
    %v5834 = vpop.f32.mrb[0].mxu0
    %v5835 = vpop.f32.mrb[0].mxu0
    %5836 = vdwg.mxu0
    %5837 = vrot.lane.b32.xlu0 %v5617, 64
    %v5838 = vpop.permute.xlu0 %5837
    %5839 = vrot.lane.b32.xlu0 %v5618, 64
    %v5840 = vpop.permute.xlu0 %5839
    %v5842 = vsel %vm886, %v5838, 0
    %v5845 = vsel %vm886, %v5840, 0
    %5847 = vmatprep.subr.bf16.mxu0 0
    %5848 = vmatpush1.bf16.xpose.msra.mxu0 %v5845
    %5849 = vmatprep.subr.bf16.mxu0 0
    %5850 = vmatpush1.bf16.xpose.msra.mxu0 0
    %5851 = vmatprep.subr.bf16.mxu0 0
    %5852 = vmatpush1.bf16.xpose.msra.mxu0 0
    %5853 = vmatprep.subr.bf16.mxu0 0
    %5854 = vmatpush1.bf16.xpose.msra.mxu0 0
    %5855 = vmatprep.subr.bf16.mxu0 0
    %5856 = vmatpush1.bf16.xpose.msra.mxu0 0
    %5857 = vmatprep.subr.bf16.mxu0 0
    %5858 = vmatpush1.bf16.xpose.msra.mxu0 0
    %5859 = vmatprep.subr.bf16.mxu0 0
    %5860 = vmatpush1.bf16.xpose.msra.mxu0 0
    %5861 = vmatprep.subr.bf16.mxu0 0
    %5862 = vmatpush1.bf16.xpose.msra.mxu0 0
    %5863 = vmatprep.subr.bf16.mxu0 0
    %5864 = vmatpush1.bf16.xpose.msra.mxu0 0
    %5865 = vmatprep.subr.bf16.mxu0 0
    %5866 = vmatpush1.bf16.xpose.msra.mxu0 0
    %5867 = vmatprep.subr.bf16.mxu0 0
    %5868 = vmatpush1.bf16.xpose.msra.mxu0 0
    %5869 = vmatprep.subr.bf16.mxu0 0
    %5870 = vmatpush1.bf16.xpose.msra.mxu0 0
    %5871 = vmatprep.subr.bf16.mxu0 0
    %5872 = vmatpush1.bf16.xpose.msra.mxu0 0
    %5873 = vmatprep.subr.bf16.mxu0 0
    %5874 = vmatpush1.bf16.xpose.msra.mxu0 0
    %5875 = vmatprep.subr.bf16.mxu0 0
    %5876 = vmatpush1.bf16.xpose.msra.mxu0 0
    %5877 = vmatprep.subr.bf16.mxu0 0
    %5878 = vmatpush1.bf16.xpose.msra.mxu0 0
    %5879 = vmatprep.mubr.bf16.mxu0 0
    %5880 = vmatmul.mubr.bf16.gmra.mrb[0].mxu0 %v5842
    %v5881 = vpop.f32.mrb[0].mxu0
    %v5882 = vadd.f32 0.0, %v5881
    %v5883 = vpop.f32.mrb[0].mxu0
    %v5884 = vpop.f32.mrb[0].mxu0
    %v5885 = vpop.f32.mrb[0].mxu0
    %5886 = vdwg.mxu0
    %v5887 = vsel %vm933, %v5882, -inf
    %5888 = vmax.xlane.f32.xlu0 %v5887
    %v5889 = vpop.xlane.xlu0 %5888
    %v5890 = vsub.f32 %v5882, %v5889
    %v5891 = vmul.f32 %v5890, 1.442695
    %v5892 = vpow.pop %v5891
    %v5893 = vsel %vm933, %v5892, 0.0
    %5894 = vadd.xlane.f32.xlu0 %v5893
    %v5895 = vpop.xlane.xlu0 %5894
    %v5896 = vrcp.pop %v5895
    %v5897 = vmul.f32 %v5892, %v5896
    %v5898 = vpack.c.bf16 %v5897, %v5897
    %5899 = vrot.lane.b32.xlu0 %v5619, 64
    %v5900 = vpop.permute.xlu0 %5899
    %v5902 = vsel %vm933, %v5898, 0
    %v5905 = vsel %vm949, %v5900, 0
    %5907 = vmatprep.subr.bf16.mxu0 0
    %5908 = vmatpush1.bf16.msra.mxu0 %v5905
    %5909 = vmatprep.subr.bf16.mxu0 0
    %5910 = vmatpush1.bf16.msra.mxu0 0
    %5911 = vmatprep.subr.bf16.mxu0 0
    %5912 = vmatpush1.bf16.msra.mxu0 0
    %5913 = vmatprep.subr.bf16.mxu0 0
    %5914 = vmatpush1.bf16.msra.mxu0 0
    %5915 = vmatprep.subr.bf16.mxu0 0
    %5916 = vmatpush1.bf16.msra.mxu0 0
    %5917 = vmatprep.subr.bf16.mxu0 0
    %5918 = vmatpush1.bf16.msra.mxu0 0
    %5919 = vmatprep.subr.bf16.mxu0 0
    %5920 = vmatpush1.bf16.msra.mxu0 0
    %5921 = vmatprep.subr.bf16.mxu0 0
    %5922 = vmatpush1.bf16.msra.mxu0 0
    %5923 = vmatprep.subr.bf16.mxu0 0
    %5924 = vmatpush1.bf16.msra.mxu0 0
    %5925 = vmatprep.subr.bf16.mxu0 0
    %5926 = vmatpush1.bf16.msra.mxu0 0
    %5927 = vmatprep.subr.bf16.mxu0 0
    %5928 = vmatpush1.bf16.msra.mxu0 0
    %5929 = vmatprep.subr.bf16.mxu0 0
    %5930 = vmatpush1.bf16.msra.mxu0 0
    %5931 = vmatprep.subr.bf16.mxu0 0
    %5932 = vmatpush1.bf16.msra.mxu0 0
    %5933 = vmatprep.subr.bf16.mxu0 0
    %5934 = vmatpush1.bf16.msra.mxu0 0
    %5935 = vmatprep.subr.bf16.mxu0 0
    %5936 = vmatpush1.bf16.msra.mxu0 0
    %5937 = vmatprep.subr.bf16.mxu0 0
    %5938 = vmatpush1.bf16.msra.mxu0 0
    %5939 = vmatprep.mubr.bf16.mxu0 0
    %5940 = vmatmul.mubr.bf16.gmra.mrb[0].mxu0 %v5902
    %v5941 = vpop.f32.mrb[0].mxu0
    %v5942 = vadd.f32 0.0, %v5941
    %v5943 = vpop.f32.mrb[0].mxu0
    %v5944 = vpop.f32.mrb[0].mxu0
    %v5945 = vpop.f32.mrb[0].mxu0
    %5946 = vdwg.mxu0
    %5947 = vrot.lane.b32.xlu0 %v5617, 32
    %v5948 = vpop.permute.xlu0 %5947
    %5949 = vrot.lane.b32.xlu0 %v5618, 32
    %v5950 = vpop.permute.xlu0 %5949
    %v5952 = vsel %vm886, %v5948, 0
    %v5955 = vsel %vm886, %v5950, 0
    %5957 = vmatprep.subr.bf16.mxu0 0
    %5958 = vmatpush1.bf16.xpose.msra.mxu0 %v5955
    %5959 = vmatprep.subr.bf16.mxu0 0
    %5960 = vmatpush1.bf16.xpose.msra.mxu0 0
    %5961 = vmatprep.subr.bf16.mxu0 0
    %5962 = vmatpush1.bf16.xpose.msra.mxu0 0
    %5963 = vmatprep.subr.bf16.mxu0 0
    %5964 = vmatpush1.bf16.xpose.msra.mxu0 0
    %5965 = vmatprep.subr.bf16.mxu0 0
    %5966 = vmatpush1.bf16.xpose.msra.mxu0 0
    %5967 = vmatprep.subr.bf16.mxu0 0
    %5968 = vmatpush1.bf16.xpose.msra.mxu0 0
    %5969 = vmatprep.subr.bf16.mxu0 0
    %5970 = vmatpush1.bf16.xpose.msra.mxu0 0
    %5971 = vmatprep.subr.bf16.mxu0 0
    %5972 = vmatpush1.bf16.xpose.msra.mxu0 0
    %5973 = vmatprep.subr.bf16.mxu0 0
    %5974 = vmatpush1.bf16.xpose.msra.mxu0 0
    %5975 = vmatprep.subr.bf16.mxu0 0
    %5976 = vmatpush1.bf16.xpose.msra.mxu0 0
    %5977 = vmatprep.subr.bf16.mxu0 0
    %5978 = vmatpush1.bf16.xpose.msra.mxu0 0
    %5979 = vmatprep.subr.bf16.mxu0 0
    %5980 = vmatpush1.bf16.xpose.msra.mxu0 0
    %5981 = vmatprep.subr.bf16.mxu0 0
    %5982 = vmatpush1.bf16.xpose.msra.mxu0 0
    %5983 = vmatprep.subr.bf16.mxu0 0
    %5984 = vmatpush1.bf16.xpose.msra.mxu0 0
    %5985 = vmatprep.subr.bf16.mxu0 0
    %5986 = vmatpush1.bf16.xpose.msra.mxu0 0
    %5987 = vmatprep.subr.bf16.mxu0 0
    %5988 = vmatpush1.bf16.xpose.msra.mxu0 0
    %5989 = vmatprep.mubr.bf16.mxu0 0
    %5990 = vmatmul.mubr.bf16.gmra.mrb[0].mxu0 %v5952
    %v5991 = vpop.f32.mrb[0].mxu0
    %v5992 = vadd.f32 0.0, %v5991
    %v5993 = vpop.f32.mrb[0].mxu0
    %v5994 = vpop.f32.mrb[0].mxu0
    %v5995 = vpop.f32.mrb[0].mxu0
    %5996 = vdwg.mxu0
    %v5997 = vsel %vm933, %v5992, -inf
    %5998 = vmax.xlane.f32.xlu0 %v5997
    %v5999 = vpop.xlane.xlu0 %5998
    %v6000 = vsub.f32 %v5992, %v5999
    %v6001 = vmul.f32 %v6000, 1.442695
    %v6002 = vpow.pop %v6001
    %v6003 = vsel %vm933, %v6002, 0.0
    %6004 = vadd.xlane.f32.xlu0 %v6003
    %v6005 = vpop.xlane.xlu0 %6004
    %v6006 = vrcp.pop %v6005
    %v6007 = vmul.f32 %v6002, %v6006
    %v6008 = vpack.c.bf16 %v6007, %v6007
    %6009 = vrot.lane.b32.xlu0 %v5619, 32
    %v6010 = vpop.permute.xlu0 %6009
    %v6012 = vsel %vm933, %v6008, 0
    %v6015 = vsel %vm949, %v6010, 0
    %6017 = vmatprep.subr.bf16.mxu0 0
    %6018 = vmatpush1.bf16.msra.mxu0 %v6015
    %6019 = vmatprep.subr.bf16.mxu0 0
    %6020 = vmatpush1.bf16.msra.mxu0 0
    %6021 = vmatprep.subr.bf16.mxu0 0
    %6022 = vmatpush1.bf16.msra.mxu0 0
    %6023 = vmatprep.subr.bf16.mxu0 0
    %6024 = vmatpush1.bf16.msra.mxu0 0
    %6025 = vmatprep.subr.bf16.mxu0 0
    %6026 = vmatpush1.bf16.msra.mxu0 0
    %6027 = vmatprep.subr.bf16.mxu0 0
    %6028 = vmatpush1.bf16.msra.mxu0 0
    %6029 = vmatprep.subr.bf16.mxu0 0
    %6030 = vmatpush1.bf16.msra.mxu0 0
    %6031 = vmatprep.subr.bf16.mxu0 0
    %6032 = vmatpush1.bf16.msra.mxu0 0
    %6033 = vmatprep.subr.bf16.mxu0 0
    %6034 = vmatpush1.bf16.msra.mxu0 0
    %6035 = vmatprep.subr.bf16.mxu0 0
    %6036 = vmatpush1.bf16.msra.mxu0 0
    %6037 = vmatprep.subr.bf16.mxu0 0
    %6038 = vmatpush1.bf16.msra.mxu0 0
    %6039 = vmatprep.subr.bf16.mxu0 0
    %6040 = vmatpush1.bf16.msra.mxu0 0
    %6041 = vmatprep.subr.bf16.mxu0 0
    %6042 = vmatpush1.bf16.msra.mxu0 0
    %6043 = vmatprep.subr.bf16.mxu0 0
    %6044 = vmatpush1.bf16.msra.mxu0 0
    %6045 = vmatprep.subr.bf16.mxu0 0
    %6046 = vmatpush1.bf16.msra.mxu0 0
    %6047 = vmatprep.subr.bf16.mxu0 0
    %6048 = vmatpush1.bf16.msra.mxu0 0
    %6049 = vmatprep.mubr.bf16.mxu0 0
    %6050 = vmatmul.mubr.bf16.gmra.mrb[0].mxu0 %v6012
    %v6051 = vpop.f32.mrb[0].mxu0
    %v6052 = vadd.f32 0.0, %v6051
    %v6053 = vpop.f32.mrb[0].mxu0
    %v6054 = vpop.f32.mrb[0].mxu0
    %v6055 = vpop.f32.mrb[0].mxu0
    %6056 = vdwg.mxu0
    %6058 = vrot.lane.b32.xlu0 %v5832, 32
    %v6059 = vpop.permute.xlu0 %6058
    %6062 = vrot.lane.b32.xlu0 %v5942, 64
    %v6063 = vpop.permute.xlu0 %6062
    %6066 = vrot.lane.b32.xlu0 %v6052, 96
    %v6067 = vpop.permute.xlu0 %6066
    %v6069 = vsel %vm886, %v5719, %v6059
    %v6070 = vsel %vm1339, %v6069, %v6063
    %v6071 = vsel %vm1341, %v6070, %v6067
    %s6072 = scalar_lea.vmem %s31, 64
    %v6073 = vld [vmem:[%s6072] sm:$0xf]
    %v6074 = vld [vmem:[%s6072 + $0x4] sm:$0xf]
    %v6075 = vld [vmem:[%s6072 + $0x8] sm:$0xf]
    %v6076 = vld [vmem:[%s6072 + $0xc] sm:$0xf]
    %v6077 = vld [vmem:[%s6072 + $0x10] sm:$0xf]
    %v6078 = vld [vmem:[%s6072 + $0x14] sm:$0xf]
    %v6079 = vld [vmem:[%s6072 + $0x18] sm:$0xf]
    %v6080 = vld [vmem:[%s6072 + $0x1c] sm:$0xf]
    %v6081 = vld [vmem:[%s6072 + $0x20] sm:$0xf]
    %v6082 = vld [vmem:[%s6072 + $0x24] sm:$0xf]
    %v6083 = vld [vmem:[%s6072 + $0x28] sm:$0xf]
    %v6084 = vld [vmem:[%s6072 + $0x2c] sm:$0xf]
    %v6085 = vld [vmem:[%s6072 + $0x30] sm:$0xf]
    %v6086 = vld [vmem:[%s6072 + $0x34] sm:$0xf]
    %v6087 = vld [vmem:[%s6072 + $0x38] sm:$0xf]
    %v6088 = vld [vmem:[%s6072 + $0x3c] sm:$0xf]
    %v6089 = vpack.c.bf16 %v6071, %v5615
    %s6090 = scalar_lea.vmem %s33, 1
    %v6091 = vld [vmem:[%s6090] sm:$0x1]
    %v6093 = vlaneseq
    %v6094 = vshrl.u32 %v6093, 7
    %v6095 = vsub.s32 0, %v6094
    %v6096 = vrot.slane %v6091, %v6095
    %v6114 = vunpack.c.l.b16 %v6073
    %v6115 = vunpack.c.l.b16 %v6074
    %v6116 = vunpack.c.l.b16 %v6075
    %v6117 = vunpack.c.l.b16 %v6076
    %v6118 = vunpack.c.l.b16 %v6077
    %v6119 = vunpack.c.l.b16 %v6078
    %v6120 = vunpack.c.l.b16 %v6079
    %v6121 = vunpack.c.l.b16 %v6080
    %v6122 = vunpack.c.l.b16 %v6081
    %v6123 = vunpack.c.l.b16 %v6082
    %v6124 = vunpack.c.l.b16 %v6083
    %v6125 = vunpack.c.l.b16 %v6084
    %v6126 = vunpack.c.l.b16 %v6085
    %v6127 = vunpack.c.l.b16 %v6086
    %v6128 = vunpack.c.l.b16 %v6087
    %v6129 = vunpack.c.l.b16 %v6088
    %v6130 = vpack.c.b16 %v6115, %v6114
    %v6131 = vpack.c.b16 %v6117, %v6116
    %v6132 = vpack.c.b16 %v6119, %v6118
    %v6133 = vpack.c.b16 %v6121, %v6120
    %v6134 = vpack.c.b16 %v6123, %v6122
    %v6135 = vpack.c.b16 %v6125, %v6124
    %v6136 = vpack.c.b16 %v6127, %v6126
    %v6137 = vpack.c.b16 %v6129, %v6128
    %6146 = vmatprep.subr.bf16.mxu0 0
    %6147 = vmatpush1.bf16.msra.mxu0 %v6130
    %6148 = vmatprep.subr.bf16.mxu0 0
    %6149 = vmatpush1.bf16.msra.mxu0 %v6131
    %6150 = vmatprep.subr.bf16.mxu0 0
    %6151 = vmatpush1.bf16.msra.mxu0 %v6132
    %6152 = vmatprep.subr.bf16.mxu0 0
    %6153 = vmatpush1.bf16.msra.mxu0 %v6133
    %6154 = vmatprep.subr.bf16.mxu0 0
    %6155 = vmatpush1.bf16.msra.mxu0 %v6134
    %6156 = vmatprep.subr.bf16.mxu0 0
    %6157 = vmatpush1.bf16.msra.mxu0 %v6135
    %6158 = vmatprep.subr.bf16.mxu0 0
    %6159 = vmatpush1.bf16.msra.mxu0 %v6136
    %6160 = vmatprep.subr.bf16.mxu0 0
    %6161 = vmatpush1.bf16.msra.mxu0 %v6137
    %6162 = vmatprep.subr.bf16.mxu0 0
    %6163 = vmatpush1.bf16.msra.mxu0 0
    %6164 = vmatprep.subr.bf16.mxu0 0
    %6165 = vmatpush1.bf16.msra.mxu0 0
    %6166 = vmatprep.subr.bf16.mxu0 0
    %6167 = vmatpush1.bf16.msra.mxu0 0
    %6168 = vmatprep.subr.bf16.mxu0 0
    %6169 = vmatpush1.bf16.msra.mxu0 0
    %6170 = vmatprep.subr.bf16.mxu0 0
    %6171 = vmatpush1.bf16.msra.mxu0 0
    %6172 = vmatprep.subr.bf16.mxu0 0
    %6173 = vmatpush1.bf16.msra.mxu0 0
    %6174 = vmatprep.subr.bf16.mxu0 0
    %6175 = vmatpush1.bf16.msra.mxu0 0
    %6176 = vmatprep.subr.bf16.mxu0 0
    %6177 = vmatpush1.bf16.msra.mxu0 0
    %6178 = vmatprep.mubr.bf16.mxu0 0
    %6179 = vmatmul.mubr.bf16.gmra.mrb[0].mxu0 %v6089
    %v6180 = vpop.f32.mrb[0].mxu0
    %v6181 = vadd.f32 %v6096, %v6180
    %v6182 = vpop.f32.mrb[0].mxu0
    %v6183 = vpop.f32.mrb[0].mxu0
    %v6184 = vadd.f32 %v6096, %v6183
    %v6185 = vpop.f32.mrb[0].mxu0
    %6186 = vdwg.mxu0
    %v6187 = vadd.f32 %v4890, %v6181
    %v6188 = vadd.f32 %v4891, %v6184
    %s6189 = scalar_lea.vmem [#allocation22], 1
    %v6190 = vld [vmem:[%s6189] sm:$0x1]
    %s6191 = scalar_lea.vmem [#allocation24], 1
    %v6192 = vld [vmem:[%s6191] sm:$0x1]
    %6193 = vadd.xlane.f32.xlu0 %v6187
    %v6194 = vpop.xlane.xlu0 %6193
    %6195 = vadd.xlane.f32.xlu0 %v6188
    %v6196 = vpop.xlane.xlu0 %6195
    %v6197 = vmul.f32 %v6194, %v1920
    %v6198 = vmul.f32 %v6196, %v1920
    %v6199 = vsub.f32 %v6187, %v6197
    %v6200 = vsub.f32 %v6188, %v6198
    %v6201 = vmul.f32 %v6199, %v6199
    %v6202 = vmul.f32 %v6200, %v6200
    %6203 = vadd.xlane.f32.xlu0 %v6201
    %v6204 = vpop.xlane.xlu0 %6203
    %6205 = vadd.xlane.f32.xlu0 %v6202
    %v6206 = vpop.xlane.xlu0 %6205
    %v6207 = vmul.f32 %v6204, %v1920
    %v6208 = vmul.f32 %v6206, %v1920
    %v6209 = vadd.f32 %v6207, 1e-05
    %v6210 = vadd.f32 %v6208, 1e-05
    %v6211 = vrsqrt.pop %v6209
    %v6212 = vrsqrt.pop %v6210
    %v6213 = vmul.f32 %v6199, %v6211
    %v6214 = vmul.f32 %v6200, %v6212
    %v6216 = vlaneseq
    %v6217 = vshrl.u32 %v6216, 7
    %v6218 = vsub.s32 0, %v6217
    %v6219 = vrot.slane %v6190, %v6218
    %v6221 = vmul.f32 %v6213, %v6219
    %v6222 = vmul.f32 %v6214, %v6219
    %v6224 = vlaneseq
    %v6225 = vshrl.u32 %v6224, 7
    %v6226 = vsub.s32 0, %v6225
    %v6227 = vrot.slane %v6192, %v6226
    %v6229 = vadd.f32 %v6221, %v6227
    %v6230 = vadd.f32 %v6222, %v6227
    %s6231 = scalar_lea.vmem [#allocation13], 64
    %v6232 = vld [vmem:[%s6231] sm:$0xf]
    %v6233 = vld [vmem:[%s6231 + $0x4] sm:$0xf]
    %v6234 = vld [vmem:[%s6231 + $0x8] sm:$0xf]
    %v6235 = vld [vmem:[%s6231 + $0xc] sm:$0xf]
    %v6236 = vld [vmem:[%s6231 + $0x10] sm:$0xf]
    %v6237 = vld [vmem:[%s6231 + $0x14] sm:$0xf]
    %v6238 = vld [vmem:[%s6231 + $0x18] sm:$0xf]
    %v6239 = vld [vmem:[%s6231 + $0x1c] sm:$0xf]
    %v6240 = vld [vmem:[%s6231 + $0x20] sm:$0xf]
    %v6241 = vld [vmem:[%s6231 + $0x24] sm:$0xf]
    %v6242 = vld [vmem:[%s6231 + $0x28] sm:$0xf]
    %v6243 = vld [vmem:[%s6231 + $0x2c] sm:$0xf]
    %v6244 = vld [vmem:[%s6231 + $0x30] sm:$0xf]
    %v6245 = vld [vmem:[%s6231 + $0x34] sm:$0xf]
    %v6246 = vld [vmem:[%s6231 + $0x38] sm:$0xf]
    %v6247 = vld [vmem:[%s6231 + $0x3c] sm:$0xf]
    %v6248 = vpack.c.bf16 %v6230, %v6229
    %s6249 = scalar_lea.vmem [#allocation15], 1
    %v6250 = vld [vmem:[%s6249] sm:$0x1]
    %v6252 = vlaneseq
    %v6253 = vshrl.u32 %v6252, 7
    %v6254 = vsub.s32 0, %v6253
    %v6255 = vrot.slane %v6250, %v6254
    %v6273 = vunpack.c.l.b16 %v6232
    %v6274 = vunpack.c.l.b16 %v6233
    %v6275 = vunpack.c.l.b16 %v6234
    %v6276 = vunpack.c.l.b16 %v6235
    %v6277 = vunpack.c.l.b16 %v6236
    %v6278 = vunpack.c.l.b16 %v6237
    %v6279 = vunpack.c.l.b16 %v6238
    %v6280 = vunpack.c.l.b16 %v6239
    %v6281 = vunpack.c.l.b16 %v6240
    %v6282 = vunpack.c.l.b16 %v6241
    %v6283 = vunpack.c.l.b16 %v6242
    %v6284 = vunpack.c.l.b16 %v6243
    %v6285 = vunpack.c.l.b16 %v6244
    %v6286 = vunpack.c.l.b16 %v6245
    %v6287 = vunpack.c.l.b16 %v6246
    %v6288 = vunpack.c.l.b16 %v6247
    %v6289 = vpack.c.b16 %v6274, %v6273
    %v6290 = vpack.c.b16 %v6276, %v6275
    %v6291 = vpack.c.b16 %v6278, %v6277
    %v6292 = vpack.c.b16 %v6280, %v6279
    %v6293 = vpack.c.b16 %v6282, %v6281
    %v6294 = vpack.c.b16 %v6284, %v6283
    %v6295 = vpack.c.b16 %v6286, %v6285
    %v6296 = vpack.c.b16 %v6288, %v6287
    %6305 = vmatprep.subr.bf16.mxu0 0
    %6306 = vmatpush1.bf16.msra.mxu0 %v6289
    %6307 = vmatprep.subr.bf16.mxu0 0
    %6308 = vmatpush1.bf16.msra.mxu0 %v6290
    %6309 = vmatprep.subr.bf16.mxu0 0
    %6310 = vmatpush1.bf16.msra.mxu0 %v6291
    %6311 = vmatprep.subr.bf16.mxu0 0
    %6312 = vmatpush1.bf16.msra.mxu0 %v6292
    %6313 = vmatprep.subr.bf16.mxu0 0
    %6314 = vmatpush1.bf16.msra.mxu0 %v6293
    %6315 = vmatprep.subr.bf16.mxu0 0
    %6316 = vmatpush1.bf16.msra.mxu0 %v6294
    %6317 = vmatprep.subr.bf16.mxu0 0
    %6318 = vmatpush1.bf16.msra.mxu0 %v6295
    %6319 = vmatprep.subr.bf16.mxu0 0
    %6320 = vmatpush1.bf16.msra.mxu0 %v6296
    %6321 = vmatprep.subr.bf16.mxu0 0
    %6322 = vmatpush1.bf16.msra.mxu0 0
    %6323 = vmatprep.subr.bf16.mxu0 0
    %6324 = vmatpush1.bf16.msra.mxu0 0
    %6325 = vmatprep.subr.bf16.mxu0 0
    %6326 = vmatpush1.bf16.msra.mxu0 0
    %6327 = vmatprep.subr.bf16.mxu0 0
    %6328 = vmatpush1.bf16.msra.mxu0 0
    %6329 = vmatprep.subr.bf16.mxu0 0
    %6330 = vmatpush1.bf16.msra.mxu0 0
    %6331 = vmatprep.subr.bf16.mxu0 0
    %6332 = vmatpush1.bf16.msra.mxu0 0
    %6333 = vmatprep.subr.bf16.mxu0 0
    %6334 = vmatpush1.bf16.msra.mxu0 0
    %6335 = vmatprep.subr.bf16.mxu0 0
    %6336 = vmatpush1.bf16.msra.mxu0 0
    %6337 = vmatprep.mubr.bf16.mxu0 0
    %6338 = vmatmul.mubr.bf16.gmra.mrb[0].mxu0 %v6248
    %v6339 = vpop.f32.mrb[0].mxu0
    %v6340 = vadd.f32 %v6255, %v6339
    %v6341 = vpop.f32.mrb[0].mxu0
    %v6342 = vpop.f32.mrb[0].mxu0
    %v6343 = vadd.f32 %v6255, %v6342
    %v6344 = vpop.f32.mrb[0].mxu0
    %6345 = vdwg.mxu0
    %v6346 = vmax.f32 %v6340, 0.0
    %v6347 = vmax.f32 %v6343, 0.0
    %s6348 = scalar_lea.vmem [#allocation16], 64
    %v6349 = vld [vmem:[%s6348] sm:$0xf]
    %v6350 = vld [vmem:[%s6348 + $0x4] sm:$0xf]
    %v6351 = vld [vmem:[%s6348 + $0x8] sm:$0xf]
    %v6352 = vld [vmem:[%s6348 + $0xc] sm:$0xf]
    %v6353 = vld [vmem:[%s6348 + $0x10] sm:$0xf]
    %v6354 = vld [vmem:[%s6348 + $0x14] sm:$0xf]
    %v6355 = vld [vmem:[%s6348 + $0x18] sm:$0xf]
    %v6356 = vld [vmem:[%s6348 + $0x1c] sm:$0xf]
    %v6357 = vld [vmem:[%s6348 + $0x20] sm:$0xf]
    %v6358 = vld [vmem:[%s6348 + $0x24] sm:$0xf]
    %v6359 = vld [vmem:[%s6348 + $0x28] sm:$0xf]
    %v6360 = vld [vmem:[%s6348 + $0x2c] sm:$0xf]
    %v6361 = vld [vmem:[%s6348 + $0x30] sm:$0xf]
    %v6362 = vld [vmem:[%s6348 + $0x34] sm:$0xf]
    %v6363 = vld [vmem:[%s6348 + $0x38] sm:$0xf]
    %v6364 = vld [vmem:[%s6348 + $0x3c] sm:$0xf]
    %v6365 = vpack.c.bf16 %v6347, %v6346
    %s6366 = scalar_lea.vmem [#allocation18], 1
    %v6367 = vld [vmem:[%s6366] sm:$0x1]
    %v6369 = vlaneseq
    %v6370 = vshrl.u32 %v6369, 7
    %v6371 = vsub.s32 0, %v6370
    %v6372 = vrot.slane %v6367, %v6371
    %v6390 = vunpack.c.l.b16 %v6349
    %v6391 = vunpack.c.l.b16 %v6350
    %v6392 = vunpack.c.l.b16 %v6351
    %v6393 = vunpack.c.l.b16 %v6352
    %v6394 = vunpack.c.l.b16 %v6353
    %v6395 = vunpack.c.l.b16 %v6354
    %v6396 = vunpack.c.l.b16 %v6355
    %v6397 = vunpack.c.l.b16 %v6356
    %v6398 = vunpack.c.l.b16 %v6357
    %v6399 = vunpack.c.l.b16 %v6358
    %v6400 = vunpack.c.l.b16 %v6359
    %v6401 = vunpack.c.l.b16 %v6360
    %v6402 = vunpack.c.l.b16 %v6361
    %v6403 = vunpack.c.l.b16 %v6362
    %v6404 = vunpack.c.l.b16 %v6363
    %v6405 = vunpack.c.l.b16 %v6364
    %v6406 = vpack.c.b16 %v6391, %v6390
    %v6407 = vpack.c.b16 %v6393, %v6392
    %v6408 = vpack.c.b16 %v6395, %v6394
    %v6409 = vpack.c.b16 %v6397, %v6396
    %v6410 = vpack.c.b16 %v6399, %v6398
    %v6411 = vpack.c.b16 %v6401, %v6400
    %v6412 = vpack.c.b16 %v6403, %v6402
    %v6413 = vpack.c.b16 %v6405, %v6404
    %6422 = vmatprep.subr.bf16.mxu0 0
    %6423 = vmatpush1.bf16.msra.mxu0 %v6406
    %6424 = vmatprep.subr.bf16.mxu0 0
    %6425 = vmatpush1.bf16.msra.mxu0 %v6407
    %6426 = vmatprep.subr.bf16.mxu0 0
    %6427 = vmatpush1.bf16.msra.mxu0 %v6408
    %6428 = vmatprep.subr.bf16.mxu0 0
    %6429 = vmatpush1.bf16.msra.mxu0 %v6409
    %6430 = vmatprep.subr.bf16.mxu0 0
    %6431 = vmatpush1.bf16.msra.mxu0 %v6410
    %6432 = vmatprep.subr.bf16.mxu0 0
    %6433 = vmatpush1.bf16.msra.mxu0 %v6411
    %6434 = vmatprep.subr.bf16.mxu0 0
    %6435 = vmatpush1.bf16.msra.mxu0 %v6412
    %6436 = vmatprep.subr.bf16.mxu0 0
    %6437 = vmatpush1.bf16.msra.mxu0 %v6413
    %6438 = vmatprep.subr.bf16.mxu0 0
    %6439 = vmatpush1.bf16.msra.mxu0 0
    %6440 = vmatprep.subr.bf16.mxu0 0
    %6441 = vmatpush1.bf16.msra.mxu0 0
    %6442 = vmatprep.subr.bf16.mxu0 0
    %6443 = vmatpush1.bf16.msra.mxu0 0
    %6444 = vmatprep.subr.bf16.mxu0 0
    %6445 = vmatpush1.bf16.msra.mxu0 0
    %6446 = vmatprep.subr.bf16.mxu0 0
    %6447 = vmatpush1.bf16.msra.mxu0 0
    %6448 = vmatprep.subr.bf16.mxu0 0
    %6449 = vmatpush1.bf16.msra.mxu0 0
    %6450 = vmatprep.subr.bf16.mxu0 0
    %6451 = vmatpush1.bf16.msra.mxu0 0
    %6452 = vmatprep.subr.bf16.mxu0 0
    %6453 = vmatpush1.bf16.msra.mxu0 0
    %6454 = vmatprep.mubr.bf16.mxu0 0
    %6455 = vmatmul.mubr.bf16.gmra.mrb[0].mxu0 %v6365
    %v6456 = vpop.f32.mrb[0].mxu0
    %v6457 = vadd.f32 %v6372, %v6456
    %v6458 = vpop.f32.mrb[0].mxu0
    %v6459 = vpop.f32.mrb[0].mxu0
    %v6460 = vadd.f32 %v6372, %v6459
    %v6461 = vpop.f32.mrb[0].mxu0
    %6462 = vdwg.mxu0
    %v6463 = vadd.f32 %v6229, %v6457
    %v6464 = vadd.f32 %v6230, %v6460
    %s6465 = scalar_lea.vmem [#allocation25], 1
    %v6466 = vld [vmem:[%s6465] sm:$0x1]
    %s6467 = scalar_lea.vmem [#allocation27], 1
    %v6468 = vld [vmem:[%s6467] sm:$0x1]
    %6469 = vadd.xlane.f32.xlu0 %v6463
    %v6470 = vpop.xlane.xlu0 %6469
    %6471 = vadd.xlane.f32.xlu0 %v6464
    %v6472 = vpop.xlane.xlu0 %6471
    %v6473 = vmul.f32 %v6470, %v1920
    %v6474 = vmul.f32 %v6472, %v1920
    %v6475 = vsub.f32 %v6463, %v6473
    %v6476 = vsub.f32 %v6464, %v6474
    %v6477 = vmul.f32 %v6475, %v6475
    %v6478 = vmul.f32 %v6476, %v6476
    %6479 = vadd.xlane.f32.xlu0 %v6477
    %v6480 = vpop.xlane.xlu0 %6479
    %6481 = vadd.xlane.f32.xlu0 %v6478
    %v6482 = vpop.xlane.xlu0 %6481
    %v6483 = vmul.f32 %v6480, %v1920
    %v6484 = vmul.f32 %v6482, %v1920
    %v6485 = vadd.f32 %v6483, 1e-05
    %v6486 = vadd.f32 %v6484, 1e-05
    %v6487 = vrsqrt.pop %v6485
    %v6488 = vrsqrt.pop %v6486
    %v6489 = vmul.f32 %v6475, %v6487
    %v6490 = vmul.f32 %v6476, %v6488
    %v6492 = vlaneseq
    %v6493 = vshrl.u32 %v6492, 7
    %v6494 = vsub.s32 0, %v6493
    %v6495 = vrot.slane %v6466, %v6494
    %v6497 = vmul.f32 %v6489, %v6495
    %v6498 = vmul.f32 %v6490, %v6495
    %v6500 = vlaneseq
    %v6501 = vshrl.u32 %v6500, 7
    %v6502 = vsub.s32 0, %v6501
    %v6503 = vrot.slane %v6468, %v6502
    %v6505 = vadd.f32 %v6497, %v6503
    %v6506 = vadd.f32 %v6498, %v6503
    %v6507 = vld [vmem:[#allocation28] sm:$0xf]
    %v6508 = vld [vmem:[#allocation28 + $0x4] sm:$0xf]
    %v6509 = vld [vmem:[#allocation28 + $0x8] sm:$0xf]
    %v6510 = vld [vmem:[#allocation28 + $0xc] sm:$0xf]
    %v6511 = vld [vmem:[#allocation28 + $0x10] sm:$0xf]
    %v6512 = vld [vmem:[#allocation28 + $0x14] sm:$0xf]
    %v6513 = vld [vmem:[#allocation28 + $0x18] sm:$0xf]
    %v6514 = vld [vmem:[#allocation28 + $0x1c] sm:$0xf]
    %v6515 = vld [vmem:[#allocation28 + $0x20] sm:$0xf]
    %v6516 = vld [vmem:[#allocation28 + $0x24] sm:$0xf]
    %v6517 = vld [vmem:[#allocation28 + $0x28] sm:$0xf]
    %v6518 = vld [vmem:[#allocation28 + $0x2c] sm:$0xf]
    %v6519 = vld [vmem:[#allocation28 + $0x30] sm:$0xf]
    %v6520 = vld [vmem:[#allocation28 + $0x34] sm:$0xf]
    %v6521 = vld [vmem:[#allocation28 + $0x38] sm:$0xf]
    %v6522 = vld [vmem:[#allocation28 + $0x3c] sm:$0xf]
    %v6523 = vpack.c.bf16 %v6506, %v6505
    %v6524 = vld [vmem:[#allocation30] sm:$0x1]
    %v6526 = vlaneseq
    %v6527 = vshrl.u32 %v6526, 7
    %v6528 = vsub.s32 0, %v6527
    %v6529 = vrot.slane %v6524, %v6528
    %v6547 = vunpack.c.l.b16 %v6507
    %v6548 = vunpack.c.l.b16 %v6508
    %v6549 = vunpack.c.l.b16 %v6509
    %v6550 = vunpack.c.l.b16 %v6510
    %v6551 = vunpack.c.l.b16 %v6511
    %v6552 = vunpack.c.l.b16 %v6512
    %v6553 = vunpack.c.l.b16 %v6513
    %v6554 = vunpack.c.l.b16 %v6514
    %v6555 = vunpack.c.l.b16 %v6515
    %v6556 = vunpack.c.l.b16 %v6516
    %v6557 = vunpack.c.l.b16 %v6517
    %v6558 = vunpack.c.l.b16 %v6518
    %v6559 = vunpack.c.l.b16 %v6519
    %v6560 = vunpack.c.l.b16 %v6520
    %v6561 = vunpack.c.l.b16 %v6521
    %v6562 = vunpack.c.l.b16 %v6522
    %v6563 = vpack.c.b16 %v6548, %v6547
    %v6564 = vpack.c.b16 %v6550, %v6549
    %v6565 = vpack.c.b16 %v6552, %v6551
    %v6566 = vpack.c.b16 %v6554, %v6553
    %v6567 = vpack.c.b16 %v6556, %v6555
    %v6568 = vpack.c.b16 %v6558, %v6557
    %v6569 = vpack.c.b16 %v6560, %v6559
    %v6570 = vpack.c.b16 %v6562, %v6561
    %6579 = vmatprep.subr.bf16.mxu0 0
    %6580 = vmatpush1.bf16.msra.mxu0 %v6563
    %6581 = vmatprep.subr.bf16.mxu0 0
    %6582 = vmatpush1.bf16.msra.mxu0 %v6564
    %6583 = vmatprep.subr.bf16.mxu0 0
    %6584 = vmatpush1.bf16.msra.mxu0 %v6565
    %6585 = vmatprep.subr.bf16.mxu0 0
    %6586 = vmatpush1.bf16.msra.mxu0 %v6566
    %6587 = vmatprep.subr.bf16.mxu0 0
    %6588 = vmatpush1.bf16.msra.mxu0 %v6567
    %6589 = vmatprep.subr.bf16.mxu0 0
    %6590 = vmatpush1.bf16.msra.mxu0 %v6568
    %6591 = vmatprep.subr.bf16.mxu0 0
    %6592 = vmatpush1.bf16.msra.mxu0 %v6569
    %6593 = vmatprep.subr.bf16.mxu0 0
    %6594 = vmatpush1.bf16.msra.mxu0 %v6570
    %6595 = vmatprep.subr.bf16.mxu0 0
    %6596 = vmatpush1.bf16.msra.mxu0 0
    %6597 = vmatprep.subr.bf16.mxu0 0
    %6598 = vmatpush1.bf16.msra.mxu0 0
    %6599 = vmatprep.subr.bf16.mxu0 0
    %6600 = vmatpush1.bf16.msra.mxu0 0
    %6601 = vmatprep.subr.bf16.mxu0 0
    %6602 = vmatpush1.bf16.msra.mxu0 0
    %6603 = vmatprep.subr.bf16.mxu0 0
    %6604 = vmatpush1.bf16.msra.mxu0 0
    %6605 = vmatprep.subr.bf16.mxu0 0
    %6606 = vmatpush1.bf16.msra.mxu0 0
    %6607 = vmatprep.subr.bf16.mxu0 0
    %6608 = vmatpush1.bf16.msra.mxu0 0
    %6609 = vmatprep.subr.bf16.mxu0 0
    %6610 = vmatpush1.bf16.msra.mxu0 0
    %6611 = vmatprep.mubr.bf16.mxu0 0
    %6612 = vmatmul.mubr.bf16.gmra.mrb[0].mxu0 %v6523
    %v6613 = vpop.f32.mrb[0].mxu0
    %v6614 = vadd.f32 %v6529, %v6613
    %v6615 = vpop.f32.mrb[0].mxu0
    %v6616 = vpop.f32.mrb[0].mxu0
    %v6617 = vadd.f32 %v6529, %v6616
    %v6618 = vpop.f32.mrb[0].mxu0
    %6619 = vdwg.mxu0
    %6620 = vst [vmem:[%s59] sm:$0xff] %v6614
    %6621 = vst [vmem:[%s59 + $0x8] sm:$0xff] %v6617
    // Predicated region
    $region194: #{forward.1} parent=1 // pred_check
      _
    $region195: #{forward.1} parent=1 // pred_check_branch
      %6623 = sbr.rel (0) target = $region197
    $region196: #{forward.1} parent=1 // pred_region
      _
    $region197: #{forward.1} parent=1 // pred_fallthru
      _
    // Predicated region
    $region198: #{forward.1} parent=1 // pred_check
      _
    $region199: #{forward.1} parent=1 // pred_check_branch
      %6625 = sbr.rel (0) target = $region201
    $region200: #{forward.1} parent=1 // pred_region
      _
    $region201: #{forward.1} parent=1 // pred_fallthru
      _
    %6626 = vsyncpa [#allocation3], 1
    %6627 = vsyncpa [#allocation5], 1
    %6628 = vsyncpa [#allocation8], 1
    %6629 = vsyncpa [#allocation11], 1
    %6630 = vsyncpa [#allocation14], 1
    %6631 = vsyncpa [#allocation17], 1
    %6632 = vsyncpa [#allocation20], 1
    %6633 = vsyncpa [#allocation23], 1
    %6634 = vsyncpa [#allocation26], 1
    %6635 = vsyncpa [#allocation29], 1

</llo_original>
